<compile_context>
chip_gen: v7x
topology: tpu7x:2x2x1
jax: 0.10.0
libtpu: 0.0.40
codegen_flags: <defaults>
</compile_context>

<pallas_src>
from functools import partial

import jax
import jax.numpy as jnp
from jax import lax
from jax.experimental import pallas as pl
from jax.experimental.pallas import tpu as pltpu

LEAKY_SLOPE = 0.01  # nn.LeakyReLU default negative_slope


# ------------------------------ fused kernel --------------------------------


def _dpfe_kernel(x_ref, ws_ref, w1_ref, w2_ref, mask_ref,
                 out_ref, tf_ref, xpad, patches, *, width, pad):
    """One grid step == one gait sequence (all S frames of one n).

    x_ref   : (S, C, P*W)        frames, lane-dense
    ws_ref  : (Cout, 9*C)        spatial 3x3 weights, tap-major columns
    w1_ref  : (Cm, 3*C)          temporal conv #1 weights, tap-major columns
    w2_ref  : (C, 3*Cm)          temporal conv #2 weights, tap-major columns
    mask_ref: (9, S*P*W)         0/1 validity mask per spatial tap
    out_ref : (S, Cout, P*W)     weighted output, lane-dense
    tf_ref  : (1, C, S*P)        temporal feature (post-residual), lane-dense
    xpad    : VMEM (C, S*P*W + 2*pad)  channel-major flat x with guard bands
    patches : VMEM (9*C, S*P*W)  im2col patch matrix
    """
    S, C, PW = x_ref.shape
    W = width
    P = PW // W
    SP = S * P
    SPW = S * PW
    f32 = jnp.float32

    # ---- stage x into the guard-band-padded, channel-major flat buffer -----
    # xpad[c, pad + s*PW + p*W + w] = x[s, c, p*W + w].  Only the guard bands
    # need (re-)zeroing (cheap, and safe under megacore scratch duplication).
    xpad[:, :pad] = jnp.zeros((C, pad), f32)
    xpad[:, pad + SPW:] = jnp.zeros((C, pad), f32)
    for s_ in range(S):
        xpad[:, pad + s_ * PW: pad + (s_ + 1) * PW] = x_ref[s_]

    x_cm = xpad[:, pad: pad + SPW]                          # (C, S*P*W) identity

    # ---- temporal branch, lane-dense (C, S*P) layout ------------------------
    tm = jnp.max(x_cm.reshape(C, SP, W), axis=-1)           # max over W

    def shift_frames(a, d):
        # out[:, j] = a[:, j + d*P] with zero fill (shift by whole frames == pad=1).
        pz = jnp.zeros((a.shape[0], P), f32)
        if d > 0:
            return jnp.concatenate([a[:, P:], pz], axis=-1)
        return jnp.concatenate([pz, a[:, :SP - P]], axis=-1)

    tstack = jnp.concatenate(
        [shift_frames(tm, -1), tm, shift_frames(tm, 1)], axis=0)      # (3C, SP)
    h = jnp.dot(w1_ref[...], tstack, preferred_element_type=f32)       # (Cm, SP)
    h = jnp.where(h >= 0, h, LEAKY_SLOPE * h)                          # LeakyReLU
    hstack = jnp.concatenate(
        [shift_frames(h, -1), h, shift_frames(h, 1)], axis=0)          # (3Cm, SP)
    tf = jnp.dot(w2_ref[...], hstack, preferred_element_type=f32) + tm  # residual
    tf_ref[0] = tf                                                     # lane-dense

    gate = jax.nn.sigmoid(tf)                                          # (C, SP)
    # Hoisted gate broadcast over W: (C, SP) -> (C, SPW), built once per step.
    gate_w = jnp.broadcast_to(gate[:, :, None], (C, SP, W)).reshape(C, SPW)

    # ---- spatial 3x3 conv: im2col patches + ONE MXU dot ---------------------
    mval = mask_ref[...]                                               # (9, SPW)
    t = 0
    for dh in (-1, 0, 1):
        for dw in (-1, 0, 1):
            off = pad + dh * W + dw
            v = xpad[:, off: off + SPW]                                # shifted view
            if dh != 0 or dw != 0:
                v = v * mval[t:t + 1, :]                               # edge mask
            patches[t * C:(t + 1) * C, :] = v
            t += 1
    conv = jnp.dot(ws_ref[...], patches[...],
                   preferred_element_type=f32)                         # (Cout, SPW)

    # ---- gate * conv + identity, lane-dense per-frame stores ----------------
    z = conv * gate_w + x_cm
    for s_ in range(S):
        out_ref[s_] = z[:, s_ * PW:(s_ + 1) * PW]


# ------------------------------ wrapper --------------------------------------


def _make_tap_masks(s, p, w):
    """(9, s*p*w) float32 0/1 mask; row t=(kh*3+kw): source (p+dh, w+dw) valid."""
    q = jnp.arange(s * p * w, dtype=jnp.int32)
    ph = (q // w) % p
    pw_ = q % w
    rows = []
    for dh in (-1, 0, 1):
        for dw in (-1, 0, 1):
            ok = jnp.ones_like(q, dtype=jnp.bool_)
            if dh == -1:
                ok = ok & (ph >= 1)
            if dh == 1:
                ok = ok & (ph <= p - 2)
            if dw == -1:
                ok = ok & (pw_ >= 1)
            if dw == 1:
                ok = ok & (pw_ <= w - 2)
            rows.append(ok.astype(jnp.float32))
    return jnp.stack(rows, axis=0)


@partial(jax.jit, static_argnames=("last",))
def dpfe_forward(x, w_spatial, w_t1, w_t2, last=False):
    """x: (n, s, c, p, w) float32.  Matches DPFE.forward."""
    n, s, c, p, w = x.shape
    cout, cin, kh, kw = w_spatial.shape
    cm = w_t1.shape[0]
    assert cout == c and cin == c and kh == 3 and kw == 3
    assert w_t1.shape == (cm, c, 3) and w_t2.shape == (c, cm, 3)

    pw = p * w
    sp = s * p
    spw = s * p * w
    pad = ((w + 1 + 127) // 128) * 128   # lane-aligned guard band, >= w+1

    # Tap-major weight layouts (tiny one-time layout plumbing, done by XLA).
    ws_mat = jnp.transpose(w_spatial, (0, 2, 3, 1)).reshape(cout, 9 * c)
    w1s = jnp.transpose(w_t1, (0, 2, 1)).reshape(cm, 3 * c)
    w2s = jnp.transpose(w_t2, (0, 2, 1)).reshape(c, 3 * cm)
    masks = _make_tap_masks(s, p, w)                     # (9, spw), const-folded
    x2d = x.reshape(n * s, c, pw)                        # free reshape

    kernel = partial(_dpfe_kernel, width=w, pad=pad)
    out_flat, tf_raw = pl.pallas_call(
        kernel,
        out_shape=(
            jax.ShapeDtypeStruct((n * s, cout, pw), jnp.float32),
            jax.ShapeDtypeStruct((n, c, sp), jnp.float32),
        ),
        grid=(n,),
        in_specs=[
            pl.BlockSpec((s, c, pw), lambda i: (i, 0, 0)),
            pl.BlockSpec((cout, 9 * c), lambda i: (0, 0)),
            pl.BlockSpec((cm, 3 * c), lambda i: (0, 0)),
            pl.BlockSpec((c, 3 * cm), lambda i: (0, 0)),
            pl.BlockSpec((9, spw), lambda i: (0, 0)),
        ],
        out_specs=(
            pl.BlockSpec((s, cout, pw), lambda i: (i, 0, 0)),
            pl.BlockSpec((1, c, sp), lambda i: (i, 0, 0)),
        ),
        scratch_shapes=[
            pltpu.VMEM((c, spw + 2 * pad), jnp.float32),
            pltpu.VMEM((9 * c, spw), jnp.float32),
        ],
        compiler_params=pltpu.CompilerParams(
            dimension_semantics=("parallel",)),
    )(x2d, ws_mat, w1s, w2s, masks)

    weighted = out_flat.reshape(n, s, cout, p, w)        # free reshape
    if last:
        temporal_f = jnp.transpose(tf_raw.reshape(n, c, s, p), (0, 2, 1, 3))
        return weighted, temporal_f
    return weighted


# ------------------------------ reference ------------------------------------


def dpfe_reference(x, w_spatial, w_t1, w_t2):
    n, s, c, p, w = x.shape
    x2d = x.reshape(n * s, c, p, w)
    sp = lax.conv_general_dilated(
        x2d, w_spatial, (1, 1), "SAME",
        dimension_numbers=("NCHW", "OIHW", "NCHW"))
    tmax = jnp.max(x, axis=-1)                                  # (n, s, c, p)
    tf = jnp.transpose(tmax, (0, 3, 2, 1))                      # (n, p, c, s)
    tff = tf.reshape(n * p, c, s)
    h = lax.conv_general_dilated(
        tff, w_t1, (1,), "SAME", dimension_numbers=("NCH", "OIH", "NCH"))
    h = jnp.where(h >= 0, h, LEAKY_SLOPE * h)
    y = lax.conv_general_dilated(
        h, w_t2, (1,), "SAME", dimension_numbers=("NCH", "OIH", "NCH"))
    tfo = y.reshape(n, p, c, s) + tf
    tfo = jnp.transpose(tfo, (0, 3, 2, 1))                      # (n, s, c, p)
    gate = jax.nn.sigmoid(tfo)[..., None]
    return sp.reshape(n, s, c, p, w) * gate + x, tfo


# -------------------------------- main ----------------------------------------


if __name__ == "__main__":
    n, s, c, p, w = 2, 8, 8, 16, 16
    squeeze = 4
    cm = c // squeeze

    key = jax.random.PRNGKey(0)
    kx, k1, k2, k3 = jax.random.split(key, 4)
    x = jax.random.normal(kx, (n, s, c, p, w), dtype=jnp.float32)
    w_spatial = 0.1 * jax.random.normal(k1, (c, c, 3, 3), dtype=jnp.float32)
    w_t1 = 0.1 * jax.random.normal(k2, (cm, c, 3), dtype=jnp.float32)
    w_t2 = 0.1 * jax.random.normal(k3, (c, cm, 3), dtype=jnp.float32)

    out, tf_out = dpfe_forward(x, w_spatial, w_t1, w_t2, last=True)
    out = jax.block_until_ready(out)

    ref_out, ref_tf = dpfe_reference(x, w_spatial, w_t1, w_t2)
    assert out.shape == (n, s, c, p, w)
    assert tf_out.shape == (n, s, c, p)
    assert jnp.allclose(out, ref_out, atol=2e-4, rtol=2e-4), (
        float(jnp.max(jnp.abs(out - ref_out))))
    assert jnp.allclose(tf_out, ref_tf, atol=2e-4, rtol=2e-4), (
        float(jnp.max(jnp.abs(tf_out - ref_tf))))

    print("KERNEL_OK")
</pallas_src>

<mosaic_0001>
module attributes {stable_mosaic.version = 11 : i64} {
  func.func @_dpfe_kernel(%arg0: i32, %arg1: memref<8x8x256xf32, #tpu.memory_space<vmem>>, %arg2: memref<8x72xf32, #tpu.memory_space<vmem>>, %arg3: memref<2x24xf32, #tpu.memory_space<vmem>>, %arg4: memref<8x6xf32, #tpu.memory_space<vmem>>, %arg5: memref<9x2048xf32, #tpu.memory_space<vmem>>, %arg6: memref<8x8x256xf32, #tpu.memory_space<vmem>>, %arg7: memref<1x8x128xf32, #tpu.memory_space<vmem>>, %arg8: memref<8x2304xf32, #tpu.memory_space<vmem>>, %arg9: memref<72x2048xf32, #tpu.memory_space<vmem>>) attributes {dimension_semantics = [#tpu.dimension_semantics<parallel>], iteration_bounds = array<i64: 2>, scalar_prefetch = 0 : i64, scratch_operands = 2 : i64, tpu.core_type = #tpu.core_type<tc>, window_params = [{transform_indices = @transform_0, window_bounds = array<i64: 8, 8, 256>}, {pipeline_mode = #tpu.pipeline_mode<synchronous>, transform_indices = @transform_1, window_bounds = array<i64: 8, 72>}, {pipeline_mode = #tpu.pipeline_mode<synchronous>, transform_indices = @transform_2, window_bounds = array<i64: 2, 24>}, {pipeline_mode = #tpu.pipeline_mode<synchronous>, transform_indices = @transform_3, window_bounds = array<i64: 8, 6>}, {pipeline_mode = #tpu.pipeline_mode<synchronous>, transform_indices = @transform_4, window_bounds = array<i64: 9, 2048>}, {transform_indices = @transform_5, window_bounds = array<i64: 8, 8, 256>}, {transform_indices = @transform_6, window_bounds = array<i64: 1, 8, 128>}]} {
    %cst = arith.constant 0.000000e+00 : f32
    %0 = vector.broadcast %cst : f32 to vector<8x128xf32>
    %c0 = arith.constant 0 : index
    %c0_0 = arith.constant 0 : index
    %1 = vector.load %arg8[%c0, %c0_0] : memref<8x2304xf32, #tpu.memory_space<vmem>>, vector<8x128xf32>
    tpu.vector_store %arg8[%c0, %c0_0], %0 {strides = array<i32>} : memref<8x2304xf32, #tpu.memory_space<vmem>>, vector<8x128xf32>,
    %cst_1 = arith.constant 0.000000e+00 : f32
    %2 = vector.broadcast %cst_1 : f32 to vector<8x128xf32>
    %c0_2 = arith.constant 0 : index
    %c2176 = arith.constant 2176 : index
    %3 = vector.load %arg8[%c0_2, %c2176] : memref<8x2304xf32, #tpu.memory_space<vmem>>, vector<8x128xf32>
    tpu.vector_store %arg8[%c0_2, %c2176], %2 {strides = array<i32>} : memref<8x2304xf32, #tpu.memory_space<vmem>>, vector<8x128xf32>,
    %c0_3 = arith.constant 0 : index
    %c0_4 = arith.constant 0 : index
    %c0_5 = arith.constant 0 : index
    %4 = vector.load %arg1[%c0_3, %c0_4, %c0_5] : memref<8x8x256xf32, #tpu.memory_space<vmem>>, vector<1x8x256xf32>
    %5 = vector.shape_cast %4 : vector<1x8x256xf32> to vector<8x256xf32>
    %c0_6 = arith.constant 0 : index
    %c128 = arith.constant 128 : index
    %6 = vector.load %arg8[%c0_6, %c128] : memref<8x2304xf32, #tpu.memory_space<vmem>>, vector<8x256xf32>
    tpu.vector_store %arg8[%c0_6, %c128], %5 {strides = array<i32>} : memref<8x2304xf32, #tpu.memory_space<vmem>>, vector<8x256xf32>,
    %c1 = arith.constant 1 : index
    %c0_7 = arith.constant 0 : index
    %c0_8 = arith.constant 0 : index
    %7 = vector.load %arg1[%c1, %c0_7, %c0_8] : memref<8x8x256xf32, #tpu.memory_space<vmem>>, vector<1x8x256xf32>
    %8 = vector.shape_cast %7 : vector<1x8x256xf32> to vector<8x256xf32>
    %c0_9 = arith.constant 0 : index
    %c384 = arith.constant 384 : index
    %9 = vector.load %arg8[%c0_9, %c384] : memref<8x2304xf32, #tpu.memory_space<vmem>>, vector<8x256xf32>
    tpu.vector_store %arg8[%c0_9, %c384], %8 {strides = array<i32>} : memref<8x2304xf32, #tpu.memory_space<vmem>>, vector<8x256xf32>,
    %c2 = arith.constant 2 : index
    %c0_10 = arith.constant 0 : index
    %c0_11 = arith.constant 0 : index
    %10 = vector.load %arg1[%c2, %c0_10, %c0_11] : memref<8x8x256xf32, #tpu.memory_space<vmem>>, vector<1x8x256xf32>
    %11 = vector.shape_cast %10 : vector<1x8x256xf32> to vector<8x256xf32>
    %c0_12 = arith.constant 0 : index
    %c640 = arith.constant 640 : index
    %12 = vector.load %arg8[%c0_12, %c640] : memref<8x2304xf32, #tpu.memory_space<vmem>>, vector<8x256xf32>
    tpu.vector_store %arg8[%c0_12, %c640], %11 {strides = array<i32>} : memref<8x2304xf32, #tpu.memory_space<vmem>>, vector<8x256xf32>,
    %c3 = arith.constant 3 : index
    %c0_13 = arith.constant 0 : index
    %c0_14 = arith.constant 0 : index
    %13 = vector.load %arg1[%c3, %c0_13, %c0_14] : memref<8x8x256xf32, #tpu.memory_space<vmem>>, vector<1x8x256xf32>
    %14 = vector.shape_cast %13 : vector<1x8x256xf32> to vector<8x256xf32>
    %c0_15 = arith.constant 0 : index
    %c896 = arith.constant 896 : index
    %15 = vector.load %arg8[%c0_15, %c896] : memref<8x2304xf32, #tpu.memory_space<vmem>>, vector<8x256xf32>
    tpu.vector_store %arg8[%c0_15, %c896], %14 {strides = array<i32>} : memref<8x2304xf32, #tpu.memory_space<vmem>>, vector<8x256xf32>,
    %c4 = arith.constant 4 : index
    %c0_16 = arith.constant 0 : index
    %c0_17 = arith.constant 0 : index
    %16 = vector.load %arg1[%c4, %c0_16, %c0_17] : memref<8x8x256xf32, #tpu.memory_space<vmem>>, vector<1x8x256xf32>
    %17 = vector.shape_cast %16 : vector<1x8x256xf32> to vector<8x256xf32>
    %c0_18 = arith.constant 0 : index
    %c1152 = arith.constant 1152 : index
    %18 = vector.load %arg8[%c0_18, %c1152] : memref<8x2304xf32, #tpu.memory_space<vmem>>, vector<8x256xf32>
    tpu.vector_store %arg8[%c0_18, %c1152], %17 {strides = array<i32>} : memref<8x2304xf32, #tpu.memory_space<vmem>>, vector<8x256xf32>,
    %c5 = arith.constant 5 : index
    %c0_19 = arith.constant 0 : index
    %c0_20 = arith.constant 0 : index
    %19 = vector.load %arg1[%c5, %c0_19, %c0_20] : memref<8x8x256xf32, #tpu.memory_space<vmem>>, vector<1x8x256xf32>
    %20 = vector.shape_cast %19 : vector<1x8x256xf32> to vector<8x256xf32>
    %c0_21 = arith.constant 0 : index
    %c1408 = arith.constant 1408 : index
    %21 = vector.load %arg8[%c0_21, %c1408] : memref<8x2304xf32, #tpu.memory_space<vmem>>, vector<8x256xf32>
    tpu.vector_store %arg8[%c0_21, %c1408], %20 {strides = array<i32>} : memref<8x2304xf32, #tpu.memory_space<vmem>>, vector<8x256xf32>,
    %c6 = arith.constant 6 : index
    %c0_22 = arith.constant 0 : index
    %c0_23 = arith.constant 0 : index
    %22 = vector.load %arg1[%c6, %c0_22, %c0_23] : memref<8x8x256xf32, #tpu.memory_space<vmem>>, vector<1x8x256xf32>
    %23 = vector.shape_cast %22 : vector<1x8x256xf32> to vector<8x256xf32>
    %c0_24 = arith.constant 0 : index
    %c1664 = arith.constant 1664 : index
    %24 = vector.load %arg8[%c0_24, %c1664] : memref<8x2304xf32, #tpu.memory_space<vmem>>, vector<8x256xf32>
    tpu.vector_store %arg8[%c0_24, %c1664], %23 {strides = array<i32>} : memref<8x2304xf32, #tpu.memory_space<vmem>>, vector<8x256xf32>,
    %c7 = arith.constant 7 : index
    %c0_25 = arith.constant 0 : index
    %c0_26 = arith.constant 0 : index
    %25 = vector.load %arg1[%c7, %c0_25, %c0_26] : memref<8x8x256xf32, #tpu.memory_space<vmem>>, vector<1x8x256xf32>
    %26 = vector.shape_cast %25 : vector<1x8x256xf32> to vector<8x256xf32>
    %c0_27 = arith.constant 0 : index
    %c1920 = arith.constant 1920 : index
    %27 = vector.load %arg8[%c0_27, %c1920] : memref<8x2304xf32, #tpu.memory_space<vmem>>, vector<8x256xf32>
    tpu.vector_store %arg8[%c0_27, %c1920], %26 {strides = array<i32>} : memref<8x2304xf32, #tpu.memory_space<vmem>>, vector<8x256xf32>,
    %c0_28 = arith.constant 0 : index
    %c128_29 = arith.constant 128 : index
    %28 = vector.load %arg8[%c0_28, %c128_29] : memref<8x2304xf32, #tpu.memory_space<vmem>>, vector<8x2048xf32>
    %29 = vector.shape_cast %28 : vector<8x2048xf32> to vector<8x128x16xf32>
    %cst_30 = arith.constant dense<0xFF800000> : vector<8x128xf32>
    %30 = vector.multi_reduction <maximumf>, %29, %cst_30 [2] : vector<8x128x16xf32> to vector<8x128xf32>
    %cst_31 = arith.constant 0.000000e+00 : f32
    %31 = vector.broadcast %cst_31 : f32 to vector<8x16xf32>
    %32 = vector.extract_strided_slice %30 {offsets = [0, 0], sizes = [8, 112], strides = [1, 1]} : vector<8x128xf32> to vector<8x112xf32>
    %33 = tpu.concatenate %31, %32 in 1 : vector<8x16xf32>, vector<8x112xf32> -> vector<8x128xf32>
    %cst_32 = arith.constant 0.000000e+00 : f32
    %34 = vector.broadcast %cst_32 : f32 to vector<8x16xf32>
    %35 = vector.extract_strided_slice %30 {offsets = [0, 16], sizes = [8, 112], strides = [1, 1]} : vector<8x128xf32> to vector<8x112xf32>
    %36 = tpu.concatenate %35, %34 in 1 : vector<8x112xf32>, vector<8x16xf32> -> vector<8x128xf32>
    %37 = tpu.concatenate %33, %30, %36 in 0 : vector<8x128xf32>, vector<8x128xf32>, vector<8x128xf32> -> vector<24x128xf32>
    %c0_33 = arith.constant 0 : index
    %c0_34 = arith.constant 0 : index
    %38 = vector.load %arg3[%c0_33, %c0_34] : memref<2x24xf32, #tpu.memory_space<vmem>>, vector<2x24xf32>
    %cst_35 = arith.constant dense<0.000000e+00> : vector<2x128xf32>
    %39 = tpu.matmul %38, %37, %cst_35 {dimension_numbers = #tpu.dot_dimension_numbers<[1], [0], [0], [1], [0, 0, 1, 1], [], []>} : vector<2x24xf32>, vector<24x128xf32>, vector<2x128xf32> -> vector<2x128xf32>
    %cst_36 = arith.constant 0.000000e+00 : f32
    %40 = vector.broadcast %cst_36 : f32 to vector<2x128xf32>
    %41 = arith.cmpf oge, %39, %40 : vector<2x128xf32>
    %cst_37 = arith.constant 0.00999999977 : f32
    %42 = vector.broadcast %cst_37 : f32 to vector<2x128xf32>
    %43 = arith.mulf %42, %39 : vector<2x128xf32>
    %44 = arith.select %41, %39, %43 : vector<2x128xi1>, vector<2x128xf32>
    %cst_38 = arith.constant 0.000000e+00 : f32
    %45 = vector.broadcast %cst_38 : f32 to vector<2x16xf32>
    %46 = vector.extract_strided_slice %44 {offsets = [0, 0], sizes = [2, 112], strides = [1, 1]} : vector<2x128xf32> to vector<2x112xf32>
    %47 = tpu.concatenate %45, %46 in 1 : vector<2x16xf32>, vector<2x112xf32> -> vector<2x128xf32>
    %cst_39 = arith.constant 0.000000e+00 : f32
    %48 = vector.broadcast %cst_39 : f32 to vector<2x16xf32>
    %49 = vector.extract_strided_slice %44 {offsets = [0, 16], sizes = [2, 112], strides = [1, 1]} : vector<2x128xf32> to vector<2x112xf32>
    %50 = tpu.concatenate %49, %48 in 1 : vector<2x112xf32>, vector<2x16xf32> -> vector<2x128xf32>
    %51 = tpu.concatenate %47, %44, %50 in 0 : vector<2x128xf32>, vector<2x128xf32>, vector<2x128xf32> -> vector<6x128xf32>
    %c0_40 = arith.constant 0 : index
    %c0_41 = arith.constant 0 : index
    %52 = vector.load %arg4[%c0_40, %c0_41] : memref<8x6xf32, #tpu.memory_space<vmem>>, vector<8x6xf32>
    %cst_42 = arith.constant dense<0.000000e+00> : vector<8x128xf32>
    %53 = tpu.matmul %52, %51, %cst_42 {dimension_numbers = #tpu.dot_dimension_numbers<[1], [0], [0], [1], [0, 0, 1, 1], [], []>} : vector<8x6xf32>, vector<6x128xf32>, vector<8x128xf32> -> vector<8x128xf32>
    %54 = arith.addf %53, %30 : vector<8x128xf32>
    %c0_43 = arith.constant 0 : index
    %c0_44 = arith.constant 0 : index
    %c0_45 = arith.constant 0 : index
    %55 = vector.load %arg7[%c0_43, %c0_44, %c0_45] : memref<1x8x128xf32, #tpu.memory_space<vmem>>, vector<1x8x128xf32>
    %56 = vector.shape_cast %55 : vector<1x8x128xf32> to vector<8x128xf32>
    %57 = vector.shape_cast %54 : vector<8x128xf32> to vector<1x8x128xf32>
    tpu.vector_store %arg7[%c0_43, %c0_44, %c0_45], %57 {strides = array<i32>} : memref<1x8x128xf32, #tpu.memory_space<vmem>>, vector<1x8x128xf32>,
    %58 = arith.negf %54 : vector<8x128xf32>
    %59 = math.exp %58 : vector<8x128xf32>
    %cst_46 = arith.constant 1.000000e+00 : f32
    %60 = vector.broadcast %cst_46 : f32 to vector<8x128xf32>
    %61 = arith.addf %60, %59 : vector<8x128xf32>
    %62 = arith.divf %60, %61 : vector<8x128xf32>
    %63 = vector.shape_cast %62 : vector<8x128xf32> to vector<8x128x1xf32>
    %64 = vector.shape_cast %63 : vector<8x128x1xf32> to vector<8x128x1xf32>
    %65 = vector.broadcast %64 : vector<8x128x1xf32> to vector<8x128x16xf32>
    %66 = vector.shape_cast %65 : vector<8x128x16xf32> to vector<8x2048xf32>
    %c0_47 = arith.constant 0 : index
    %c0_48 = arith.constant 0 : index
    %67 = vector.load %arg5[%c0_47, %c0_48] : memref<9x2048xf32, #tpu.memory_space<vmem>>, vector<9x2048xf32>
    %c0_49 = arith.constant 0 : index
    %c111 = arith.constant 111 : index
    %68 = vector.load %arg8[%c0_49, %c111] : memref<8x2304xf32, #tpu.memory_space<vmem>>, vector<8x2048xf32>
    %69 = vector.extract_strided_slice %67 {offsets = [0, 0], sizes = [1, 2048], strides = [1, 1]} : vector<9x2048xf32> to vector<1x2048xf32>
    %70 = vector.broadcast %69 : vector<1x2048xf32> to vector<8x2048xf32>
    %71 = arith.mulf %68, %70 : vector<8x2048xf32>
    %c0_50 = arith.constant 0 : index
    %c0_51 = arith.constant 0 : index
    %72 = vector.load %arg9[%c0_50, %c0_51] : memref<72x2048xf32, #tpu.memory_space<vmem>>, vector<8x2048xf32>
    tpu.vector_store %arg9[%c0_50, %c0_51], %71 {strides = array<i32>} : memref<72x2048xf32, #tpu.memory_space<vmem>>, vector<8x2048xf32>,
    %c0_52 = arith.constant 0 : index
    %c112 = arith.constant 112 : index
    %73 = vector.load %arg8[%c0_52, %c112] : memref<8x2304xf32, #tpu.memory_space<vmem>>, vector<8x2048xf32>
    %74 = vector.extract_strided_slice %67 {offsets = [1, 0], sizes = [1, 2048], strides = [1, 1]} : vector<9x2048xf32> to vector<1x2048xf32>
    %75 = vector.broadcast %74 : vector<1x2048xf32> to vector<8x2048xf32>
    %76 = arith.mulf %73, %75 : vector<8x2048xf32>
    %c8 = arith.constant 8 : index
    %c0_53 = arith.constant 0 : index
    %77 = vector.load %arg9[%c8, %c0_53] : memref<72x2048xf32, #tpu.memory_space<vmem>>, vector<8x2048xf32>
    tpu.vector_store %arg9[%c8, %c0_53], %76 {strides = array<i32>} : memref<72x2048xf32, #tpu.memory_space<vmem>>, vector<8x2048xf32>,
    %c0_54 = arith.constant 0 : index
    %c113 = arith.constant 113 : index
    %78 = vector.load %arg8[%c0_54, %c113] : memref<8x2304xf32, #tpu.memory_space<vmem>>, vector<8x2048xf32>
    %79 = vector.extract_strided_slice %67 {offsets = [2, 0], sizes = [1, 2048], strides = [1, 1]} : vector<9x2048xf32> to vector<1x2048xf32>
    %80 = vector.broadcast %79 : vector<1x2048xf32> to vector<8x2048xf32>
    %81 = arith.mulf %78, %80 : vector<8x2048xf32>
    %c16 = arith.constant 16 : index
    %c0_55 = arith.constant 0 : index
    %82 = vector.load %arg9[%c16, %c0_55] : memref<72x2048xf32, #tpu.memory_space<vmem>>, vector<8x2048xf32>
    tpu.vector_store %arg9[%c16, %c0_55], %81 {strides = array<i32>} : memref<72x2048xf32, #tpu.memory_space<vmem>>, vector<8x2048xf32>,
    %c0_56 = arith.constant 0 : index
    %c127 = arith.constant 127 : index
    %83 = vector.load %arg8[%c0_56, %c127] : memref<8x2304xf32, #tpu.memory_space<vmem>>, vector<8x2048xf32>
    %84 = vector.extract_strided_slice %67 {offsets = [3, 0], sizes = [1, 2048], strides = [1, 1]} : vector<9x2048xf32> to vector<1x2048xf32>
    %85 = vector.broadcast %84 : vector<1x2048xf32> to vector<8x2048xf32>
    %86 = arith.mulf %83, %85 : vector<8x2048xf32>
    %c24 = arith.constant 24 : index
    %c0_57 = arith.constant 0 : index
    %87 = vector.load %arg9[%c24, %c0_57] : memref<72x2048xf32, #tpu.memory_space<vmem>>, vector<8x2048xf32>
    tpu.vector_store %arg9[%c24, %c0_57], %86 {strides = array<i32>} : memref<72x2048xf32, #tpu.memory_space<vmem>>, vector<8x2048xf32>,
    %c0_58 = arith.constant 0 : index
    %c128_59 = arith.constant 128 : index
    %88 = vector.load %arg8[%c0_58, %c128_59] : memref<8x2304xf32, #tpu.memory_space<vmem>>, vector<8x2048xf32>
    %c32 = arith.constant 32 : index
    %c0_60 = arith.constant 0 : index
    %89 = vector.load %arg9[%c32, %c0_60] : memref<72x2048xf32, #tpu.memory_space<vmem>>, vector<8x2048xf32>
    tpu.vector_store %arg9[%c32, %c0_60], %88 {strides = array<i32>} : memref<72x2048xf32, #tpu.memory_space<vmem>>, vector<8x2048xf32>,
    %c0_61 = arith.constant 0 : index
    %c129 = arith.constant 129 : index
    %90 = vector.load %arg8[%c0_61, %c129] : memref<8x2304xf32, #tpu.memory_space<vmem>>, vector<8x2048xf32>
    %91 = vector.extract_strided_slice %67 {offsets = [5, 0], sizes = [1, 2048], strides = [1, 1]} : vector<9x2048xf32> to vector<1x2048xf32>
    %92 = vector.broadcast %91 : vector<1x2048xf32> to vector<8x2048xf32>
    %93 = arith.mulf %90, %92 : vector<8x2048xf32>
    %c40 = arith.constant 40 : index
    %c0_62 = arith.constant 0 : index
    %94 = vector.load %arg9[%c40, %c0_62] : memref<72x2048xf32, #tpu.memory_space<vmem>>, vector<8x2048xf32>
    tpu.vector_store %arg9[%c40, %c0_62], %93 {strides = array<i32>} : memref<72x2048xf32, #tpu.memory_space<vmem>>, vector<8x2048xf32>,
    %c0_63 = arith.constant 0 : index
    %c143 = arith.constant 143 : index
    %95 = vector.load %arg8[%c0_63, %c143] : memref<8x2304xf32, #tpu.memory_space<vmem>>, vector<8x2048xf32>
    %96 = vector.extract_strided_slice %67 {offsets = [6, 0], sizes = [1, 2048], strides = [1, 1]} : vector<9x2048xf32> to vector<1x2048xf32>
    %97 = vector.broadcast %96 : vector<1x2048xf32> to vector<8x2048xf32>
    %98 = arith.mulf %95, %97 : vector<8x2048xf32>
    %c48 = arith.constant 48 : index
    %c0_64 = arith.constant 0 : index
    %99 = vector.load %arg9[%c48, %c0_64] : memref<72x2048xf32, #tpu.memory_space<vmem>>, vector<8x2048xf32>
    tpu.vector_store %arg9[%c48, %c0_64], %98 {strides = array<i32>} : memref<72x2048xf32, #tpu.memory_space<vmem>>, vector<8x2048xf32>,
    %c0_65 = arith.constant 0 : index
    %c144 = arith.constant 144 : index
    %100 = vector.load %arg8[%c0_65, %c144] : memref<8x2304xf32, #tpu.memory_space<vmem>>, vector<8x2048xf32>
    %101 = vector.extract_strided_slice %67 {offsets = [7, 0], sizes = [1, 2048], strides = [1, 1]} : vector<9x2048xf32> to vector<1x2048xf32>
    %102 = vector.broadcast %101 : vector<1x2048xf32> to vector<8x2048xf32>
    %103 = arith.mulf %100, %102 : vector<8x2048xf32>
    %c56 = arith.constant 56 : index
    %c0_66 = arith.constant 0 : index
    %104 = vector.load %arg9[%c56, %c0_66] : memref<72x2048xf32, #tpu.memory_space<vmem>>, vector<8x2048xf32>
    tpu.vector_store %arg9[%c56, %c0_66], %103 {strides = array<i32>} : memref<72x2048xf32, #tpu.memory_space<vmem>>, vector<8x2048xf32>,
    %c0_67 = arith.constant 0 : index
    %c145 = arith.constant 145 : index
    %105 = vector.load %arg8[%c0_67, %c145] : memref<8x2304xf32, #tpu.memory_space<vmem>>, vector<8x2048xf32>
    %106 = vector.extract_strided_slice %67 {offsets = [8, 0], sizes = [1, 2048], strides = [1, 1]} : vector<9x2048xf32> to vector<1x2048xf32>
    %107 = vector.broadcast %106 : vector<1x2048xf32> to vector<8x2048xf32>
    %108 = arith.mulf %105, %107 : vector<8x2048xf32>
    %c64 = arith.constant 64 : index
    %c0_68 = arith.constant 0 : index
    %109 = vector.load %arg9[%c64, %c0_68] : memref<72x2048xf32, #tpu.memory_space<vmem>>, vector<8x2048xf32>
    tpu.vector_store %arg9[%c64, %c0_68], %108 {strides = array<i32>} : memref<72x2048xf32, #tpu.memory_space<vmem>>, vector<8x2048xf32>,
    %c0_69 = arith.constant 0 : index
    %c0_70 = arith.constant 0 : index
    %110 = vector.load %arg2[%c0_69, %c0_70] : memref<8x72xf32, #tpu.memory_space<vmem>>, vector<8x72xf32>
    %c0_71 = arith.constant 0 : index
    %c0_72 = arith.constant 0 : index
    %111 = vector.load %arg9[%c0_71, %c0_72] : memref<72x2048xf32, #tpu.memory_space<vmem>>, vector<72x2048xf32>
    %cst_73 = arith.constant dense<0.000000e+00> : vector<8x2048xf32>
    %112 = tpu.matmul %110, %111, %cst_73 {dimension_numbers = #tpu.dot_dimension_numbers<[1], [0], [0], [1], [0, 0, 1, 1], [], []>} : vector<8x72xf32>, vector<72x2048xf32>, vector<8x2048xf32> -> vector<8x2048xf32>
    %113 = arith.mulf %112, %66 : vector<8x2048xf32>
    %114 = arith.addf %113, %28 : vector<8x2048xf32>
    %115 = vector.extract_strided_slice %114 {offsets = [0, 0], sizes = [8, 256], strides = [1, 1]} : vector<8x2048xf32> to vector<8x256xf32>
    %c0_74 = arith.constant 0 : index
    %c0_75 = arith.constant 0 : index
    %c0_76 = arith.constant 0 : index
    %116 = vector.load %arg6[%c0_74, %c0_75, %c0_76] : memref<8x8x256xf32, #tpu.memory_space<vmem>>, vector<1x8x256xf32>
    %117 = vector.shape_cast %116 : vector<1x8x256xf32> to vector<8x256xf32>
    %118 = vector.shape_cast %115 : vector<8x256xf32> to vector<1x8x256xf32>
    tpu.vector_store %arg6[%c0_74, %c0_75, %c0_76], %118 {strides = array<i32>} : memref<8x8x256xf32, #tpu.memory_space<vmem>>, vector<1x8x256xf32>,
    %119 = vector.extract_strided_slice %114 {offsets = [0, 256], sizes = [8, 256], strides = [1, 1]} : vector<8x2048xf32> to vector<8x256xf32>
    %c1_77 = arith.constant 1 : index
    %c0_78 = arith.constant 0 : index
    %c0_79 = arith.constant 0 : index
    %120 = vector.load %arg6[%c1_77, %c0_78, %c0_79] : memref<8x8x256xf32, #tpu.memory_space<vmem>>, vector<1x8x256xf32>
    %121 = vector.shape_cast %120 : vector<1x8x256xf32> to vector<8x256xf32>
    %122 = vector.shape_cast %119 : vector<8x256xf32> to vector<1x8x256xf32>
    tpu.vector_store %arg6[%c1_77, %c0_78, %c0_79], %122 {strides = array<i32>} : memref<8x8x256xf32, #tpu.memory_space<vmem>>, vector<1x8x256xf32>,
    %123 = vector.extract_strided_slice %114 {offsets = [0, 512], sizes = [8, 256], strides = [1, 1]} : vector<8x2048xf32> to vector<8x256xf32>
    %c2_80 = arith.constant 2 : index
    %c0_81 = arith.constant 0 : index
    %c0_82 = arith.constant 0 : index
    %124 = vector.load %arg6[%c2_80, %c0_81, %c0_82] : memref<8x8x256xf32, #tpu.memory_space<vmem>>, vector<1x8x256xf32>
    %125 = vector.shape_cast %124 : vector<1x8x256xf32> to vector<8x256xf32>
    %126 = vector.shape_cast %123 : vector<8x256xf32> to vector<1x8x256xf32>
    tpu.vector_store %arg6[%c2_80, %c0_81, %c0_82], %126 {strides = array<i32>} : memref<8x8x256xf32, #tpu.memory_space<vmem>>, vector<1x8x256xf32>,
    %127 = vector.extract_strided_slice %114 {offsets = [0, 768], sizes = [8, 256], strides = [1, 1]} : vector<8x2048xf32> to vector<8x256xf32>
    %c3_83 = arith.constant 3 : index
    %c0_84 = arith.constant 0 : index
    %c0_85 = arith.constant 0 : index
    %128 = vector.load %arg6[%c3_83, %c0_84, %c0_85] : memref<8x8x256xf32, #tpu.memory_space<vmem>>, vector<1x8x256xf32>
    %129 = vector.shape_cast %128 : vector<1x8x256xf32> to vector<8x256xf32>
    %130 = vector.shape_cast %127 : vector<8x256xf32> to vector<1x8x256xf32>
    tpu.vector_store %arg6[%c3_83, %c0_84, %c0_85], %130 {strides = array<i32>} : memref<8x8x256xf32, #tpu.memory_space<vmem>>, vector<1x8x256xf32>,
    %131 = vector.extract_strided_slice %114 {offsets = [0, 1024], sizes = [8, 256], strides = [1, 1]} : vector<8x2048xf32> to vector<8x256xf32>
    %c4_86 = arith.constant 4 : index
    %c0_87 = arith.constant 0 : index
    %c0_88 = arith.constant 0 : index
    %132 = vector.load %arg6[%c4_86, %c0_87, %c0_88] : memref<8x8x256xf32, #tpu.memory_space<vmem>>, vector<1x8x256xf32>
    %133 = vector.shape_cast %132 : vector<1x8x256xf32> to vector<8x256xf32>
    %134 = vector.shape_cast %131 : vector<8x256xf32> to vector<1x8x256xf32>
    tpu.vector_store %arg6[%c4_86, %c0_87, %c0_88], %134 {strides = array<i32>} : memref<8x8x256xf32, #tpu.memory_space<vmem>>, vector<1x8x256xf32>,
    %135 = vector.extract_strided_slice %114 {offsets = [0, 1280], sizes = [8, 256], strides = [1, 1]} : vector<8x2048xf32> to vector<8x256xf32>
    %c5_89 = arith.constant 5 : index
    %c0_90 = arith.constant 0 : index
    %c0_91 = arith.constant 0 : index
    %136 = vector.load %arg6[%c5_89, %c0_90, %c0_91] : memref<8x8x256xf32, #tpu.memory_space<vmem>>, vector<1x8x256xf32>
    %137 = vector.shape_cast %136 : vector<1x8x256xf32> to vector<8x256xf32>
    %138 = vector.shape_cast %135 : vector<8x256xf32> to vector<1x8x256xf32>
    tpu.vector_store %arg6[%c5_89, %c0_90, %c0_91], %138 {strides = array<i32>} : memref<8x8x256xf32, #tpu.memory_space<vmem>>, vector<1x8x256xf32>,
    %139 = vector.extract_strided_slice %114 {offsets = [0, 1536], sizes = [8, 256], strides = [1, 1]} : vector<8x2048xf32> to vector<8x256xf32>
    %c6_92 = arith.constant 6 : index
    %c0_93 = arith.constant 0 : index
    %c0_94 = arith.constant 0 : index
    %140 = vector.load %arg6[%c6_92, %c0_93, %c0_94] : memref<8x8x256xf32, #tpu.memory_space<vmem>>, vector<1x8x256xf32>
    %141 = vector.shape_cast %140 : vector<1x8x256xf32> to vector<8x256xf32>
    %142 = vector.shape_cast %139 : vector<8x256xf32> to vector<1x8x256xf32>
    tpu.vector_store %arg6[%c6_92, %c0_93, %c0_94], %142 {strides = array<i32>} : memref<8x8x256xf32, #tpu.memory_space<vmem>>, vector<1x8x256xf32>,
    %143 = vector.extract_strided_slice %114 {offsets = [0, 1792], sizes = [8, 256], strides = [1, 1]} : vector<8x2048xf32> to vector<8x256xf32>
    %c7_95 = arith.constant 7 : index
    %c0_96 = arith.constant 0 : index
    %c0_97 = arith.constant 0 : index
    %144 = vector.load %arg6[%c7_95, %c0_96, %c0_97] : memref<8x8x256xf32, #tpu.memory_space<vmem>>, vector<1x8x256xf32>
    %145 = vector.shape_cast %144 : vector<1x8x256xf32> to vector<8x256xf32>
    %146 = vector.shape_cast %143 : vector<8x256xf32> to vector<1x8x256xf32>
    tpu.vector_store %arg6[%c7_95, %c0_96, %c0_97], %146 {strides = array<i32>} : memref<8x8x256xf32, #tpu.memory_space<vmem>>, vector<1x8x256xf32>,
    return
  }
  func.func @transform_0(%arg0: i32) -> (i32, i32, i32) {
    %c0_i32 = arith.constant 0 : i32
    %c0_i32_0 = arith.constant 0 : i32
    %c0_i32_1 = arith.constant 0 : i32
    return %arg0, %c0_i32, %c0_i32_0 : i32, i32, i32
  }
  func.func @transform_1(%arg0: i32) -> (i32, i32) {
    %c0_i32 = arith.constant 0 : i32
    %c0_i32_0 = arith.constant 0 : i32
    %c0_i32_1 = arith.constant 0 : i32
    return %c0_i32, %c0_i32_0 : i32, i32
  }
  func.func @transform_2(%arg0: i32) -> (i32, i32) {
    %c0_i32 = arith.constant 0 : i32
    %c0_i32_0 = arith.constant 0 : i32
    %c0_i32_1 = arith.constant 0 : i32
    return %c0_i32, %c0_i32_0 : i32, i32
  }
  func.func @transform_3(%arg0: i32) -> (i32, i32) {
    %c0_i32 = arith.constant 0 : i32
    %c0_i32_0 = arith.constant 0 : i32
    %c0_i32_1 = arith.constant 0 : i32
    return %c0_i32, %c0_i32_0 : i32, i32
  }
  func.func @transform_4(%arg0: i32) -> (i32, i32) {
    %c0_i32 = arith.constant 0 : i32
    %c0_i32_0 = arith.constant 0 : i32
    %c0_i32_1 = arith.constant 0 : i32
    return %c0_i32, %c0_i32_0 : i32, i32
  }
  func.func @transform_5(%arg0: i32) -> (i32, i32, i32) {
    %c0_i32 = arith.constant 0 : i32
    %c0_i32_0 = arith.constant 0 : i32
    %c0_i32_1 = arith.constant 0 : i32
    return %arg0, %c0_i32, %c0_i32_0 : i32, i32, i32
  }
  func.func @transform_6(%arg0: i32) -> (i32, i32, i32) {
    %c0_i32 = arith.constant 0 : i32
    %c0_i32_0 = arith.constant 0 : i32
    %c0_i32_1 = arith.constant 0 : i32
    return %arg0, %c0_i32, %c0_i32_0 : i32, i32, i32
  }
}

</mosaic_0001>

<llo_original>
// kernel: dpfe_forward.1
$region0: #{dpfe_forward.1}
  #allocation0 [shape = 'u32[]', space=smem, size = 0x4, offset = 0x4, fixed_abs, tag = 'smem constant byte address 0x4 - core index']
  #allocation1 [shape = 'u32[144,128]{1,0:T(1,128)}', space=vmem, size = 0x12000, scoped, tag = 'internal scratch']
  #allocation2 [shape = 'f32[8,2304]{1,0:T(8,128)}', space=vmem, size = 0x12000, scoped, tag = 'scratch operand']
  #allocation3 [shape = 'f32[72,2048]{1,0:T(8,128)}', space=vmem, size = 0x90000, scoped, tag = 'scratch operand']
  %s0 = inlined_call_operand.vmem [shape: f32[16,8,256], index: 0, kind: input, shape index: {}]
  %s1 = inlined_call_operand.vmem [shape: f32[8,72], index: 1, kind: input, shape index: {}]
  %s2 = inlined_call_operand.vmem [shape: f32[2,24], index: 2, kind: input, shape index: {}]
  %s3 = inlined_call_operand.vmem [shape: f32[8,6], index: 3, kind: input, shape index: {}]
  %s4 = inlined_call_operand.vmem [shape: f32[9,2048], index: 4, kind: input, shape index: {}]
  %s5 = inlined_call_operand.vmem [shape: f32[16,8,256], index: 5, kind: output, shape index: {0}]
  %s6 = inlined_call_operand.vmem [shape: f32[2,8,128], index: 6, kind: output, shape index: {1}]
  %7 = xla_tuple %s5, %s6
  %s8 = sld [smem:[#allocation0]]
  $region61: #{dpfe_forward.1} parent=0
    _
  %s10 = ssub.s32 1, %s8
  %s11 = scalar_select 0, %s10, %s8
  loop: start=0, step=1, limit=4
  $region2: #{dpfe_forward.1} parent=0 // loop_pre_header
    _
  $region3: #{dpfe_forward.1} parent=0 // loop_header
    %s13 = sphi 0, %s17
    %p14 = scmp.ge.s32.totalorder %s13, 4
    %s23 = sphi 0, %s25
    %s26 = sphi 0, %s23
    %s27 = sphi 0, %s26
    %s43 = sphi 0, %s27
    %s47 = sphi 0, %s47
    %s49 = sphi 0, %s47
    %s50 = sphi 0, %s49
    %s64 = sphi 0, %s50
    %s68 = sphi 0, %s68
    %s70 = sphi 0, %s68
    %s71 = sphi 0, %s70
    %s85 = sphi 0, %s71
    %s89 = sphi 0, %s89
    %s91 = sphi 0, %s89
    %s92 = sphi 0, %s91
    %s106 = sphi 0, %s92
    %s110 = sphi 0, %s110
    %s112 = sphi 0, %s110
    %s113 = sphi 0, %s112
    %s127 = sphi 0, %s113
    %s133 = sphi 0, %s135
    %s136 = sphi 0, %s133
    %s137 = sphi 0, %s136
    %s153 = sphi 0, %s137
    %s159 = sphi 0, %s161
    %s162 = sphi 0, %s159
    %s163 = sphi 0, %s162
    %s179 = sphi 0, %s163
  $region4: #{dpfe_forward.1} parent=0 // loop_header_branch
    %16 = sbr.rel (%p14) target = $region8
  $region5: #{dpfe_forward.1} parent=0 // loop_body
    %s18 = ssub.s32 %s13, 1
    %s19 = ssub.s32 %s13, 2
    %s20 = sadd.s32 %s13, 1
    %s21 = ssub.s32 %s13, %s20
    %p22 = scmp.eq.s32.totalorder %s21, 0
    %s24 = sadd.s32 %s23, 1
    %s25 = scalar_select %p22, %s23, %s24
    %p28 = pneg %p22
    %p29 = scmp.eq.s32.totalorder %s13, 1
    %p30 = por %p28, %p29
    %p31 = scmp.ne.s32.totalorder %s23, %s26
    %p32 = scmp.eq.s32.totalorder %s13, 0
    %p33 = por %p31, %p32
    %p34 = scmp.ne.s32.totalorder %s23, %s26
    %p35 = scmp.eq.s32.totalorder %s18, 1
    %p36 = por %p34, %p35
    %p37 = scmp.ne.s32.totalorder %s26, %s27
    %p38 = scmp.eq.s32.totalorder %s18, 0
    %p39 = por %p37, %p38
    %p40 = scmp.ne.s32.totalorder %s26, %s27
    %p41 = scmp.eq.s32.totalorder %s19, 1
    %p42 = por %p40, %p41
    %p44 = scmp.ne.s32.totalorder %s27, %s43
    %p45 = scmp.eq.s32.totalorder %s19, 0
    %p46 = por %p44, %p45
    %s48 = sadd.s32 %s47, 1
    %p51 = scmp.eq.s32.totalorder %s13, 1
    %p52 = scmp.ne.s32.totalorder %s47, %s49
    %p53 = scmp.eq.s32.totalorder %s13, 0
    %p54 = por %p52, %p53
    %p55 = scmp.ne.s32.totalorder %s47, %s49
    %p56 = scmp.eq.s32.totalorder %s18, 1
    %p57 = por %p55, %p56
    %p58 = scmp.ne.s32.totalorder %s49, %s50
    %p59 = scmp.eq.s32.totalorder %s18, 0
    %p60 = por %p58, %p59
    %p61 = scmp.ne.s32.totalorder %s49, %s50
    %p62 = scmp.eq.s32.totalorder %s19, 1
    %p63 = por %p61, %p62
    %p65 = scmp.ne.s32.totalorder %s50, %s64
    %p66 = scmp.eq.s32.totalorder %s19, 0
    %p67 = por %p65, %p66
    %s69 = sadd.s32 %s68, 1
    %p72 = scmp.eq.s32.totalorder %s13, 1
    %p73 = scmp.ne.s32.totalorder %s68, %s70
    %p74 = scmp.eq.s32.totalorder %s13, 0
    %p75 = por %p73, %p74
    %p76 = scmp.ne.s32.totalorder %s68, %s70
    %p77 = scmp.eq.s32.totalorder %s18, 1
    %p78 = por %p76, %p77
    %p79 = scmp.ne.s32.totalorder %s70, %s71
    %p80 = scmp.eq.s32.totalorder %s18, 0
    %p81 = por %p79, %p80
    %p82 = scmp.ne.s32.totalorder %s70, %s71
    %p83 = scmp.eq.s32.totalorder %s19, 1
    %p84 = por %p82, %p83
    %p86 = scmp.ne.s32.totalorder %s71, %s85
    %p87 = scmp.eq.s32.totalorder %s19, 0
    %p88 = por %p86, %p87
    %s90 = sadd.s32 %s89, 1
    %p93 = scmp.eq.s32.totalorder %s13, 1
    %p94 = scmp.ne.s32.totalorder %s89, %s91
    %p95 = scmp.eq.s32.totalorder %s13, 0
    %p96 = por %p94, %p95
    %p97 = scmp.ne.s32.totalorder %s89, %s91
    %p98 = scmp.eq.s32.totalorder %s18, 1
    %p99 = por %p97, %p98
    %p100 = scmp.ne.s32.totalorder %s91, %s92
    %p101 = scmp.eq.s32.totalorder %s18, 0
    %p102 = por %p100, %p101
    %p103 = scmp.ne.s32.totalorder %s91, %s92
    %p104 = scmp.eq.s32.totalorder %s19, 1
    %p105 = por %p103, %p104
    %p107 = scmp.ne.s32.totalorder %s92, %s106
    %p108 = scmp.eq.s32.totalorder %s19, 0
    %p109 = por %p107, %p108
    %s111 = sadd.s32 %s110, 1
    %p114 = scmp.eq.s32.totalorder %s13, 1
    %p115 = scmp.ne.s32.totalorder %s110, %s112
    %p116 = scmp.eq.s32.totalorder %s13, 0
    %p117 = por %p115, %p116
    %p118 = scmp.ne.s32.totalorder %s110, %s112
    %p119 = scmp.eq.s32.totalorder %s18, 1
    %p120 = por %p118, %p119
    %p121 = scmp.ne.s32.totalorder %s112, %s113
    %p122 = scmp.eq.s32.totalorder %s18, 0
    %p123 = por %p121, %p122
    %p124 = scmp.ne.s32.totalorder %s112, %s113
    %p125 = scmp.eq.s32.totalorder %s19, 1
    %p126 = por %p124, %p125
    %p128 = scmp.ne.s32.totalorder %s113, %s127
    %p129 = scmp.eq.s32.totalorder %s19, 0
    %p130 = por %p128, %p129
    %s131 = ssub.s32 %s13, %s20
    %p132 = scmp.eq.s32.totalorder %s131, 0
    %s134 = sadd.s32 %s133, 1
    %s135 = scalar_select %p132, %s133, %s134
    %p138 = pneg %p132
    %p139 = scmp.eq.s32.totalorder %s13, 1
    %p140 = por %p138, %p139
    %p141 = scmp.ne.s32.totalorder %s133, %s136
    %p142 = scmp.eq.s32.totalorder %s13, 0
    %p143 = por %p141, %p142
    %p144 = scmp.ne.s32.totalorder %s133, %s136
    %p145 = scmp.eq.s32.totalorder %s18, 1
    %p146 = por %p144, %p145
    %p147 = scmp.ne.s32.totalorder %s136, %s137
    %p148 = scmp.eq.s32.totalorder %s18, 0
    %p149 = por %p147, %p148
    %p150 = scmp.ne.s32.totalorder %s136, %s137
    %p151 = scmp.eq.s32.totalorder %s19, 1
    %p152 = por %p150, %p151
    %p154 = scmp.ne.s32.totalorder %s137, %s153
    %p155 = scmp.eq.s32.totalorder %s19, 0
    %p156 = por %p154, %p155
    %s157 = ssub.s32 %s13, %s20
    %p158 = scmp.eq.s32.totalorder %s157, 0
    %s160 = sadd.s32 %s159, 1
    %s161 = scalar_select %p158, %s159, %s160
    %p164 = pneg %p158
    %p165 = scmp.eq.s32.totalorder %s13, 1
    %p166 = por %p164, %p165
    %p167 = scmp.ne.s32.totalorder %s159, %s162
    %p168 = scmp.eq.s32.totalorder %s13, 0
    %p169 = por %p167, %p168
    %p170 = scmp.ne.s32.totalorder %s159, %s162
    %p171 = scmp.eq.s32.totalorder %s18, 1
    %p172 = por %p170, %p171
    %p173 = scmp.ne.s32.totalorder %s162, %s163
    %p174 = scmp.eq.s32.totalorder %s18, 0
    %p175 = por %p173, %p174
    %p176 = scmp.ne.s32.totalorder %s162, %s163
    %p177 = scmp.eq.s32.totalorder %s19, 1
    %p178 = por %p176, %p177
    %p180 = scmp.ne.s32.totalorder %s163, %s179
    %p181 = scmp.eq.s32.totalorder %s19, 0
    %p182 = por %p180, %p181
    %p183 = scmp.le.s32.totalorder 1, %s13
    %p184 = scmp.lt.s32.totalorder %s13, 3
    %p185 = pnand %p183, %p184
    %p186 = pneg %p185
    // Predicated region
    $region9: #{dpfe_forward.1} parent=5 // pred_check
      _
    $region10: #{dpfe_forward.1} parent=5 // pred_check_branch
      %188 = sbr.rel (%p185) target = $region12
    $region11: #{dpfe_forward.1} parent=5 // pred_region
      %s189 = ssub.s32 %s13, 1
      // Predicated region
      $region13: #{dpfe_forward.1} parent=11 // pred_check
        %p190 = pneg %p60
      $region14: #{dpfe_forward.1} parent=11 // pred_check_branch
        %192 = sbr.rel (%p190) target = $region16
      $region15: #{dpfe_forward.1} parent=11 // pred_region
        _
      $region16: #{dpfe_forward.1} parent=11 // pred_fallthru
        _
      // Predicated region
      $region17: #{dpfe_forward.1} parent=11 // pred_check
        %p193 = pneg %p81
      $region18: #{dpfe_forward.1} parent=11 // pred_check_branch
        %195 = sbr.rel (%p193) target = $region20
      $region19: #{dpfe_forward.1} parent=11 // pred_region
        _
      $region20: #{dpfe_forward.1} parent=11 // pred_fallthru
        _
      // Predicated region
      $region21: #{dpfe_forward.1} parent=11 // pred_check
        %p196 = pneg %p102
      $region22: #{dpfe_forward.1} parent=11 // pred_check_branch
        %198 = sbr.rel (%p196) target = $region24
      $region23: #{dpfe_forward.1} parent=11 // pred_region
        _
      $region24: #{dpfe_forward.1} parent=11 // pred_fallthru
        _
      // Predicated region
      $region25: #{dpfe_forward.1} parent=11 // pred_check
        %p199 = pneg %p123
      $region26: #{dpfe_forward.1} parent=11 // pred_check_branch
        %201 = sbr.rel (%p199) target = $region28
      $region27: #{dpfe_forward.1} parent=11 // pred_region
        _
      $region28: #{dpfe_forward.1} parent=11 // pred_fallthru
        _
    $region12: #{dpfe_forward.1} parent=5 // pred_fallthru
      _
    %p202 = scmp.lt.s32.totalorder %s13, 2
    // Predicated region
    $region29: #{dpfe_forward.1} parent=5 // pred_check
      %p203 = pneg %p202
    $region30: #{dpfe_forward.1} parent=5 // pred_check_branch
      %205 = sbr.rel (%p203) target = $region32
    $region31: #{dpfe_forward.1} parent=5 // pred_region
      // Predicated region
      $region33: #{dpfe_forward.1} parent=31 // pred_check
        %p206 = pneg %p33
      $region34: #{dpfe_forward.1} parent=31 // pred_check_branch
        %208 = sbr.rel (%p206) target = $region36
      $region35: #{dpfe_forward.1} parent=31 // pred_region
        %s209 = smul.u32 8, %s13
        %p210 = scmp.lt.s32.totalorder %s209, 15
        %s211 = scalar_select %p210, %s209, 15
        %s212 = smul.addr %s211, 2
        %s213 = smul.addr %s212, 8
        %s214 = scalar_lea.vmem %s0, %s213
        %s215 = smul.u32 8, %s13
      $region36: #{dpfe_forward.1} parent=31 // pred_fallthru
        _
    $region32: #{dpfe_forward.1} parent=5 // pred_fallthru
      _
    %p216 = scmp.le.s32.totalorder 1, %s13
    %p217 = scmp.lt.s32.totalorder %s13, 3
    %p218 = pnand %p216, %p217
    %p219 = pneg %p218
    // Predicated region
    $region37: #{dpfe_forward.1} parent=5 // pred_check
      _
    $region38: #{dpfe_forward.1} parent=5 // pred_check_branch
      %221 = sbr.rel (%p218) target = $region40
    $region39: #{dpfe_forward.1} parent=5 // pred_region
      %s222 = ssub.s32 %s13, 1
      %s223 = smul.u32 8, %s18
      %p224 = scmp.lt.s32.totalorder %s223, 15
      %s225 = scalar_select %p224, %s223, 15
      %s226 = smul.addr %s225, 2
      %s227 = smul.addr %s226, 8
      %s228 = scalar_lea.vmem %s0, %s227
      %p229 = pneg %p39
      %p230 = pneg %p36
      %p231 = pneg %p60
      %p232 = pneg %p57
      %p233 = pneg %p81
      %p234 = pneg %p78
      %p235 = pneg %p102
      %p236 = pneg %p99
      %p237 = pneg %p123
      %p238 = pneg %p120
      %p239 = pneg %p149
      %p240 = pneg %p146
      %s241 = smul.u32 8, %s18
      %p242 = scmp.lt.s32.totalorder %s241, 15
      %s243 = scalar_select %p242, %s241, 15
      %s244 = smul.addr %s243, 2
      %s245 = smul.addr %s244, 8
      %s246 = scalar_lea.vmem %s5, %s245
      %p247 = pneg %p175
      %p248 = pneg %p172
      %p249 = scmp.lt.s32.totalorder %s18, 1
      %s250 = scalar_select %p249, %s18, 1
      %s251 = smul.addr %s250, 8
      %s252 = scalar_lea.vmem %s6, %s251
      %s253 = smul.u32 8, %s18
      %p254 = scmp.lt.s32.totalorder %s253, 15
      %s255 = scalar_select %p254, %s253, 15
      %s256 = smul.addr %s255, 2
      %s257 = smul.addr %s256, 8
      %s258 = scalar_lea.vmem %s0, %s257
      %s259 = smul.u32 8, %s18
      %s260 = smul.u32 8, %s18
      %p261 = scmp.lt.s32.totalorder %s260, 15
      %s262 = scalar_select %p261, %s260, 15
      %s263 = smul.addr %s262, 2
      %s264 = smul.addr %s263, 8
      %s265 = scalar_lea.vmem %s5, %s264
      %s266 = smul.u32 8, %s18
      %p267 = scmp.lt.s32.totalorder %s18, 1
      %s268 = scalar_select %p267, %s18, 1
      %s269 = smul.addr %s268, 8
      %s270 = scalar_lea.vmem %s6, %s269
      %271 = vst [vmem:[#allocation2] sm:$0xff] 0.0
      %272 = vst [vmem:[#allocation2 + $0x88] sm:$0xff] 0.0
      %v273 = vld [vmem:[%s258] sm:$0xff]
      %v274 = vld [vmem:[%s258 + $0x8] sm:$0xff]
      %275 = vst [vmem:[#allocation2 + $0x8] sm:$0xff] %v273
      %276 = vst [vmem:[#allocation2 + $0x10] sm:$0xff] %v274
      %s277 = scalar_lea.vmem %s258, 16
      %v278 = vld [vmem:[%s277] sm:$0xff]
      %v279 = vld [vmem:[%s277 + $0x8] sm:$0xff]
      %280 = vst [vmem:[#allocation2 + $0x18] sm:$0xff] %v278
      %281 = vst [vmem:[#allocation2 + $0x20] sm:$0xff] %v279
      %s282 = scalar_lea.vmem %s258, 32
      %v283 = vld [vmem:[%s282] sm:$0xff]
      %v284 = vld [vmem:[%s282 + $0x8] sm:$0xff]
      %285 = vst [vmem:[#allocation2 + $0x28] sm:$0xff] %v283
      %286 = vst [vmem:[#allocation2 + $0x30] sm:$0xff] %v284
      %s287 = scalar_lea.vmem %s258, 48
      %v288 = vld [vmem:[%s287] sm:$0xff]
      %v289 = vld [vmem:[%s287 + $0x8] sm:$0xff]
      %290 = vst [vmem:[#allocation2 + $0x38] sm:$0xff] %v288
      %291 = vst [vmem:[#allocation2 + $0x40] sm:$0xff] %v289
      %s292 = scalar_lea.vmem %s258, 64
      %v293 = vld [vmem:[%s292] sm:$0xff]
      %v294 = vld [vmem:[%s292 + $0x8] sm:$0xff]
      %295 = vst [vmem:[#allocation2 + $0x48] sm:$0xff] %v293
      %296 = vst [vmem:[#allocation2 + $0x50] sm:$0xff] %v294
      %s297 = scalar_lea.vmem %s258, 80
      %v298 = vld [vmem:[%s297] sm:$0xff]
      %v299 = vld [vmem:[%s297 + $0x8] sm:$0xff]
      %300 = vst [vmem:[#allocation2 + $0x58] sm:$0xff] %v298
      %301 = vst [vmem:[#allocation2 + $0x60] sm:$0xff] %v299
      %s302 = scalar_lea.vmem %s258, 96
      %v303 = vld [vmem:[%s302] sm:$0xff]
      %v304 = vld [vmem:[%s302 + $0x8] sm:$0xff]
      %305 = vst [vmem:[#allocation2 + $0x68] sm:$0xff] %v303
      %306 = vst [vmem:[#allocation2 + $0x70] sm:$0xff] %v304
      %s307 = scalar_lea.vmem %s258, 112
      %v308 = vld [vmem:[%s307] sm:$0xff]
      %v309 = vld [vmem:[%s307 + $0x8] sm:$0xff]
      %310 = vst [vmem:[#allocation2 + $0x78] sm:$0xff] %v308
      %311 = vst [vmem:[#allocation2 + $0x80] sm:$0xff] %v309
      %v312 = vld [vmem:[#allocation2 + $0x8] sm:$0xff]
      %v313 = vld [vmem:[#allocation2 + $0x10] sm:$0xff]
      %v314 = vld [vmem:[#allocation2 + $0x18] sm:$0xff]
      %v315 = vld [vmem:[#allocation2 + $0x20] sm:$0xff]
      %v316 = vld [vmem:[#allocation2 + $0x28] sm:$0xff]
      %v317 = vld [vmem:[#allocation2 + $0x30] sm:$0xff]
      %v318 = vld [vmem:[#allocation2 + $0x38] sm:$0xff]
      %v319 = vld [vmem:[#allocation2 + $0x40] sm:$0xff]
      %v320 = vld [vmem:[#allocation2 + $0x48] sm:$0xff]
      %v321 = vld [vmem:[#allocation2 + $0x50] sm:$0xff]
      %v322 = vld [vmem:[#allocation2 + $0x58] sm:$0xff]
      %v323 = vld [vmem:[#allocation2 + $0x60] sm:$0xff]
      %v324 = vld [vmem:[#allocation2 + $0x68] sm:$0xff]
      %v325 = vld [vmem:[#allocation2 + $0x70] sm:$0xff]
      %v326 = vld [vmem:[#allocation2 + $0x78] sm:$0xff]
      %v327 = vld [vmem:[#allocation2 + $0x80] sm:$0xff]
      %329 = vrot.lane.b32.xlu0 %v312, 112
      %v330 = vpop.permute.xlu0 %329
      %332 = vrot.lane.b32.xlu0 %v312, 96
      %v333 = vpop.permute.xlu0 %332
      %335 = vrot.lane.b32.xlu0 %v312, 80
      %v336 = vpop.permute.xlu0 %335
      %338 = vrot.lane.b32.xlu0 %v312, 64
      %v339 = vpop.permute.xlu0 %338
      %341 = vrot.lane.b32.xlu0 %v312, 48
      %v342 = vpop.permute.xlu0 %341
      %344 = vrot.lane.b32.xlu0 %v312, 32
      %v345 = vpop.permute.xlu0 %344
      %347 = vrot.lane.b32.xlu0 %v312, 16
      %v348 = vpop.permute.xlu0 %347
      %351 = vrot.lane.b32.xlu0 %v313, 112
      %v352 = vpop.permute.xlu0 %351
      %354 = vrot.lane.b32.xlu0 %v313, 96
      %v355 = vpop.permute.xlu0 %354
      %357 = vrot.lane.b32.xlu0 %v313, 80
      %v358 = vpop.permute.xlu0 %357
      %360 = vrot.lane.b32.xlu0 %v313, 64
      %v361 = vpop.permute.xlu0 %360
      %363 = vrot.lane.b32.xlu0 %v313, 48
      %v364 = vpop.permute.xlu0 %363
      %366 = vrot.lane.b32.xlu0 %v313, 32
      %v367 = vpop.permute.xlu0 %366
      %369 = vrot.lane.b32.xlu0 %v313, 16
      %v370 = vpop.permute.xlu0 %369
      %373 = vrot.lane.b32.xlu0 %v314, 112
      %v374 = vpop.permute.xlu0 %373
      %376 = vrot.lane.b32.xlu0 %v314, 96
      %v377 = vpop.permute.xlu0 %376
      %379 = vrot.lane.b32.xlu0 %v314, 80
      %v380 = vpop.permute.xlu0 %379
      %382 = vrot.lane.b32.xlu0 %v314, 64
      %v383 = vpop.permute.xlu0 %382
      %385 = vrot.lane.b32.xlu0 %v314, 48
      %v386 = vpop.permute.xlu0 %385
      %388 = vrot.lane.b32.xlu0 %v314, 32
      %v389 = vpop.permute.xlu0 %388
      %391 = vrot.lane.b32.xlu0 %v314, 16
      %v392 = vpop.permute.xlu0 %391
      %395 = vrot.lane.b32.xlu0 %v315, 112
      %v396 = vpop.permute.xlu0 %395
      %398 = vrot.lane.b32.xlu0 %v315, 96
      %v399 = vpop.permute.xlu0 %398
      %401 = vrot.lane.b32.xlu0 %v315, 80
      %v402 = vpop.permute.xlu0 %401
      %404 = vrot.lane.b32.xlu0 %v315, 64
      %v405 = vpop.permute.xlu0 %404
      %407 = vrot.lane.b32.xlu0 %v315, 48
      %v408 = vpop.permute.xlu0 %407
      %410 = vrot.lane.b32.xlu0 %v315, 32
      %v411 = vpop.permute.xlu0 %410
      %413 = vrot.lane.b32.xlu0 %v315, 16
      %v414 = vpop.permute.xlu0 %413
      %417 = vrot.lane.b32.xlu0 %v316, 112
      %v418 = vpop.permute.xlu0 %417
      %420 = vrot.lane.b32.xlu0 %v316, 96
      %v421 = vpop.permute.xlu0 %420
      %423 = vrot.lane.b32.xlu0 %v316, 80
      %v424 = vpop.permute.xlu0 %423
      %426 = vrot.lane.b32.xlu0 %v316, 64
      %v427 = vpop.permute.xlu0 %426
      %429 = vrot.lane.b32.xlu0 %v316, 48
      %v430 = vpop.permute.xlu0 %429
      %432 = vrot.lane.b32.xlu0 %v316, 32
      %v433 = vpop.permute.xlu0 %432
      %435 = vrot.lane.b32.xlu0 %v316, 16
      %v436 = vpop.permute.xlu0 %435
      %439 = vrot.lane.b32.xlu0 %v317, 112
      %v440 = vpop.permute.xlu0 %439
      %442 = vrot.lane.b32.xlu0 %v317, 96
      %v443 = vpop.permute.xlu0 %442
      %445 = vrot.lane.b32.xlu0 %v317, 80
      %v446 = vpop.permute.xlu0 %445
      %448 = vrot.lane.b32.xlu0 %v317, 64
      %v449 = vpop.permute.xlu0 %448
      %451 = vrot.lane.b32.xlu0 %v317, 48
      %v452 = vpop.permute.xlu0 %451
      %454 = vrot.lane.b32.xlu0 %v317, 32
      %v455 = vpop.permute.xlu0 %454
      %457 = vrot.lane.b32.xlu0 %v317, 16
      %v458 = vpop.permute.xlu0 %457
      %461 = vrot.lane.b32.xlu0 %v318, 112
      %v462 = vpop.permute.xlu0 %461
      %464 = vrot.lane.b32.xlu0 %v318, 96
      %v465 = vpop.permute.xlu0 %464
      %467 = vrot.lane.b32.xlu0 %v318, 80
      %v468 = vpop.permute.xlu0 %467
      %470 = vrot.lane.b32.xlu0 %v318, 64
      %v471 = vpop.permute.xlu0 %470
      %473 = vrot.lane.b32.xlu0 %v318, 48
      %v474 = vpop.permute.xlu0 %473
      %476 = vrot.lane.b32.xlu0 %v318, 32
      %v477 = vpop.permute.xlu0 %476
      %479 = vrot.lane.b32.xlu0 %v318, 16
      %v480 = vpop.permute.xlu0 %479
      %483 = vrot.lane.b32.xlu0 %v319, 112
      %v484 = vpop.permute.xlu0 %483
      %486 = vrot.lane.b32.xlu0 %v319, 96
      %v487 = vpop.permute.xlu0 %486
      %489 = vrot.lane.b32.xlu0 %v319, 80
      %v490 = vpop.permute.xlu0 %489
      %492 = vrot.lane.b32.xlu0 %v319, 64
      %v493 = vpop.permute.xlu0 %492
      %495 = vrot.lane.b32.xlu0 %v319, 48
      %v496 = vpop.permute.xlu0 %495
      %498 = vrot.lane.b32.xlu0 %v319, 32
      %v499 = vpop.permute.xlu0 %498
      %501 = vrot.lane.b32.xlu0 %v319, 16
      %v502 = vpop.permute.xlu0 %501
      %505 = vrot.lane.b32.xlu0 %v320, 112
      %v506 = vpop.permute.xlu0 %505
      %508 = vrot.lane.b32.xlu0 %v320, 96
      %v509 = vpop.permute.xlu0 %508
      %511 = vrot.lane.b32.xlu0 %v320, 80
      %v512 = vpop.permute.xlu0 %511
      %514 = vrot.lane.b32.xlu0 %v320, 64
      %v515 = vpop.permute.xlu0 %514
      %517 = vrot.lane.b32.xlu0 %v320, 48
      %v518 = vpop.permute.xlu0 %517
      %520 = vrot.lane.b32.xlu0 %v320, 32
      %v521 = vpop.permute.xlu0 %520
      %523 = vrot.lane.b32.xlu0 %v320, 16
      %v524 = vpop.permute.xlu0 %523
      %527 = vrot.lane.b32.xlu0 %v321, 112
      %v528 = vpop.permute.xlu0 %527
      %530 = vrot.lane.b32.xlu0 %v321, 96
      %v531 = vpop.permute.xlu0 %530
      %533 = vrot.lane.b32.xlu0 %v321, 80
      %v534 = vpop.permute.xlu0 %533
      %536 = vrot.lane.b32.xlu0 %v321, 64
      %v537 = vpop.permute.xlu0 %536
      %539 = vrot.lane.b32.xlu0 %v321, 48
      %v540 = vpop.permute.xlu0 %539
      %542 = vrot.lane.b32.xlu0 %v321, 32
      %v543 = vpop.permute.xlu0 %542
      %545 = vrot.lane.b32.xlu0 %v321, 16
      %v546 = vpop.permute.xlu0 %545
      %549 = vrot.lane.b32.xlu0 %v322, 112
      %v550 = vpop.permute.xlu0 %549
      %552 = vrot.lane.b32.xlu0 %v322, 96
      %v553 = vpop.permute.xlu0 %552
      %555 = vrot.lane.b32.xlu0 %v322, 80
      %v556 = vpop.permute.xlu0 %555
      %558 = vrot.lane.b32.xlu0 %v322, 64
      %v559 = vpop.permute.xlu0 %558
      %561 = vrot.lane.b32.xlu0 %v322, 48
      %v562 = vpop.permute.xlu0 %561
      %564 = vrot.lane.b32.xlu0 %v322, 32
      %v565 = vpop.permute.xlu0 %564
      %567 = vrot.lane.b32.xlu0 %v322, 16
      %v568 = vpop.permute.xlu0 %567
      %571 = vrot.lane.b32.xlu0 %v323, 112
      %v572 = vpop.permute.xlu0 %571
      %574 = vrot.lane.b32.xlu0 %v323, 96
      %v575 = vpop.permute.xlu0 %574
      %577 = vrot.lane.b32.xlu0 %v323, 80
      %v578 = vpop.permute.xlu0 %577
      %580 = vrot.lane.b32.xlu0 %v323, 64
      %v581 = vpop.permute.xlu0 %580
      %583 = vrot.lane.b32.xlu0 %v323, 48
      %v584 = vpop.permute.xlu0 %583
      %586 = vrot.lane.b32.xlu0 %v323, 32
      %v587 = vpop.permute.xlu0 %586
      %589 = vrot.lane.b32.xlu0 %v323, 16
      %v590 = vpop.permute.xlu0 %589
      %593 = vrot.lane.b32.xlu0 %v324, 112
      %v594 = vpop.permute.xlu0 %593
      %596 = vrot.lane.b32.xlu0 %v324, 96
      %v597 = vpop.permute.xlu0 %596
      %599 = vrot.lane.b32.xlu0 %v324, 80
      %v600 = vpop.permute.xlu0 %599
      %602 = vrot.lane.b32.xlu0 %v324, 64
      %v603 = vpop.permute.xlu0 %602
      %605 = vrot.lane.b32.xlu0 %v324, 48
      %v606 = vpop.permute.xlu0 %605
      %608 = vrot.lane.b32.xlu0 %v324, 32
      %v609 = vpop.permute.xlu0 %608
      %611 = vrot.lane.b32.xlu0 %v324, 16
      %v612 = vpop.permute.xlu0 %611
      %615 = vrot.lane.b32.xlu0 %v325, 112
      %v616 = vpop.permute.xlu0 %615
      %618 = vrot.lane.b32.xlu0 %v325, 96
      %v619 = vpop.permute.xlu0 %618
      %621 = vrot.lane.b32.xlu0 %v325, 80
      %v622 = vpop.permute.xlu0 %621
      %624 = vrot.lane.b32.xlu0 %v325, 64
      %v625 = vpop.permute.xlu0 %624
      %627 = vrot.lane.b32.xlu0 %v325, 48
      %v628 = vpop.permute.xlu0 %627
      %630 = vrot.lane.b32.xlu0 %v325, 32
      %v631 = vpop.permute.xlu0 %630
      %633 = vrot.lane.b32.xlu0 %v325, 16
      %v634 = vpop.permute.xlu0 %633
      %637 = vrot.lane.b32.xlu0 %v326, 112
      %v638 = vpop.permute.xlu0 %637
      %640 = vrot.lane.b32.xlu0 %v326, 96
      %v641 = vpop.permute.xlu0 %640
      %643 = vrot.lane.b32.xlu0 %v326, 80
      %v644 = vpop.permute.xlu0 %643
      %646 = vrot.lane.b32.xlu0 %v326, 64
      %v647 = vpop.permute.xlu0 %646
      %649 = vrot.lane.b32.xlu0 %v326, 48
      %v650 = vpop.permute.xlu0 %649
      %652 = vrot.lane.b32.xlu0 %v326, 32
      %v653 = vpop.permute.xlu0 %652
      %655 = vrot.lane.b32.xlu0 %v326, 16
      %v656 = vpop.permute.xlu0 %655
      %659 = vrot.lane.b32.xlu0 %v327, 112
      %v660 = vpop.permute.xlu0 %659
      %662 = vrot.lane.b32.xlu0 %v327, 96
      %v663 = vpop.permute.xlu0 %662
      %665 = vrot.lane.b32.xlu0 %v327, 80
      %v666 = vpop.permute.xlu0 %665
      %668 = vrot.lane.b32.xlu0 %v327, 64
      %v669 = vpop.permute.xlu0 %668
      %671 = vrot.lane.b32.xlu0 %v327, 48
      %v672 = vpop.permute.xlu0 %671
      %674 = vrot.lane.b32.xlu0 %v327, 32
      %v675 = vpop.permute.xlu0 %674
      %677 = vrot.lane.b32.xlu0 %v327, 16
      %v678 = vpop.permute.xlu0 %677
      %v680 = vcombine.low %v312, %v333
      %v681 = vcombine.high %v312, %v333
      %v683 = vunpack.c.l.s4 1983009808
      %v684 = vunpack.c.0.s8 %v683
      %v685 = vlaneseq
      %v686 = vshrl.u32 %v685, 7
      %v687 = vsub.s32 %v684, %v686
      %v688 = vrot.slane %v680, %v687
      %v690 = vunpack.c.l.s4 1983009808
      %v691 = vunpack.c.0.s8 %v690
      %v692 = vlaneseq
      %v693 = vshrl.u32 %v692, 7
      %v694 = vsub.s32 %v691, %v693
      %v695 = vrot.slane %v681, %v694
      %v696 = vcombine.low %v330, %v336
      %v697 = vcombine.high %v330, %v336
      %v699 = vunpack.c.l.s4 1983009808
      %v700 = vunpack.c.0.s8 %v699
      %v701 = vlaneseq
      %v702 = vshrl.u32 %v701, 7
      %v703 = vsub.s32 %v700, %v702
      %v704 = vrot.slane %v696, %v703
      %v706 = vunpack.c.l.s4 1983009808
      %v707 = vunpack.c.0.s8 %v706
      %v708 = vlaneseq
      %v709 = vshrl.u32 %v708, 7
      %v710 = vsub.s32 %v707, %v709
      %v711 = vrot.slane %v697, %v710
      %v712 = vcombine.low %v339, %v345
      %v713 = vcombine.high %v339, %v345
      %v715 = vunpack.c.l.s4 1983009808
      %v716 = vunpack.c.0.s8 %v715
      %v717 = vlaneseq
      %v718 = vshrl.u32 %v717, 7
      %v719 = vsub.s32 %v716, %v718
      %v720 = vrot.slane %v712, %v719
      %v722 = vunpack.c.l.s4 1983009808
      %v723 = vunpack.c.0.s8 %v722
      %v724 = vlaneseq
      %v725 = vshrl.u32 %v724, 7
      %v726 = vsub.s32 %v723, %v725
      %v727 = vrot.slane %v713, %v726
      %v728 = vcombine.low %v342, %v348
      %v729 = vcombine.high %v342, %v348
      %v731 = vunpack.c.l.s4 1983009808
      %v732 = vunpack.c.0.s8 %v731
      %v733 = vlaneseq
      %v734 = vshrl.u32 %v733, 7
      %v735 = vsub.s32 %v732, %v734
      %v736 = vrot.slane %v728, %v735
      %v738 = vunpack.c.l.s4 1983009808
      %v739 = vunpack.c.0.s8 %v738
      %v740 = vlaneseq
      %v741 = vshrl.u32 %v740, 7
      %v742 = vsub.s32 %v739, %v741
      %v743 = vrot.slane %v729, %v742
      %v744 = vcombine.low %v688, %v704
      %v745 = vcombine.high %v688, %v704
      %v747 = vunpack.c.l.s4 1934713408
      %v748 = vunpack.c.0.s8 %v747
      %v749 = vlaneseq
      %v750 = vshrl.u32 %v749, 7
      %v751 = vsub.s32 %v748, %v750
      %v752 = vrot.slane %v744, %v751
      %v754 = vunpack.c.l.s4 1934713408
      %v755 = vunpack.c.0.s8 %v754
      %v756 = vlaneseq
      %v757 = vshrl.u32 %v756, 7
      %v758 = vsub.s32 %v755, %v757
      %v759 = vrot.slane %v745, %v758
      %v760 = vcombine.low %v695, %v711
      %v761 = vcombine.high %v695, %v711
      %v763 = vunpack.c.l.s4 1934713408
      %v764 = vunpack.c.0.s8 %v763
      %v765 = vlaneseq
      %v766 = vshrl.u32 %v765, 7
      %v767 = vsub.s32 %v764, %v766
      %v768 = vrot.slane %v760, %v767
      %v770 = vunpack.c.l.s4 1934713408
      %v771 = vunpack.c.0.s8 %v770
      %v772 = vlaneseq
      %v773 = vshrl.u32 %v772, 7
      %v774 = vsub.s32 %v771, %v773
      %v775 = vrot.slane %v761, %v774
      %v776 = vcombine.low %v720, %v736
      %v777 = vcombine.high %v720, %v736
      %v779 = vunpack.c.l.s4 1934713408
      %v780 = vunpack.c.0.s8 %v779
      %v781 = vlaneseq
      %v782 = vshrl.u32 %v781, 7
      %v783 = vsub.s32 %v780, %v782
      %v784 = vrot.slane %v776, %v783
      %v786 = vunpack.c.l.s4 1934713408
      %v787 = vunpack.c.0.s8 %v786
      %v788 = vlaneseq
      %v789 = vshrl.u32 %v788, 7
      %v790 = vsub.s32 %v787, %v789
      %v791 = vrot.slane %v777, %v790
      %v792 = vcombine.low %v727, %v743
      %v793 = vcombine.high %v727, %v743
      %v795 = vunpack.c.l.s4 1934713408
      %v796 = vunpack.c.0.s8 %v795
      %v797 = vlaneseq
      %v798 = vshrl.u32 %v797, 7
      %v799 = vsub.s32 %v796, %v798
      %v800 = vrot.slane %v792, %v799
      %v802 = vunpack.c.l.s4 1934713408
      %v803 = vunpack.c.0.s8 %v802
      %v804 = vlaneseq
      %v805 = vshrl.u32 %v804, 7
      %v806 = vsub.s32 %v803, %v805
      %v807 = vrot.slane %v793, %v806
      %v808 = vcombine.low %v752, %v784
      %v809 = vcombine.high %v752, %v784
      %v810 = vcombine.low %v759, %v791
      %v811 = vcombine.high %v759, %v791
      %v812 = vcombine.low %v768, %v800
      %v813 = vcombine.high %v768, %v800
      %v814 = vcombine.low %v775, %v807
      %v815 = vcombine.high %v775, %v807
      %v816 = vcombine.low %v313, %v355
      %v817 = vcombine.high %v313, %v355
      %v819 = vunpack.c.l.s4 1983009808
      %v820 = vunpack.c.0.s8 %v819
      %v821 = vlaneseq
      %v822 = vshrl.u32 %v821, 7
      %v823 = vsub.s32 %v820, %v822
      %v824 = vrot.slane %v816, %v823
      %v826 = vunpack.c.l.s4 1983009808
      %v827 = vunpack.c.0.s8 %v826
      %v828 = vlaneseq
      %v829 = vshrl.u32 %v828, 7
      %v830 = vsub.s32 %v827, %v829
      %v831 = vrot.slane %v817, %v830
      %v832 = vcombine.low %v352, %v358
      %v833 = vcombine.high %v352, %v358
      %v835 = vunpack.c.l.s4 1983009808
      %v836 = vunpack.c.0.s8 %v835
      %v837 = vlaneseq
      %v838 = vshrl.u32 %v837, 7
      %v839 = vsub.s32 %v836, %v838
      %v840 = vrot.slane %v832, %v839
      %v842 = vunpack.c.l.s4 1983009808
      %v843 = vunpack.c.0.s8 %v842
      %v844 = vlaneseq
      %v845 = vshrl.u32 %v844, 7
      %v846 = vsub.s32 %v843, %v845
      %v847 = vrot.slane %v833, %v846
      %v848 = vcombine.low %v361, %v367
      %v849 = vcombine.high %v361, %v367
      %v851 = vunpack.c.l.s4 1983009808
      %v852 = vunpack.c.0.s8 %v851
      %v853 = vlaneseq
      %v854 = vshrl.u32 %v853, 7
      %v855 = vsub.s32 %v852, %v854
      %v856 = vrot.slane %v848, %v855
      %v858 = vunpack.c.l.s4 1983009808
      %v859 = vunpack.c.0.s8 %v858
      %v860 = vlaneseq
      %v861 = vshrl.u32 %v860, 7
      %v862 = vsub.s32 %v859, %v861
      %v863 = vrot.slane %v849, %v862
      %v864 = vcombine.low %v364, %v370
      %v865 = vcombine.high %v364, %v370
      %v867 = vunpack.c.l.s4 1983009808
      %v868 = vunpack.c.0.s8 %v867
      %v869 = vlaneseq
      %v870 = vshrl.u32 %v869, 7
      %v871 = vsub.s32 %v868, %v870
      %v872 = vrot.slane %v864, %v871
      %v874 = vunpack.c.l.s4 1983009808
      %v875 = vunpack.c.0.s8 %v874
      %v876 = vlaneseq
      %v877 = vshrl.u32 %v876, 7
      %v878 = vsub.s32 %v875, %v877
      %v879 = vrot.slane %v865, %v878
      %v880 = vcombine.low %v824, %v840
      %v881 = vcombine.high %v824, %v840
      %v883 = vunpack.c.l.s4 1934713408
      %v884 = vunpack.c.0.s8 %v883
      %v885 = vlaneseq
      %v886 = vshrl.u32 %v885, 7
      %v887 = vsub.s32 %v884, %v886
      %v888 = vrot.slane %v880, %v887
      %v890 = vunpack.c.l.s4 1934713408
      %v891 = vunpack.c.0.s8 %v890
      %v892 = vlaneseq
      %v893 = vshrl.u32 %v892, 7
      %v894 = vsub.s32 %v891, %v893
      %v895 = vrot.slane %v881, %v894
      %v896 = vcombine.low %v831, %v847
      %v897 = vcombine.high %v831, %v847
      %v899 = vunpack.c.l.s4 1934713408
      %v900 = vunpack.c.0.s8 %v899
      %v901 = vlaneseq
      %v902 = vshrl.u32 %v901, 7
      %v903 = vsub.s32 %v900, %v902
      %v904 = vrot.slane %v896, %v903
      %v906 = vunpack.c.l.s4 1934713408
      %v907 = vunpack.c.0.s8 %v906
      %v908 = vlaneseq
      %v909 = vshrl.u32 %v908, 7
      %v910 = vsub.s32 %v907, %v909
      %v911 = vrot.slane %v897, %v910
      %v912 = vcombine.low %v856, %v872
      %v913 = vcombine.high %v856, %v872
      %v915 = vunpack.c.l.s4 1934713408
      %v916 = vunpack.c.0.s8 %v915
      %v917 = vlaneseq
      %v918 = vshrl.u32 %v917, 7
      %v919 = vsub.s32 %v916, %v918
      %v920 = vrot.slane %v912, %v919
      %v922 = vunpack.c.l.s4 1934713408
      %v923 = vunpack.c.0.s8 %v922
      %v924 = vlaneseq
      %v925 = vshrl.u32 %v924, 7
      %v926 = vsub.s32 %v923, %v925
      %v927 = vrot.slane %v913, %v926
      %v928 = vcombine.low %v863, %v879
      %v929 = vcombine.high %v863, %v879
      %v931 = vunpack.c.l.s4 1934713408
      %v932 = vunpack.c.0.s8 %v931
      %v933 = vlaneseq
      %v934 = vshrl.u32 %v933, 7
      %v935 = vsub.s32 %v932, %v934
      %v936 = vrot.slane %v928, %v935
      %v938 = vunpack.c.l.s4 1934713408
      %v939 = vunpack.c.0.s8 %v938
      %v940 = vlaneseq
      %v941 = vshrl.u32 %v940, 7
      %v942 = vsub.s32 %v939, %v941
      %v943 = vrot.slane %v929, %v942
      %v944 = vcombine.low %v888, %v920
      %v945 = vcombine.high %v888, %v920
      %v946 = vcombine.low %v895, %v927
      %v947 = vcombine.high %v895, %v927
      %v948 = vcombine.low %v904, %v936
      %v949 = vcombine.high %v904, %v936
      %v950 = vcombine.low %v911, %v943
      %v951 = vcombine.high %v911, %v943
      %v952 = vcombine.low %v314, %v377
      %v953 = vcombine.high %v314, %v377
      %v955 = vunpack.c.l.s4 1983009808
      %v956 = vunpack.c.0.s8 %v955
      %v957 = vlaneseq
      %v958 = vshrl.u32 %v957, 7
      %v959 = vsub.s32 %v956, %v958
      %v960 = vrot.slane %v952, %v959
      %v962 = vunpack.c.l.s4 1983009808
      %v963 = vunpack.c.0.s8 %v962
      %v964 = vlaneseq
      %v965 = vshrl.u32 %v964, 7
      %v966 = vsub.s32 %v963, %v965
      %v967 = vrot.slane %v953, %v966
      %v968 = vcombine.low %v374, %v380
      %v969 = vcombine.high %v374, %v380
      %v971 = vunpack.c.l.s4 1983009808
      %v972 = vunpack.c.0.s8 %v971
      %v973 = vlaneseq
      %v974 = vshrl.u32 %v973, 7
      %v975 = vsub.s32 %v972, %v974
      %v976 = vrot.slane %v968, %v975
      %v978 = vunpack.c.l.s4 1983009808
      %v979 = vunpack.c.0.s8 %v978
      %v980 = vlaneseq
      %v981 = vshrl.u32 %v980, 7
      %v982 = vsub.s32 %v979, %v981
      %v983 = vrot.slane %v969, %v982
      %v984 = vcombine.low %v383, %v389
      %v985 = vcombine.high %v383, %v389
      %v987 = vunpack.c.l.s4 1983009808
      %v988 = vunpack.c.0.s8 %v987
      %v989 = vlaneseq
      %v990 = vshrl.u32 %v989, 7
      %v991 = vsub.s32 %v988, %v990
      %v992 = vrot.slane %v984, %v991
      %v994 = vunpack.c.l.s4 1983009808
      %v995 = vunpack.c.0.s8 %v994
      %v996 = vlaneseq
      %v997 = vshrl.u32 %v996, 7
      %v998 = vsub.s32 %v995, %v997
      %v999 = vrot.slane %v985, %v998
      %v1000 = vcombine.low %v386, %v392
      %v1001 = vcombine.high %v386, %v392
      %v1003 = vunpack.c.l.s4 1983009808
      %v1004 = vunpack.c.0.s8 %v1003
      %v1005 = vlaneseq
      %v1006 = vshrl.u32 %v1005, 7
      %v1007 = vsub.s32 %v1004, %v1006
      %v1008 = vrot.slane %v1000, %v1007
      %v1010 = vunpack.c.l.s4 1983009808
      %v1011 = vunpack.c.0.s8 %v1010
      %v1012 = vlaneseq
      %v1013 = vshrl.u32 %v1012, 7
      %v1014 = vsub.s32 %v1011, %v1013
      %v1015 = vrot.slane %v1001, %v1014
      %v1016 = vcombine.low %v960, %v976
      %v1017 = vcombine.high %v960, %v976
      %v1019 = vunpack.c.l.s4 1934713408
      %v1020 = vunpack.c.0.s8 %v1019
      %v1021 = vlaneseq
      %v1022 = vshrl.u32 %v1021, 7
      %v1023 = vsub.s32 %v1020, %v1022
      %v1024 = vrot.slane %v1016, %v1023
      %v1026 = vunpack.c.l.s4 1934713408
      %v1027 = vunpack.c.0.s8 %v1026
      %v1028 = vlaneseq
      %v1029 = vshrl.u32 %v1028, 7
      %v1030 = vsub.s32 %v1027, %v1029
      %v1031 = vrot.slane %v1017, %v1030
      %v1032 = vcombine.low %v967, %v983
      %v1033 = vcombine.high %v967, %v983
      %v1035 = vunpack.c.l.s4 1934713408
      %v1036 = vunpack.c.0.s8 %v1035
      %v1037 = vlaneseq
      %v1038 = vshrl.u32 %v1037, 7
      %v1039 = vsub.s32 %v1036, %v1038
      %v1040 = vrot.slane %v1032, %v1039
      %v1042 = vunpack.c.l.s4 1934713408
      %v1043 = vunpack.c.0.s8 %v1042
      %v1044 = vlaneseq
      %v1045 = vshrl.u32 %v1044, 7
      %v1046 = vsub.s32 %v1043, %v1045
      %v1047 = vrot.slane %v1033, %v1046
      %v1048 = vcombine.low %v992, %v1008
      %v1049 = vcombine.high %v992, %v1008
      %v1051 = vunpack.c.l.s4 1934713408
      %v1052 = vunpack.c.0.s8 %v1051
      %v1053 = vlaneseq
      %v1054 = vshrl.u32 %v1053, 7
      %v1055 = vsub.s32 %v1052, %v1054
      %v1056 = vrot.slane %v1048, %v1055
      %v1058 = vunpack.c.l.s4 1934713408
      %v1059 = vunpack.c.0.s8 %v1058
      %v1060 = vlaneseq
      %v1061 = vshrl.u32 %v1060, 7
      %v1062 = vsub.s32 %v1059, %v1061
      %v1063 = vrot.slane %v1049, %v1062
      %v1064 = vcombine.low %v999, %v1015
      %v1065 = vcombine.high %v999, %v1015
      %v1067 = vunpack.c.l.s4 1934713408
      %v1068 = vunpack.c.0.s8 %v1067
      %v1069 = vlaneseq
      %v1070 = vshrl.u32 %v1069, 7
      %v1071 = vsub.s32 %v1068, %v1070
      %v1072 = vrot.slane %v1064, %v1071
      %v1074 = vunpack.c.l.s4 1934713408
      %v1075 = vunpack.c.0.s8 %v1074
      %v1076 = vlaneseq
      %v1077 = vshrl.u32 %v1076, 7
      %v1078 = vsub.s32 %v1075, %v1077
      %v1079 = vrot.slane %v1065, %v1078
      %v1080 = vcombine.low %v1024, %v1056
      %v1081 = vcombine.high %v1024, %v1056
      %v1082 = vcombine.low %v1031, %v1063
      %v1083 = vcombine.high %v1031, %v1063
      %v1084 = vcombine.low %v1040, %v1072
      %v1085 = vcombine.high %v1040, %v1072
      %v1086 = vcombine.low %v1047, %v1079
      %v1087 = vcombine.high %v1047, %v1079
      %v1088 = vcombine.low %v315, %v399
      %v1089 = vcombine.high %v315, %v399
      %v1091 = vunpack.c.l.s4 1983009808
      %v1092 = vunpack.c.0.s8 %v1091
      %v1093 = vlaneseq
      %v1094 = vshrl.u32 %v1093, 7
      %v1095 = vsub.s32 %v1092, %v1094
      %v1096 = vrot.slane %v1088, %v1095
      %v1098 = vunpack.c.l.s4 1983009808
      %v1099 = vunpack.c.0.s8 %v1098
      %v1100 = vlaneseq
      %v1101 = vshrl.u32 %v1100, 7
      %v1102 = vsub.s32 %v1099, %v1101
      %v1103 = vrot.slane %v1089, %v1102
      %v1104 = vcombine.low %v396, %v402
      %v1105 = vcombine.high %v396, %v402
      %v1107 = vunpack.c.l.s4 1983009808
      %v1108 = vunpack.c.0.s8 %v1107
      %v1109 = vlaneseq
      %v1110 = vshrl.u32 %v1109, 7
      %v1111 = vsub.s32 %v1108, %v1110
      %v1112 = vrot.slane %v1104, %v1111
      %v1114 = vunpack.c.l.s4 1983009808
      %v1115 = vunpack.c.0.s8 %v1114
      %v1116 = vlaneseq
      %v1117 = vshrl.u32 %v1116, 7
      %v1118 = vsub.s32 %v1115, %v1117
      %v1119 = vrot.slane %v1105, %v1118
      %v1120 = vcombine.low %v405, %v411
      %v1121 = vcombine.high %v405, %v411
      %v1123 = vunpack.c.l.s4 1983009808
      %v1124 = vunpack.c.0.s8 %v1123
      %v1125 = vlaneseq
      %v1126 = vshrl.u32 %v1125, 7
      %v1127 = vsub.s32 %v1124, %v1126
      %v1128 = vrot.slane %v1120, %v1127
      %v1130 = vunpack.c.l.s4 1983009808
      %v1131 = vunpack.c.0.s8 %v1130
      %v1132 = vlaneseq
      %v1133 = vshrl.u32 %v1132, 7
      %v1134 = vsub.s32 %v1131, %v1133
      %v1135 = vrot.slane %v1121, %v1134
      %v1136 = vcombine.low %v408, %v414
      %v1137 = vcombine.high %v408, %v414
      %v1139 = vunpack.c.l.s4 1983009808
      %v1140 = vunpack.c.0.s8 %v1139
      %v1141 = vlaneseq
      %v1142 = vshrl.u32 %v1141, 7
      %v1143 = vsub.s32 %v1140, %v1142
      %v1144 = vrot.slane %v1136, %v1143
      %v1146 = vunpack.c.l.s4 1983009808
      %v1147 = vunpack.c.0.s8 %v1146
      %v1148 = vlaneseq
      %v1149 = vshrl.u32 %v1148, 7
      %v1150 = vsub.s32 %v1147, %v1149
      %v1151 = vrot.slane %v1137, %v1150
      %v1152 = vcombine.low %v1096, %v1112
      %v1153 = vcombine.high %v1096, %v1112
      %v1155 = vunpack.c.l.s4 1934713408
      %v1156 = vunpack.c.0.s8 %v1155
      %v1157 = vlaneseq
      %v1158 = vshrl.u32 %v1157, 7
      %v1159 = vsub.s32 %v1156, %v1158
      %v1160 = vrot.slane %v1152, %v1159
      %v1162 = vunpack.c.l.s4 1934713408
      %v1163 = vunpack.c.0.s8 %v1162
      %v1164 = vlaneseq
      %v1165 = vshrl.u32 %v1164, 7
      %v1166 = vsub.s32 %v1163, %v1165
      %v1167 = vrot.slane %v1153, %v1166
      %v1168 = vcombine.low %v1103, %v1119
      %v1169 = vcombine.high %v1103, %v1119
      %v1171 = vunpack.c.l.s4 1934713408
      %v1172 = vunpack.c.0.s8 %v1171
      %v1173 = vlaneseq
      %v1174 = vshrl.u32 %v1173, 7
      %v1175 = vsub.s32 %v1172, %v1174
      %v1176 = vrot.slane %v1168, %v1175
      %v1178 = vunpack.c.l.s4 1934713408
      %v1179 = vunpack.c.0.s8 %v1178
      %v1180 = vlaneseq
      %v1181 = vshrl.u32 %v1180, 7
      %v1182 = vsub.s32 %v1179, %v1181
      %v1183 = vrot.slane %v1169, %v1182
      %v1184 = vcombine.low %v1128, %v1144
      %v1185 = vcombine.high %v1128, %v1144
      %v1187 = vunpack.c.l.s4 1934713408
      %v1188 = vunpack.c.0.s8 %v1187
      %v1189 = vlaneseq
      %v1190 = vshrl.u32 %v1189, 7
      %v1191 = vsub.s32 %v1188, %v1190
      %v1192 = vrot.slane %v1184, %v1191
      %v1194 = vunpack.c.l.s4 1934713408
      %v1195 = vunpack.c.0.s8 %v1194
      %v1196 = vlaneseq
      %v1197 = vshrl.u32 %v1196, 7
      %v1198 = vsub.s32 %v1195, %v1197
      %v1199 = vrot.slane %v1185, %v1198
      %v1200 = vcombine.low %v1135, %v1151
      %v1201 = vcombine.high %v1135, %v1151
      %v1203 = vunpack.c.l.s4 1934713408
      %v1204 = vunpack.c.0.s8 %v1203
      %v1205 = vlaneseq
      %v1206 = vshrl.u32 %v1205, 7
      %v1207 = vsub.s32 %v1204, %v1206
      %v1208 = vrot.slane %v1200, %v1207
      %v1210 = vunpack.c.l.s4 1934713408
      %v1211 = vunpack.c.0.s8 %v1210
      %v1212 = vlaneseq
      %v1213 = vshrl.u32 %v1212, 7
      %v1214 = vsub.s32 %v1211, %v1213
      %v1215 = vrot.slane %v1201, %v1214
      %v1216 = vcombine.low %v1160, %v1192
      %v1217 = vcombine.high %v1160, %v1192
      %v1218 = vcombine.low %v1167, %v1199
      %v1219 = vcombine.high %v1167, %v1199
      %v1220 = vcombine.low %v1176, %v1208
      %v1221 = vcombine.high %v1176, %v1208
      %v1222 = vcombine.low %v1183, %v1215
      %v1223 = vcombine.high %v1183, %v1215
      %v1224 = vcombine.low %v316, %v421
      %v1225 = vcombine.high %v316, %v421
      %v1227 = vunpack.c.l.s4 1983009808
      %v1228 = vunpack.c.0.s8 %v1227
      %v1229 = vlaneseq
      %v1230 = vshrl.u32 %v1229, 7
      %v1231 = vsub.s32 %v1228, %v1230
      %v1232 = vrot.slane %v1224, %v1231
      %v1234 = vunpack.c.l.s4 1983009808
      %v1235 = vunpack.c.0.s8 %v1234
      %v1236 = vlaneseq
      %v1237 = vshrl.u32 %v1236, 7
      %v1238 = vsub.s32 %v1235, %v1237
      %v1239 = vrot.slane %v1225, %v1238
      %v1240 = vcombine.low %v418, %v424
      %v1241 = vcombine.high %v418, %v424
      %v1243 = vunpack.c.l.s4 1983009808
      %v1244 = vunpack.c.0.s8 %v1243
      %v1245 = vlaneseq
      %v1246 = vshrl.u32 %v1245, 7
      %v1247 = vsub.s32 %v1244, %v1246
      %v1248 = vrot.slane %v1240, %v1247
      %v1250 = vunpack.c.l.s4 1983009808
      %v1251 = vunpack.c.0.s8 %v1250
      %v1252 = vlaneseq
      %v1253 = vshrl.u32 %v1252, 7
      %v1254 = vsub.s32 %v1251, %v1253
      %v1255 = vrot.slane %v1241, %v1254
      %v1256 = vcombine.low %v427, %v433
      %v1257 = vcombine.high %v427, %v433
      %v1259 = vunpack.c.l.s4 1983009808
      %v1260 = vunpack.c.0.s8 %v1259
      %v1261 = vlaneseq
      %v1262 = vshrl.u32 %v1261, 7
      %v1263 = vsub.s32 %v1260, %v1262
      %v1264 = vrot.slane %v1256, %v1263
      %v1266 = vunpack.c.l.s4 1983009808
      %v1267 = vunpack.c.0.s8 %v1266
      %v1268 = vlaneseq
      %v1269 = vshrl.u32 %v1268, 7
      %v1270 = vsub.s32 %v1267, %v1269
      %v1271 = vrot.slane %v1257, %v1270
      %v1272 = vcombine.low %v430, %v436
      %v1273 = vcombine.high %v430, %v436
      %v1275 = vunpack.c.l.s4 1983009808
      %v1276 = vunpack.c.0.s8 %v1275
      %v1277 = vlaneseq
      %v1278 = vshrl.u32 %v1277, 7
      %v1279 = vsub.s32 %v1276, %v1278
      %v1280 = vrot.slane %v1272, %v1279
      %v1282 = vunpack.c.l.s4 1983009808
      %v1283 = vunpack.c.0.s8 %v1282
      %v1284 = vlaneseq
      %v1285 = vshrl.u32 %v1284, 7
      %v1286 = vsub.s32 %v1283, %v1285
      %v1287 = vrot.slane %v1273, %v1286
      %v1288 = vcombine.low %v1232, %v1248
      %v1289 = vcombine.high %v1232, %v1248
      %v1291 = vunpack.c.l.s4 1934713408
      %v1292 = vunpack.c.0.s8 %v1291
      %v1293 = vlaneseq
      %v1294 = vshrl.u32 %v1293, 7
      %v1295 = vsub.s32 %v1292, %v1294
      %v1296 = vrot.slane %v1288, %v1295
      %v1298 = vunpack.c.l.s4 1934713408
      %v1299 = vunpack.c.0.s8 %v1298
      %v1300 = vlaneseq
      %v1301 = vshrl.u32 %v1300, 7
      %v1302 = vsub.s32 %v1299, %v1301
      %v1303 = vrot.slane %v1289, %v1302
      %v1304 = vcombine.low %v1239, %v1255
      %v1305 = vcombine.high %v1239, %v1255
      %v1307 = vunpack.c.l.s4 1934713408
      %v1308 = vunpack.c.0.s8 %v1307
      %v1309 = vlaneseq
      %v1310 = vshrl.u32 %v1309, 7
      %v1311 = vsub.s32 %v1308, %v1310
      %v1312 = vrot.slane %v1304, %v1311
      %v1314 = vunpack.c.l.s4 1934713408
      %v1315 = vunpack.c.0.s8 %v1314
      %v1316 = vlaneseq
      %v1317 = vshrl.u32 %v1316, 7
      %v1318 = vsub.s32 %v1315, %v1317
      %v1319 = vrot.slane %v1305, %v1318
      %v1320 = vcombine.low %v1264, %v1280
      %v1321 = vcombine.high %v1264, %v1280
      %v1323 = vunpack.c.l.s4 1934713408
      %v1324 = vunpack.c.0.s8 %v1323
      %v1325 = vlaneseq
      %v1326 = vshrl.u32 %v1325, 7
      %v1327 = vsub.s32 %v1324, %v1326
      %v1328 = vrot.slane %v1320, %v1327
      %v1330 = vunpack.c.l.s4 1934713408
      %v1331 = vunpack.c.0.s8 %v1330
      %v1332 = vlaneseq
      %v1333 = vshrl.u32 %v1332, 7
      %v1334 = vsub.s32 %v1331, %v1333
      %v1335 = vrot.slane %v1321, %v1334
      %v1336 = vcombine.low %v1271, %v1287
      %v1337 = vcombine.high %v1271, %v1287
      %v1339 = vunpack.c.l.s4 1934713408
      %v1340 = vunpack.c.0.s8 %v1339
      %v1341 = vlaneseq
      %v1342 = vshrl.u32 %v1341, 7
      %v1343 = vsub.s32 %v1340, %v1342
      %v1344 = vrot.slane %v1336, %v1343
      %v1346 = vunpack.c.l.s4 1934713408
      %v1347 = vunpack.c.0.s8 %v1346
      %v1348 = vlaneseq
      %v1349 = vshrl.u32 %v1348, 7
      %v1350 = vsub.s32 %v1347, %v1349
      %v1351 = vrot.slane %v1337, %v1350
      %v1352 = vcombine.low %v1296, %v1328
      %v1353 = vcombine.high %v1296, %v1328
      %v1354 = vcombine.low %v1303, %v1335
      %v1355 = vcombine.high %v1303, %v1335
      %v1356 = vcombine.low %v1312, %v1344
      %v1357 = vcombine.high %v1312, %v1344
      %v1358 = vcombine.low %v1319, %v1351
      %v1359 = vcombine.high %v1319, %v1351
      %v1360 = vcombine.low %v317, %v443
      %v1361 = vcombine.high %v317, %v443
      %v1363 = vunpack.c.l.s4 1983009808
      %v1364 = vunpack.c.0.s8 %v1363
      %v1365 = vlaneseq
      %v1366 = vshrl.u32 %v1365, 7
      %v1367 = vsub.s32 %v1364, %v1366
      %v1368 = vrot.slane %v1360, %v1367
      %v1370 = vunpack.c.l.s4 1983009808
      %v1371 = vunpack.c.0.s8 %v1370
      %v1372 = vlaneseq
      %v1373 = vshrl.u32 %v1372, 7
      %v1374 = vsub.s32 %v1371, %v1373
      %v1375 = vrot.slane %v1361, %v1374
      %v1376 = vcombine.low %v440, %v446
      %v1377 = vcombine.high %v440, %v446
      %v1379 = vunpack.c.l.s4 1983009808
      %v1380 = vunpack.c.0.s8 %v1379
      %v1381 = vlaneseq
      %v1382 = vshrl.u32 %v1381, 7
      %v1383 = vsub.s32 %v1380, %v1382
      %v1384 = vrot.slane %v1376, %v1383
      %v1386 = vunpack.c.l.s4 1983009808
      %v1387 = vunpack.c.0.s8 %v1386
      %v1388 = vlaneseq
      %v1389 = vshrl.u32 %v1388, 7
      %v1390 = vsub.s32 %v1387, %v1389
      %v1391 = vrot.slane %v1377, %v1390
      %v1392 = vcombine.low %v449, %v455
      %v1393 = vcombine.high %v449, %v455
      %v1395 = vunpack.c.l.s4 1983009808
      %v1396 = vunpack.c.0.s8 %v1395
      %v1397 = vlaneseq
      %v1398 = vshrl.u32 %v1397, 7
      %v1399 = vsub.s32 %v1396, %v1398
      %v1400 = vrot.slane %v1392, %v1399
      %v1402 = vunpack.c.l.s4 1983009808
      %v1403 = vunpack.c.0.s8 %v1402
      %v1404 = vlaneseq
      %v1405 = vshrl.u32 %v1404, 7
      %v1406 = vsub.s32 %v1403, %v1405
      %v1407 = vrot.slane %v1393, %v1406
      %v1408 = vcombine.low %v452, %v458
      %v1409 = vcombine.high %v452, %v458
      %v1411 = vunpack.c.l.s4 1983009808
      %v1412 = vunpack.c.0.s8 %v1411
      %v1413 = vlaneseq
      %v1414 = vshrl.u32 %v1413, 7
      %v1415 = vsub.s32 %v1412, %v1414
      %v1416 = vrot.slane %v1408, %v1415
      %v1418 = vunpack.c.l.s4 1983009808
      %v1419 = vunpack.c.0.s8 %v1418
      %v1420 = vlaneseq
      %v1421 = vshrl.u32 %v1420, 7
      %v1422 = vsub.s32 %v1419, %v1421
      %v1423 = vrot.slane %v1409, %v1422
      %v1424 = vcombine.low %v1368, %v1384
      %v1425 = vcombine.high %v1368, %v1384
      %v1427 = vunpack.c.l.s4 1934713408
      %v1428 = vunpack.c.0.s8 %v1427
      %v1429 = vlaneseq
      %v1430 = vshrl.u32 %v1429, 7
      %v1431 = vsub.s32 %v1428, %v1430
      %v1432 = vrot.slane %v1424, %v1431
      %v1434 = vunpack.c.l.s4 1934713408
      %v1435 = vunpack.c.0.s8 %v1434
      %v1436 = vlaneseq
      %v1437 = vshrl.u32 %v1436, 7
      %v1438 = vsub.s32 %v1435, %v1437
      %v1439 = vrot.slane %v1425, %v1438
      %v1440 = vcombine.low %v1375, %v1391
      %v1441 = vcombine.high %v1375, %v1391
      %v1443 = vunpack.c.l.s4 1934713408
      %v1444 = vunpack.c.0.s8 %v1443
      %v1445 = vlaneseq
      %v1446 = vshrl.u32 %v1445, 7
      %v1447 = vsub.s32 %v1444, %v1446
      %v1448 = vrot.slane %v1440, %v1447
      %v1450 = vunpack.c.l.s4 1934713408
      %v1451 = vunpack.c.0.s8 %v1450
      %v1452 = vlaneseq
      %v1453 = vshrl.u32 %v1452, 7
      %v1454 = vsub.s32 %v1451, %v1453
      %v1455 = vrot.slane %v1441, %v1454
      %v1456 = vcombine.low %v1400, %v1416
      %v1457 = vcombine.high %v1400, %v1416
      %v1459 = vunpack.c.l.s4 1934713408
      %v1460 = vunpack.c.0.s8 %v1459
      %v1461 = vlaneseq
      %v1462 = vshrl.u32 %v1461, 7
      %v1463 = vsub.s32 %v1460, %v1462
      %v1464 = vrot.slane %v1456, %v1463
      %v1466 = vunpack.c.l.s4 1934713408
      %v1467 = vunpack.c.0.s8 %v1466
      %v1468 = vlaneseq
      %v1469 = vshrl.u32 %v1468, 7
      %v1470 = vsub.s32 %v1467, %v1469
      %v1471 = vrot.slane %v1457, %v1470
      %v1472 = vcombine.low %v1407, %v1423
      %v1473 = vcombine.high %v1407, %v1423
      %v1475 = vunpack.c.l.s4 1934713408
      %v1476 = vunpack.c.0.s8 %v1475
      %v1477 = vlaneseq
      %v1478 = vshrl.u32 %v1477, 7
      %v1479 = vsub.s32 %v1476, %v1478
      %v1480 = vrot.slane %v1472, %v1479
      %v1482 = vunpack.c.l.s4 1934713408
      %v1483 = vunpack.c.0.s8 %v1482
      %v1484 = vlaneseq
      %v1485 = vshrl.u32 %v1484, 7
      %v1486 = vsub.s32 %v1483, %v1485
      %v1487 = vrot.slane %v1473, %v1486
      %v1488 = vcombine.low %v1432, %v1464
      %v1489 = vcombine.high %v1432, %v1464
      %v1490 = vcombine.low %v1439, %v1471
      %v1491 = vcombine.high %v1439, %v1471
      %v1492 = vcombine.low %v1448, %v1480
      %v1493 = vcombine.high %v1448, %v1480
      %v1494 = vcombine.low %v1455, %v1487
      %v1495 = vcombine.high %v1455, %v1487
      %v1496 = vcombine.low %v318, %v465
      %v1497 = vcombine.high %v318, %v465
      %v1499 = vunpack.c.l.s4 1983009808
      %v1500 = vunpack.c.0.s8 %v1499
      %v1501 = vlaneseq
      %v1502 = vshrl.u32 %v1501, 7
      %v1503 = vsub.s32 %v1500, %v1502
      %v1504 = vrot.slane %v1496, %v1503
      %v1506 = vunpack.c.l.s4 1983009808
      %v1507 = vunpack.c.0.s8 %v1506
      %v1508 = vlaneseq
      %v1509 = vshrl.u32 %v1508, 7
      %v1510 = vsub.s32 %v1507, %v1509
      %v1511 = vrot.slane %v1497, %v1510
      %v1512 = vcombine.low %v462, %v468
      %v1513 = vcombine.high %v462, %v468
      %v1515 = vunpack.c.l.s4 1983009808
      %v1516 = vunpack.c.0.s8 %v1515
      %v1517 = vlaneseq
      %v1518 = vshrl.u32 %v1517, 7
      %v1519 = vsub.s32 %v1516, %v1518
      %v1520 = vrot.slane %v1512, %v1519
      %v1522 = vunpack.c.l.s4 1983009808
      %v1523 = vunpack.c.0.s8 %v1522
      %v1524 = vlaneseq
      %v1525 = vshrl.u32 %v1524, 7
      %v1526 = vsub.s32 %v1523, %v1525
      %v1527 = vrot.slane %v1513, %v1526
      %v1528 = vcombine.low %v471, %v477
      %v1529 = vcombine.high %v471, %v477
      %v1531 = vunpack.c.l.s4 1983009808
      %v1532 = vunpack.c.0.s8 %v1531
      %v1533 = vlaneseq
      %v1534 = vshrl.u32 %v1533, 7
      %v1535 = vsub.s32 %v1532, %v1534
      %v1536 = vrot.slane %v1528, %v1535
      %v1538 = vunpack.c.l.s4 1983009808
      %v1539 = vunpack.c.0.s8 %v1538
      %v1540 = vlaneseq
      %v1541 = vshrl.u32 %v1540, 7
      %v1542 = vsub.s32 %v1539, %v1541
      %v1543 = vrot.slane %v1529, %v1542
      %v1544 = vcombine.low %v474, %v480
      %v1545 = vcombine.high %v474, %v480
      %v1547 = vunpack.c.l.s4 1983009808
      %v1548 = vunpack.c.0.s8 %v1547
      %v1549 = vlaneseq
      %v1550 = vshrl.u32 %v1549, 7
      %v1551 = vsub.s32 %v1548, %v1550
      %v1552 = vrot.slane %v1544, %v1551
      %v1554 = vunpack.c.l.s4 1983009808
      %v1555 = vunpack.c.0.s8 %v1554
      %v1556 = vlaneseq
      %v1557 = vshrl.u32 %v1556, 7
      %v1558 = vsub.s32 %v1555, %v1557
      %v1559 = vrot.slane %v1545, %v1558
      %v1560 = vcombine.low %v1504, %v1520
      %v1561 = vcombine.high %v1504, %v1520
      %v1563 = vunpack.c.l.s4 1934713408
      %v1564 = vunpack.c.0.s8 %v1563
      %v1565 = vlaneseq
      %v1566 = vshrl.u32 %v1565, 7
      %v1567 = vsub.s32 %v1564, %v1566
      %v1568 = vrot.slane %v1560, %v1567
      %v1570 = vunpack.c.l.s4 1934713408
      %v1571 = vunpack.c.0.s8 %v1570
      %v1572 = vlaneseq
      %v1573 = vshrl.u32 %v1572, 7
      %v1574 = vsub.s32 %v1571, %v1573
      %v1575 = vrot.slane %v1561, %v1574
      %v1576 = vcombine.low %v1511, %v1527
      %v1577 = vcombine.high %v1511, %v1527
      %v1579 = vunpack.c.l.s4 1934713408
      %v1580 = vunpack.c.0.s8 %v1579
      %v1581 = vlaneseq
      %v1582 = vshrl.u32 %v1581, 7
      %v1583 = vsub.s32 %v1580, %v1582
      %v1584 = vrot.slane %v1576, %v1583
      %v1586 = vunpack.c.l.s4 1934713408
      %v1587 = vunpack.c.0.s8 %v1586
      %v1588 = vlaneseq
      %v1589 = vshrl.u32 %v1588, 7
      %v1590 = vsub.s32 %v1587, %v1589
      %v1591 = vrot.slane %v1577, %v1590
      %v1592 = vcombine.low %v1536, %v1552
      %v1593 = vcombine.high %v1536, %v1552
      %v1595 = vunpack.c.l.s4 1934713408
      %v1596 = vunpack.c.0.s8 %v1595
      %v1597 = vlaneseq
      %v1598 = vshrl.u32 %v1597, 7
      %v1599 = vsub.s32 %v1596, %v1598
      %v1600 = vrot.slane %v1592, %v1599
      %v1602 = vunpack.c.l.s4 1934713408
      %v1603 = vunpack.c.0.s8 %v1602
      %v1604 = vlaneseq
      %v1605 = vshrl.u32 %v1604, 7
      %v1606 = vsub.s32 %v1603, %v1605
      %v1607 = vrot.slane %v1593, %v1606
      %v1608 = vcombine.low %v1543, %v1559
      %v1609 = vcombine.high %v1543, %v1559
      %v1611 = vunpack.c.l.s4 1934713408
      %v1612 = vunpack.c.0.s8 %v1611
      %v1613 = vlaneseq
      %v1614 = vshrl.u32 %v1613, 7
      %v1615 = vsub.s32 %v1612, %v1614
      %v1616 = vrot.slane %v1608, %v1615
      %v1618 = vunpack.c.l.s4 1934713408
      %v1619 = vunpack.c.0.s8 %v1618
      %v1620 = vlaneseq
      %v1621 = vshrl.u32 %v1620, 7
      %v1622 = vsub.s32 %v1619, %v1621
      %v1623 = vrot.slane %v1609, %v1622
      %v1624 = vcombine.low %v1568, %v1600
      %v1625 = vcombine.high %v1568, %v1600
      %v1626 = vcombine.low %v1575, %v1607
      %v1627 = vcombine.high %v1575, %v1607
      %v1628 = vcombine.low %v1584, %v1616
      %v1629 = vcombine.high %v1584, %v1616
      %v1630 = vcombine.low %v1591, %v1623
      %v1631 = vcombine.high %v1591, %v1623
      %v1632 = vcombine.low %v319, %v487
      %v1633 = vcombine.high %v319, %v487
      %v1635 = vunpack.c.l.s4 1983009808
      %v1636 = vunpack.c.0.s8 %v1635
      %v1637 = vlaneseq
      %v1638 = vshrl.u32 %v1637, 7
      %v1639 = vsub.s32 %v1636, %v1638
      %v1640 = vrot.slane %v1632, %v1639
      %v1642 = vunpack.c.l.s4 1983009808
      %v1643 = vunpack.c.0.s8 %v1642
      %v1644 = vlaneseq
      %v1645 = vshrl.u32 %v1644, 7
      %v1646 = vsub.s32 %v1643, %v1645
      %v1647 = vrot.slane %v1633, %v1646
      %v1648 = vcombine.low %v484, %v490
      %v1649 = vcombine.high %v484, %v490
      %v1651 = vunpack.c.l.s4 1983009808
      %v1652 = vunpack.c.0.s8 %v1651
      %v1653 = vlaneseq
      %v1654 = vshrl.u32 %v1653, 7
      %v1655 = vsub.s32 %v1652, %v1654
      %v1656 = vrot.slane %v1648, %v1655
      %v1658 = vunpack.c.l.s4 1983009808
      %v1659 = vunpack.c.0.s8 %v1658
      %v1660 = vlaneseq
      %v1661 = vshrl.u32 %v1660, 7
      %v1662 = vsub.s32 %v1659, %v1661
      %v1663 = vrot.slane %v1649, %v1662
      %v1664 = vcombine.low %v493, %v499
      %v1665 = vcombine.high %v493, %v499
      %v1667 = vunpack.c.l.s4 1983009808
      %v1668 = vunpack.c.0.s8 %v1667
      %v1669 = vlaneseq
      %v1670 = vshrl.u32 %v1669, 7
      %v1671 = vsub.s32 %v1668, %v1670
      %v1672 = vrot.slane %v1664, %v1671
      %v1674 = vunpack.c.l.s4 1983009808
      %v1675 = vunpack.c.0.s8 %v1674
      %v1676 = vlaneseq
      %v1677 = vshrl.u32 %v1676, 7
      %v1678 = vsub.s32 %v1675, %v1677
      %v1679 = vrot.slane %v1665, %v1678
      %v1680 = vcombine.low %v496, %v502
      %v1681 = vcombine.high %v496, %v502
      %v1683 = vunpack.c.l.s4 1983009808
      %v1684 = vunpack.c.0.s8 %v1683
      %v1685 = vlaneseq
      %v1686 = vshrl.u32 %v1685, 7
      %v1687 = vsub.s32 %v1684, %v1686
      %v1688 = vrot.slane %v1680, %v1687
      %v1690 = vunpack.c.l.s4 1983009808
      %v1691 = vunpack.c.0.s8 %v1690
      %v1692 = vlaneseq
      %v1693 = vshrl.u32 %v1692, 7
      %v1694 = vsub.s32 %v1691, %v1693
      %v1695 = vrot.slane %v1681, %v1694
      %v1696 = vcombine.low %v1640, %v1656
      %v1697 = vcombine.high %v1640, %v1656
      %v1699 = vunpack.c.l.s4 1934713408
      %v1700 = vunpack.c.0.s8 %v1699
      %v1701 = vlaneseq
      %v1702 = vshrl.u32 %v1701, 7
      %v1703 = vsub.s32 %v1700, %v1702
      %v1704 = vrot.slane %v1696, %v1703
      %v1706 = vunpack.c.l.s4 1934713408
      %v1707 = vunpack.c.0.s8 %v1706
      %v1708 = vlaneseq
      %v1709 = vshrl.u32 %v1708, 7
      %v1710 = vsub.s32 %v1707, %v1709
      %v1711 = vrot.slane %v1697, %v1710
      %v1712 = vcombine.low %v1647, %v1663
      %v1713 = vcombine.high %v1647, %v1663
      %v1715 = vunpack.c.l.s4 1934713408
      %v1716 = vunpack.c.0.s8 %v1715
      %v1717 = vlaneseq
      %v1718 = vshrl.u32 %v1717, 7
      %v1719 = vsub.s32 %v1716, %v1718
      %v1720 = vrot.slane %v1712, %v1719
      %v1722 = vunpack.c.l.s4 1934713408
      %v1723 = vunpack.c.0.s8 %v1722
      %v1724 = vlaneseq
      %v1725 = vshrl.u32 %v1724, 7
      %v1726 = vsub.s32 %v1723, %v1725
      %v1727 = vrot.slane %v1713, %v1726
      %v1728 = vcombine.low %v1672, %v1688
      %v1729 = vcombine.high %v1672, %v1688
      %v1731 = vunpack.c.l.s4 1934713408
      %v1732 = vunpack.c.0.s8 %v1731
      %v1733 = vlaneseq
      %v1734 = vshrl.u32 %v1733, 7
      %v1735 = vsub.s32 %v1732, %v1734
      %v1736 = vrot.slane %v1728, %v1735
      %v1738 = vunpack.c.l.s4 1934713408
      %v1739 = vunpack.c.0.s8 %v1738
      %v1740 = vlaneseq
      %v1741 = vshrl.u32 %v1740, 7
      %v1742 = vsub.s32 %v1739, %v1741
      %v1743 = vrot.slane %v1729, %v1742
      %v1744 = vcombine.low %v1679, %v1695
      %v1745 = vcombine.high %v1679, %v1695
      %v1747 = vunpack.c.l.s4 1934713408
      %v1748 = vunpack.c.0.s8 %v1747
      %v1749 = vlaneseq
      %v1750 = vshrl.u32 %v1749, 7
      %v1751 = vsub.s32 %v1748, %v1750
      %v1752 = vrot.slane %v1744, %v1751
      %v1754 = vunpack.c.l.s4 1934713408
      %v1755 = vunpack.c.0.s8 %v1754
      %v1756 = vlaneseq
      %v1757 = vshrl.u32 %v1756, 7
      %v1758 = vsub.s32 %v1755, %v1757
      %v1759 = vrot.slane %v1745, %v1758
      %v1760 = vcombine.low %v1704, %v1736
      %v1761 = vcombine.high %v1704, %v1736
      %v1762 = vcombine.low %v1711, %v1743
      %v1763 = vcombine.high %v1711, %v1743
      %v1764 = vcombine.low %v1720, %v1752
      %v1765 = vcombine.high %v1720, %v1752
      %v1766 = vcombine.low %v1727, %v1759
      %v1767 = vcombine.high %v1727, %v1759
      %v1768 = vcombine.low %v320, %v509
      %v1769 = vcombine.high %v320, %v509
      %v1771 = vunpack.c.l.s4 1983009808
      %v1772 = vunpack.c.0.s8 %v1771
      %v1773 = vlaneseq
      %v1774 = vshrl.u32 %v1773, 7
      %v1775 = vsub.s32 %v1772, %v1774
      %v1776 = vrot.slane %v1768, %v1775
      %v1778 = vunpack.c.l.s4 1983009808
      %v1779 = vunpack.c.0.s8 %v1778
      %v1780 = vlaneseq
      %v1781 = vshrl.u32 %v1780, 7
      %v1782 = vsub.s32 %v1779, %v1781
      %v1783 = vrot.slane %v1769, %v1782
      %v1784 = vcombine.low %v506, %v512
      %v1785 = vcombine.high %v506, %v512
      %v1787 = vunpack.c.l.s4 1983009808
      %v1788 = vunpack.c.0.s8 %v1787
      %v1789 = vlaneseq
      %v1790 = vshrl.u32 %v1789, 7
      %v1791 = vsub.s32 %v1788, %v1790
      %v1792 = vrot.slane %v1784, %v1791
      %v1794 = vunpack.c.l.s4 1983009808
      %v1795 = vunpack.c.0.s8 %v1794
      %v1796 = vlaneseq
      %v1797 = vshrl.u32 %v1796, 7
      %v1798 = vsub.s32 %v1795, %v1797
      %v1799 = vrot.slane %v1785, %v1798
      %v1800 = vcombine.low %v515, %v521
      %v1801 = vcombine.high %v515, %v521
      %v1803 = vunpack.c.l.s4 1983009808
      %v1804 = vunpack.c.0.s8 %v1803
      %v1805 = vlaneseq
      %v1806 = vshrl.u32 %v1805, 7
      %v1807 = vsub.s32 %v1804, %v1806
      %v1808 = vrot.slane %v1800, %v1807
      %v1810 = vunpack.c.l.s4 1983009808
      %v1811 = vunpack.c.0.s8 %v1810
      %v1812 = vlaneseq
      %v1813 = vshrl.u32 %v1812, 7
      %v1814 = vsub.s32 %v1811, %v1813
      %v1815 = vrot.slane %v1801, %v1814
      %v1816 = vcombine.low %v518, %v524
      %v1817 = vcombine.high %v518, %v524
      %v1819 = vunpack.c.l.s4 1983009808
      %v1820 = vunpack.c.0.s8 %v1819
      %v1821 = vlaneseq
      %v1822 = vshrl.u32 %v1821, 7
      %v1823 = vsub.s32 %v1820, %v1822
      %v1824 = vrot.slane %v1816, %v1823
      %v1826 = vunpack.c.l.s4 1983009808
      %v1827 = vunpack.c.0.s8 %v1826
      %v1828 = vlaneseq
      %v1829 = vshrl.u32 %v1828, 7
      %v1830 = vsub.s32 %v1827, %v1829
      %v1831 = vrot.slane %v1817, %v1830
      %v1832 = vcombine.low %v1776, %v1792
      %v1833 = vcombine.high %v1776, %v1792
      %v1835 = vunpack.c.l.s4 1934713408
      %v1836 = vunpack.c.0.s8 %v1835
      %v1837 = vlaneseq
      %v1838 = vshrl.u32 %v1837, 7
      %v1839 = vsub.s32 %v1836, %v1838
      %v1840 = vrot.slane %v1832, %v1839
      %v1842 = vunpack.c.l.s4 1934713408
      %v1843 = vunpack.c.0.s8 %v1842
      %v1844 = vlaneseq
      %v1845 = vshrl.u32 %v1844, 7
      %v1846 = vsub.s32 %v1843, %v1845
      %v1847 = vrot.slane %v1833, %v1846
      %v1848 = vcombine.low %v1783, %v1799
      %v1849 = vcombine.high %v1783, %v1799
      %v1851 = vunpack.c.l.s4 1934713408
      %v1852 = vunpack.c.0.s8 %v1851
      %v1853 = vlaneseq
      %v1854 = vshrl.u32 %v1853, 7
      %v1855 = vsub.s32 %v1852, %v1854
      %v1856 = vrot.slane %v1848, %v1855
      %v1858 = vunpack.c.l.s4 1934713408
      %v1859 = vunpack.c.0.s8 %v1858
      %v1860 = vlaneseq
      %v1861 = vshrl.u32 %v1860, 7
      %v1862 = vsub.s32 %v1859, %v1861
      %v1863 = vrot.slane %v1849, %v1862
      %v1864 = vcombine.low %v1808, %v1824
      %v1865 = vcombine.high %v1808, %v1824
      %v1867 = vunpack.c.l.s4 1934713408
      %v1868 = vunpack.c.0.s8 %v1867
      %v1869 = vlaneseq
      %v1870 = vshrl.u32 %v1869, 7
      %v1871 = vsub.s32 %v1868, %v1870
      %v1872 = vrot.slane %v1864, %v1871
      %v1874 = vunpack.c.l.s4 1934713408
      %v1875 = vunpack.c.0.s8 %v1874
      %v1876 = vlaneseq
      %v1877 = vshrl.u32 %v1876, 7
      %v1878 = vsub.s32 %v1875, %v1877
      %v1879 = vrot.slane %v1865, %v1878
      %v1880 = vcombine.low %v1815, %v1831
      %v1881 = vcombine.high %v1815, %v1831
      %v1883 = vunpack.c.l.s4 1934713408
      %v1884 = vunpack.c.0.s8 %v1883
      %v1885 = vlaneseq
      %v1886 = vshrl.u32 %v1885, 7
      %v1887 = vsub.s32 %v1884, %v1886
      %v1888 = vrot.slane %v1880, %v1887
      %v1890 = vunpack.c.l.s4 1934713408
      %v1891 = vunpack.c.0.s8 %v1890
      %v1892 = vlaneseq
      %v1893 = vshrl.u32 %v1892, 7
      %v1894 = vsub.s32 %v1891, %v1893
      %v1895 = vrot.slane %v1881, %v1894
      %v1896 = vcombine.low %v1840, %v1872
      %v1897 = vcombine.high %v1840, %v1872
      %v1898 = vcombine.low %v1847, %v1879
      %v1899 = vcombine.high %v1847, %v1879
      %v1900 = vcombine.low %v1856, %v1888
      %v1901 = vcombine.high %v1856, %v1888
      %v1902 = vcombine.low %v1863, %v1895
      %v1903 = vcombine.high %v1863, %v1895
      %v1904 = vcombine.low %v321, %v531
      %v1905 = vcombine.high %v321, %v531
      %v1907 = vunpack.c.l.s4 1983009808
      %v1908 = vunpack.c.0.s8 %v1907
      %v1909 = vlaneseq
      %v1910 = vshrl.u32 %v1909, 7
      %v1911 = vsub.s32 %v1908, %v1910
      %v1912 = vrot.slane %v1904, %v1911
      %v1914 = vunpack.c.l.s4 1983009808
      %v1915 = vunpack.c.0.s8 %v1914
      %v1916 = vlaneseq
      %v1917 = vshrl.u32 %v1916, 7
      %v1918 = vsub.s32 %v1915, %v1917
      %v1919 = vrot.slane %v1905, %v1918
      %v1920 = vcombine.low %v528, %v534
      %v1921 = vcombine.high %v528, %v534
      %v1923 = vunpack.c.l.s4 1983009808
      %v1924 = vunpack.c.0.s8 %v1923
      %v1925 = vlaneseq
      %v1926 = vshrl.u32 %v1925, 7
      %v1927 = vsub.s32 %v1924, %v1926
      %v1928 = vrot.slane %v1920, %v1927
      %v1930 = vunpack.c.l.s4 1983009808
      %v1931 = vunpack.c.0.s8 %v1930
      %v1932 = vlaneseq
      %v1933 = vshrl.u32 %v1932, 7
      %v1934 = vsub.s32 %v1931, %v1933
      %v1935 = vrot.slane %v1921, %v1934
      %v1936 = vcombine.low %v537, %v543
      %v1937 = vcombine.high %v537, %v543
      %v1939 = vunpack.c.l.s4 1983009808
      %v1940 = vunpack.c.0.s8 %v1939
      %v1941 = vlaneseq
      %v1942 = vshrl.u32 %v1941, 7
      %v1943 = vsub.s32 %v1940, %v1942
      %v1944 = vrot.slane %v1936, %v1943
      %v1946 = vunpack.c.l.s4 1983009808
      %v1947 = vunpack.c.0.s8 %v1946
      %v1948 = vlaneseq
      %v1949 = vshrl.u32 %v1948, 7
      %v1950 = vsub.s32 %v1947, %v1949
      %v1951 = vrot.slane %v1937, %v1950
      %v1952 = vcombine.low %v540, %v546
      %v1953 = vcombine.high %v540, %v546
      %v1955 = vunpack.c.l.s4 1983009808
      %v1956 = vunpack.c.0.s8 %v1955
      %v1957 = vlaneseq
      %v1958 = vshrl.u32 %v1957, 7
      %v1959 = vsub.s32 %v1956, %v1958
      %v1960 = vrot.slane %v1952, %v1959
      %v1962 = vunpack.c.l.s4 1983009808
      %v1963 = vunpack.c.0.s8 %v1962
      %v1964 = vlaneseq
      %v1965 = vshrl.u32 %v1964, 7
      %v1966 = vsub.s32 %v1963, %v1965
      %v1967 = vrot.slane %v1953, %v1966
      %v1968 = vcombine.low %v1912, %v1928
      %v1969 = vcombine.high %v1912, %v1928
      %v1971 = vunpack.c.l.s4 1934713408
      %v1972 = vunpack.c.0.s8 %v1971
      %v1973 = vlaneseq
      %v1974 = vshrl.u32 %v1973, 7
      %v1975 = vsub.s32 %v1972, %v1974
      %v1976 = vrot.slane %v1968, %v1975
      %v1978 = vunpack.c.l.s4 1934713408
      %v1979 = vunpack.c.0.s8 %v1978
      %v1980 = vlaneseq
      %v1981 = vshrl.u32 %v1980, 7
      %v1982 = vsub.s32 %v1979, %v1981
      %v1983 = vrot.slane %v1969, %v1982
      %v1984 = vcombine.low %v1919, %v1935
      %v1985 = vcombine.high %v1919, %v1935
      %v1987 = vunpack.c.l.s4 1934713408
      %v1988 = vunpack.c.0.s8 %v1987
      %v1989 = vlaneseq
      %v1990 = vshrl.u32 %v1989, 7
      %v1991 = vsub.s32 %v1988, %v1990
      %v1992 = vrot.slane %v1984, %v1991
      %v1994 = vunpack.c.l.s4 1934713408
      %v1995 = vunpack.c.0.s8 %v1994
      %v1996 = vlaneseq
      %v1997 = vshrl.u32 %v1996, 7
      %v1998 = vsub.s32 %v1995, %v1997
      %v1999 = vrot.slane %v1985, %v1998
      %v2000 = vcombine.low %v1944, %v1960
      %v2001 = vcombine.high %v1944, %v1960
      %v2003 = vunpack.c.l.s4 1934713408
      %v2004 = vunpack.c.0.s8 %v2003
      %v2005 = vlaneseq
      %v2006 = vshrl.u32 %v2005, 7
      %v2007 = vsub.s32 %v2004, %v2006
      %v2008 = vrot.slane %v2000, %v2007
      %v2010 = vunpack.c.l.s4 1934713408
      %v2011 = vunpack.c.0.s8 %v2010
      %v2012 = vlaneseq
      %v2013 = vshrl.u32 %v2012, 7
      %v2014 = vsub.s32 %v2011, %v2013
      %v2015 = vrot.slane %v2001, %v2014
      %v2016 = vcombine.low %v1951, %v1967
      %v2017 = vcombine.high %v1951, %v1967
      %v2019 = vunpack.c.l.s4 1934713408
      %v2020 = vunpack.c.0.s8 %v2019
      %v2021 = vlaneseq
      %v2022 = vshrl.u32 %v2021, 7
      %v2023 = vsub.s32 %v2020, %v2022
      %v2024 = vrot.slane %v2016, %v2023
      %v2026 = vunpack.c.l.s4 1934713408
      %v2027 = vunpack.c.0.s8 %v2026
      %v2028 = vlaneseq
      %v2029 = vshrl.u32 %v2028, 7
      %v2030 = vsub.s32 %v2027, %v2029
      %v2031 = vrot.slane %v2017, %v2030
      %v2032 = vcombine.low %v1976, %v2008
      %v2033 = vcombine.high %v1976, %v2008
      %v2034 = vcombine.low %v1983, %v2015
      %v2035 = vcombine.high %v1983, %v2015
      %v2036 = vcombine.low %v1992, %v2024
      %v2037 = vcombine.high %v1992, %v2024
      %v2038 = vcombine.low %v1999, %v2031
      %v2039 = vcombine.high %v1999, %v2031
      %v2040 = vcombine.low %v322, %v553
      %v2041 = vcombine.high %v322, %v553
      %v2043 = vunpack.c.l.s4 1983009808
      %v2044 = vunpack.c.0.s8 %v2043
      %v2045 = vlaneseq
      %v2046 = vshrl.u32 %v2045, 7
      %v2047 = vsub.s32 %v2044, %v2046
      %v2048 = vrot.slane %v2040, %v2047
      %v2050 = vunpack.c.l.s4 1983009808
      %v2051 = vunpack.c.0.s8 %v2050
      %v2052 = vlaneseq
      %v2053 = vshrl.u32 %v2052, 7
      %v2054 = vsub.s32 %v2051, %v2053
      %v2055 = vrot.slane %v2041, %v2054
      %v2056 = vcombine.low %v550, %v556
      %v2057 = vcombine.high %v550, %v556
      %v2059 = vunpack.c.l.s4 1983009808
      %v2060 = vunpack.c.0.s8 %v2059
      %v2061 = vlaneseq
      %v2062 = vshrl.u32 %v2061, 7
      %v2063 = vsub.s32 %v2060, %v2062
      %v2064 = vrot.slane %v2056, %v2063
      %v2066 = vunpack.c.l.s4 1983009808
      %v2067 = vunpack.c.0.s8 %v2066
      %v2068 = vlaneseq
      %v2069 = vshrl.u32 %v2068, 7
      %v2070 = vsub.s32 %v2067, %v2069
      %v2071 = vrot.slane %v2057, %v2070
      %v2072 = vcombine.low %v559, %v565
      %v2073 = vcombine.high %v559, %v565
      %v2075 = vunpack.c.l.s4 1983009808
      %v2076 = vunpack.c.0.s8 %v2075
      %v2077 = vlaneseq
      %v2078 = vshrl.u32 %v2077, 7
      %v2079 = vsub.s32 %v2076, %v2078
      %v2080 = vrot.slane %v2072, %v2079
      %v2082 = vunpack.c.l.s4 1983009808
      %v2083 = vunpack.c.0.s8 %v2082
      %v2084 = vlaneseq
      %v2085 = vshrl.u32 %v2084, 7
      %v2086 = vsub.s32 %v2083, %v2085
      %v2087 = vrot.slane %v2073, %v2086
      %v2088 = vcombine.low %v562, %v568
      %v2089 = vcombine.high %v562, %v568
      %v2091 = vunpack.c.l.s4 1983009808
      %v2092 = vunpack.c.0.s8 %v2091
      %v2093 = vlaneseq
      %v2094 = vshrl.u32 %v2093, 7
      %v2095 = vsub.s32 %v2092, %v2094
      %v2096 = vrot.slane %v2088, %v2095
      %v2098 = vunpack.c.l.s4 1983009808
      %v2099 = vunpack.c.0.s8 %v2098
      %v2100 = vlaneseq
      %v2101 = vshrl.u32 %v2100, 7
      %v2102 = vsub.s32 %v2099, %v2101
      %v2103 = vrot.slane %v2089, %v2102
      %v2104 = vcombine.low %v2048, %v2064
      %v2105 = vcombine.high %v2048, %v2064
      %v2107 = vunpack.c.l.s4 1934713408
      %v2108 = vunpack.c.0.s8 %v2107
      %v2109 = vlaneseq
      %v2110 = vshrl.u32 %v2109, 7
      %v2111 = vsub.s32 %v2108, %v2110
      %v2112 = vrot.slane %v2104, %v2111
      %v2114 = vunpack.c.l.s4 1934713408
      %v2115 = vunpack.c.0.s8 %v2114
      %v2116 = vlaneseq
      %v2117 = vshrl.u32 %v2116, 7
      %v2118 = vsub.s32 %v2115, %v2117
      %v2119 = vrot.slane %v2105, %v2118
      %v2120 = vcombine.low %v2055, %v2071
      %v2121 = vcombine.high %v2055, %v2071
      %v2123 = vunpack.c.l.s4 1934713408
      %v2124 = vunpack.c.0.s8 %v2123
      %v2125 = vlaneseq
      %v2126 = vshrl.u32 %v2125, 7
      %v2127 = vsub.s32 %v2124, %v2126
      %v2128 = vrot.slane %v2120, %v2127
      %v2130 = vunpack.c.l.s4 1934713408
      %v2131 = vunpack.c.0.s8 %v2130
      %v2132 = vlaneseq
      %v2133 = vshrl.u32 %v2132, 7
      %v2134 = vsub.s32 %v2131, %v2133
      %v2135 = vrot.slane %v2121, %v2134
      %v2136 = vcombine.low %v2080, %v2096
      %v2137 = vcombine.high %v2080, %v2096
      %v2139 = vunpack.c.l.s4 1934713408
      %v2140 = vunpack.c.0.s8 %v2139
      %v2141 = vlaneseq
      %v2142 = vshrl.u32 %v2141, 7
      %v2143 = vsub.s32 %v2140, %v2142
      %v2144 = vrot.slane %v2136, %v2143
      %v2146 = vunpack.c.l.s4 1934713408
      %v2147 = vunpack.c.0.s8 %v2146
      %v2148 = vlaneseq
      %v2149 = vshrl.u32 %v2148, 7
      %v2150 = vsub.s32 %v2147, %v2149
      %v2151 = vrot.slane %v2137, %v2150
      %v2152 = vcombine.low %v2087, %v2103
      %v2153 = vcombine.high %v2087, %v2103
      %v2155 = vunpack.c.l.s4 1934713408
      %v2156 = vunpack.c.0.s8 %v2155
      %v2157 = vlaneseq
      %v2158 = vshrl.u32 %v2157, 7
      %v2159 = vsub.s32 %v2156, %v2158
      %v2160 = vrot.slane %v2152, %v2159
      %v2162 = vunpack.c.l.s4 1934713408
      %v2163 = vunpack.c.0.s8 %v2162
      %v2164 = vlaneseq
      %v2165 = vshrl.u32 %v2164, 7
      %v2166 = vsub.s32 %v2163, %v2165
      %v2167 = vrot.slane %v2153, %v2166
      %v2168 = vcombine.low %v2112, %v2144
      %v2169 = vcombine.high %v2112, %v2144
      %v2170 = vcombine.low %v2119, %v2151
      %v2171 = vcombine.high %v2119, %v2151
      %v2172 = vcombine.low %v2128, %v2160
      %v2173 = vcombine.high %v2128, %v2160
      %v2174 = vcombine.low %v2135, %v2167
      %v2175 = vcombine.high %v2135, %v2167
      %v2176 = vcombine.low %v323, %v575
      %v2177 = vcombine.high %v323, %v575
      %v2179 = vunpack.c.l.s4 1983009808
      %v2180 = vunpack.c.0.s8 %v2179
      %v2181 = vlaneseq
      %v2182 = vshrl.u32 %v2181, 7
      %v2183 = vsub.s32 %v2180, %v2182
      %v2184 = vrot.slane %v2176, %v2183
      %v2186 = vunpack.c.l.s4 1983009808
      %v2187 = vunpack.c.0.s8 %v2186
      %v2188 = vlaneseq
      %v2189 = vshrl.u32 %v2188, 7
      %v2190 = vsub.s32 %v2187, %v2189
      %v2191 = vrot.slane %v2177, %v2190
      %v2192 = vcombine.low %v572, %v578
      %v2193 = vcombine.high %v572, %v578
      %v2195 = vunpack.c.l.s4 1983009808
      %v2196 = vunpack.c.0.s8 %v2195
      %v2197 = vlaneseq
      %v2198 = vshrl.u32 %v2197, 7
      %v2199 = vsub.s32 %v2196, %v2198
      %v2200 = vrot.slane %v2192, %v2199
      %v2202 = vunpack.c.l.s4 1983009808
      %v2203 = vunpack.c.0.s8 %v2202
      %v2204 = vlaneseq
      %v2205 = vshrl.u32 %v2204, 7
      %v2206 = vsub.s32 %v2203, %v2205
      %v2207 = vrot.slane %v2193, %v2206
      %v2208 = vcombine.low %v581, %v587
      %v2209 = vcombine.high %v581, %v587
      %v2211 = vunpack.c.l.s4 1983009808
      %v2212 = vunpack.c.0.s8 %v2211
      %v2213 = vlaneseq
      %v2214 = vshrl.u32 %v2213, 7
      %v2215 = vsub.s32 %v2212, %v2214
      %v2216 = vrot.slane %v2208, %v2215
      %v2218 = vunpack.c.l.s4 1983009808
      %v2219 = vunpack.c.0.s8 %v2218
      %v2220 = vlaneseq
      %v2221 = vshrl.u32 %v2220, 7
      %v2222 = vsub.s32 %v2219, %v2221
      %v2223 = vrot.slane %v2209, %v2222
      %v2224 = vcombine.low %v584, %v590
      %v2225 = vcombine.high %v584, %v590
      %v2227 = vunpack.c.l.s4 1983009808
      %v2228 = vunpack.c.0.s8 %v2227
      %v2229 = vlaneseq
      %v2230 = vshrl.u32 %v2229, 7
      %v2231 = vsub.s32 %v2228, %v2230
      %v2232 = vrot.slane %v2224, %v2231
      %v2234 = vunpack.c.l.s4 1983009808
      %v2235 = vunpack.c.0.s8 %v2234
      %v2236 = vlaneseq
      %v2237 = vshrl.u32 %v2236, 7
      %v2238 = vsub.s32 %v2235, %v2237
      %v2239 = vrot.slane %v2225, %v2238
      %v2240 = vcombine.low %v2184, %v2200
      %v2241 = vcombine.high %v2184, %v2200
      %v2243 = vunpack.c.l.s4 1934713408
      %v2244 = vunpack.c.0.s8 %v2243
      %v2245 = vlaneseq
      %v2246 = vshrl.u32 %v2245, 7
      %v2247 = vsub.s32 %v2244, %v2246
      %v2248 = vrot.slane %v2240, %v2247
      %v2250 = vunpack.c.l.s4 1934713408
      %v2251 = vunpack.c.0.s8 %v2250
      %v2252 = vlaneseq
      %v2253 = vshrl.u32 %v2252, 7
      %v2254 = vsub.s32 %v2251, %v2253
      %v2255 = vrot.slane %v2241, %v2254
      %v2256 = vcombine.low %v2191, %v2207
      %v2257 = vcombine.high %v2191, %v2207
      %v2259 = vunpack.c.l.s4 1934713408
      %v2260 = vunpack.c.0.s8 %v2259
      %v2261 = vlaneseq
      %v2262 = vshrl.u32 %v2261, 7
      %v2263 = vsub.s32 %v2260, %v2262
      %v2264 = vrot.slane %v2256, %v2263
      %v2266 = vunpack.c.l.s4 1934713408
      %v2267 = vunpack.c.0.s8 %v2266
      %v2268 = vlaneseq
      %v2269 = vshrl.u32 %v2268, 7
      %v2270 = vsub.s32 %v2267, %v2269
      %v2271 = vrot.slane %v2257, %v2270
      %v2272 = vcombine.low %v2216, %v2232
      %v2273 = vcombine.high %v2216, %v2232
      %v2275 = vunpack.c.l.s4 1934713408
      %v2276 = vunpack.c.0.s8 %v2275
      %v2277 = vlaneseq
      %v2278 = vshrl.u32 %v2277, 7
      %v2279 = vsub.s32 %v2276, %v2278
      %v2280 = vrot.slane %v2272, %v2279
      %v2282 = vunpack.c.l.s4 1934713408
      %v2283 = vunpack.c.0.s8 %v2282
      %v2284 = vlaneseq
      %v2285 = vshrl.u32 %v2284, 7
      %v2286 = vsub.s32 %v2283, %v2285
      %v2287 = vrot.slane %v2273, %v2286
      %v2288 = vcombine.low %v2223, %v2239
      %v2289 = vcombine.high %v2223, %v2239
      %v2291 = vunpack.c.l.s4 1934713408
      %v2292 = vunpack.c.0.s8 %v2291
      %v2293 = vlaneseq
      %v2294 = vshrl.u32 %v2293, 7
      %v2295 = vsub.s32 %v2292, %v2294
      %v2296 = vrot.slane %v2288, %v2295
      %v2298 = vunpack.c.l.s4 1934713408
      %v2299 = vunpack.c.0.s8 %v2298
      %v2300 = vlaneseq
      %v2301 = vshrl.u32 %v2300, 7
      %v2302 = vsub.s32 %v2299, %v2301
      %v2303 = vrot.slane %v2289, %v2302
      %v2304 = vcombine.low %v2248, %v2280
      %v2305 = vcombine.high %v2248, %v2280
      %v2306 = vcombine.low %v2255, %v2287
      %v2307 = vcombine.high %v2255, %v2287
      %v2308 = vcombine.low %v2264, %v2296
      %v2309 = vcombine.high %v2264, %v2296
      %v2310 = vcombine.low %v2271, %v2303
      %v2311 = vcombine.high %v2271, %v2303
      %v2312 = vcombine.low %v324, %v597
      %v2313 = vcombine.high %v324, %v597
      %v2315 = vunpack.c.l.s4 1983009808
      %v2316 = vunpack.c.0.s8 %v2315
      %v2317 = vlaneseq
      %v2318 = vshrl.u32 %v2317, 7
      %v2319 = vsub.s32 %v2316, %v2318
      %v2320 = vrot.slane %v2312, %v2319
      %v2322 = vunpack.c.l.s4 1983009808
      %v2323 = vunpack.c.0.s8 %v2322
      %v2324 = vlaneseq
      %v2325 = vshrl.u32 %v2324, 7
      %v2326 = vsub.s32 %v2323, %v2325
      %v2327 = vrot.slane %v2313, %v2326
      %v2328 = vcombine.low %v594, %v600
      %v2329 = vcombine.high %v594, %v600
      %v2331 = vunpack.c.l.s4 1983009808
      %v2332 = vunpack.c.0.s8 %v2331
      %v2333 = vlaneseq
      %v2334 = vshrl.u32 %v2333, 7
      %v2335 = vsub.s32 %v2332, %v2334
      %v2336 = vrot.slane %v2328, %v2335
      %v2338 = vunpack.c.l.s4 1983009808
      %v2339 = vunpack.c.0.s8 %v2338
      %v2340 = vlaneseq
      %v2341 = vshrl.u32 %v2340, 7
      %v2342 = vsub.s32 %v2339, %v2341
      %v2343 = vrot.slane %v2329, %v2342
      %v2344 = vcombine.low %v603, %v609
      %v2345 = vcombine.high %v603, %v609
      %v2347 = vunpack.c.l.s4 1983009808
      %v2348 = vunpack.c.0.s8 %v2347
      %v2349 = vlaneseq
      %v2350 = vshrl.u32 %v2349, 7
      %v2351 = vsub.s32 %v2348, %v2350
      %v2352 = vrot.slane %v2344, %v2351
      %v2354 = vunpack.c.l.s4 1983009808
      %v2355 = vunpack.c.0.s8 %v2354
      %v2356 = vlaneseq
      %v2357 = vshrl.u32 %v2356, 7
      %v2358 = vsub.s32 %v2355, %v2357
      %v2359 = vrot.slane %v2345, %v2358
      %v2360 = vcombine.low %v606, %v612
      %v2361 = vcombine.high %v606, %v612
      %v2363 = vunpack.c.l.s4 1983009808
      %v2364 = vunpack.c.0.s8 %v2363
      %v2365 = vlaneseq
      %v2366 = vshrl.u32 %v2365, 7
      %v2367 = vsub.s32 %v2364, %v2366
      %v2368 = vrot.slane %v2360, %v2367
      %v2370 = vunpack.c.l.s4 1983009808
      %v2371 = vunpack.c.0.s8 %v2370
      %v2372 = vlaneseq
      %v2373 = vshrl.u32 %v2372, 7
      %v2374 = vsub.s32 %v2371, %v2373
      %v2375 = vrot.slane %v2361, %v2374
      %v2376 = vcombine.low %v2320, %v2336
      %v2377 = vcombine.high %v2320, %v2336
      %v2379 = vunpack.c.l.s4 1934713408
      %v2380 = vunpack.c.0.s8 %v2379
      %v2381 = vlaneseq
      %v2382 = vshrl.u32 %v2381, 7
      %v2383 = vsub.s32 %v2380, %v2382
      %v2384 = vrot.slane %v2376, %v2383
      %v2386 = vunpack.c.l.s4 1934713408
      %v2387 = vunpack.c.0.s8 %v2386
      %v2388 = vlaneseq
      %v2389 = vshrl.u32 %v2388, 7
      %v2390 = vsub.s32 %v2387, %v2389
      %v2391 = vrot.slane %v2377, %v2390
      %v2392 = vcombine.low %v2327, %v2343
      %v2393 = vcombine.high %v2327, %v2343
      %v2395 = vunpack.c.l.s4 1934713408
      %v2396 = vunpack.c.0.s8 %v2395
      %v2397 = vlaneseq
      %v2398 = vshrl.u32 %v2397, 7
      %v2399 = vsub.s32 %v2396, %v2398
      %v2400 = vrot.slane %v2392, %v2399
      %v2402 = vunpack.c.l.s4 1934713408
      %v2403 = vunpack.c.0.s8 %v2402
      %v2404 = vlaneseq
      %v2405 = vshrl.u32 %v2404, 7
      %v2406 = vsub.s32 %v2403, %v2405
      %v2407 = vrot.slane %v2393, %v2406
      %v2408 = vcombine.low %v2352, %v2368
      %v2409 = vcombine.high %v2352, %v2368
      %v2411 = vunpack.c.l.s4 1934713408
      %v2412 = vunpack.c.0.s8 %v2411
      %v2413 = vlaneseq
      %v2414 = vshrl.u32 %v2413, 7
      %v2415 = vsub.s32 %v2412, %v2414
      %v2416 = vrot.slane %v2408, %v2415
      %v2418 = vunpack.c.l.s4 1934713408
      %v2419 = vunpack.c.0.s8 %v2418
      %v2420 = vlaneseq
      %v2421 = vshrl.u32 %v2420, 7
      %v2422 = vsub.s32 %v2419, %v2421
      %v2423 = vrot.slane %v2409, %v2422
      %v2424 = vcombine.low %v2359, %v2375
      %v2425 = vcombine.high %v2359, %v2375
      %v2427 = vunpack.c.l.s4 1934713408
      %v2428 = vunpack.c.0.s8 %v2427
      %v2429 = vlaneseq
      %v2430 = vshrl.u32 %v2429, 7
      %v2431 = vsub.s32 %v2428, %v2430
      %v2432 = vrot.slane %v2424, %v2431
      %v2434 = vunpack.c.l.s4 1934713408
      %v2435 = vunpack.c.0.s8 %v2434
      %v2436 = vlaneseq
      %v2437 = vshrl.u32 %v2436, 7
      %v2438 = vsub.s32 %v2435, %v2437
      %v2439 = vrot.slane %v2425, %v2438
      %v2440 = vcombine.low %v2384, %v2416
      %v2441 = vcombine.high %v2384, %v2416
      %v2442 = vcombine.low %v2391, %v2423
      %v2443 = vcombine.high %v2391, %v2423
      %v2444 = vcombine.low %v2400, %v2432
      %v2445 = vcombine.high %v2400, %v2432
      %v2446 = vcombine.low %v2407, %v2439
      %v2447 = vcombine.high %v2407, %v2439
      %v2448 = vcombine.low %v325, %v619
      %v2449 = vcombine.high %v325, %v619
      %v2451 = vunpack.c.l.s4 1983009808
      %v2452 = vunpack.c.0.s8 %v2451
      %v2453 = vlaneseq
      %v2454 = vshrl.u32 %v2453, 7
      %v2455 = vsub.s32 %v2452, %v2454
      %v2456 = vrot.slane %v2448, %v2455
      %v2458 = vunpack.c.l.s4 1983009808
      %v2459 = vunpack.c.0.s8 %v2458
      %v2460 = vlaneseq
      %v2461 = vshrl.u32 %v2460, 7
      %v2462 = vsub.s32 %v2459, %v2461
      %v2463 = vrot.slane %v2449, %v2462
      %v2464 = vcombine.low %v616, %v622
      %v2465 = vcombine.high %v616, %v622
      %v2467 = vunpack.c.l.s4 1983009808
      %v2468 = vunpack.c.0.s8 %v2467
      %v2469 = vlaneseq
      %v2470 = vshrl.u32 %v2469, 7
      %v2471 = vsub.s32 %v2468, %v2470
      %v2472 = vrot.slane %v2464, %v2471
      %v2474 = vunpack.c.l.s4 1983009808
      %v2475 = vunpack.c.0.s8 %v2474
      %v2476 = vlaneseq
      %v2477 = vshrl.u32 %v2476, 7
      %v2478 = vsub.s32 %v2475, %v2477
      %v2479 = vrot.slane %v2465, %v2478
      %v2480 = vcombine.low %v625, %v631
      %v2481 = vcombine.high %v625, %v631
      %v2483 = vunpack.c.l.s4 1983009808
      %v2484 = vunpack.c.0.s8 %v2483
      %v2485 = vlaneseq
      %v2486 = vshrl.u32 %v2485, 7
      %v2487 = vsub.s32 %v2484, %v2486
      %v2488 = vrot.slane %v2480, %v2487
      %v2490 = vunpack.c.l.s4 1983009808
      %v2491 = vunpack.c.0.s8 %v2490
      %v2492 = vlaneseq
      %v2493 = vshrl.u32 %v2492, 7
      %v2494 = vsub.s32 %v2491, %v2493
      %v2495 = vrot.slane %v2481, %v2494
      %v2496 = vcombine.low %v628, %v634
      %v2497 = vcombine.high %v628, %v634
      %v2499 = vunpack.c.l.s4 1983009808
      %v2500 = vunpack.c.0.s8 %v2499
      %v2501 = vlaneseq
      %v2502 = vshrl.u32 %v2501, 7
      %v2503 = vsub.s32 %v2500, %v2502
      %v2504 = vrot.slane %v2496, %v2503
      %v2506 = vunpack.c.l.s4 1983009808
      %v2507 = vunpack.c.0.s8 %v2506
      %v2508 = vlaneseq
      %v2509 = vshrl.u32 %v2508, 7
      %v2510 = vsub.s32 %v2507, %v2509
      %v2511 = vrot.slane %v2497, %v2510
      %v2512 = vcombine.low %v2456, %v2472
      %v2513 = vcombine.high %v2456, %v2472
      %v2515 = vunpack.c.l.s4 1934713408
      %v2516 = vunpack.c.0.s8 %v2515
      %v2517 = vlaneseq
      %v2518 = vshrl.u32 %v2517, 7
      %v2519 = vsub.s32 %v2516, %v2518
      %v2520 = vrot.slane %v2512, %v2519
      %v2522 = vunpack.c.l.s4 1934713408
      %v2523 = vunpack.c.0.s8 %v2522
      %v2524 = vlaneseq
      %v2525 = vshrl.u32 %v2524, 7
      %v2526 = vsub.s32 %v2523, %v2525
      %v2527 = vrot.slane %v2513, %v2526
      %v2528 = vcombine.low %v2463, %v2479
      %v2529 = vcombine.high %v2463, %v2479
      %v2531 = vunpack.c.l.s4 1934713408
      %v2532 = vunpack.c.0.s8 %v2531
      %v2533 = vlaneseq
      %v2534 = vshrl.u32 %v2533, 7
      %v2535 = vsub.s32 %v2532, %v2534
      %v2536 = vrot.slane %v2528, %v2535
      %v2538 = vunpack.c.l.s4 1934713408
      %v2539 = vunpack.c.0.s8 %v2538
      %v2540 = vlaneseq
      %v2541 = vshrl.u32 %v2540, 7
      %v2542 = vsub.s32 %v2539, %v2541
      %v2543 = vrot.slane %v2529, %v2542
      %v2544 = vcombine.low %v2488, %v2504
      %v2545 = vcombine.high %v2488, %v2504
      %v2547 = vunpack.c.l.s4 1934713408
      %v2548 = vunpack.c.0.s8 %v2547
      %v2549 = vlaneseq
      %v2550 = vshrl.u32 %v2549, 7
      %v2551 = vsub.s32 %v2548, %v2550
      %v2552 = vrot.slane %v2544, %v2551
      %v2554 = vunpack.c.l.s4 1934713408
      %v2555 = vunpack.c.0.s8 %v2554
      %v2556 = vlaneseq
      %v2557 = vshrl.u32 %v2556, 7
      %v2558 = vsub.s32 %v2555, %v2557
      %v2559 = vrot.slane %v2545, %v2558
      %v2560 = vcombine.low %v2495, %v2511
      %v2561 = vcombine.high %v2495, %v2511
      %v2563 = vunpack.c.l.s4 1934713408
      %v2564 = vunpack.c.0.s8 %v2563
      %v2565 = vlaneseq
      %v2566 = vshrl.u32 %v2565, 7
      %v2567 = vsub.s32 %v2564, %v2566
      %v2568 = vrot.slane %v2560, %v2567
      %v2570 = vunpack.c.l.s4 1934713408
      %v2571 = vunpack.c.0.s8 %v2570
      %v2572 = vlaneseq
      %v2573 = vshrl.u32 %v2572, 7
      %v2574 = vsub.s32 %v2571, %v2573
      %v2575 = vrot.slane %v2561, %v2574
      %v2576 = vcombine.low %v2520, %v2552
      %v2577 = vcombine.high %v2520, %v2552
      %v2578 = vcombine.low %v2527, %v2559
      %v2579 = vcombine.high %v2527, %v2559
      %v2580 = vcombine.low %v2536, %v2568
      %v2581 = vcombine.high %v2536, %v2568
      %v2582 = vcombine.low %v2543, %v2575
      %v2583 = vcombine.high %v2543, %v2575
      %v2584 = vcombine.low %v326, %v641
      %v2585 = vcombine.high %v326, %v641
      %v2587 = vunpack.c.l.s4 1983009808
      %v2588 = vunpack.c.0.s8 %v2587
      %v2589 = vlaneseq
      %v2590 = vshrl.u32 %v2589, 7
      %v2591 = vsub.s32 %v2588, %v2590
      %v2592 = vrot.slane %v2584, %v2591
      %v2594 = vunpack.c.l.s4 1983009808
      %v2595 = vunpack.c.0.s8 %v2594
      %v2596 = vlaneseq
      %v2597 = vshrl.u32 %v2596, 7
      %v2598 = vsub.s32 %v2595, %v2597
      %v2599 = vrot.slane %v2585, %v2598
      %v2600 = vcombine.low %v638, %v644
      %v2601 = vcombine.high %v638, %v644
      %v2603 = vunpack.c.l.s4 1983009808
      %v2604 = vunpack.c.0.s8 %v2603
      %v2605 = vlaneseq
      %v2606 = vshrl.u32 %v2605, 7
      %v2607 = vsub.s32 %v2604, %v2606
      %v2608 = vrot.slane %v2600, %v2607
      %v2610 = vunpack.c.l.s4 1983009808
      %v2611 = vunpack.c.0.s8 %v2610
      %v2612 = vlaneseq
      %v2613 = vshrl.u32 %v2612, 7
      %v2614 = vsub.s32 %v2611, %v2613
      %v2615 = vrot.slane %v2601, %v2614
      %v2616 = vcombine.low %v647, %v653
      %v2617 = vcombine.high %v647, %v653
      %v2619 = vunpack.c.l.s4 1983009808
      %v2620 = vunpack.c.0.s8 %v2619
      %v2621 = vlaneseq
      %v2622 = vshrl.u32 %v2621, 7
      %v2623 = vsub.s32 %v2620, %v2622
      %v2624 = vrot.slane %v2616, %v2623
      %v2626 = vunpack.c.l.s4 1983009808
      %v2627 = vunpack.c.0.s8 %v2626
      %v2628 = vlaneseq
      %v2629 = vshrl.u32 %v2628, 7
      %v2630 = vsub.s32 %v2627, %v2629
      %v2631 = vrot.slane %v2617, %v2630
      %v2632 = vcombine.low %v650, %v656
      %v2633 = vcombine.high %v650, %v656
      %v2635 = vunpack.c.l.s4 1983009808
      %v2636 = vunpack.c.0.s8 %v2635
      %v2637 = vlaneseq
      %v2638 = vshrl.u32 %v2637, 7
      %v2639 = vsub.s32 %v2636, %v2638
      %v2640 = vrot.slane %v2632, %v2639
      %v2642 = vunpack.c.l.s4 1983009808
      %v2643 = vunpack.c.0.s8 %v2642
      %v2644 = vlaneseq
      %v2645 = vshrl.u32 %v2644, 7
      %v2646 = vsub.s32 %v2643, %v2645
      %v2647 = vrot.slane %v2633, %v2646
      %v2648 = vcombine.low %v2592, %v2608
      %v2649 = vcombine.high %v2592, %v2608
      %v2651 = vunpack.c.l.s4 1934713408
      %v2652 = vunpack.c.0.s8 %v2651
      %v2653 = vlaneseq
      %v2654 = vshrl.u32 %v2653, 7
      %v2655 = vsub.s32 %v2652, %v2654
      %v2656 = vrot.slane %v2648, %v2655
      %v2658 = vunpack.c.l.s4 1934713408
      %v2659 = vunpack.c.0.s8 %v2658
      %v2660 = vlaneseq
      %v2661 = vshrl.u32 %v2660, 7
      %v2662 = vsub.s32 %v2659, %v2661
      %v2663 = vrot.slane %v2649, %v2662
      %v2664 = vcombine.low %v2599, %v2615
      %v2665 = vcombine.high %v2599, %v2615
      %v2667 = vunpack.c.l.s4 1934713408
      %v2668 = vunpack.c.0.s8 %v2667
      %v2669 = vlaneseq
      %v2670 = vshrl.u32 %v2669, 7
      %v2671 = vsub.s32 %v2668, %v2670
      %v2672 = vrot.slane %v2664, %v2671
      %v2674 = vunpack.c.l.s4 1934713408
      %v2675 = vunpack.c.0.s8 %v2674
      %v2676 = vlaneseq
      %v2677 = vshrl.u32 %v2676, 7
      %v2678 = vsub.s32 %v2675, %v2677
      %v2679 = vrot.slane %v2665, %v2678
      %v2680 = vcombine.low %v2624, %v2640
      %v2681 = vcombine.high %v2624, %v2640
      %v2683 = vunpack.c.l.s4 1934713408
      %v2684 = vunpack.c.0.s8 %v2683
      %v2685 = vlaneseq
      %v2686 = vshrl.u32 %v2685, 7
      %v2687 = vsub.s32 %v2684, %v2686
      %v2688 = vrot.slane %v2680, %v2687
      %v2690 = vunpack.c.l.s4 1934713408
      %v2691 = vunpack.c.0.s8 %v2690
      %v2692 = vlaneseq
      %v2693 = vshrl.u32 %v2692, 7
      %v2694 = vsub.s32 %v2691, %v2693
      %v2695 = vrot.slane %v2681, %v2694
      %v2696 = vcombine.low %v2631, %v2647
      %v2697 = vcombine.high %v2631, %v2647
      %v2699 = vunpack.c.l.s4 1934713408
      %v2700 = vunpack.c.0.s8 %v2699
      %v2701 = vlaneseq
      %v2702 = vshrl.u32 %v2701, 7
      %v2703 = vsub.s32 %v2700, %v2702
      %v2704 = vrot.slane %v2696, %v2703
      %v2706 = vunpack.c.l.s4 1934713408
      %v2707 = vunpack.c.0.s8 %v2706
      %v2708 = vlaneseq
      %v2709 = vshrl.u32 %v2708, 7
      %v2710 = vsub.s32 %v2707, %v2709
      %v2711 = vrot.slane %v2697, %v2710
      %v2712 = vcombine.low %v2656, %v2688
      %v2713 = vcombine.high %v2656, %v2688
      %v2714 = vcombine.low %v2663, %v2695
      %v2715 = vcombine.high %v2663, %v2695
      %v2716 = vcombine.low %v2672, %v2704
      %v2717 = vcombine.high %v2672, %v2704
      %v2718 = vcombine.low %v2679, %v2711
      %v2719 = vcombine.high %v2679, %v2711
      %v2720 = vcombine.low %v327, %v663
      %v2721 = vcombine.high %v327, %v663
      %v2723 = vunpack.c.l.s4 1983009808
      %v2724 = vunpack.c.0.s8 %v2723
      %v2725 = vlaneseq
      %v2726 = vshrl.u32 %v2725, 7
      %v2727 = vsub.s32 %v2724, %v2726
      %v2728 = vrot.slane %v2720, %v2727
      %v2730 = vunpack.c.l.s4 1983009808
      %v2731 = vunpack.c.0.s8 %v2730
      %v2732 = vlaneseq
      %v2733 = vshrl.u32 %v2732, 7
      %v2734 = vsub.s32 %v2731, %v2733
      %v2735 = vrot.slane %v2721, %v2734
      %v2736 = vcombine.low %v660, %v666
      %v2737 = vcombine.high %v660, %v666
      %v2739 = vunpack.c.l.s4 1983009808
      %v2740 = vunpack.c.0.s8 %v2739
      %v2741 = vlaneseq
      %v2742 = vshrl.u32 %v2741, 7
      %v2743 = vsub.s32 %v2740, %v2742
      %v2744 = vrot.slane %v2736, %v2743
      %v2746 = vunpack.c.l.s4 1983009808
      %v2747 = vunpack.c.0.s8 %v2746
      %v2748 = vlaneseq
      %v2749 = vshrl.u32 %v2748, 7
      %v2750 = vsub.s32 %v2747, %v2749
      %v2751 = vrot.slane %v2737, %v2750
      %v2752 = vcombine.low %v669, %v675
      %v2753 = vcombine.high %v669, %v675
      %v2755 = vunpack.c.l.s4 1983009808
      %v2756 = vunpack.c.0.s8 %v2755
      %v2757 = vlaneseq
      %v2758 = vshrl.u32 %v2757, 7
      %v2759 = vsub.s32 %v2756, %v2758
      %v2760 = vrot.slane %v2752, %v2759
      %v2762 = vunpack.c.l.s4 1983009808
      %v2763 = vunpack.c.0.s8 %v2762
      %v2764 = vlaneseq
      %v2765 = vshrl.u32 %v2764, 7
      %v2766 = vsub.s32 %v2763, %v2765
      %v2767 = vrot.slane %v2753, %v2766
      %v2768 = vcombine.low %v672, %v678
      %v2769 = vcombine.high %v672, %v678
      %v2771 = vunpack.c.l.s4 1983009808
      %v2772 = vunpack.c.0.s8 %v2771
      %v2773 = vlaneseq
      %v2774 = vshrl.u32 %v2773, 7
      %v2775 = vsub.s32 %v2772, %v2774
      %v2776 = vrot.slane %v2768, %v2775
      %v2778 = vunpack.c.l.s4 1983009808
      %v2779 = vunpack.c.0.s8 %v2778
      %v2780 = vlaneseq
      %v2781 = vshrl.u32 %v2780, 7
      %v2782 = vsub.s32 %v2779, %v2781
      %v2783 = vrot.slane %v2769, %v2782
      %v2784 = vcombine.low %v2728, %v2744
      %v2785 = vcombine.high %v2728, %v2744
      %v2787 = vunpack.c.l.s4 1934713408
      %v2788 = vunpack.c.0.s8 %v2787
      %v2789 = vlaneseq
      %v2790 = vshrl.u32 %v2789, 7
      %v2791 = vsub.s32 %v2788, %v2790
      %v2792 = vrot.slane %v2784, %v2791
      %v2794 = vunpack.c.l.s4 1934713408
      %v2795 = vunpack.c.0.s8 %v2794
      %v2796 = vlaneseq
      %v2797 = vshrl.u32 %v2796, 7
      %v2798 = vsub.s32 %v2795, %v2797
      %v2799 = vrot.slane %v2785, %v2798
      %v2800 = vcombine.low %v2735, %v2751
      %v2801 = vcombine.high %v2735, %v2751
      %v2803 = vunpack.c.l.s4 1934713408
      %v2804 = vunpack.c.0.s8 %v2803
      %v2805 = vlaneseq
      %v2806 = vshrl.u32 %v2805, 7
      %v2807 = vsub.s32 %v2804, %v2806
      %v2808 = vrot.slane %v2800, %v2807
      %v2810 = vunpack.c.l.s4 1934713408
      %v2811 = vunpack.c.0.s8 %v2810
      %v2812 = vlaneseq
      %v2813 = vshrl.u32 %v2812, 7
      %v2814 = vsub.s32 %v2811, %v2813
      %v2815 = vrot.slane %v2801, %v2814
      %v2816 = vcombine.low %v2760, %v2776
      %v2817 = vcombine.high %v2760, %v2776
      %v2819 = vunpack.c.l.s4 1934713408
      %v2820 = vunpack.c.0.s8 %v2819
      %v2821 = vlaneseq
      %v2822 = vshrl.u32 %v2821, 7
      %v2823 = vsub.s32 %v2820, %v2822
      %v2824 = vrot.slane %v2816, %v2823
      %v2826 = vunpack.c.l.s4 1934713408
      %v2827 = vunpack.c.0.s8 %v2826
      %v2828 = vlaneseq
      %v2829 = vshrl.u32 %v2828, 7
      %v2830 = vsub.s32 %v2827, %v2829
      %v2831 = vrot.slane %v2817, %v2830
      %v2832 = vcombine.low %v2767, %v2783
      %v2833 = vcombine.high %v2767, %v2783
      %v2835 = vunpack.c.l.s4 1934713408
      %v2836 = vunpack.c.0.s8 %v2835
      %v2837 = vlaneseq
      %v2838 = vshrl.u32 %v2837, 7
      %v2839 = vsub.s32 %v2836, %v2838
      %v2840 = vrot.slane %v2832, %v2839
      %v2842 = vunpack.c.l.s4 1934713408
      %v2843 = vunpack.c.0.s8 %v2842
      %v2844 = vlaneseq
      %v2845 = vshrl.u32 %v2844, 7
      %v2846 = vsub.s32 %v2843, %v2845
      %v2847 = vrot.slane %v2833, %v2846
      %v2848 = vcombine.low %v2792, %v2824
      %v2849 = vcombine.high %v2792, %v2824
      %v2850 = vcombine.low %v2799, %v2831
      %v2851 = vcombine.high %v2799, %v2831
      %v2852 = vcombine.low %v2808, %v2840
      %v2853 = vcombine.high %v2808, %v2840
      %v2854 = vcombine.low %v2815, %v2847
      %v2855 = vcombine.high %v2815, %v2847
      %vm2856 = vcmask 130048
      %v2857 = vsel %vm2856, %v808, -inf
      %2858 = vmax.xlane.f32.xlu0 %v2857
      %v2859 = vpop.xlane.xlu0 %2858
      %v2860 = vsel %vm2856, %v944, -inf
      %2861 = vmax.xlane.f32.xlu0 %v2860
      %v2862 = vpop.xlane.xlu0 %2861
      %v2863 = vsel %vm2856, %v1080, -inf
      %2864 = vmax.xlane.f32.xlu0 %v2863
      %v2865 = vpop.xlane.xlu0 %2864
      %v2866 = vsel %vm2856, %v1216, -inf
      %2867 = vmax.xlane.f32.xlu0 %v2866
      %v2868 = vpop.xlane.xlu0 %2867
      %v2869 = vsel %vm2856, %v1352, -inf
      %2870 = vmax.xlane.f32.xlu0 %v2869
      %v2871 = vpop.xlane.xlu0 %2870
      %v2872 = vsel %vm2856, %v1488, -inf
      %2873 = vmax.xlane.f32.xlu0 %v2872
      %v2874 = vpop.xlane.xlu0 %2873
      %v2875 = vsel %vm2856, %v1624, -inf
      %2876 = vmax.xlane.f32.xlu0 %v2875
      %v2877 = vpop.xlane.xlu0 %2876
      %v2878 = vsel %vm2856, %v1760, -inf
      %2879 = vmax.xlane.f32.xlu0 %v2878
      %v2880 = vpop.xlane.xlu0 %2879
      %v2881 = vsel %vm2856, %v1896, -inf
      %2882 = vmax.xlane.f32.xlu0 %v2881
      %v2883 = vpop.xlane.xlu0 %2882
      %v2884 = vsel %vm2856, %v2032, -inf
      %2885 = vmax.xlane.f32.xlu0 %v2884
      %v2886 = vpop.xlane.xlu0 %2885
      %v2887 = vsel %vm2856, %v2168, -inf
      %2888 = vmax.xlane.f32.xlu0 %v2887
      %v2889 = vpop.xlane.xlu0 %2888
      %v2890 = vsel %vm2856, %v2304, -inf
      %2891 = vmax.xlane.f32.xlu0 %v2890
      %v2892 = vpop.xlane.xlu0 %2891
      %v2893 = vsel %vm2856, %v2440, -inf
      %2894 = vmax.xlane.f32.xlu0 %v2893
      %v2895 = vpop.xlane.xlu0 %2894
      %v2896 = vsel %vm2856, %v2576, -inf
      %2897 = vmax.xlane.f32.xlu0 %v2896
      %v2898 = vpop.xlane.xlu0 %2897
      %v2899 = vsel %vm2856, %v2712, -inf
      %2900 = vmax.xlane.f32.xlu0 %v2899
      %v2901 = vpop.xlane.xlu0 %2900
      %v2902 = vsel %vm2856, %v2848, -inf
      %2903 = vmax.xlane.f32.xlu0 %v2902
      %v2904 = vpop.xlane.xlu0 %2903
      %v2905 = vsel %vm2856, %v809, -inf
      %2906 = vmax.xlane.f32.xlu0 %v2905
      %v2907 = vpop.xlane.xlu0 %2906
      %v2908 = vsel %vm2856, %v945, -inf
      %2909 = vmax.xlane.f32.xlu0 %v2908
      %v2910 = vpop.xlane.xlu0 %2909
      %v2911 = vsel %vm2856, %v1081, -inf
      %2912 = vmax.xlane.f32.xlu0 %v2911
      %v2913 = vpop.xlane.xlu0 %2912
      %v2914 = vsel %vm2856, %v1217, -inf
      %2915 = vmax.xlane.f32.xlu0 %v2914
      %v2916 = vpop.xlane.xlu0 %2915
      %v2917 = vsel %vm2856, %v1353, -inf
      %2918 = vmax.xlane.f32.xlu0 %v2917
      %v2919 = vpop.xlane.xlu0 %2918
      %v2920 = vsel %vm2856, %v1489, -inf
      %2921 = vmax.xlane.f32.xlu0 %v2920
      %v2922 = vpop.xlane.xlu0 %2921
      %v2923 = vsel %vm2856, %v1625, -inf
      %2924 = vmax.xlane.f32.xlu0 %v2923
      %v2925 = vpop.xlane.xlu0 %2924
      %v2926 = vsel %vm2856, %v1761, -inf
      %2927 = vmax.xlane.f32.xlu0 %v2926
      %v2928 = vpop.xlane.xlu0 %2927
      %v2929 = vsel %vm2856, %v1897, -inf
      %2930 = vmax.xlane.f32.xlu0 %v2929
      %v2931 = vpop.xlane.xlu0 %2930
      %v2932 = vsel %vm2856, %v2033, -inf
      %2933 = vmax.xlane.f32.xlu0 %v2932
      %v2934 = vpop.xlane.xlu0 %2933
      %v2935 = vsel %vm2856, %v2169, -inf
      %2936 = vmax.xlane.f32.xlu0 %v2935
      %v2937 = vpop.xlane.xlu0 %2936
      %v2938 = vsel %vm2856, %v2305, -inf
      %2939 = vmax.xlane.f32.xlu0 %v2938
      %v2940 = vpop.xlane.xlu0 %2939
      %v2941 = vsel %vm2856, %v2441, -inf
      %2942 = vmax.xlane.f32.xlu0 %v2941
      %v2943 = vpop.xlane.xlu0 %2942
      %v2944 = vsel %vm2856, %v2577, -inf
      %2945 = vmax.xlane.f32.xlu0 %v2944
      %v2946 = vpop.xlane.xlu0 %2945
      %v2947 = vsel %vm2856, %v2713, -inf
      %2948 = vmax.xlane.f32.xlu0 %v2947
      %v2949 = vpop.xlane.xlu0 %2948
      %v2950 = vsel %vm2856, %v2849, -inf
      %2951 = vmax.xlane.f32.xlu0 %v2950
      %v2952 = vpop.xlane.xlu0 %2951
      %v2953 = vsel %vm2856, %v810, -inf
      %2954 = vmax.xlane.f32.xlu0 %v2953
      %v2955 = vpop.xlane.xlu0 %2954
      %v2956 = vsel %vm2856, %v946, -inf
      %2957 = vmax.xlane.f32.xlu0 %v2956
      %v2958 = vpop.xlane.xlu0 %2957
      %v2959 = vsel %vm2856, %v1082, -inf
      %2960 = vmax.xlane.f32.xlu0 %v2959
      %v2961 = vpop.xlane.xlu0 %2960
      %v2962 = vsel %vm2856, %v1218, -inf
      %2963 = vmax.xlane.f32.xlu0 %v2962
      %v2964 = vpop.xlane.xlu0 %2963
      %v2965 = vsel %vm2856, %v1354, -inf
      %2966 = vmax.xlane.f32.xlu0 %v2965
      %v2967 = vpop.xlane.xlu0 %2966
      %v2968 = vsel %vm2856, %v1490, -inf
      %2969 = vmax.xlane.f32.xlu0 %v2968
      %v2970 = vpop.xlane.xlu0 %2969
      %v2971 = vsel %vm2856, %v1626, -inf
      %2972 = vmax.xlane.f32.xlu0 %v2971
      %v2973 = vpop.xlane.xlu0 %2972
      %v2974 = vsel %vm2856, %v1762, -inf
      %2975 = vmax.xlane.f32.xlu0 %v2974
      %v2976 = vpop.xlane.xlu0 %2975
      %v2977 = vsel %vm2856, %v1898, -inf
      %2978 = vmax.xlane.f32.xlu0 %v2977
      %v2979 = vpop.xlane.xlu0 %2978
      %v2980 = vsel %vm2856, %v2034, -inf
      %2981 = vmax.xlane.f32.xlu0 %v2980
      %v2982 = vpop.xlane.xlu0 %2981
      %v2983 = vsel %vm2856, %v2170, -inf
      %2984 = vmax.xlane.f32.xlu0 %v2983
      %v2985 = vpop.xlane.xlu0 %2984
      %v2986 = vsel %vm2856, %v2306, -inf
      %2987 = vmax.xlane.f32.xlu0 %v2986
      %v2988 = vpop.xlane.xlu0 %2987
      %v2989 = vsel %vm2856, %v2442, -inf
      %2990 = vmax.xlane.f32.xlu0 %v2989
      %v2991 = vpop.xlane.xlu0 %2990
      %v2992 = vsel %vm2856, %v2578, -inf
      %2993 = vmax.xlane.f32.xlu0 %v2992
      %v2994 = vpop.xlane.xlu0 %2993
      %v2995 = vsel %vm2856, %v2714, -inf
      %2996 = vmax.xlane.f32.xlu0 %v2995
      %v2997 = vpop.xlane.xlu0 %2996
      %v2998 = vsel %vm2856, %v2850, -inf
      %2999 = vmax.xlane.f32.xlu0 %v2998
      %v3000 = vpop.xlane.xlu0 %2999
      %v3001 = vsel %vm2856, %v811, -inf
      %3002 = vmax.xlane.f32.xlu0 %v3001
      %v3003 = vpop.xlane.xlu0 %3002
      %v3004 = vsel %vm2856, %v947, -inf
      %3005 = vmax.xlane.f32.xlu0 %v3004
      %v3006 = vpop.xlane.xlu0 %3005
      %v3007 = vsel %vm2856, %v1083, -inf
      %3008 = vmax.xlane.f32.xlu0 %v3007
      %v3009 = vpop.xlane.xlu0 %3008
      %v3010 = vsel %vm2856, %v1219, -inf
      %3011 = vmax.xlane.f32.xlu0 %v3010
      %v3012 = vpop.xlane.xlu0 %3011
      %v3013 = vsel %vm2856, %v1355, -inf
      %3014 = vmax.xlane.f32.xlu0 %v3013
      %v3015 = vpop.xlane.xlu0 %3014
      %v3016 = vsel %vm2856, %v1491, -inf
      %3017 = vmax.xlane.f32.xlu0 %v3016
      %v3018 = vpop.xlane.xlu0 %3017
      %v3019 = vsel %vm2856, %v1627, -inf
      %3020 = vmax.xlane.f32.xlu0 %v3019
      %v3021 = vpop.xlane.xlu0 %3020
      %v3022 = vsel %vm2856, %v1763, -inf
      %3023 = vmax.xlane.f32.xlu0 %v3022
      %v3024 = vpop.xlane.xlu0 %3023
      %v3025 = vsel %vm2856, %v1899, -inf
      %3026 = vmax.xlane.f32.xlu0 %v3025
      %v3027 = vpop.xlane.xlu0 %3026
      %v3028 = vsel %vm2856, %v2035, -inf
      %3029 = vmax.xlane.f32.xlu0 %v3028
      %v3030 = vpop.xlane.xlu0 %3029
      %v3031 = vsel %vm2856, %v2171, -inf
      %3032 = vmax.xlane.f32.xlu0 %v3031
      %v3033 = vpop.xlane.xlu0 %3032
      %v3034 = vsel %vm2856, %v2307, -inf
      %3035 = vmax.xlane.f32.xlu0 %v3034
      %v3036 = vpop.xlane.xlu0 %3035
      %v3037 = vsel %vm2856, %v2443, -inf
      %3038 = vmax.xlane.f32.xlu0 %v3037
      %v3039 = vpop.xlane.xlu0 %3038
      %v3040 = vsel %vm2856, %v2579, -inf
      %3041 = vmax.xlane.f32.xlu0 %v3040
      %v3042 = vpop.xlane.xlu0 %3041
      %v3043 = vsel %vm2856, %v2715, -inf
      %3044 = vmax.xlane.f32.xlu0 %v3043
      %v3045 = vpop.xlane.xlu0 %3044
      %v3046 = vsel %vm2856, %v2851, -inf
      %3047 = vmax.xlane.f32.xlu0 %v3046
      %v3048 = vpop.xlane.xlu0 %3047
      %v3049 = vsel %vm2856, %v812, -inf
      %3050 = vmax.xlane.f32.xlu0 %v3049
      %v3051 = vpop.xlane.xlu0 %3050
      %v3052 = vsel %vm2856, %v948, -inf
      %3053 = vmax.xlane.f32.xlu0 %v3052
      %v3054 = vpop.xlane.xlu0 %3053
      %v3055 = vsel %vm2856, %v1084, -inf
      %3056 = vmax.xlane.f32.xlu0 %v3055
      %v3057 = vpop.xlane.xlu0 %3056
      %v3058 = vsel %vm2856, %v1220, -inf
      %3059 = vmax.xlane.f32.xlu0 %v3058
      %v3060 = vpop.xlane.xlu0 %3059
      %v3061 = vsel %vm2856, %v1356, -inf
      %3062 = vmax.xlane.f32.xlu0 %v3061
      %v3063 = vpop.xlane.xlu0 %3062
      %v3064 = vsel %vm2856, %v1492, -inf
      %3065 = vmax.xlane.f32.xlu0 %v3064
      %v3066 = vpop.xlane.xlu0 %3065
      %v3067 = vsel %vm2856, %v1628, -inf
      %3068 = vmax.xlane.f32.xlu0 %v3067
      %v3069 = vpop.xlane.xlu0 %3068
      %v3070 = vsel %vm2856, %v1764, -inf
      %3071 = vmax.xlane.f32.xlu0 %v3070
      %v3072 = vpop.xlane.xlu0 %3071
      %v3073 = vsel %vm2856, %v1900, -inf
      %3074 = vmax.xlane.f32.xlu0 %v3073
      %v3075 = vpop.xlane.xlu0 %3074
      %v3076 = vsel %vm2856, %v2036, -inf
      %3077 = vmax.xlane.f32.xlu0 %v3076
      %v3078 = vpop.xlane.xlu0 %3077
      %v3079 = vsel %vm2856, %v2172, -inf
      %3080 = vmax.xlane.f32.xlu0 %v3079
      %v3081 = vpop.xlane.xlu0 %3080
      %v3082 = vsel %vm2856, %v2308, -inf
      %3083 = vmax.xlane.f32.xlu0 %v3082
      %v3084 = vpop.xlane.xlu0 %3083
      %v3085 = vsel %vm2856, %v2444, -inf
      %3086 = vmax.xlane.f32.xlu0 %v3085
      %v3087 = vpop.xlane.xlu0 %3086
      %v3088 = vsel %vm2856, %v2580, -inf
      %3089 = vmax.xlane.f32.xlu0 %v3088
      %v3090 = vpop.xlane.xlu0 %3089
      %v3091 = vsel %vm2856, %v2716, -inf
      %3092 = vmax.xlane.f32.xlu0 %v3091
      %v3093 = vpop.xlane.xlu0 %3092
      %v3094 = vsel %vm2856, %v2852, -inf
      %3095 = vmax.xlane.f32.xlu0 %v3094
      %v3096 = vpop.xlane.xlu0 %3095
      %v3097 = vsel %vm2856, %v813, -inf
      %3098 = vmax.xlane.f32.xlu0 %v3097
      %v3099 = vpop.xlane.xlu0 %3098
      %v3100 = vsel %vm2856, %v949, -inf
      %3101 = vmax.xlane.f32.xlu0 %v3100
      %v3102 = vpop.xlane.xlu0 %3101
      %v3103 = vsel %vm2856, %v1085, -inf
      %3104 = vmax.xlane.f32.xlu0 %v3103
      %v3105 = vpop.xlane.xlu0 %3104
      %v3106 = vsel %vm2856, %v1221, -inf
      %3107 = vmax.xlane.f32.xlu0 %v3106
      %v3108 = vpop.xlane.xlu0 %3107
      %v3109 = vsel %vm2856, %v1357, -inf
      %3110 = vmax.xlane.f32.xlu0 %v3109
      %v3111 = vpop.xlane.xlu0 %3110
      %v3112 = vsel %vm2856, %v1493, -inf
      %3113 = vmax.xlane.f32.xlu0 %v3112
      %v3114 = vpop.xlane.xlu0 %3113
      %v3115 = vsel %vm2856, %v1629, -inf
      %3116 = vmax.xlane.f32.xlu0 %v3115
      %v3117 = vpop.xlane.xlu0 %3116
      %v3118 = vsel %vm2856, %v1765, -inf
      %3119 = vmax.xlane.f32.xlu0 %v3118
      %v3120 = vpop.xlane.xlu0 %3119
      %v3121 = vsel %vm2856, %v1901, -inf
      %3122 = vmax.xlane.f32.xlu0 %v3121
      %v3123 = vpop.xlane.xlu0 %3122
      %v3124 = vsel %vm2856, %v2037, -inf
      %3125 = vmax.xlane.f32.xlu0 %v3124
      %v3126 = vpop.xlane.xlu0 %3125
      %v3127 = vsel %vm2856, %v2173, -inf
      %3128 = vmax.xlane.f32.xlu0 %v3127
      %v3129 = vpop.xlane.xlu0 %3128
      %v3130 = vsel %vm2856, %v2309, -inf
      %3131 = vmax.xlane.f32.xlu0 %v3130
      %v3132 = vpop.xlane.xlu0 %3131
      %v3133 = vsel %vm2856, %v2445, -inf
      %3134 = vmax.xlane.f32.xlu0 %v3133
      %v3135 = vpop.xlane.xlu0 %3134
      %v3136 = vsel %vm2856, %v2581, -inf
      %3137 = vmax.xlane.f32.xlu0 %v3136
      %v3138 = vpop.xlane.xlu0 %3137
      %v3139 = vsel %vm2856, %v2717, -inf
      %3140 = vmax.xlane.f32.xlu0 %v3139
      %v3141 = vpop.xlane.xlu0 %3140
      %v3142 = vsel %vm2856, %v2853, -inf
      %3143 = vmax.xlane.f32.xlu0 %v3142
      %v3144 = vpop.xlane.xlu0 %3143
      %v3145 = vsel %vm2856, %v814, -inf
      %3146 = vmax.xlane.f32.xlu0 %v3145
      %v3147 = vpop.xlane.xlu0 %3146
      %v3148 = vsel %vm2856, %v950, -inf
      %3149 = vmax.xlane.f32.xlu0 %v3148
      %v3150 = vpop.xlane.xlu0 %3149
      %v3151 = vsel %vm2856, %v1086, -inf
      %3152 = vmax.xlane.f32.xlu0 %v3151
      %v3153 = vpop.xlane.xlu0 %3152
      %v3154 = vsel %vm2856, %v1222, -inf
      %3155 = vmax.xlane.f32.xlu0 %v3154
      %v3156 = vpop.xlane.xlu0 %3155
      %v3157 = vsel %vm2856, %v1358, -inf
      %3158 = vmax.xlane.f32.xlu0 %v3157
      %v3159 = vpop.xlane.xlu0 %3158
      %v3160 = vsel %vm2856, %v1494, -inf
      %3161 = vmax.xlane.f32.xlu0 %v3160
      %v3162 = vpop.xlane.xlu0 %3161
      %v3163 = vsel %vm2856, %v1630, -inf
      %3164 = vmax.xlane.f32.xlu0 %v3163
      %v3165 = vpop.xlane.xlu0 %3164
      %v3166 = vsel %vm2856, %v1766, -inf
      %3167 = vmax.xlane.f32.xlu0 %v3166
      %v3168 = vpop.xlane.xlu0 %3167
      %v3169 = vsel %vm2856, %v1902, -inf
      %3170 = vmax.xlane.f32.xlu0 %v3169
      %v3171 = vpop.xlane.xlu0 %3170
      %v3172 = vsel %vm2856, %v2038, -inf
      %3173 = vmax.xlane.f32.xlu0 %v3172
      %v3174 = vpop.xlane.xlu0 %3173
      %v3175 = vsel %vm2856, %v2174, -inf
      %3176 = vmax.xlane.f32.xlu0 %v3175
      %v3177 = vpop.xlane.xlu0 %3176
      %v3178 = vsel %vm2856, %v2310, -inf
      %3179 = vmax.xlane.f32.xlu0 %v3178
      %v3180 = vpop.xlane.xlu0 %3179
      %v3181 = vsel %vm2856, %v2446, -inf
      %3182 = vmax.xlane.f32.xlu0 %v3181
      %v3183 = vpop.xlane.xlu0 %3182
      %v3184 = vsel %vm2856, %v2582, -inf
      %3185 = vmax.xlane.f32.xlu0 %v3184
      %v3186 = vpop.xlane.xlu0 %3185
      %v3187 = vsel %vm2856, %v2718, -inf
      %3188 = vmax.xlane.f32.xlu0 %v3187
      %v3189 = vpop.xlane.xlu0 %3188
      %v3190 = vsel %vm2856, %v2854, -inf
      %3191 = vmax.xlane.f32.xlu0 %v3190
      %v3192 = vpop.xlane.xlu0 %3191
      %v3193 = vsel %vm2856, %v815, -inf
      %3194 = vmax.xlane.f32.xlu0 %v3193
      %v3195 = vpop.xlane.xlu0 %3194
      %v3196 = vsel %vm2856, %v951, -inf
      %3197 = vmax.xlane.f32.xlu0 %v3196
      %v3198 = vpop.xlane.xlu0 %3197
      %v3199 = vsel %vm2856, %v1087, -inf
      %3200 = vmax.xlane.f32.xlu0 %v3199
      %v3201 = vpop.xlane.xlu0 %3200
      %v3202 = vsel %vm2856, %v1223, -inf
      %3203 = vmax.xlane.f32.xlu0 %v3202
      %v3204 = vpop.xlane.xlu0 %3203
      %v3205 = vsel %vm2856, %v1359, -inf
      %3206 = vmax.xlane.f32.xlu0 %v3205
      %v3207 = vpop.xlane.xlu0 %3206
      %v3208 = vsel %vm2856, %v1495, -inf
      %3209 = vmax.xlane.f32.xlu0 %v3208
      %v3210 = vpop.xlane.xlu0 %3209
      %v3211 = vsel %vm2856, %v1631, -inf
      %3212 = vmax.xlane.f32.xlu0 %v3211
      %v3213 = vpop.xlane.xlu0 %3212
      %v3214 = vsel %vm2856, %v1767, -inf
      %3215 = vmax.xlane.f32.xlu0 %v3214
      %v3216 = vpop.xlane.xlu0 %3215
      %v3217 = vsel %vm2856, %v1903, -inf
      %3218 = vmax.xlane.f32.xlu0 %v3217
      %v3219 = vpop.xlane.xlu0 %3218
      %v3220 = vsel %vm2856, %v2039, -inf
      %3221 = vmax.xlane.f32.xlu0 %v3220
      %v3222 = vpop.xlane.xlu0 %3221
      %v3223 = vsel %vm2856, %v2175, -inf
      %3224 = vmax.xlane.f32.xlu0 %v3223
      %v3225 = vpop.xlane.xlu0 %3224
      %v3226 = vsel %vm2856, %v2311, -inf
      %3227 = vmax.xlane.f32.xlu0 %v3226
      %v3228 = vpop.xlane.xlu0 %3227
      %v3229 = vsel %vm2856, %v2447, -inf
      %3230 = vmax.xlane.f32.xlu0 %v3229
      %v3231 = vpop.xlane.xlu0 %3230
      %v3232 = vsel %vm2856, %v2583, -inf
      %3233 = vmax.xlane.f32.xlu0 %v3232
      %v3234 = vpop.xlane.xlu0 %3233
      %v3235 = vsel %vm2856, %v2719, -inf
      %3236 = vmax.xlane.f32.xlu0 %v3235
      %v3237 = vpop.xlane.xlu0 %3236
      %v3238 = vsel %vm2856, %v2855, -inf
      %3239 = vmax.xlane.f32.xlu0 %v3238
      %v3240 = vpop.xlane.xlu0 %3239
      %v3353 = vlaneseq
      %v3354 = vand.u32 %v3353, 127
      %v3355 = vadd.s32 %v3354, 4294967280
      %v3356 = vlaneseq
      %v3357 = vshrl.u32 %v3356, 7
      %v3358 = vsub.s32 %v3355, %v3357
      %v3359 = vrot.slane %v2859, %v3358
      %v3360 = vadd.s32 %v3354, 4294967272
      %v3361 = vlaneseq
      %v3362 = vshrl.u32 %v3361, 7
      %v3363 = vsub.s32 %v3360, %v3362
      %v3364 = vrot.slane %v2862, %v3363
      %vm3365 = vcmask 261312
      %v3366 = vsel %vm3365, %v3364, %v3359
      %v3367 = vadd.s32 %v3354, 4294967264
      %v3368 = vlaneseq
      %v3369 = vshrl.u32 %v3368, 7
      %v3370 = vsub.s32 %v3367, %v3369
      %v3371 = vrot.slane %v2865, %v3370
      %vm3372 = vcmask 326912
      %v3373 = vsel %vm3372, %v3371, %v3366
      %v3374 = vadd.s32 %v3354, 4294967256
      %v3375 = vlaneseq
      %v3376 = vshrl.u32 %v3375, 7
      %v3377 = vsub.s32 %v3374, %v3376
      %v3378 = vrot.slane %v2868, %v3377
      %vm3379 = vcmask 392512
      %v3380 = vsel %vm3379, %v3378, %v3373
      %v3381 = vadd.s32 %v3354, 4294967248
      %v3382 = vlaneseq
      %v3383 = vshrl.u32 %v3382, 7
      %v3384 = vsub.s32 %v3381, %v3383
      %v3385 = vrot.slane %v2871, %v3384
      %vm3386 = vcmask 458112
      %v3387 = vsel %vm3386, %v3385, %v3380
      %v3388 = vadd.s32 %v3354, 4294967240
      %v3389 = vlaneseq
      %v3390 = vshrl.u32 %v3389, 7
      %v3391 = vsub.s32 %v3388, %v3390
      %v3392 = vrot.slane %v2874, %v3391
      %vm3393 = vcmask 523712
      %v3394 = vsel %vm3393, %v3392, %v3387
      %v3395 = vadd.s32 %v3354, 4294967232
      %v3396 = vlaneseq
      %v3397 = vshrl.u32 %v3396, 7
      %v3398 = vsub.s32 %v3395, %v3397
      %v3399 = vrot.slane %v2877, %v3398
      %vm3400 = vcmask 589312
      %v3401 = vsel %vm3400, %v3399, %v3394
      %v3402 = vadd.s32 %v3354, 4294967224
      %v3403 = vlaneseq
      %v3404 = vshrl.u32 %v3403, 7
      %v3405 = vsub.s32 %v3402, %v3404
      %v3406 = vrot.slane %v2880, %v3405
      %vm3407 = vcmask 654912
      %v3408 = vsel %vm3407, %v3406, %v3401
      %v3409 = vadd.s32 %v3354, 4294967216
      %v3410 = vlaneseq
      %v3411 = vshrl.u32 %v3410, 7
      %v3412 = vsub.s32 %v3409, %v3411
      %v3413 = vrot.slane %v2883, %v3412
      %vm3414 = vcmask 720512
      %v3415 = vsel %vm3414, %v3413, %v3408
      %v3416 = vadd.s32 %v3354, 4294967208
      %v3417 = vlaneseq
      %v3418 = vshrl.u32 %v3417, 7
      %v3419 = vsub.s32 %v3416, %v3418
      %v3420 = vrot.slane %v2886, %v3419
      %vm3421 = vcmask 786112
      %v3422 = vsel %vm3421, %v3420, %v3415
      %v3423 = vadd.s32 %v3354, 4294967200
      %v3424 = vlaneseq
      %v3425 = vshrl.u32 %v3424, 7
      %v3426 = vsub.s32 %v3423, %v3425
      %v3427 = vrot.slane %v2889, %v3426
      %vm3428 = vcmask 851712
      %v3429 = vsel %vm3428, %v3427, %v3422
      %v3430 = vadd.s32 %v3354, 4294967192
      %v3431 = vlaneseq
      %v3432 = vshrl.u32 %v3431, 7
      %v3433 = vsub.s32 %v3430, %v3432
      %v3434 = vrot.slane %v2892, %v3433
      %vm3435 = vcmask 917312
      %v3436 = vsel %vm3435, %v3434, %v3429
      %v3437 = vadd.s32 %v3354, 4294967184
      %v3438 = vlaneseq
      %v3439 = vshrl.u32 %v3438, 7
      %v3440 = vsub.s32 %v3437, %v3439
      %v3441 = vrot.slane %v2895, %v3440
      %vm3442 = vcmask 982912
      %v3443 = vsel %vm3442, %v3441, %v3436
      %v3444 = vadd.s32 %v3354, 4294967176
      %v3445 = vlaneseq
      %v3446 = vshrl.u32 %v3445, 7
      %v3447 = vsub.s32 %v3444, %v3446
      %v3448 = vrot.slane %v2898, %v3447
      %vm3449 = vcmask 1048512
      %v3450 = vsel %vm3449, %v3448, %v3443
      %v3451 = vlaneseq
      %v3452 = vshrl.u32 %v3451, 7
      %v3453 = vsub.s32 %v3355, %v3452
      %v3454 = vrot.slane %v2907, %v3453
      %v3455 = vlaneseq
      %v3456 = vshrl.u32 %v3455, 7
      %v3457 = vsub.s32 %v3360, %v3456
      %v3458 = vrot.slane %v2910, %v3457
      %v3459 = vsel %vm3365, %v3458, %v3454
      %v3460 = vlaneseq
      %v3461 = vshrl.u32 %v3460, 7
      %v3462 = vsub.s32 %v3367, %v3461
      %v3463 = vrot.slane %v2913, %v3462
      %v3464 = vsel %vm3372, %v3463, %v3459
      %v3465 = vlaneseq
      %v3466 = vshrl.u32 %v3465, 7
      %v3467 = vsub.s32 %v3374, %v3466
      %v3468 = vrot.slane %v2916, %v3467
      %v3469 = vsel %vm3379, %v3468, %v3464
      %v3470 = vlaneseq
      %v3471 = vshrl.u32 %v3470, 7
      %v3472 = vsub.s32 %v3381, %v3471
      %v3473 = vrot.slane %v2919, %v3472
      %v3474 = vsel %vm3386, %v3473, %v3469
      %v3475 = vlaneseq
      %v3476 = vshrl.u32 %v3475, 7
      %v3477 = vsub.s32 %v3388, %v3476
      %v3478 = vrot.slane %v2922, %v3477
      %v3479 = vsel %vm3393, %v3478, %v3474
      %v3480 = vlaneseq
      %v3481 = vshrl.u32 %v3480, 7
      %v3482 = vsub.s32 %v3395, %v3481
      %v3483 = vrot.slane %v2925, %v3482
      %v3484 = vsel %vm3400, %v3483, %v3479
      %v3485 = vlaneseq
      %v3486 = vshrl.u32 %v3485, 7
      %v3487 = vsub.s32 %v3402, %v3486
      %v3488 = vrot.slane %v2928, %v3487
      %v3489 = vsel %vm3407, %v3488, %v3484
      %v3490 = vlaneseq
      %v3491 = vshrl.u32 %v3490, 7
      %v3492 = vsub.s32 %v3409, %v3491
      %v3493 = vrot.slane %v2931, %v3492
      %v3494 = vsel %vm3414, %v3493, %v3489
      %v3495 = vlaneseq
      %v3496 = vshrl.u32 %v3495, 7
      %v3497 = vsub.s32 %v3416, %v3496
      %v3498 = vrot.slane %v2934, %v3497
      %v3499 = vsel %vm3421, %v3498, %v3494
      %v3500 = vlaneseq
      %v3501 = vshrl.u32 %v3500, 7
      %v3502 = vsub.s32 %v3423, %v3501
      %v3503 = vrot.slane %v2937, %v3502
      %v3504 = vsel %vm3428, %v3503, %v3499
      %v3505 = vlaneseq
      %v3506 = vshrl.u32 %v3505, 7
      %v3507 = vsub.s32 %v3430, %v3506
      %v3508 = vrot.slane %v2940, %v3507
      %v3509 = vsel %vm3435, %v3508, %v3504
      %v3510 = vlaneseq
      %v3511 = vshrl.u32 %v3510, 7
      %v3512 = vsub.s32 %v3437, %v3511
      %v3513 = vrot.slane %v2943, %v3512
      %v3514 = vsel %vm3442, %v3513, %v3509
      %v3515 = vlaneseq
      %v3516 = vshrl.u32 %v3515, 7
      %v3517 = vsub.s32 %v3444, %v3516
      %v3518 = vrot.slane %v2946, %v3517
      %v3519 = vsel %vm3449, %v3518, %v3514
      %v3520 = vlaneseq
      %v3521 = vshrl.u32 %v3520, 7
      %v3522 = vsub.s32 %v3355, %v3521
      %v3523 = vrot.slane %v2955, %v3522
      %v3524 = vlaneseq
      %v3525 = vshrl.u32 %v3524, 7
      %v3526 = vsub.s32 %v3360, %v3525
      %v3527 = vrot.slane %v2958, %v3526
      %v3528 = vsel %vm3365, %v3527, %v3523
      %v3529 = vlaneseq
      %v3530 = vshrl.u32 %v3529, 7
      %v3531 = vsub.s32 %v3367, %v3530
      %v3532 = vrot.slane %v2961, %v3531
      %v3533 = vsel %vm3372, %v3532, %v3528
      %v3534 = vlaneseq
      %v3535 = vshrl.u32 %v3534, 7
      %v3536 = vsub.s32 %v3374, %v3535
      %v3537 = vrot.slane %v2964, %v3536
      %v3538 = vsel %vm3379, %v3537, %v3533
      %v3539 = vlaneseq
      %v3540 = vshrl.u32 %v3539, 7
      %v3541 = vsub.s32 %v3381, %v3540
      %v3542 = vrot.slane %v2967, %v3541
      %v3543 = vsel %vm3386, %v3542, %v3538
      %v3544 = vlaneseq
      %v3545 = vshrl.u32 %v3544, 7
      %v3546 = vsub.s32 %v3388, %v3545
      %v3547 = vrot.slane %v2970, %v3546
      %v3548 = vsel %vm3393, %v3547, %v3543
      %v3549 = vlaneseq
      %v3550 = vshrl.u32 %v3549, 7
      %v3551 = vsub.s32 %v3395, %v3550
      %v3552 = vrot.slane %v2973, %v3551
      %v3553 = vsel %vm3400, %v3552, %v3548
      %v3554 = vlaneseq
      %v3555 = vshrl.u32 %v3554, 7
      %v3556 = vsub.s32 %v3402, %v3555
      %v3557 = vrot.slane %v2976, %v3556
      %v3558 = vsel %vm3407, %v3557, %v3553
      %v3559 = vlaneseq
      %v3560 = vshrl.u32 %v3559, 7
      %v3561 = vsub.s32 %v3409, %v3560
      %v3562 = vrot.slane %v2979, %v3561
      %v3563 = vsel %vm3414, %v3562, %v3558
      %v3564 = vlaneseq
      %v3565 = vshrl.u32 %v3564, 7
      %v3566 = vsub.s32 %v3416, %v3565
      %v3567 = vrot.slane %v2982, %v3566
      %v3568 = vsel %vm3421, %v3567, %v3563
      %v3569 = vlaneseq
      %v3570 = vshrl.u32 %v3569, 7
      %v3571 = vsub.s32 %v3423, %v3570
      %v3572 = vrot.slane %v2985, %v3571
      %v3573 = vsel %vm3428, %v3572, %v3568
      %v3574 = vlaneseq
      %v3575 = vshrl.u32 %v3574, 7
      %v3576 = vsub.s32 %v3430, %v3575
      %v3577 = vrot.slane %v2988, %v3576
      %v3578 = vsel %vm3435, %v3577, %v3573
      %v3579 = vlaneseq
      %v3580 = vshrl.u32 %v3579, 7
      %v3581 = vsub.s32 %v3437, %v3580
      %v3582 = vrot.slane %v2991, %v3581
      %v3583 = vsel %vm3442, %v3582, %v3578
      %v3584 = vlaneseq
      %v3585 = vshrl.u32 %v3584, 7
      %v3586 = vsub.s32 %v3444, %v3585
      %v3587 = vrot.slane %v2994, %v3586
      %v3588 = vsel %vm3449, %v3587, %v3583
      %v3589 = vlaneseq
      %v3590 = vshrl.u32 %v3589, 7
      %v3591 = vsub.s32 %v3355, %v3590
      %v3592 = vrot.slane %v3003, %v3591
      %v3593 = vlaneseq
      %v3594 = vshrl.u32 %v3593, 7
      %v3595 = vsub.s32 %v3360, %v3594
      %v3596 = vrot.slane %v3006, %v3595
      %v3597 = vsel %vm3365, %v3596, %v3592
      %v3598 = vlaneseq
      %v3599 = vshrl.u32 %v3598, 7
      %v3600 = vsub.s32 %v3367, %v3599
      %v3601 = vrot.slane %v3009, %v3600
      %v3602 = vsel %vm3372, %v3601, %v3597
      %v3603 = vlaneseq
      %v3604 = vshrl.u32 %v3603, 7
      %v3605 = vsub.s32 %v3374, %v3604
      %v3606 = vrot.slane %v3012, %v3605
      %v3607 = vsel %vm3379, %v3606, %v3602
      %v3608 = vlaneseq
      %v3609 = vshrl.u32 %v3608, 7
      %v3610 = vsub.s32 %v3381, %v3609
      %v3611 = vrot.slane %v3015, %v3610
      %v3612 = vsel %vm3386, %v3611, %v3607
      %v3613 = vlaneseq
      %v3614 = vshrl.u32 %v3613, 7
      %v3615 = vsub.s32 %v3388, %v3614
      %v3616 = vrot.slane %v3018, %v3615
      %v3617 = vsel %vm3393, %v3616, %v3612
      %v3618 = vlaneseq
      %v3619 = vshrl.u32 %v3618, 7
      %v3620 = vsub.s32 %v3395, %v3619
      %v3621 = vrot.slane %v3021, %v3620
      %v3622 = vsel %vm3400, %v3621, %v3617
      %v3623 = vlaneseq
      %v3624 = vshrl.u32 %v3623, 7
      %v3625 = vsub.s32 %v3402, %v3624
      %v3626 = vrot.slane %v3024, %v3625
      %v3627 = vsel %vm3407, %v3626, %v3622
      %v3628 = vlaneseq
      %v3629 = vshrl.u32 %v3628, 7
      %v3630 = vsub.s32 %v3409, %v3629
      %v3631 = vrot.slane %v3027, %v3630
      %v3632 = vsel %vm3414, %v3631, %v3627
      %v3633 = vlaneseq
      %v3634 = vshrl.u32 %v3633, 7
      %v3635 = vsub.s32 %v3416, %v3634
      %v3636 = vrot.slane %v3030, %v3635
      %v3637 = vsel %vm3421, %v3636, %v3632
      %v3638 = vlaneseq
      %v3639 = vshrl.u32 %v3638, 7
      %v3640 = vsub.s32 %v3423, %v3639
      %v3641 = vrot.slane %v3033, %v3640
      %v3642 = vsel %vm3428, %v3641, %v3637
      %v3643 = vlaneseq
      %v3644 = vshrl.u32 %v3643, 7
      %v3645 = vsub.s32 %v3430, %v3644
      %v3646 = vrot.slane %v3036, %v3645
      %v3647 = vsel %vm3435, %v3646, %v3642
      %v3648 = vlaneseq
      %v3649 = vshrl.u32 %v3648, 7
      %v3650 = vsub.s32 %v3437, %v3649
      %v3651 = vrot.slane %v3039, %v3650
      %v3652 = vsel %vm3442, %v3651, %v3647
      %v3653 = vlaneseq
      %v3654 = vshrl.u32 %v3653, 7
      %v3655 = vsub.s32 %v3444, %v3654
      %v3656 = vrot.slane %v3042, %v3655
      %v3657 = vsel %vm3449, %v3656, %v3652
      %v3658 = vlaneseq
      %v3659 = vshrl.u32 %v3658, 7
      %v3660 = vsub.s32 %v3355, %v3659
      %v3661 = vrot.slane %v3051, %v3660
      %v3662 = vlaneseq
      %v3663 = vshrl.u32 %v3662, 7
      %v3664 = vsub.s32 %v3360, %v3663
      %v3665 = vrot.slane %v3054, %v3664
      %v3666 = vsel %vm3365, %v3665, %v3661
      %v3667 = vlaneseq
      %v3668 = vshrl.u32 %v3667, 7
      %v3669 = vsub.s32 %v3367, %v3668
      %v3670 = vrot.slane %v3057, %v3669
      %v3671 = vsel %vm3372, %v3670, %v3666
      %v3672 = vlaneseq
      %v3673 = vshrl.u32 %v3672, 7
      %v3674 = vsub.s32 %v3374, %v3673
      %v3675 = vrot.slane %v3060, %v3674
      %v3676 = vsel %vm3379, %v3675, %v3671
      %v3677 = vlaneseq
      %v3678 = vshrl.u32 %v3677, 7
      %v3679 = vsub.s32 %v3381, %v3678
      %v3680 = vrot.slane %v3063, %v3679
      %v3681 = vsel %vm3386, %v3680, %v3676
      %v3682 = vlaneseq
      %v3683 = vshrl.u32 %v3682, 7
      %v3684 = vsub.s32 %v3388, %v3683
      %v3685 = vrot.slane %v3066, %v3684
      %v3686 = vsel %vm3393, %v3685, %v3681
      %v3687 = vlaneseq
      %v3688 = vshrl.u32 %v3687, 7
      %v3689 = vsub.s32 %v3395, %v3688
      %v3690 = vrot.slane %v3069, %v3689
      %v3691 = vsel %vm3400, %v3690, %v3686
      %v3692 = vlaneseq
      %v3693 = vshrl.u32 %v3692, 7
      %v3694 = vsub.s32 %v3402, %v3693
      %v3695 = vrot.slane %v3072, %v3694
      %v3696 = vsel %vm3407, %v3695, %v3691
      %v3697 = vlaneseq
      %v3698 = vshrl.u32 %v3697, 7
      %v3699 = vsub.s32 %v3409, %v3698
      %v3700 = vrot.slane %v3075, %v3699
      %v3701 = vsel %vm3414, %v3700, %v3696
      %v3702 = vlaneseq
      %v3703 = vshrl.u32 %v3702, 7
      %v3704 = vsub.s32 %v3416, %v3703
      %v3705 = vrot.slane %v3078, %v3704
      %v3706 = vsel %vm3421, %v3705, %v3701
      %v3707 = vlaneseq
      %v3708 = vshrl.u32 %v3707, 7
      %v3709 = vsub.s32 %v3423, %v3708
      %v3710 = vrot.slane %v3081, %v3709
      %v3711 = vsel %vm3428, %v3710, %v3706
      %v3712 = vlaneseq
      %v3713 = vshrl.u32 %v3712, 7
      %v3714 = vsub.s32 %v3430, %v3713
      %v3715 = vrot.slane %v3084, %v3714
      %v3716 = vsel %vm3435, %v3715, %v3711
      %v3717 = vlaneseq
      %v3718 = vshrl.u32 %v3717, 7
      %v3719 = vsub.s32 %v3437, %v3718
      %v3720 = vrot.slane %v3087, %v3719
      %v3721 = vsel %vm3442, %v3720, %v3716
      %v3722 = vlaneseq
      %v3723 = vshrl.u32 %v3722, 7
      %v3724 = vsub.s32 %v3444, %v3723
      %v3725 = vrot.slane %v3090, %v3724
      %v3726 = vsel %vm3449, %v3725, %v3721
      %v3727 = vlaneseq
      %v3728 = vshrl.u32 %v3727, 7
      %v3729 = vsub.s32 %v3355, %v3728
      %v3730 = vrot.slane %v3099, %v3729
      %v3731 = vlaneseq
      %v3732 = vshrl.u32 %v3731, 7
      %v3733 = vsub.s32 %v3360, %v3732
      %v3734 = vrot.slane %v3102, %v3733
      %v3735 = vsel %vm3365, %v3734, %v3730
      %v3736 = vlaneseq
      %v3737 = vshrl.u32 %v3736, 7
      %v3738 = vsub.s32 %v3367, %v3737
      %v3739 = vrot.slane %v3105, %v3738
      %v3740 = vsel %vm3372, %v3739, %v3735
      %v3741 = vlaneseq
      %v3742 = vshrl.u32 %v3741, 7
      %v3743 = vsub.s32 %v3374, %v3742
      %v3744 = vrot.slane %v3108, %v3743
      %v3745 = vsel %vm3379, %v3744, %v3740
      %v3746 = vlaneseq
      %v3747 = vshrl.u32 %v3746, 7
      %v3748 = vsub.s32 %v3381, %v3747
      %v3749 = vrot.slane %v3111, %v3748
      %v3750 = vsel %vm3386, %v3749, %v3745
      %v3751 = vlaneseq
      %v3752 = vshrl.u32 %v3751, 7
      %v3753 = vsub.s32 %v3388, %v3752
      %v3754 = vrot.slane %v3114, %v3753
      %v3755 = vsel %vm3393, %v3754, %v3750
      %v3756 = vlaneseq
      %v3757 = vshrl.u32 %v3756, 7
      %v3758 = vsub.s32 %v3395, %v3757
      %v3759 = vrot.slane %v3117, %v3758
      %v3760 = vsel %vm3400, %v3759, %v3755
      %v3761 = vlaneseq
      %v3762 = vshrl.u32 %v3761, 7
      %v3763 = vsub.s32 %v3402, %v3762
      %v3764 = vrot.slane %v3120, %v3763
      %v3765 = vsel %vm3407, %v3764, %v3760
      %v3766 = vlaneseq
      %v3767 = vshrl.u32 %v3766, 7
      %v3768 = vsub.s32 %v3409, %v3767
      %v3769 = vrot.slane %v3123, %v3768
      %v3770 = vsel %vm3414, %v3769, %v3765
      %v3771 = vlaneseq
      %v3772 = vshrl.u32 %v3771, 7
      %v3773 = vsub.s32 %v3416, %v3772
      %v3774 = vrot.slane %v3126, %v3773
      %v3775 = vsel %vm3421, %v3774, %v3770
      %v3776 = vlaneseq
      %v3777 = vshrl.u32 %v3776, 7
      %v3778 = vsub.s32 %v3423, %v3777
      %v3779 = vrot.slane %v3129, %v3778
      %v3780 = vsel %vm3428, %v3779, %v3775
      %v3781 = vlaneseq
      %v3782 = vshrl.u32 %v3781, 7
      %v3783 = vsub.s32 %v3430, %v3782
      %v3784 = vrot.slane %v3132, %v3783
      %v3785 = vsel %vm3435, %v3784, %v3780
      %v3786 = vlaneseq
      %v3787 = vshrl.u32 %v3786, 7
      %v3788 = vsub.s32 %v3437, %v3787
      %v3789 = vrot.slane %v3135, %v3788
      %v3790 = vsel %vm3442, %v3789, %v3785
      %v3791 = vlaneseq
      %v3792 = vshrl.u32 %v3791, 7
      %v3793 = vsub.s32 %v3444, %v3792
      %v3794 = vrot.slane %v3138, %v3793
      %v3795 = vsel %vm3449, %v3794, %v3790
      %v3796 = vlaneseq
      %v3797 = vshrl.u32 %v3796, 7
      %v3798 = vsub.s32 %v3355, %v3797
      %v3799 = vrot.slane %v3147, %v3798
      %v3800 = vlaneseq
      %v3801 = vshrl.u32 %v3800, 7
      %v3802 = vsub.s32 %v3360, %v3801
      %v3803 = vrot.slane %v3150, %v3802
      %v3804 = vsel %vm3365, %v3803, %v3799
      %v3805 = vlaneseq
      %v3806 = vshrl.u32 %v3805, 7
      %v3807 = vsub.s32 %v3367, %v3806
      %v3808 = vrot.slane %v3153, %v3807
      %v3809 = vsel %vm3372, %v3808, %v3804
      %v3810 = vlaneseq
      %v3811 = vshrl.u32 %v3810, 7
      %v3812 = vsub.s32 %v3374, %v3811
      %v3813 = vrot.slane %v3156, %v3812
      %v3814 = vsel %vm3379, %v3813, %v3809
      %v3815 = vlaneseq
      %v3816 = vshrl.u32 %v3815, 7
      %v3817 = vsub.s32 %v3381, %v3816
      %v3818 = vrot.slane %v3159, %v3817
      %v3819 = vsel %vm3386, %v3818, %v3814
      %v3820 = vlaneseq
      %v3821 = vshrl.u32 %v3820, 7
      %v3822 = vsub.s32 %v3388, %v3821
      %v3823 = vrot.slane %v3162, %v3822
      %v3824 = vsel %vm3393, %v3823, %v3819
      %v3825 = vlaneseq
      %v3826 = vshrl.u32 %v3825, 7
      %v3827 = vsub.s32 %v3395, %v3826
      %v3828 = vrot.slane %v3165, %v3827
      %v3829 = vsel %vm3400, %v3828, %v3824
      %v3830 = vlaneseq
      %v3831 = vshrl.u32 %v3830, 7
      %v3832 = vsub.s32 %v3402, %v3831
      %v3833 = vrot.slane %v3168, %v3832
      %v3834 = vsel %vm3407, %v3833, %v3829
      %v3835 = vlaneseq
      %v3836 = vshrl.u32 %v3835, 7
      %v3837 = vsub.s32 %v3409, %v3836
      %v3838 = vrot.slane %v3171, %v3837
      %v3839 = vsel %vm3414, %v3838, %v3834
      %v3840 = vlaneseq
      %v3841 = vshrl.u32 %v3840, 7
      %v3842 = vsub.s32 %v3416, %v3841
      %v3843 = vrot.slane %v3174, %v3842
      %v3844 = vsel %vm3421, %v3843, %v3839
      %v3845 = vlaneseq
      %v3846 = vshrl.u32 %v3845, 7
      %v3847 = vsub.s32 %v3423, %v3846
      %v3848 = vrot.slane %v3177, %v3847
      %v3849 = vsel %vm3428, %v3848, %v3844
      %v3850 = vlaneseq
      %v3851 = vshrl.u32 %v3850, 7
      %v3852 = vsub.s32 %v3430, %v3851
      %v3853 = vrot.slane %v3180, %v3852
      %v3854 = vsel %vm3435, %v3853, %v3849
      %v3855 = vlaneseq
      %v3856 = vshrl.u32 %v3855, 7
      %v3857 = vsub.s32 %v3437, %v3856
      %v3858 = vrot.slane %v3183, %v3857
      %v3859 = vsel %vm3442, %v3858, %v3854
      %v3860 = vlaneseq
      %v3861 = vshrl.u32 %v3860, 7
      %v3862 = vsub.s32 %v3444, %v3861
      %v3863 = vrot.slane %v3186, %v3862
      %v3864 = vsel %vm3449, %v3863, %v3859
      %v3865 = vlaneseq
      %v3866 = vshrl.u32 %v3865, 7
      %v3867 = vsub.s32 %v3355, %v3866
      %v3868 = vrot.slane %v3195, %v3867
      %v3869 = vlaneseq
      %v3870 = vshrl.u32 %v3869, 7
      %v3871 = vsub.s32 %v3360, %v3870
      %v3872 = vrot.slane %v3198, %v3871
      %v3873 = vsel %vm3365, %v3872, %v3868
      %v3874 = vlaneseq
      %v3875 = vshrl.u32 %v3874, 7
      %v3876 = vsub.s32 %v3367, %v3875
      %v3877 = vrot.slane %v3201, %v3876
      %v3878 = vsel %vm3372, %v3877, %v3873
      %v3879 = vlaneseq
      %v3880 = vshrl.u32 %v3879, 7
      %v3881 = vsub.s32 %v3374, %v3880
      %v3882 = vrot.slane %v3204, %v3881
      %v3883 = vsel %vm3379, %v3882, %v3878
      %v3884 = vlaneseq
      %v3885 = vshrl.u32 %v3884, 7
      %v3886 = vsub.s32 %v3381, %v3885
      %v3887 = vrot.slane %v3207, %v3886
      %v3888 = vsel %vm3386, %v3887, %v3883
      %v3889 = vlaneseq
      %v3890 = vshrl.u32 %v3889, 7
      %v3891 = vsub.s32 %v3388, %v3890
      %v3892 = vrot.slane %v3210, %v3891
      %v3893 = vsel %vm3393, %v3892, %v3888
      %v3894 = vlaneseq
      %v3895 = vshrl.u32 %v3894, 7
      %v3896 = vsub.s32 %v3395, %v3895
      %v3897 = vrot.slane %v3213, %v3896
      %v3898 = vsel %vm3400, %v3897, %v3893
      %v3899 = vlaneseq
      %v3900 = vshrl.u32 %v3899, 7
      %v3901 = vsub.s32 %v3402, %v3900
      %v3902 = vrot.slane %v3216, %v3901
      %v3903 = vsel %vm3407, %v3902, %v3898
      %v3904 = vlaneseq
      %v3905 = vshrl.u32 %v3904, 7
      %v3906 = vsub.s32 %v3409, %v3905
      %v3907 = vrot.slane %v3219, %v3906
      %v3908 = vsel %vm3414, %v3907, %v3903
      %v3909 = vlaneseq
      %v3910 = vshrl.u32 %v3909, 7
      %v3911 = vsub.s32 %v3416, %v3910
      %v3912 = vrot.slane %v3222, %v3911
      %v3913 = vsel %vm3421, %v3912, %v3908
      %v3914 = vlaneseq
      %v3915 = vshrl.u32 %v3914, 7
      %v3916 = vsub.s32 %v3423, %v3915
      %v3917 = vrot.slane %v3225, %v3916
      %v3918 = vsel %vm3428, %v3917, %v3913
      %v3919 = vlaneseq
      %v3920 = vshrl.u32 %v3919, 7
      %v3921 = vsub.s32 %v3430, %v3920
      %v3922 = vrot.slane %v3228, %v3921
      %v3923 = vsel %vm3435, %v3922, %v3918
      %v3924 = vlaneseq
      %v3925 = vshrl.u32 %v3924, 7
      %v3926 = vsub.s32 %v3437, %v3925
      %v3927 = vrot.slane %v3231, %v3926
      %v3928 = vsel %vm3442, %v3927, %v3923
      %v3929 = vlaneseq
      %v3930 = vshrl.u32 %v3929, 7
      %v3931 = vsub.s32 %v3444, %v3930
      %v3932 = vrot.slane %v3234, %v3931
      %v3933 = vsel %vm3449, %v3932, %v3928
      %vm3934 = vcmask 1041409
      %v3935 = vsel %vm3934, %v3519, %v3450
      %vm3936 = vcmask 1042434
      %v3937 = vsel %vm3936, %v3588, %v3935
      %vm3938 = vcmask 1043459
      %v3939 = vsel %vm3938, %v3657, %v3937
      %vm3940 = vcmask 1044484
      %v3941 = vsel %vm3940, %v3726, %v3939
      %vm3942 = vcmask 1045509
      %v3943 = vsel %vm3942, %v3795, %v3941
      %vm3944 = vcmask 1046534
      %v3945 = vsel %vm3944, %v3864, %v3943
      %vm3946 = vcmask 1047559
      %v3947 = vsel %vm3946, %v3933, %v3945
      %v3949 = vsel %vm2856, 0.0, %v3947
      %v3966 = vlaneseq
      %v3967 = vshrl.u32 %v3966, 7
      %v3968 = vsub.s32 %v3354, %v3967
      %v3969 = vrot.slane %v2865, %v3968
      %v3970 = vadd.s32 %v3354, 4294967288
      %v3971 = vlaneseq
      %v3972 = vshrl.u32 %v3971, 7
      %v3973 = vsub.s32 %v3970, %v3972
      %v3974 = vrot.slane %v2868, %v3973
      %vm3975 = vcmask 130112
      %v3976 = vsel %vm3975, %v3974, %v3969
      %v3977 = vlaneseq
      %v3978 = vshrl.u32 %v3977, 7
      %v3979 = vsub.s32 %v3355, %v3978
      %v3980 = vrot.slane %v2871, %v3979
      %vm3981 = vcmask 195712
      %v3982 = vsel %vm3981, %v3980, %v3976
      %v3983 = vlaneseq
      %v3984 = vshrl.u32 %v3983, 7
      %v3985 = vsub.s32 %v3360, %v3984
      %v3986 = vrot.slane %v2874, %v3985
      %v3987 = vsel %vm3365, %v3986, %v3982
      %v3988 = vlaneseq
      %v3989 = vshrl.u32 %v3988, 7
      %v3990 = vsub.s32 %v3367, %v3989
      %v3991 = vrot.slane %v2877, %v3990
      %v3992 = vsel %vm3372, %v3991, %v3987
      %v3993 = vlaneseq
      %v3994 = vshrl.u32 %v3993, 7
      %v3995 = vsub.s32 %v3374, %v3994
      %v3996 = vrot.slane %v2880, %v3995
      %v3997 = vsel %vm3379, %v3996, %v3992
      %v3998 = vlaneseq
      %v3999 = vshrl.u32 %v3998, 7
      %v4000 = vsub.s32 %v3381, %v3999
      %v4001 = vrot.slane %v2883, %v4000
      %v4002 = vsel %vm3386, %v4001, %v3997
      %v4003 = vlaneseq
      %v4004 = vshrl.u32 %v4003, 7
      %v4005 = vsub.s32 %v3388, %v4004
      %v4006 = vrot.slane %v2886, %v4005
      %v4007 = vsel %vm3393, %v4006, %v4002
      %v4008 = vlaneseq
      %v4009 = vshrl.u32 %v4008, 7
      %v4010 = vsub.s32 %v3395, %v4009
      %v4011 = vrot.slane %v2889, %v4010
      %v4012 = vsel %vm3400, %v4011, %v4007
      %v4013 = vlaneseq
      %v4014 = vshrl.u32 %v4013, 7
      %v4015 = vsub.s32 %v3402, %v4014
      %v4016 = vrot.slane %v2892, %v4015
      %v4017 = vsel %vm3407, %v4016, %v4012
      %v4018 = vlaneseq
      %v4019 = vshrl.u32 %v4018, 7
      %v4020 = vsub.s32 %v3409, %v4019
      %v4021 = vrot.slane %v2895, %v4020
      %v4022 = vsel %vm3414, %v4021, %v4017
      %v4023 = vlaneseq
      %v4024 = vshrl.u32 %v4023, 7
      %v4025 = vsub.s32 %v3416, %v4024
      %v4026 = vrot.slane %v2898, %v4025
      %v4027 = vsel %vm3421, %v4026, %v4022
      %v4028 = vlaneseq
      %v4029 = vshrl.u32 %v4028, 7
      %v4030 = vsub.s32 %v3423, %v4029
      %v4031 = vrot.slane %v2901, %v4030
      %v4032 = vsel %vm3428, %v4031, %v4027
      %v4033 = vlaneseq
      %v4034 = vshrl.u32 %v4033, 7
      %v4035 = vsub.s32 %v3430, %v4034
      %v4036 = vrot.slane %v2904, %v4035
      %v4037 = vsel %vm3435, %v4036, %v4032
      %v4038 = vlaneseq
      %v4039 = vshrl.u32 %v4038, 7
      %v4040 = vsub.s32 %v3354, %v4039
      %v4041 = vrot.slane %v2913, %v4040
      %v4042 = vlaneseq
      %v4043 = vshrl.u32 %v4042, 7
      %v4044 = vsub.s32 %v3970, %v4043
      %v4045 = vrot.slane %v2916, %v4044
      %v4046 = vsel %vm3975, %v4045, %v4041
      %v4047 = vlaneseq
      %v4048 = vshrl.u32 %v4047, 7
      %v4049 = vsub.s32 %v3355, %v4048
      %v4050 = vrot.slane %v2919, %v4049
      %v4051 = vsel %vm3981, %v4050, %v4046
      %v4052 = vlaneseq
      %v4053 = vshrl.u32 %v4052, 7
      %v4054 = vsub.s32 %v3360, %v4053
      %v4055 = vrot.slane %v2922, %v4054
      %v4056 = vsel %vm3365, %v4055, %v4051
      %v4057 = vlaneseq
      %v4058 = vshrl.u32 %v4057, 7
      %v4059 = vsub.s32 %v3367, %v4058
      %v4060 = vrot.slane %v2925, %v4059
      %v4061 = vsel %vm3372, %v4060, %v4056
      %v4062 = vlaneseq
      %v4063 = vshrl.u32 %v4062, 7
      %v4064 = vsub.s32 %v3374, %v4063
      %v4065 = vrot.slane %v2928, %v4064
      %v4066 = vsel %vm3379, %v4065, %v4061
      %v4067 = vlaneseq
      %v4068 = vshrl.u32 %v4067, 7
      %v4069 = vsub.s32 %v3381, %v4068
      %v4070 = vrot.slane %v2931, %v4069
      %v4071 = vsel %vm3386, %v4070, %v4066
      %v4072 = vlaneseq
      %v4073 = vshrl.u32 %v4072, 7
      %v4074 = vsub.s32 %v3388, %v4073
      %v4075 = vrot.slane %v2934, %v4074
      %v4076 = vsel %vm3393, %v4075, %v4071
      %v4077 = vlaneseq
      %v4078 = vshrl.u32 %v4077, 7
      %v4079 = vsub.s32 %v3395, %v4078
      %v4080 = vrot.slane %v2937, %v4079
      %v4081 = vsel %vm3400, %v4080, %v4076
      %v4082 = vlaneseq
      %v4083 = vshrl.u32 %v4082, 7
      %v4084 = vsub.s32 %v3402, %v4083
      %v4085 = vrot.slane %v2940, %v4084
      %v4086 = vsel %vm3407, %v4085, %v4081
      %v4087 = vlaneseq
      %v4088 = vshrl.u32 %v4087, 7
      %v4089 = vsub.s32 %v3409, %v4088
      %v4090 = vrot.slane %v2943, %v4089
      %v4091 = vsel %vm3414, %v4090, %v4086
      %v4092 = vlaneseq
      %v4093 = vshrl.u32 %v4092, 7
      %v4094 = vsub.s32 %v3416, %v4093
      %v4095 = vrot.slane %v2946, %v4094
      %v4096 = vsel %vm3421, %v4095, %v4091
      %v4097 = vlaneseq
      %v4098 = vshrl.u32 %v4097, 7
      %v4099 = vsub.s32 %v3423, %v4098
      %v4100 = vrot.slane %v2949, %v4099
      %v4101 = vsel %vm3428, %v4100, %v4096
      %v4102 = vlaneseq
      %v4103 = vshrl.u32 %v4102, 7
      %v4104 = vsub.s32 %v3430, %v4103
      %v4105 = vrot.slane %v2952, %v4104
      %v4106 = vsel %vm3435, %v4105, %v4101
      %v4107 = vlaneseq
      %v4108 = vshrl.u32 %v4107, 7
      %v4109 = vsub.s32 %v3354, %v4108
      %v4110 = vrot.slane %v2961, %v4109
      %v4111 = vlaneseq
      %v4112 = vshrl.u32 %v4111, 7
      %v4113 = vsub.s32 %v3970, %v4112
      %v4114 = vrot.slane %v2964, %v4113
      %v4115 = vsel %vm3975, %v4114, %v4110
      %v4116 = vlaneseq
      %v4117 = vshrl.u32 %v4116, 7
      %v4118 = vsub.s32 %v3355, %v4117
      %v4119 = vrot.slane %v2967, %v4118
      %v4120 = vsel %vm3981, %v4119, %v4115
      %v4121 = vlaneseq
      %v4122 = vshrl.u32 %v4121, 7
      %v4123 = vsub.s32 %v3360, %v4122
      %v4124 = vrot.slane %v2970, %v4123
      %v4125 = vsel %vm3365, %v4124, %v4120
      %v4126 = vlaneseq
      %v4127 = vshrl.u32 %v4126, 7
      %v4128 = vsub.s32 %v3367, %v4127
      %v4129 = vrot.slane %v2973, %v4128
      %v4130 = vsel %vm3372, %v4129, %v4125
      %v4131 = vlaneseq
      %v4132 = vshrl.u32 %v4131, 7
      %v4133 = vsub.s32 %v3374, %v4132
      %v4134 = vrot.slane %v2976, %v4133
      %v4135 = vsel %vm3379, %v4134, %v4130
      %v4136 = vlaneseq
      %v4137 = vshrl.u32 %v4136, 7
      %v4138 = vsub.s32 %v3381, %v4137
      %v4139 = vrot.slane %v2979, %v4138
      %v4140 = vsel %vm3386, %v4139, %v4135
      %v4141 = vlaneseq
      %v4142 = vshrl.u32 %v4141, 7
      %v4143 = vsub.s32 %v3388, %v4142
      %v4144 = vrot.slane %v2982, %v4143
      %v4145 = vsel %vm3393, %v4144, %v4140
      %v4146 = vlaneseq
      %v4147 = vshrl.u32 %v4146, 7
      %v4148 = vsub.s32 %v3395, %v4147
      %v4149 = vrot.slane %v2985, %v4148
      %v4150 = vsel %vm3400, %v4149, %v4145
      %v4151 = vlaneseq
      %v4152 = vshrl.u32 %v4151, 7
      %v4153 = vsub.s32 %v3402, %v4152
      %v4154 = vrot.slane %v2988, %v4153
      %v4155 = vsel %vm3407, %v4154, %v4150
      %v4156 = vlaneseq
      %v4157 = vshrl.u32 %v4156, 7
      %v4158 = vsub.s32 %v3409, %v4157
      %v4159 = vrot.slane %v2991, %v4158
      %v4160 = vsel %vm3414, %v4159, %v4155
      %v4161 = vlaneseq
      %v4162 = vshrl.u32 %v4161, 7
      %v4163 = vsub.s32 %v3416, %v4162
      %v4164 = vrot.slane %v2994, %v4163
      %v4165 = vsel %vm3421, %v4164, %v4160
      %v4166 = vlaneseq
      %v4167 = vshrl.u32 %v4166, 7
      %v4168 = vsub.s32 %v3423, %v4167
      %v4169 = vrot.slane %v2997, %v4168
      %v4170 = vsel %vm3428, %v4169, %v4165
      %v4171 = vlaneseq
      %v4172 = vshrl.u32 %v4171, 7
      %v4173 = vsub.s32 %v3430, %v4172
      %v4174 = vrot.slane %v3000, %v4173
      %v4175 = vsel %vm3435, %v4174, %v4170
      %v4176 = vlaneseq
      %v4177 = vshrl.u32 %v4176, 7
      %v4178 = vsub.s32 %v3354, %v4177
      %v4179 = vrot.slane %v3009, %v4178
      %v4180 = vlaneseq
      %v4181 = vshrl.u32 %v4180, 7
      %v4182 = vsub.s32 %v3970, %v4181
      %v4183 = vrot.slane %v3012, %v4182
      %v4184 = vsel %vm3975, %v4183, %v4179
      %v4185 = vlaneseq
      %v4186 = vshrl.u32 %v4185, 7
      %v4187 = vsub.s32 %v3355, %v4186
      %v4188 = vrot.slane %v3015, %v4187
      %v4189 = vsel %vm3981, %v4188, %v4184
      %v4190 = vlaneseq
      %v4191 = vshrl.u32 %v4190, 7
      %v4192 = vsub.s32 %v3360, %v4191
      %v4193 = vrot.slane %v3018, %v4192
      %v4194 = vsel %vm3365, %v4193, %v4189
      %v4195 = vlaneseq
      %v4196 = vshrl.u32 %v4195, 7
      %v4197 = vsub.s32 %v3367, %v4196
      %v4198 = vrot.slane %v3021, %v4197
      %v4199 = vsel %vm3372, %v4198, %v4194
      %v4200 = vlaneseq
      %v4201 = vshrl.u32 %v4200, 7
      %v4202 = vsub.s32 %v3374, %v4201
      %v4203 = vrot.slane %v3024, %v4202
      %v4204 = vsel %vm3379, %v4203, %v4199
      %v4205 = vlaneseq
      %v4206 = vshrl.u32 %v4205, 7
      %v4207 = vsub.s32 %v3381, %v4206
      %v4208 = vrot.slane %v3027, %v4207
      %v4209 = vsel %vm3386, %v4208, %v4204
      %v4210 = vlaneseq
      %v4211 = vshrl.u32 %v4210, 7
      %v4212 = vsub.s32 %v3388, %v4211
      %v4213 = vrot.slane %v3030, %v4212
      %v4214 = vsel %vm3393, %v4213, %v4209
      %v4215 = vlaneseq
      %v4216 = vshrl.u32 %v4215, 7
      %v4217 = vsub.s32 %v3395, %v4216
      %v4218 = vrot.slane %v3033, %v4217
      %v4219 = vsel %vm3400, %v4218, %v4214
      %v4220 = vlaneseq
      %v4221 = vshrl.u32 %v4220, 7
      %v4222 = vsub.s32 %v3402, %v4221
      %v4223 = vrot.slane %v3036, %v4222
      %v4224 = vsel %vm3407, %v4223, %v4219
      %v4225 = vlaneseq
      %v4226 = vshrl.u32 %v4225, 7
      %v4227 = vsub.s32 %v3409, %v4226
      %v4228 = vrot.slane %v3039, %v4227
      %v4229 = vsel %vm3414, %v4228, %v4224
      %v4230 = vlaneseq
      %v4231 = vshrl.u32 %v4230, 7
      %v4232 = vsub.s32 %v3416, %v4231
      %v4233 = vrot.slane %v3042, %v4232
      %v4234 = vsel %vm3421, %v4233, %v4229
      %v4235 = vlaneseq
      %v4236 = vshrl.u32 %v4235, 7
      %v4237 = vsub.s32 %v3423, %v4236
      %v4238 = vrot.slane %v3045, %v4237
      %v4239 = vsel %vm3428, %v4238, %v4234
      %v4240 = vlaneseq
      %v4241 = vshrl.u32 %v4240, 7
      %v4242 = vsub.s32 %v3430, %v4241
      %v4243 = vrot.slane %v3048, %v4242
      %v4244 = vsel %vm3435, %v4243, %v4239
      %v4245 = vlaneseq
      %v4246 = vshrl.u32 %v4245, 7
      %v4247 = vsub.s32 %v3354, %v4246
      %v4248 = vrot.slane %v3057, %v4247
      %v4249 = vlaneseq
      %v4250 = vshrl.u32 %v4249, 7
      %v4251 = vsub.s32 %v3970, %v4250
      %v4252 = vrot.slane %v3060, %v4251
      %v4253 = vsel %vm3975, %v4252, %v4248
      %v4254 = vlaneseq
      %v4255 = vshrl.u32 %v4254, 7
      %v4256 = vsub.s32 %v3355, %v4255
      %v4257 = vrot.slane %v3063, %v4256
      %v4258 = vsel %vm3981, %v4257, %v4253
      %v4259 = vlaneseq
      %v4260 = vshrl.u32 %v4259, 7
      %v4261 = vsub.s32 %v3360, %v4260
      %v4262 = vrot.slane %v3066, %v4261
      %v4263 = vsel %vm3365, %v4262, %v4258
      %v4264 = vlaneseq
      %v4265 = vshrl.u32 %v4264, 7
      %v4266 = vsub.s32 %v3367, %v4265
      %v4267 = vrot.slane %v3069, %v4266
      %v4268 = vsel %vm3372, %v4267, %v4263
      %v4269 = vlaneseq
      %v4270 = vshrl.u32 %v4269, 7
      %v4271 = vsub.s32 %v3374, %v4270
      %v4272 = vrot.slane %v3072, %v4271
      %v4273 = vsel %vm3379, %v4272, %v4268
      %v4274 = vlaneseq
      %v4275 = vshrl.u32 %v4274, 7
      %v4276 = vsub.s32 %v3381, %v4275
      %v4277 = vrot.slane %v3075, %v4276
      %v4278 = vsel %vm3386, %v4277, %v4273
      %v4279 = vlaneseq
      %v4280 = vshrl.u32 %v4279, 7
      %v4281 = vsub.s32 %v3388, %v4280
      %v4282 = vrot.slane %v3078, %v4281
      %v4283 = vsel %vm3393, %v4282, %v4278
      %v4284 = vlaneseq
      %v4285 = vshrl.u32 %v4284, 7
      %v4286 = vsub.s32 %v3395, %v4285
      %v4287 = vrot.slane %v3081, %v4286
      %v4288 = vsel %vm3400, %v4287, %v4283
      %v4289 = vlaneseq
      %v4290 = vshrl.u32 %v4289, 7
      %v4291 = vsub.s32 %v3402, %v4290
      %v4292 = vrot.slane %v3084, %v4291
      %v4293 = vsel %vm3407, %v4292, %v4288
      %v4294 = vlaneseq
      %v4295 = vshrl.u32 %v4294, 7
      %v4296 = vsub.s32 %v3409, %v4295
      %v4297 = vrot.slane %v3087, %v4296
      %v4298 = vsel %vm3414, %v4297, %v4293
      %v4299 = vlaneseq
      %v4300 = vshrl.u32 %v4299, 7
      %v4301 = vsub.s32 %v3416, %v4300
      %v4302 = vrot.slane %v3090, %v4301
      %v4303 = vsel %vm3421, %v4302, %v4298
      %v4304 = vlaneseq
      %v4305 = vshrl.u32 %v4304, 7
      %v4306 = vsub.s32 %v3423, %v4305
      %v4307 = vrot.slane %v3093, %v4306
      %v4308 = vsel %vm3428, %v4307, %v4303
      %v4309 = vlaneseq
      %v4310 = vshrl.u32 %v4309, 7
      %v4311 = vsub.s32 %v3430, %v4310
      %v4312 = vrot.slane %v3096, %v4311
      %v4313 = vsel %vm3435, %v4312, %v4308
      %v4314 = vlaneseq
      %v4315 = vshrl.u32 %v4314, 7
      %v4316 = vsub.s32 %v3354, %v4315
      %v4317 = vrot.slane %v3105, %v4316
      %v4318 = vlaneseq
      %v4319 = vshrl.u32 %v4318, 7
      %v4320 = vsub.s32 %v3970, %v4319
      %v4321 = vrot.slane %v3108, %v4320
      %v4322 = vsel %vm3975, %v4321, %v4317
      %v4323 = vlaneseq
      %v4324 = vshrl.u32 %v4323, 7
      %v4325 = vsub.s32 %v3355, %v4324
      %v4326 = vrot.slane %v3111, %v4325
      %v4327 = vsel %vm3981, %v4326, %v4322
      %v4328 = vlaneseq
      %v4329 = vshrl.u32 %v4328, 7
      %v4330 = vsub.s32 %v3360, %v4329
      %v4331 = vrot.slane %v3114, %v4330
      %v4332 = vsel %vm3365, %v4331, %v4327
      %v4333 = vlaneseq
      %v4334 = vshrl.u32 %v4333, 7
      %v4335 = vsub.s32 %v3367, %v4334
      %v4336 = vrot.slane %v3117, %v4335
      %v4337 = vsel %vm3372, %v4336, %v4332
      %v4338 = vlaneseq
      %v4339 = vshrl.u32 %v4338, 7
      %v4340 = vsub.s32 %v3374, %v4339
      %v4341 = vrot.slane %v3120, %v4340
      %v4342 = vsel %vm3379, %v4341, %v4337
      %v4343 = vlaneseq
      %v4344 = vshrl.u32 %v4343, 7
      %v4345 = vsub.s32 %v3381, %v4344
      %v4346 = vrot.slane %v3123, %v4345
      %v4347 = vsel %vm3386, %v4346, %v4342
      %v4348 = vlaneseq
      %v4349 = vshrl.u32 %v4348, 7
      %v4350 = vsub.s32 %v3388, %v4349
      %v4351 = vrot.slane %v3126, %v4350
      %v4352 = vsel %vm3393, %v4351, %v4347
      %v4353 = vlaneseq
      %v4354 = vshrl.u32 %v4353, 7
      %v4355 = vsub.s32 %v3395, %v4354
      %v4356 = vrot.slane %v3129, %v4355
      %v4357 = vsel %vm3400, %v4356, %v4352
      %v4358 = vlaneseq
      %v4359 = vshrl.u32 %v4358, 7
      %v4360 = vsub.s32 %v3402, %v4359
      %v4361 = vrot.slane %v3132, %v4360
      %v4362 = vsel %vm3407, %v4361, %v4357
      %v4363 = vlaneseq
      %v4364 = vshrl.u32 %v4363, 7
      %v4365 = vsub.s32 %v3409, %v4364
      %v4366 = vrot.slane %v3135, %v4365
      %v4367 = vsel %vm3414, %v4366, %v4362
      %v4368 = vlaneseq
      %v4369 = vshrl.u32 %v4368, 7
      %v4370 = vsub.s32 %v3416, %v4369
      %v4371 = vrot.slane %v3138, %v4370
      %v4372 = vsel %vm3421, %v4371, %v4367
      %v4373 = vlaneseq
      %v4374 = vshrl.u32 %v4373, 7
      %v4375 = vsub.s32 %v3423, %v4374
      %v4376 = vrot.slane %v3141, %v4375
      %v4377 = vsel %vm3428, %v4376, %v4372
      %v4378 = vlaneseq
      %v4379 = vshrl.u32 %v4378, 7
      %v4380 = vsub.s32 %v3430, %v4379
      %v4381 = vrot.slane %v3144, %v4380
      %v4382 = vsel %vm3435, %v4381, %v4377
      %v4383 = vlaneseq
      %v4384 = vshrl.u32 %v4383, 7
      %v4385 = vsub.s32 %v3354, %v4384
      %v4386 = vrot.slane %v3153, %v4385
      %v4387 = vlaneseq
      %v4388 = vshrl.u32 %v4387, 7
      %v4389 = vsub.s32 %v3970, %v4388
      %v4390 = vrot.slane %v3156, %v4389
      %v4391 = vsel %vm3975, %v4390, %v4386
      %v4392 = vlaneseq
      %v4393 = vshrl.u32 %v4392, 7
      %v4394 = vsub.s32 %v3355, %v4393
      %v4395 = vrot.slane %v3159, %v4394
      %v4396 = vsel %vm3981, %v4395, %v4391
      %v4397 = vlaneseq
      %v4398 = vshrl.u32 %v4397, 7
      %v4399 = vsub.s32 %v3360, %v4398
      %v4400 = vrot.slane %v3162, %v4399
      %v4401 = vsel %vm3365, %v4400, %v4396
      %v4402 = vlaneseq
      %v4403 = vshrl.u32 %v4402, 7
      %v4404 = vsub.s32 %v3367, %v4403
      %v4405 = vrot.slane %v3165, %v4404
      %v4406 = vsel %vm3372, %v4405, %v4401
      %v4407 = vlaneseq
      %v4408 = vshrl.u32 %v4407, 7
      %v4409 = vsub.s32 %v3374, %v4408
      %v4410 = vrot.slane %v3168, %v4409
      %v4411 = vsel %vm3379, %v4410, %v4406
      %v4412 = vlaneseq
      %v4413 = vshrl.u32 %v4412, 7
      %v4414 = vsub.s32 %v3381, %v4413
      %v4415 = vrot.slane %v3171, %v4414
      %v4416 = vsel %vm3386, %v4415, %v4411
      %v4417 = vlaneseq
      %v4418 = vshrl.u32 %v4417, 7
      %v4419 = vsub.s32 %v3388, %v4418
      %v4420 = vrot.slane %v3174, %v4419
      %v4421 = vsel %vm3393, %v4420, %v4416
      %v4422 = vlaneseq
      %v4423 = vshrl.u32 %v4422, 7
      %v4424 = vsub.s32 %v3395, %v4423
      %v4425 = vrot.slane %v3177, %v4424
      %v4426 = vsel %vm3400, %v4425, %v4421
      %v4427 = vlaneseq
      %v4428 = vshrl.u32 %v4427, 7
      %v4429 = vsub.s32 %v3402, %v4428
      %v4430 = vrot.slane %v3180, %v4429
      %v4431 = vsel %vm3407, %v4430, %v4426
      %v4432 = vlaneseq
      %v4433 = vshrl.u32 %v4432, 7
      %v4434 = vsub.s32 %v3409, %v4433
      %v4435 = vrot.slane %v3183, %v4434
      %v4436 = vsel %vm3414, %v4435, %v4431
      %v4437 = vlaneseq
      %v4438 = vshrl.u32 %v4437, 7
      %v4439 = vsub.s32 %v3416, %v4438
      %v4440 = vrot.slane %v3186, %v4439
      %v4441 = vsel %vm3421, %v4440, %v4436
      %v4442 = vlaneseq
      %v4443 = vshrl.u32 %v4442, 7
      %v4444 = vsub.s32 %v3423, %v4443
      %v4445 = vrot.slane %v3189, %v4444
      %v4446 = vsel %vm3428, %v4445, %v4441
      %v4447 = vlaneseq
      %v4448 = vshrl.u32 %v4447, 7
      %v4449 = vsub.s32 %v3430, %v4448
      %v4450 = vrot.slane %v3192, %v4449
      %v4451 = vsel %vm3435, %v4450, %v4446
      %v4452 = vlaneseq
      %v4453 = vshrl.u32 %v4452, 7
      %v4454 = vsub.s32 %v3354, %v4453
      %v4455 = vrot.slane %v3201, %v4454
      %v4456 = vlaneseq
      %v4457 = vshrl.u32 %v4456, 7
      %v4458 = vsub.s32 %v3970, %v4457
      %v4459 = vrot.slane %v3204, %v4458
      %v4460 = vsel %vm3975, %v4459, %v4455
      %v4461 = vlaneseq
      %v4462 = vshrl.u32 %v4461, 7
      %v4463 = vsub.s32 %v3355, %v4462
      %v4464 = vrot.slane %v3207, %v4463
      %v4465 = vsel %vm3981, %v4464, %v4460
      %v4466 = vlaneseq
      %v4467 = vshrl.u32 %v4466, 7
      %v4468 = vsub.s32 %v3360, %v4467
      %v4469 = vrot.slane %v3210, %v4468
      %v4470 = vsel %vm3365, %v4469, %v4465
      %v4471 = vlaneseq
      %v4472 = vshrl.u32 %v4471, 7
      %v4473 = vsub.s32 %v3367, %v4472
      %v4474 = vrot.slane %v3213, %v4473
      %v4475 = vsel %vm3372, %v4474, %v4470
      %v4476 = vlaneseq
      %v4477 = vshrl.u32 %v4476, 7
      %v4478 = vsub.s32 %v3374, %v4477
      %v4479 = vrot.slane %v3216, %v4478
      %v4480 = vsel %vm3379, %v4479, %v4475
      %v4481 = vlaneseq
      %v4482 = vshrl.u32 %v4481, 7
      %v4483 = vsub.s32 %v3381, %v4482
      %v4484 = vrot.slane %v3219, %v4483
      %v4485 = vsel %vm3386, %v4484, %v4480
      %v4486 = vlaneseq
      %v4487 = vshrl.u32 %v4486, 7
      %v4488 = vsub.s32 %v3388, %v4487
      %v4489 = vrot.slane %v3222, %v4488
      %v4490 = vsel %vm3393, %v4489, %v4485
      %v4491 = vlaneseq
      %v4492 = vshrl.u32 %v4491, 7
      %v4493 = vsub.s32 %v3395, %v4492
      %v4494 = vrot.slane %v3225, %v4493
      %v4495 = vsel %vm3400, %v4494, %v4490
      %v4496 = vlaneseq
      %v4497 = vshrl.u32 %v4496, 7
      %v4498 = vsub.s32 %v3402, %v4497
      %v4499 = vrot.slane %v3228, %v4498
      %v4500 = vsel %vm3407, %v4499, %v4495
      %v4501 = vlaneseq
      %v4502 = vshrl.u32 %v4501, 7
      %v4503 = vsub.s32 %v3409, %v4502
      %v4504 = vrot.slane %v3231, %v4503
      %v4505 = vsel %vm3414, %v4504, %v4500
      %v4506 = vlaneseq
      %v4507 = vshrl.u32 %v4506, 7
      %v4508 = vsub.s32 %v3416, %v4507
      %v4509 = vrot.slane %v3234, %v4508
      %v4510 = vsel %vm3421, %v4509, %v4505
      %v4511 = vlaneseq
      %v4512 = vshrl.u32 %v4511, 7
      %v4513 = vsub.s32 %v3423, %v4512
      %v4514 = vrot.slane %v3237, %v4513
      %v4515 = vsel %vm3428, %v4514, %v4510
      %v4516 = vlaneseq
      %v4517 = vshrl.u32 %v4516, 7
      %v4518 = vsub.s32 %v3430, %v4517
      %v4519 = vrot.slane %v3240, %v4518
      %v4520 = vsel %vm3435, %v4519, %v4515
      %v4521 = vsel %vm3934, %v4106, %v4037
      %v4522 = vsel %vm3936, %v4175, %v4521
      %v4523 = vsel %vm3938, %v4244, %v4522
      %v4524 = vsel %vm3940, %v4313, %v4523
      %v4525 = vsel %vm3942, %v4382, %v4524
      %v4526 = vsel %vm3944, %v4451, %v4525
      %v4527 = vsel %vm3946, %v4520, %v4526
      %vm4529 = vcmask 916480
      %v4530 = vsel %vm4529, %v4527, 0.0
      %v4531 = vlaneseq
      %v4532 = vshrl.u32 %v4531, 7
      %v4533 = vsub.s32 %v3354, %v4532
      %v4534 = vrot.slane %v2859, %v4533
      %v4535 = vlaneseq
      %v4536 = vshrl.u32 %v4535, 7
      %v4537 = vsub.s32 %v3970, %v4536
      %v4538 = vrot.slane %v2862, %v4537
      %v4539 = vsel %vm3975, %v4538, %v4534
      %v4540 = vlaneseq
      %v4541 = vshrl.u32 %v4540, 7
      %v4542 = vsub.s32 %v3355, %v4541
      %v4543 = vrot.slane %v2865, %v4542
      %v4544 = vsel %vm3981, %v4543, %v4539
      %v4545 = vlaneseq
      %v4546 = vshrl.u32 %v4545, 7
      %v4547 = vsub.s32 %v3360, %v4546
      %v4548 = vrot.slane %v2868, %v4547
      %v4549 = vsel %vm3365, %v4548, %v4544
      %v4550 = vlaneseq
      %v4551 = vshrl.u32 %v4550, 7
      %v4552 = vsub.s32 %v3367, %v4551
      %v4553 = vrot.slane %v2871, %v4552
      %v4554 = vsel %vm3372, %v4553, %v4549
      %v4555 = vlaneseq
      %v4556 = vshrl.u32 %v4555, 7
      %v4557 = vsub.s32 %v3374, %v4556
      %v4558 = vrot.slane %v2874, %v4557
      %v4559 = vsel %vm3379, %v4558, %v4554
      %v4560 = vlaneseq
      %v4561 = vshrl.u32 %v4560, 7
      %v4562 = vsub.s32 %v3381, %v4561
      %v4563 = vrot.slane %v2877, %v4562
      %v4564 = vsel %vm3386, %v4563, %v4559
      %v4565 = vlaneseq
      %v4566 = vshrl.u32 %v4565, 7
      %v4567 = vsub.s32 %v3388, %v4566
      %v4568 = vrot.slane %v2880, %v4567
      %v4569 = vsel %vm3393, %v4568, %v4564
      %v4570 = vlaneseq
      %v4571 = vshrl.u32 %v4570, 7
      %v4572 = vsub.s32 %v3395, %v4571
      %v4573 = vrot.slane %v2883, %v4572
      %v4574 = vsel %vm3400, %v4573, %v4569
      %v4575 = vlaneseq
      %v4576 = vshrl.u32 %v4575, 7
      %v4577 = vsub.s32 %v3402, %v4576
      %v4578 = vrot.slane %v2886, %v4577
      %v4579 = vsel %vm3407, %v4578, %v4574
      %v4580 = vlaneseq
      %v4581 = vshrl.u32 %v4580, 7
      %v4582 = vsub.s32 %v3409, %v4581
      %v4583 = vrot.slane %v2889, %v4582
      %v4584 = vsel %vm3414, %v4583, %v4579
      %v4585 = vlaneseq
      %v4586 = vshrl.u32 %v4585, 7
      %v4587 = vsub.s32 %v3416, %v4586
      %v4588 = vrot.slane %v2892, %v4587
      %v4589 = vsel %vm3421, %v4588, %v4584
      %v4590 = vlaneseq
      %v4591 = vshrl.u32 %v4590, 7
      %v4592 = vsub.s32 %v3423, %v4591
      %v4593 = vrot.slane %v2895, %v4592
      %v4594 = vsel %vm3428, %v4593, %v4589
      %v4595 = vlaneseq
      %v4596 = vshrl.u32 %v4595, 7
      %v4597 = vsub.s32 %v3430, %v4596
      %v4598 = vrot.slane %v2898, %v4597
      %v4599 = vsel %vm3435, %v4598, %v4594
      %v4600 = vlaneseq
      %v4601 = vshrl.u32 %v4600, 7
      %v4602 = vsub.s32 %v3437, %v4601
      %v4603 = vrot.slane %v2901, %v4602
      %v4604 = vsel %vm3442, %v4603, %v4599
      %v4605 = vlaneseq
      %v4606 = vshrl.u32 %v4605, 7
      %v4607 = vsub.s32 %v3444, %v4606
      %v4608 = vrot.slane %v2904, %v4607
      %v4609 = vsel %vm3449, %v4608, %v4604
      %v4610 = vlaneseq
      %v4611 = vshrl.u32 %v4610, 7
      %v4612 = vsub.s32 %v3354, %v4611
      %v4613 = vrot.slane %v2907, %v4612
      %v4614 = vlaneseq
      %v4615 = vshrl.u32 %v4614, 7
      %v4616 = vsub.s32 %v3970, %v4615
      %v4617 = vrot.slane %v2910, %v4616
      %v4618 = vsel %vm3975, %v4617, %v4613
      %v4619 = vlaneseq
      %v4620 = vshrl.u32 %v4619, 7
      %v4621 = vsub.s32 %v3355, %v4620
      %v4622 = vrot.slane %v2913, %v4621
      %v4623 = vsel %vm3981, %v4622, %v4618
      %v4624 = vlaneseq
      %v4625 = vshrl.u32 %v4624, 7
      %v4626 = vsub.s32 %v3360, %v4625
      %v4627 = vrot.slane %v2916, %v4626
      %v4628 = vsel %vm3365, %v4627, %v4623
      %v4629 = vlaneseq
      %v4630 = vshrl.u32 %v4629, 7
      %v4631 = vsub.s32 %v3367, %v4630
      %v4632 = vrot.slane %v2919, %v4631
      %v4633 = vsel %vm3372, %v4632, %v4628
      %v4634 = vlaneseq
      %v4635 = vshrl.u32 %v4634, 7
      %v4636 = vsub.s32 %v3374, %v4635
      %v4637 = vrot.slane %v2922, %v4636
      %v4638 = vsel %vm3379, %v4637, %v4633
      %v4639 = vlaneseq
      %v4640 = vshrl.u32 %v4639, 7
      %v4641 = vsub.s32 %v3381, %v4640
      %v4642 = vrot.slane %v2925, %v4641
      %v4643 = vsel %vm3386, %v4642, %v4638
      %v4644 = vlaneseq
      %v4645 = vshrl.u32 %v4644, 7
      %v4646 = vsub.s32 %v3388, %v4645
      %v4647 = vrot.slane %v2928, %v4646
      %v4648 = vsel %vm3393, %v4647, %v4643
      %v4649 = vlaneseq
      %v4650 = vshrl.u32 %v4649, 7
      %v4651 = vsub.s32 %v3395, %v4650
      %v4652 = vrot.slane %v2931, %v4651
      %v4653 = vsel %vm3400, %v4652, %v4648
      %v4654 = vlaneseq
      %v4655 = vshrl.u32 %v4654, 7
      %v4656 = vsub.s32 %v3402, %v4655
      %v4657 = vrot.slane %v2934, %v4656
      %v4658 = vsel %vm3407, %v4657, %v4653
      %v4659 = vlaneseq
      %v4660 = vshrl.u32 %v4659, 7
      %v4661 = vsub.s32 %v3409, %v4660
      %v4662 = vrot.slane %v2937, %v4661
      %v4663 = vsel %vm3414, %v4662, %v4658
      %v4664 = vlaneseq
      %v4665 = vshrl.u32 %v4664, 7
      %v4666 = vsub.s32 %v3416, %v4665
      %v4667 = vrot.slane %v2940, %v4666
      %v4668 = vsel %vm3421, %v4667, %v4663
      %v4669 = vlaneseq
      %v4670 = vshrl.u32 %v4669, 7
      %v4671 = vsub.s32 %v3423, %v4670
      %v4672 = vrot.slane %v2943, %v4671
      %v4673 = vsel %vm3428, %v4672, %v4668
      %v4674 = vlaneseq
      %v4675 = vshrl.u32 %v4674, 7
      %v4676 = vsub.s32 %v3430, %v4675
      %v4677 = vrot.slane %v2946, %v4676
      %v4678 = vsel %vm3435, %v4677, %v4673
      %v4679 = vlaneseq
      %v4680 = vshrl.u32 %v4679, 7
      %v4681 = vsub.s32 %v3437, %v4680
      %v4682 = vrot.slane %v2949, %v4681
      %v4683 = vsel %vm3442, %v4682, %v4678
      %v4684 = vlaneseq
      %v4685 = vshrl.u32 %v4684, 7
      %v4686 = vsub.s32 %v3444, %v4685
      %v4687 = vrot.slane %v2952, %v4686
      %v4688 = vsel %vm3449, %v4687, %v4683
      %v4689 = vlaneseq
      %v4690 = vshrl.u32 %v4689, 7
      %v4691 = vsub.s32 %v3354, %v4690
      %v4692 = vrot.slane %v2955, %v4691
      %v4693 = vlaneseq
      %v4694 = vshrl.u32 %v4693, 7
      %v4695 = vsub.s32 %v3970, %v4694
      %v4696 = vrot.slane %v2958, %v4695
      %v4697 = vsel %vm3975, %v4696, %v4692
      %v4698 = vlaneseq
      %v4699 = vshrl.u32 %v4698, 7
      %v4700 = vsub.s32 %v3355, %v4699
      %v4701 = vrot.slane %v2961, %v4700
      %v4702 = vsel %vm3981, %v4701, %v4697
      %v4703 = vlaneseq
      %v4704 = vshrl.u32 %v4703, 7
      %v4705 = vsub.s32 %v3360, %v4704
      %v4706 = vrot.slane %v2964, %v4705
      %v4707 = vsel %vm3365, %v4706, %v4702
      %v4708 = vlaneseq
      %v4709 = vshrl.u32 %v4708, 7
      %v4710 = vsub.s32 %v3367, %v4709
      %v4711 = vrot.slane %v2967, %v4710
      %v4712 = vsel %vm3372, %v4711, %v4707
      %v4713 = vlaneseq
      %v4714 = vshrl.u32 %v4713, 7
      %v4715 = vsub.s32 %v3374, %v4714
      %v4716 = vrot.slane %v2970, %v4715
      %v4717 = vsel %vm3379, %v4716, %v4712
      %v4718 = vlaneseq
      %v4719 = vshrl.u32 %v4718, 7
      %v4720 = vsub.s32 %v3381, %v4719
      %v4721 = vrot.slane %v2973, %v4720
      %v4722 = vsel %vm3386, %v4721, %v4717
      %v4723 = vlaneseq
      %v4724 = vshrl.u32 %v4723, 7
      %v4725 = vsub.s32 %v3388, %v4724
      %v4726 = vrot.slane %v2976, %v4725
      %v4727 = vsel %vm3393, %v4726, %v4722
      %v4728 = vlaneseq
      %v4729 = vshrl.u32 %v4728, 7
      %v4730 = vsub.s32 %v3395, %v4729
      %v4731 = vrot.slane %v2979, %v4730
      %v4732 = vsel %vm3400, %v4731, %v4727
      %v4733 = vlaneseq
      %v4734 = vshrl.u32 %v4733, 7
      %v4735 = vsub.s32 %v3402, %v4734
      %v4736 = vrot.slane %v2982, %v4735
      %v4737 = vsel %vm3407, %v4736, %v4732
      %v4738 = vlaneseq
      %v4739 = vshrl.u32 %v4738, 7
      %v4740 = vsub.s32 %v3409, %v4739
      %v4741 = vrot.slane %v2985, %v4740
      %v4742 = vsel %vm3414, %v4741, %v4737
      %v4743 = vlaneseq
      %v4744 = vshrl.u32 %v4743, 7
      %v4745 = vsub.s32 %v3416, %v4744
      %v4746 = vrot.slane %v2988, %v4745
      %v4747 = vsel %vm3421, %v4746, %v4742
      %v4748 = vlaneseq
      %v4749 = vshrl.u32 %v4748, 7
      %v4750 = vsub.s32 %v3423, %v4749
      %v4751 = vrot.slane %v2991, %v4750
      %v4752 = vsel %vm3428, %v4751, %v4747
      %v4753 = vlaneseq
      %v4754 = vshrl.u32 %v4753, 7
      %v4755 = vsub.s32 %v3430, %v4754
      %v4756 = vrot.slane %v2994, %v4755
      %v4757 = vsel %vm3435, %v4756, %v4752
      %v4758 = vlaneseq
      %v4759 = vshrl.u32 %v4758, 7
      %v4760 = vsub.s32 %v3437, %v4759
      %v4761 = vrot.slane %v2997, %v4760
      %v4762 = vsel %vm3442, %v4761, %v4757
      %v4763 = vlaneseq
      %v4764 = vshrl.u32 %v4763, 7
      %v4765 = vsub.s32 %v3444, %v4764
      %v4766 = vrot.slane %v3000, %v4765
      %v4767 = vsel %vm3449, %v4766, %v4762
      %v4768 = vlaneseq
      %v4769 = vshrl.u32 %v4768, 7
      %v4770 = vsub.s32 %v3354, %v4769
      %v4771 = vrot.slane %v3003, %v4770
      %v4772 = vlaneseq
      %v4773 = vshrl.u32 %v4772, 7
      %v4774 = vsub.s32 %v3970, %v4773
      %v4775 = vrot.slane %v3006, %v4774
      %v4776 = vsel %vm3975, %v4775, %v4771
      %v4777 = vlaneseq
      %v4778 = vshrl.u32 %v4777, 7
      %v4779 = vsub.s32 %v3355, %v4778
      %v4780 = vrot.slane %v3009, %v4779
      %v4781 = vsel %vm3981, %v4780, %v4776
      %v4782 = vlaneseq
      %v4783 = vshrl.u32 %v4782, 7
      %v4784 = vsub.s32 %v3360, %v4783
      %v4785 = vrot.slane %v3012, %v4784
      %v4786 = vsel %vm3365, %v4785, %v4781
      %v4787 = vlaneseq
      %v4788 = vshrl.u32 %v4787, 7
      %v4789 = vsub.s32 %v3367, %v4788
      %v4790 = vrot.slane %v3015, %v4789
      %v4791 = vsel %vm3372, %v4790, %v4786
      %v4792 = vlaneseq
      %v4793 = vshrl.u32 %v4792, 7
      %v4794 = vsub.s32 %v3374, %v4793
      %v4795 = vrot.slane %v3018, %v4794
      %v4796 = vsel %vm3379, %v4795, %v4791
      %v4797 = vlaneseq
      %v4798 = vshrl.u32 %v4797, 7
      %v4799 = vsub.s32 %v3381, %v4798
      %v4800 = vrot.slane %v3021, %v4799
      %v4801 = vsel %vm3386, %v4800, %v4796
      %v4802 = vlaneseq
      %v4803 = vshrl.u32 %v4802, 7
      %v4804 = vsub.s32 %v3388, %v4803
      %v4805 = vrot.slane %v3024, %v4804
      %v4806 = vsel %vm3393, %v4805, %v4801
      %v4807 = vlaneseq
      %v4808 = vshrl.u32 %v4807, 7
      %v4809 = vsub.s32 %v3395, %v4808
      %v4810 = vrot.slane %v3027, %v4809
      %v4811 = vsel %vm3400, %v4810, %v4806
      %v4812 = vlaneseq
      %v4813 = vshrl.u32 %v4812, 7
      %v4814 = vsub.s32 %v3402, %v4813
      %v4815 = vrot.slane %v3030, %v4814
      %v4816 = vsel %vm3407, %v4815, %v4811
      %v4817 = vlaneseq
      %v4818 = vshrl.u32 %v4817, 7
      %v4819 = vsub.s32 %v3409, %v4818
      %v4820 = vrot.slane %v3033, %v4819
      %v4821 = vsel %vm3414, %v4820, %v4816
      %v4822 = vlaneseq
      %v4823 = vshrl.u32 %v4822, 7
      %v4824 = vsub.s32 %v3416, %v4823
      %v4825 = vrot.slane %v3036, %v4824
      %v4826 = vsel %vm3421, %v4825, %v4821
      %v4827 = vlaneseq
      %v4828 = vshrl.u32 %v4827, 7
      %v4829 = vsub.s32 %v3423, %v4828
      %v4830 = vrot.slane %v3039, %v4829
      %v4831 = vsel %vm3428, %v4830, %v4826
      %v4832 = vlaneseq
      %v4833 = vshrl.u32 %v4832, 7
      %v4834 = vsub.s32 %v3430, %v4833
      %v4835 = vrot.slane %v3042, %v4834
      %v4836 = vsel %vm3435, %v4835, %v4831
      %v4837 = vlaneseq
      %v4838 = vshrl.u32 %v4837, 7
      %v4839 = vsub.s32 %v3437, %v4838
      %v4840 = vrot.slane %v3045, %v4839
      %v4841 = vsel %vm3442, %v4840, %v4836
      %v4842 = vlaneseq
      %v4843 = vshrl.u32 %v4842, 7
      %v4844 = vsub.s32 %v3444, %v4843
      %v4845 = vrot.slane %v3048, %v4844
      %v4846 = vsel %vm3449, %v4845, %v4841
      %v4847 = vlaneseq
      %v4848 = vshrl.u32 %v4847, 7
      %v4849 = vsub.s32 %v3354, %v4848
      %v4850 = vrot.slane %v3051, %v4849
      %v4851 = vlaneseq
      %v4852 = vshrl.u32 %v4851, 7
      %v4853 = vsub.s32 %v3970, %v4852
      %v4854 = vrot.slane %v3054, %v4853
      %v4855 = vsel %vm3975, %v4854, %v4850
      %v4856 = vlaneseq
      %v4857 = vshrl.u32 %v4856, 7
      %v4858 = vsub.s32 %v3355, %v4857
      %v4859 = vrot.slane %v3057, %v4858
      %v4860 = vsel %vm3981, %v4859, %v4855
      %v4861 = vlaneseq
      %v4862 = vshrl.u32 %v4861, 7
      %v4863 = vsub.s32 %v3360, %v4862
      %v4864 = vrot.slane %v3060, %v4863
      %v4865 = vsel %vm3365, %v4864, %v4860
      %v4866 = vlaneseq
      %v4867 = vshrl.u32 %v4866, 7
      %v4868 = vsub.s32 %v3367, %v4867
      %v4869 = vrot.slane %v3063, %v4868
      %v4870 = vsel %vm3372, %v4869, %v4865
      %v4871 = vlaneseq
      %v4872 = vshrl.u32 %v4871, 7
      %v4873 = vsub.s32 %v3374, %v4872
      %v4874 = vrot.slane %v3066, %v4873
      %v4875 = vsel %vm3379, %v4874, %v4870
      %v4876 = vlaneseq
      %v4877 = vshrl.u32 %v4876, 7
      %v4878 = vsub.s32 %v3381, %v4877
      %v4879 = vrot.slane %v3069, %v4878
      %v4880 = vsel %vm3386, %v4879, %v4875
      %v4881 = vlaneseq
      %v4882 = vshrl.u32 %v4881, 7
      %v4883 = vsub.s32 %v3388, %v4882
      %v4884 = vrot.slane %v3072, %v4883
      %v4885 = vsel %vm3393, %v4884, %v4880
      %v4886 = vlaneseq
      %v4887 = vshrl.u32 %v4886, 7
      %v4888 = vsub.s32 %v3395, %v4887
      %v4889 = vrot.slane %v3075, %v4888
      %v4890 = vsel %vm3400, %v4889, %v4885
      %v4891 = vlaneseq
      %v4892 = vshrl.u32 %v4891, 7
      %v4893 = vsub.s32 %v3402, %v4892
      %v4894 = vrot.slane %v3078, %v4893
      %v4895 = vsel %vm3407, %v4894, %v4890
      %v4896 = vlaneseq
      %v4897 = vshrl.u32 %v4896, 7
      %v4898 = vsub.s32 %v3409, %v4897
      %v4899 = vrot.slane %v3081, %v4898
      %v4900 = vsel %vm3414, %v4899, %v4895
      %v4901 = vlaneseq
      %v4902 = vshrl.u32 %v4901, 7
      %v4903 = vsub.s32 %v3416, %v4902
      %v4904 = vrot.slane %v3084, %v4903
      %v4905 = vsel %vm3421, %v4904, %v4900
      %v4906 = vlaneseq
      %v4907 = vshrl.u32 %v4906, 7
      %v4908 = vsub.s32 %v3423, %v4907
      %v4909 = vrot.slane %v3087, %v4908
      %v4910 = vsel %vm3428, %v4909, %v4905
      %v4911 = vlaneseq
      %v4912 = vshrl.u32 %v4911, 7
      %v4913 = vsub.s32 %v3430, %v4912
      %v4914 = vrot.slane %v3090, %v4913
      %v4915 = vsel %vm3435, %v4914, %v4910
      %v4916 = vlaneseq
      %v4917 = vshrl.u32 %v4916, 7
      %v4918 = vsub.s32 %v3437, %v4917
      %v4919 = vrot.slane %v3093, %v4918
      %v4920 = vsel %vm3442, %v4919, %v4915
      %v4921 = vlaneseq
      %v4922 = vshrl.u32 %v4921, 7
      %v4923 = vsub.s32 %v3444, %v4922
      %v4924 = vrot.slane %v3096, %v4923
      %v4925 = vsel %vm3449, %v4924, %v4920
      %v4926 = vlaneseq
      %v4927 = vshrl.u32 %v4926, 7
      %v4928 = vsub.s32 %v3354, %v4927
      %v4929 = vrot.slane %v3099, %v4928
      %v4930 = vlaneseq
      %v4931 = vshrl.u32 %v4930, 7
      %v4932 = vsub.s32 %v3970, %v4931
      %v4933 = vrot.slane %v3102, %v4932
      %v4934 = vsel %vm3975, %v4933, %v4929
      %v4935 = vlaneseq
      %v4936 = vshrl.u32 %v4935, 7
      %v4937 = vsub.s32 %v3355, %v4936
      %v4938 = vrot.slane %v3105, %v4937
      %v4939 = vsel %vm3981, %v4938, %v4934
      %v4940 = vlaneseq
      %v4941 = vshrl.u32 %v4940, 7
      %v4942 = vsub.s32 %v3360, %v4941
      %v4943 = vrot.slane %v3108, %v4942
      %v4944 = vsel %vm3365, %v4943, %v4939
      %v4945 = vlaneseq
      %v4946 = vshrl.u32 %v4945, 7
      %v4947 = vsub.s32 %v3367, %v4946
      %v4948 = vrot.slane %v3111, %v4947
      %v4949 = vsel %vm3372, %v4948, %v4944
      %v4950 = vlaneseq
      %v4951 = vshrl.u32 %v4950, 7
      %v4952 = vsub.s32 %v3374, %v4951
      %v4953 = vrot.slane %v3114, %v4952
      %v4954 = vsel %vm3379, %v4953, %v4949
      %v4955 = vlaneseq
      %v4956 = vshrl.u32 %v4955, 7
      %v4957 = vsub.s32 %v3381, %v4956
      %v4958 = vrot.slane %v3117, %v4957
      %v4959 = vsel %vm3386, %v4958, %v4954
      %v4960 = vlaneseq
      %v4961 = vshrl.u32 %v4960, 7
      %v4962 = vsub.s32 %v3388, %v4961
      %v4963 = vrot.slane %v3120, %v4962
      %v4964 = vsel %vm3393, %v4963, %v4959
      %v4965 = vlaneseq
      %v4966 = vshrl.u32 %v4965, 7
      %v4967 = vsub.s32 %v3395, %v4966
      %v4968 = vrot.slane %v3123, %v4967
      %v4969 = vsel %vm3400, %v4968, %v4964
      %v4970 = vlaneseq
      %v4971 = vshrl.u32 %v4970, 7
      %v4972 = vsub.s32 %v3402, %v4971
      %v4973 = vrot.slane %v3126, %v4972
      %v4974 = vsel %vm3407, %v4973, %v4969
      %v4975 = vlaneseq
      %v4976 = vshrl.u32 %v4975, 7
      %v4977 = vsub.s32 %v3409, %v4976
      %v4978 = vrot.slane %v3129, %v4977
      %v4979 = vsel %vm3414, %v4978, %v4974
      %v4980 = vlaneseq
      %v4981 = vshrl.u32 %v4980, 7
      %v4982 = vsub.s32 %v3416, %v4981
      %v4983 = vrot.slane %v3132, %v4982
      %v4984 = vsel %vm3421, %v4983, %v4979
      %v4985 = vlaneseq
      %v4986 = vshrl.u32 %v4985, 7
      %v4987 = vsub.s32 %v3423, %v4986
      %v4988 = vrot.slane %v3135, %v4987
      %v4989 = vsel %vm3428, %v4988, %v4984
      %v4990 = vlaneseq
      %v4991 = vshrl.u32 %v4990, 7
      %v4992 = vsub.s32 %v3430, %v4991
      %v4993 = vrot.slane %v3138, %v4992
      %v4994 = vsel %vm3435, %v4993, %v4989
      %v4995 = vlaneseq
      %v4996 = vshrl.u32 %v4995, 7
      %v4997 = vsub.s32 %v3437, %v4996
      %v4998 = vrot.slane %v3141, %v4997
      %v4999 = vsel %vm3442, %v4998, %v4994
      %v5000 = vlaneseq
      %v5001 = vshrl.u32 %v5000, 7
      %v5002 = vsub.s32 %v3444, %v5001
      %v5003 = vrot.slane %v3144, %v5002
      %v5004 = vsel %vm3449, %v5003, %v4999
      %v5005 = vlaneseq
      %v5006 = vshrl.u32 %v5005, 7
      %v5007 = vsub.s32 %v3354, %v5006
      %v5008 = vrot.slane %v3147, %v5007
      %v5009 = vlaneseq
      %v5010 = vshrl.u32 %v5009, 7
      %v5011 = vsub.s32 %v3970, %v5010
      %v5012 = vrot.slane %v3150, %v5011
      %v5013 = vsel %vm3975, %v5012, %v5008
      %v5014 = vlaneseq
      %v5015 = vshrl.u32 %v5014, 7
      %v5016 = vsub.s32 %v3355, %v5015
      %v5017 = vrot.slane %v3153, %v5016
      %v5018 = vsel %vm3981, %v5017, %v5013
      %v5019 = vlaneseq
      %v5020 = vshrl.u32 %v5019, 7
      %v5021 = vsub.s32 %v3360, %v5020
      %v5022 = vrot.slane %v3156, %v5021
      %v5023 = vsel %vm3365, %v5022, %v5018
      %v5024 = vlaneseq
      %v5025 = vshrl.u32 %v5024, 7
      %v5026 = vsub.s32 %v3367, %v5025
      %v5027 = vrot.slane %v3159, %v5026
      %v5028 = vsel %vm3372, %v5027, %v5023
      %v5029 = vlaneseq
      %v5030 = vshrl.u32 %v5029, 7
      %v5031 = vsub.s32 %v3374, %v5030
      %v5032 = vrot.slane %v3162, %v5031
      %v5033 = vsel %vm3379, %v5032, %v5028
      %v5034 = vlaneseq
      %v5035 = vshrl.u32 %v5034, 7
      %v5036 = vsub.s32 %v3381, %v5035
      %v5037 = vrot.slane %v3165, %v5036
      %v5038 = vsel %vm3386, %v5037, %v5033
      %v5039 = vlaneseq
      %v5040 = vshrl.u32 %v5039, 7
      %v5041 = vsub.s32 %v3388, %v5040
      %v5042 = vrot.slane %v3168, %v5041
      %v5043 = vsel %vm3393, %v5042, %v5038
      %v5044 = vlaneseq
      %v5045 = vshrl.u32 %v5044, 7
      %v5046 = vsub.s32 %v3395, %v5045
      %v5047 = vrot.slane %v3171, %v5046
      %v5048 = vsel %vm3400, %v5047, %v5043
      %v5049 = vlaneseq
      %v5050 = vshrl.u32 %v5049, 7
      %v5051 = vsub.s32 %v3402, %v5050
      %v5052 = vrot.slane %v3174, %v5051
      %v5053 = vsel %vm3407, %v5052, %v5048
      %v5054 = vlaneseq
      %v5055 = vshrl.u32 %v5054, 7
      %v5056 = vsub.s32 %v3409, %v5055
      %v5057 = vrot.slane %v3177, %v5056
      %v5058 = vsel %vm3414, %v5057, %v5053
      %v5059 = vlaneseq
      %v5060 = vshrl.u32 %v5059, 7
      %v5061 = vsub.s32 %v3416, %v5060
      %v5062 = vrot.slane %v3180, %v5061
      %v5063 = vsel %vm3421, %v5062, %v5058
      %v5064 = vlaneseq
      %v5065 = vshrl.u32 %v5064, 7
      %v5066 = vsub.s32 %v3423, %v5065
      %v5067 = vrot.slane %v3183, %v5066
      %v5068 = vsel %vm3428, %v5067, %v5063
      %v5069 = vlaneseq
      %v5070 = vshrl.u32 %v5069, 7
      %v5071 = vsub.s32 %v3430, %v5070
      %v5072 = vrot.slane %v3186, %v5071
      %v5073 = vsel %vm3435, %v5072, %v5068
      %v5074 = vlaneseq
      %v5075 = vshrl.u32 %v5074, 7
      %v5076 = vsub.s32 %v3437, %v5075
      %v5077 = vrot.slane %v3189, %v5076
      %v5078 = vsel %vm3442, %v5077, %v5073
      %v5079 = vlaneseq
      %v5080 = vshrl.u32 %v5079, 7
      %v5081 = vsub.s32 %v3444, %v5080
      %v5082 = vrot.slane %v3192, %v5081
      %v5083 = vsel %vm3449, %v5082, %v5078
      %v5084 = vlaneseq
      %v5085 = vshrl.u32 %v5084, 7
      %v5086 = vsub.s32 %v3354, %v5085
      %v5087 = vrot.slane %v3195, %v5086
      %v5088 = vlaneseq
      %v5089 = vshrl.u32 %v5088, 7
      %v5090 = vsub.s32 %v3970, %v5089
      %v5091 = vrot.slane %v3198, %v5090
      %v5092 = vsel %vm3975, %v5091, %v5087
      %v5093 = vlaneseq
      %v5094 = vshrl.u32 %v5093, 7
      %v5095 = vsub.s32 %v3355, %v5094
      %v5096 = vrot.slane %v3201, %v5095
      %v5097 = vsel %vm3981, %v5096, %v5092
      %v5098 = vlaneseq
      %v5099 = vshrl.u32 %v5098, 7
      %v5100 = vsub.s32 %v3360, %v5099
      %v5101 = vrot.slane %v3204, %v5100
      %v5102 = vsel %vm3365, %v5101, %v5097
      %v5103 = vlaneseq
      %v5104 = vshrl.u32 %v5103, 7
      %v5105 = vsub.s32 %v3367, %v5104
      %v5106 = vrot.slane %v3207, %v5105
      %v5107 = vsel %vm3372, %v5106, %v5102
      %v5108 = vlaneseq
      %v5109 = vshrl.u32 %v5108, 7
      %v5110 = vsub.s32 %v3374, %v5109
      %v5111 = vrot.slane %v3210, %v5110
      %v5112 = vsel %vm3379, %v5111, %v5107
      %v5113 = vlaneseq
      %v5114 = vshrl.u32 %v5113, 7
      %v5115 = vsub.s32 %v3381, %v5114
      %v5116 = vrot.slane %v3213, %v5115
      %v5117 = vsel %vm3386, %v5116, %v5112
      %v5118 = vlaneseq
      %v5119 = vshrl.u32 %v5118, 7
      %v5120 = vsub.s32 %v3388, %v5119
      %v5121 = vrot.slane %v3216, %v5120
      %v5122 = vsel %vm3393, %v5121, %v5117
      %v5123 = vlaneseq
      %v5124 = vshrl.u32 %v5123, 7
      %v5125 = vsub.s32 %v3395, %v5124
      %v5126 = vrot.slane %v3219, %v5125
      %v5127 = vsel %vm3400, %v5126, %v5122
      %v5128 = vlaneseq
      %v5129 = vshrl.u32 %v5128, 7
      %v5130 = vsub.s32 %v3402, %v5129
      %v5131 = vrot.slane %v3222, %v5130
      %v5132 = vsel %vm3407, %v5131, %v5127
      %v5133 = vlaneseq
      %v5134 = vshrl.u32 %v5133, 7
      %v5135 = vsub.s32 %v3409, %v5134
      %v5136 = vrot.slane %v3225, %v5135
      %v5137 = vsel %vm3414, %v5136, %v5132
      %v5138 = vlaneseq
      %v5139 = vshrl.u32 %v5138, 7
      %v5140 = vsub.s32 %v3416, %v5139
      %v5141 = vrot.slane %v3228, %v5140
      %v5142 = vsel %vm3421, %v5141, %v5137
      %v5143 = vlaneseq
      %v5144 = vshrl.u32 %v5143, 7
      %v5145 = vsub.s32 %v3423, %v5144
      %v5146 = vrot.slane %v3231, %v5145
      %v5147 = vsel %vm3428, %v5146, %v5142
      %v5148 = vlaneseq
      %v5149 = vshrl.u32 %v5148, 7
      %v5150 = vsub.s32 %v3430, %v5149
      %v5151 = vrot.slane %v3234, %v5150
      %v5152 = vsel %vm3435, %v5151, %v5147
      %v5153 = vlaneseq
      %v5154 = vshrl.u32 %v5153, 7
      %v5155 = vsub.s32 %v3437, %v5154
      %v5156 = vrot.slane %v3237, %v5155
      %v5157 = vsel %vm3442, %v5156, %v5152
      %v5158 = vlaneseq
      %v5159 = vshrl.u32 %v5158, 7
      %v5160 = vsub.s32 %v3444, %v5159
      %v5161 = vrot.slane %v3240, %v5160
      %v5162 = vsel %vm3449, %v5161, %v5157
      %v5163 = vsel %vm3934, %v4688, %v4609
      %v5164 = vsel %vm3936, %v4767, %v5163
      %v5165 = vsel %vm3938, %v4846, %v5164
      %v5166 = vsel %vm3940, %v4925, %v5165
      %v5167 = vsel %vm3942, %v5004, %v5166
      %v5168 = vsel %vm3944, %v5083, %v5167
      %v5169 = vsel %vm3946, %v5162, %v5168
      %v5171 = vld [vmem:[%s2] sm:$0x3]
      %vm5172 = vcmask 195584
      %v5174 = vsel %vm5172, %v5171, 0
      %5176 = vmatprep.subr.mxu0 0.0
      %5177 = vmatpush1.msra.mxu0 %v3949
      %5178 = vmatprep.subr.mxu0 0.0
      %5179 = vmatpush1.msra.mxu0 %v5169
      %5180 = vmatprep.subr.mxu0 0.0
      %5181 = vmatpush1.msra.mxu0 %v4530
      %5182 = vmatprep.subr.mxu0 0.0
      %5183 = vmatpush1.msra.mxu0 0.0
      %5184 = vmatprep.subr.mxu0 0.0
      %5185 = vmatpush1.msra.mxu0 0.0
      %5186 = vmatprep.subr.mxu0 0.0
      %5187 = vmatpush1.msra.mxu0 0.0
      %5188 = vmatprep.subr.mxu0 0.0
      %5189 = vmatpush1.msra.mxu0 0.0
      %5190 = vmatprep.subr.mxu0 0.0
      %5191 = vmatpush1.msra.mxu0 0.0
      %5192 = vmatprep.subr.mxu0 0.0
      %5193 = vmatpush1.msra.mxu0 0.0
      %5194 = vmatprep.subr.mxu0 0.0
      %5195 = vmatpush1.msra.mxu0 0.0
      %5196 = vmatprep.subr.mxu0 0.0
      %5197 = vmatpush1.msra.mxu0 0.0
      %5198 = vmatprep.subr.mxu0 0.0
      %5199 = vmatpush1.msra.mxu0 0.0
      %5200 = vmatprep.subr.mxu0 0.0
      %5201 = vmatpush1.msra.mxu0 0.0
      %5202 = vmatprep.subr.mxu0 0.0
      %5203 = vmatpush1.msra.mxu0 0.0
      %5204 = vmatprep.subr.mxu0 0.0
      %5205 = vmatpush1.msra.mxu0 0.0
      %5206 = vmatprep.subr.mxu0 0.0
      %5207 = vmatpush1.msra.mxu0 0.0
      %5208 = vmatprep.subr.mxu0 0.0
      %5209 = vmatpush1.msra.mxu0 0.0
      %5210 = vmatprep.subr.mxu0 0.0
      %5211 = vmatpush1.msra.mxu0 0.0
      %5212 = vmatprep.subr.mxu0 0.0
      %5213 = vmatpush1.msra.mxu0 0.0
      %5214 = vmatprep.subr.mxu0 0.0
      %5215 = vmatpush1.msra.mxu0 0.0
      %5216 = vmatprep.subr.mxu0 0.0
      %5217 = vmatpush1.msra.mxu0 0.0
      %5218 = vmatprep.subr.mxu0 0.0
      %5219 = vmatpush1.msra.mxu0 0.0
      %5220 = vmatprep.subr.mxu0 0.0
      %5221 = vmatpush1.msra.mxu0 0.0
      %5222 = vmatprep.subr.mxu0 0.0
      %5223 = vmatpush1.msra.mxu0 0.0
      %5224 = vmatprep.subr.mxu0 0.0
      %5225 = vmatpush1.msra.mxu0 0.0
      %5226 = vmatprep.subr.mxu0 0.0
      %5227 = vmatpush1.msra.mxu0 0.0
      %5228 = vmatprep.subr.mxu0 0.0
      %5229 = vmatpush1.msra.mxu0 0.0
      %5230 = vmatprep.subr.mxu0 0.0
      %5231 = vmatpush1.msra.mxu0 0.0
      %5232 = vmatprep.subr.mxu0 0.0
      %5233 = vmatpush1.msra.mxu0 0.0
      %5234 = vmatprep.subr.mxu0 0.0
      %5235 = vmatpush1.msra.mxu0 0.0
      %5236 = vmatprep.subr.mxu0 0.0
      %5237 = vmatpush1.msra.mxu0 0.0
      %5238 = vmatprep.subr.mxu0 0.0
      %5239 = vmatpush1.msra.mxu0 0.0
      %5240 = vmatprep.mubr.f32.mxu0 0.0
      %5241 = vmatmul.mubr.f32.gmra.mrb[0].mxu0 %v5174
      %v5242 = vpop.f32.mrb[0].mxu0
      %v5243 = vadd.f32 0.0, %v5242
      %v5244 = vpop.f32.mrb[0].mxu0
      %5245 = vdwg.mxu0
      %vm5246 = vcmp.ge.f32.partialorder %v5243, 0.0
      %v5247 = vmul.f32 %v5243, 0.01
      %v5248 = vsel %vm5246, %v5243, %v5247
      %5250 = vrot.lane.b32.xlu0 %v5248, 16
      %v5251 = vpop.permute.xlu0 %5250
      %v5253 = vsel %vm2856, 0.0, %v5251
      %5254 = vrot.lane.b32.xlu0 %v5248, 112
      %v5255 = vpop.permute.xlu0 %5254
      %v5257 = vsel %vm4529, %v5255, 0.0
      %v5258 = vrot.slane %v5248, 6
      %v5261 = vrot.slane %v5257, 4
      %vm5263 = vcmask 1041408
      %v5264 = vsel %vm5263, %v5253, %v5258
      %vm5265 = vcmask 1043456
      %v5266 = vsel %vm5265, %v5264, %v5261
      %v5267 = vld [vmem:[%s3] sm:$0xff]
      %vm5268 = vcmask 48128
      %v5270 = vsel %vm5268, %v5267, 0
      %vm5272 = vcmask 1045504
      %v5274 = vsel %vm5272, %v5266, 0
      %5276 = vmatprep.subr.mxu0 0.0
      %5277 = vmatpush1.msra.mxu0 %v5274
      %5278 = vmatprep.subr.mxu0 0.0
      %5279 = vmatpush1.msra.mxu0 0.0
      %5280 = vmatprep.subr.mxu0 0.0
      %5281 = vmatpush1.msra.mxu0 0.0
      %5282 = vmatprep.subr.mxu0 0.0
      %5283 = vmatpush1.msra.mxu0 0.0
      %5284 = vmatprep.subr.mxu0 0.0
      %5285 = vmatpush1.msra.mxu0 0.0
      %5286 = vmatprep.subr.mxu0 0.0
      %5287 = vmatpush1.msra.mxu0 0.0
      %5288 = vmatprep.subr.mxu0 0.0
      %5289 = vmatpush1.msra.mxu0 0.0
      %5290 = vmatprep.subr.mxu0 0.0
      %5291 = vmatpush1.msra.mxu0 0.0
      %5292 = vmatprep.subr.mxu0 0.0
      %5293 = vmatpush1.msra.mxu0 0.0
      %5294 = vmatprep.subr.mxu0 0.0
      %5295 = vmatpush1.msra.mxu0 0.0
      %5296 = vmatprep.subr.mxu0 0.0
      %5297 = vmatpush1.msra.mxu0 0.0
      %5298 = vmatprep.subr.mxu0 0.0
      %5299 = vmatpush1.msra.mxu0 0.0
      %5300 = vmatprep.subr.mxu0 0.0
      %5301 = vmatpush1.msra.mxu0 0.0
      %5302 = vmatprep.subr.mxu0 0.0
      %5303 = vmatpush1.msra.mxu0 0.0
      %5304 = vmatprep.subr.mxu0 0.0
      %5305 = vmatpush1.msra.mxu0 0.0
      %5306 = vmatprep.subr.mxu0 0.0
      %5307 = vmatpush1.msra.mxu0 0.0
      %5308 = vmatprep.subr.mxu0 0.0
      %5309 = vmatpush1.msra.mxu0 0.0
      %5310 = vmatprep.subr.mxu0 0.0
      %5311 = vmatpush1.msra.mxu0 0.0
      %5312 = vmatprep.subr.mxu0 0.0
      %5313 = vmatpush1.msra.mxu0 0.0
      %5314 = vmatprep.subr.mxu0 0.0
      %5315 = vmatpush1.msra.mxu0 0.0
      %5316 = vmatprep.subr.mxu0 0.0
      %5317 = vmatpush1.msra.mxu0 0.0
      %5318 = vmatprep.subr.mxu0 0.0
      %5319 = vmatpush1.msra.mxu0 0.0
      %5320 = vmatprep.subr.mxu0 0.0
      %5321 = vmatpush1.msra.mxu0 0.0
      %5322 = vmatprep.subr.mxu0 0.0
      %5323 = vmatpush1.msra.mxu0 0.0
      %5324 = vmatprep.subr.mxu0 0.0
      %5325 = vmatpush1.msra.mxu0 0.0
      %5326 = vmatprep.subr.mxu0 0.0
      %5327 = vmatpush1.msra.mxu0 0.0
      %5328 = vmatprep.subr.mxu0 0.0
      %5329 = vmatpush1.msra.mxu0 0.0
      %5330 = vmatprep.subr.mxu0 0.0
      %5331 = vmatpush1.msra.mxu0 0.0
      %5332 = vmatprep.subr.mxu0 0.0
      %5333 = vmatpush1.msra.mxu0 0.0
      %5334 = vmatprep.subr.mxu0 0.0
      %5335 = vmatpush1.msra.mxu0 0.0
      %5336 = vmatprep.subr.mxu0 0.0
      %5337 = vmatpush1.msra.mxu0 0.0
      %5338 = vmatprep.subr.mxu0 0.0
      %5339 = vmatpush1.msra.mxu0 0.0
      %5340 = vmatprep.mubr.f32.mxu0 0.0
      %5341 = vmatmul.mubr.f32.gmra.mrb[0].mxu0 %v5270
      %v5342 = vpop.f32.mrb[0].mxu0
      %v5343 = vadd.f32 %v5169, %v5342
      %v5344 = vpop.f32.mrb[0].mxu0
      %5345 = vdwg.mxu0
      %5346 = vst [vmem:[%s270] sm:$0xff] %v5343
      %v5347 = vxor.u32 %v5343, 2147483648
      %v5348 = vmul.f32 %v5347, 1.442695
      %v5349 = vpow.pop %v5348
      %v5350 = vadd.f32 %v5349, 1.0
      %v5351 = vrcp.pop %v5350
      %v5352 = vmul.f32 1.0, %v5351
      %v5353 = vlaneseq
      %v5354 = vshrl.u32 %v5353, 7
      %v5355 = vsub.s32 0, %v5354
      %v5356 = vrot.slane %v5352, %v5355
      %5358 = vbcast.lane.b32.xlu0 %v5356, 256
      %v5359 = vpop.permute.xlu0 %5358
      %s5361 = sor.u32 256, 8
      %5362 = vbcast.lane.b32.xlu0 %v5356, %s5361
      %v5363 = vpop.permute.xlu0 %5362
      %s5365 = sor.u32 256, 16
      %5366 = vbcast.lane.b32.xlu0 %v5356, %s5365
      %v5367 = vpop.permute.xlu0 %5366
      %s5369 = sor.u32 256, 24
      %5370 = vbcast.lane.b32.xlu0 %v5356, %s5369
      %v5371 = vpop.permute.xlu0 %5370
      %s5373 = sor.u32 256, 32
      %5374 = vbcast.lane.b32.xlu0 %v5356, %s5373
      %v5375 = vpop.permute.xlu0 %5374
      %s5377 = sor.u32 256, 40
      %5378 = vbcast.lane.b32.xlu0 %v5356, %s5377
      %v5379 = vpop.permute.xlu0 %5378
      %s5381 = sor.u32 256, 48
      %5382 = vbcast.lane.b32.xlu0 %v5356, %s5381
      %v5383 = vpop.permute.xlu0 %5382
      %s5385 = sor.u32 256, 56
      %5386 = vbcast.lane.b32.xlu0 %v5356, %s5385
      %v5387 = vpop.permute.xlu0 %5386
      %s5389 = sor.u32 256, 64
      %5390 = vbcast.lane.b32.xlu0 %v5356, %s5389
      %v5391 = vpop.permute.xlu0 %5390
      %s5393 = sor.u32 256, 72
      %5394 = vbcast.lane.b32.xlu0 %v5356, %s5393
      %v5395 = vpop.permute.xlu0 %5394
      %s5397 = sor.u32 256, 80
      %5398 = vbcast.lane.b32.xlu0 %v5356, %s5397
      %v5399 = vpop.permute.xlu0 %5398
      %s5401 = sor.u32 256, 88
      %5402 = vbcast.lane.b32.xlu0 %v5356, %s5401
      %v5403 = vpop.permute.xlu0 %5402
      %s5405 = sor.u32 256, 96
      %5406 = vbcast.lane.b32.xlu0 %v5356, %s5405
      %v5407 = vpop.permute.xlu0 %5406
      %s5409 = sor.u32 256, 104
      %5410 = vbcast.lane.b32.xlu0 %v5356, %s5409
      %v5411 = vpop.permute.xlu0 %5410
      %s5413 = sor.u32 256, 112
      %5414 = vbcast.lane.b32.xlu0 %v5356, %s5413
      %v5415 = vpop.permute.xlu0 %5414
      %s5417 = sor.u32 256, 120
      %5418 = vbcast.lane.b32.xlu0 %v5356, %s5417
      %v5419 = vpop.permute.xlu0 %5418
      %v5420 = vlaneseq
      %v5421 = vshrl.u32 %v5420, 7
      %v5422 = vsub.s32 1, %v5421
      %v5423 = vrot.slane %v5352, %v5422
      %5425 = vbcast.lane.b32.xlu0 %v5423, 256
      %v5426 = vpop.permute.xlu0 %5425
      %s5428 = sor.u32 256, 8
      %5429 = vbcast.lane.b32.xlu0 %v5423, %s5428
      %v5430 = vpop.permute.xlu0 %5429
      %s5432 = sor.u32 256, 16
      %5433 = vbcast.lane.b32.xlu0 %v5423, %s5432
      %v5434 = vpop.permute.xlu0 %5433
      %s5436 = sor.u32 256, 24
      %5437 = vbcast.lane.b32.xlu0 %v5423, %s5436
      %v5438 = vpop.permute.xlu0 %5437
      %s5440 = sor.u32 256, 32
      %5441 = vbcast.lane.b32.xlu0 %v5423, %s5440
      %v5442 = vpop.permute.xlu0 %5441
      %s5444 = sor.u32 256, 40
      %5445 = vbcast.lane.b32.xlu0 %v5423, %s5444
      %v5446 = vpop.permute.xlu0 %5445
      %s5448 = sor.u32 256, 48
      %5449 = vbcast.lane.b32.xlu0 %v5423, %s5448
      %v5450 = vpop.permute.xlu0 %5449
      %s5452 = sor.u32 256, 56
      %5453 = vbcast.lane.b32.xlu0 %v5423, %s5452
      %v5454 = vpop.permute.xlu0 %5453
      %s5456 = sor.u32 256, 64
      %5457 = vbcast.lane.b32.xlu0 %v5423, %s5456
      %v5458 = vpop.permute.xlu0 %5457
      %s5460 = sor.u32 256, 72
      %5461 = vbcast.lane.b32.xlu0 %v5423, %s5460
      %v5462 = vpop.permute.xlu0 %5461
      %s5464 = sor.u32 256, 80
      %5465 = vbcast.lane.b32.xlu0 %v5423, %s5464
      %v5466 = vpop.permute.xlu0 %5465
      %s5468 = sor.u32 256, 88
      %5469 = vbcast.lane.b32.xlu0 %v5423, %s5468
      %v5470 = vpop.permute.xlu0 %5469
      %s5472 = sor.u32 256, 96
      %5473 = vbcast.lane.b32.xlu0 %v5423, %s5472
      %v5474 = vpop.permute.xlu0 %5473
      %s5476 = sor.u32 256, 104
      %5477 = vbcast.lane.b32.xlu0 %v5423, %s5476
      %v5478 = vpop.permute.xlu0 %5477
      %s5480 = sor.u32 256, 112
      %5481 = vbcast.lane.b32.xlu0 %v5423, %s5480
      %v5482 = vpop.permute.xlu0 %5481
      %s5484 = sor.u32 256, 120
      %5485 = vbcast.lane.b32.xlu0 %v5423, %s5484
      %v5486 = vpop.permute.xlu0 %5485
      %v5487 = vlaneseq
      %v5488 = vshrl.u32 %v5487, 7
      %v5489 = vsub.s32 2, %v5488
      %v5490 = vrot.slane %v5352, %v5489
      %5492 = vbcast.lane.b32.xlu0 %v5490, 256
      %v5493 = vpop.permute.xlu0 %5492
      %s5495 = sor.u32 256, 8
      %5496 = vbcast.lane.b32.xlu0 %v5490, %s5495
      %v5497 = vpop.permute.xlu0 %5496
      %s5499 = sor.u32 256, 16
      %5500 = vbcast.lane.b32.xlu0 %v5490, %s5499
      %v5501 = vpop.permute.xlu0 %5500
      %s5503 = sor.u32 256, 24
      %5504 = vbcast.lane.b32.xlu0 %v5490, %s5503
      %v5505 = vpop.permute.xlu0 %5504
      %s5507 = sor.u32 256, 32
      %5508 = vbcast.lane.b32.xlu0 %v5490, %s5507
      %v5509 = vpop.permute.xlu0 %5508
      %s5511 = sor.u32 256, 40
      %5512 = vbcast.lane.b32.xlu0 %v5490, %s5511
      %v5513 = vpop.permute.xlu0 %5512
      %s5515 = sor.u32 256, 48
      %5516 = vbcast.lane.b32.xlu0 %v5490, %s5515
      %v5517 = vpop.permute.xlu0 %5516
      %s5519 = sor.u32 256, 56
      %5520 = vbcast.lane.b32.xlu0 %v5490, %s5519
      %v5521 = vpop.permute.xlu0 %5520
      %s5523 = sor.u32 256, 64
      %5524 = vbcast.lane.b32.xlu0 %v5490, %s5523
      %v5525 = vpop.permute.xlu0 %5524
      %s5527 = sor.u32 256, 72
      %5528 = vbcast.lane.b32.xlu0 %v5490, %s5527
      %v5529 = vpop.permute.xlu0 %5528
      %s5531 = sor.u32 256, 80
      %5532 = vbcast.lane.b32.xlu0 %v5490, %s5531
      %v5533 = vpop.permute.xlu0 %5532
      %s5535 = sor.u32 256, 88
      %5536 = vbcast.lane.b32.xlu0 %v5490, %s5535
      %v5537 = vpop.permute.xlu0 %5536
      %s5539 = sor.u32 256, 96
      %5540 = vbcast.lane.b32.xlu0 %v5490, %s5539
      %v5541 = vpop.permute.xlu0 %5540
      %s5543 = sor.u32 256, 104
      %5544 = vbcast.lane.b32.xlu0 %v5490, %s5543
      %v5545 = vpop.permute.xlu0 %5544
      %s5547 = sor.u32 256, 112
      %5548 = vbcast.lane.b32.xlu0 %v5490, %s5547
      %v5549 = vpop.permute.xlu0 %5548
      %s5551 = sor.u32 256, 120
      %5552 = vbcast.lane.b32.xlu0 %v5490, %s5551
      %v5553 = vpop.permute.xlu0 %5552
      %v5554 = vlaneseq
      %v5555 = vshrl.u32 %v5554, 7
      %v5556 = vsub.s32 3, %v5555
      %v5557 = vrot.slane %v5352, %v5556
      %5559 = vbcast.lane.b32.xlu0 %v5557, 256
      %v5560 = vpop.permute.xlu0 %5559
      %s5562 = sor.u32 256, 8
      %5563 = vbcast.lane.b32.xlu0 %v5557, %s5562
      %v5564 = vpop.permute.xlu0 %5563
      %s5566 = sor.u32 256, 16
      %5567 = vbcast.lane.b32.xlu0 %v5557, %s5566
      %v5568 = vpop.permute.xlu0 %5567
      %s5570 = sor.u32 256, 24
      %5571 = vbcast.lane.b32.xlu0 %v5557, %s5570
      %v5572 = vpop.permute.xlu0 %5571
      %s5574 = sor.u32 256, 32
      %5575 = vbcast.lane.b32.xlu0 %v5557, %s5574
      %v5576 = vpop.permute.xlu0 %5575
      %s5578 = sor.u32 256, 40
      %5579 = vbcast.lane.b32.xlu0 %v5557, %s5578
      %v5580 = vpop.permute.xlu0 %5579
      %s5582 = sor.u32 256, 48
      %5583 = vbcast.lane.b32.xlu0 %v5557, %s5582
      %v5584 = vpop.permute.xlu0 %5583
      %s5586 = sor.u32 256, 56
      %5587 = vbcast.lane.b32.xlu0 %v5557, %s5586
      %v5588 = vpop.permute.xlu0 %5587
      %s5590 = sor.u32 256, 64
      %5591 = vbcast.lane.b32.xlu0 %v5557, %s5590
      %v5592 = vpop.permute.xlu0 %5591
      %s5594 = sor.u32 256, 72
      %5595 = vbcast.lane.b32.xlu0 %v5557, %s5594
      %v5596 = vpop.permute.xlu0 %5595
      %s5598 = sor.u32 256, 80
      %5599 = vbcast.lane.b32.xlu0 %v5557, %s5598
      %v5600 = vpop.permute.xlu0 %5599
      %s5602 = sor.u32 256, 88
      %5603 = vbcast.lane.b32.xlu0 %v5557, %s5602
      %v5604 = vpop.permute.xlu0 %5603
      %s5606 = sor.u32 256, 96
      %5607 = vbcast.lane.b32.xlu0 %v5557, %s5606
      %v5608 = vpop.permute.xlu0 %5607
      %s5610 = sor.u32 256, 104
      %5611 = vbcast.lane.b32.xlu0 %v5557, %s5610
      %v5612 = vpop.permute.xlu0 %5611
      %s5614 = sor.u32 256, 112
      %5615 = vbcast.lane.b32.xlu0 %v5557, %s5614
      %v5616 = vpop.permute.xlu0 %5615
      %s5618 = sor.u32 256, 120
      %5619 = vbcast.lane.b32.xlu0 %v5557, %s5618
      %v5620 = vpop.permute.xlu0 %5619
      %v5621 = vlaneseq
      %v5622 = vshrl.u32 %v5621, 7
      %v5623 = vsub.s32 4, %v5622
      %v5624 = vrot.slane %v5352, %v5623
      %5626 = vbcast.lane.b32.xlu0 %v5624, 256
      %v5627 = vpop.permute.xlu0 %5626
      %s5629 = sor.u32 256, 8
      %5630 = vbcast.lane.b32.xlu0 %v5624, %s5629
      %v5631 = vpop.permute.xlu0 %5630
      %s5633 = sor.u32 256, 16
      %5634 = vbcast.lane.b32.xlu0 %v5624, %s5633
      %v5635 = vpop.permute.xlu0 %5634
      %s5637 = sor.u32 256, 24
      %5638 = vbcast.lane.b32.xlu0 %v5624, %s5637
      %v5639 = vpop.permute.xlu0 %5638
      %s5641 = sor.u32 256, 32
      %5642 = vbcast.lane.b32.xlu0 %v5624, %s5641
      %v5643 = vpop.permute.xlu0 %5642
      %s5645 = sor.u32 256, 40
      %5646 = vbcast.lane.b32.xlu0 %v5624, %s5645
      %v5647 = vpop.permute.xlu0 %5646
      %s5649 = sor.u32 256, 48
      %5650 = vbcast.lane.b32.xlu0 %v5624, %s5649
      %v5651 = vpop.permute.xlu0 %5650
      %s5653 = sor.u32 256, 56
      %5654 = vbcast.lane.b32.xlu0 %v5624, %s5653
      %v5655 = vpop.permute.xlu0 %5654
      %s5657 = sor.u32 256, 64
      %5658 = vbcast.lane.b32.xlu0 %v5624, %s5657
      %v5659 = vpop.permute.xlu0 %5658
      %s5661 = sor.u32 256, 72
      %5662 = vbcast.lane.b32.xlu0 %v5624, %s5661
      %v5663 = vpop.permute.xlu0 %5662
      %s5665 = sor.u32 256, 80
      %5666 = vbcast.lane.b32.xlu0 %v5624, %s5665
      %v5667 = vpop.permute.xlu0 %5666
      %s5669 = sor.u32 256, 88
      %5670 = vbcast.lane.b32.xlu0 %v5624, %s5669
      %v5671 = vpop.permute.xlu0 %5670
      %s5673 = sor.u32 256, 96
      %5674 = vbcast.lane.b32.xlu0 %v5624, %s5673
      %v5675 = vpop.permute.xlu0 %5674
      %s5677 = sor.u32 256, 104
      %5678 = vbcast.lane.b32.xlu0 %v5624, %s5677
      %v5679 = vpop.permute.xlu0 %5678
      %s5681 = sor.u32 256, 112
      %5682 = vbcast.lane.b32.xlu0 %v5624, %s5681
      %v5683 = vpop.permute.xlu0 %5682
      %s5685 = sor.u32 256, 120
      %5686 = vbcast.lane.b32.xlu0 %v5624, %s5685
      %v5687 = vpop.permute.xlu0 %5686
      %v5688 = vlaneseq
      %v5689 = vshrl.u32 %v5688, 7
      %v5690 = vsub.s32 5, %v5689
      %v5691 = vrot.slane %v5352, %v5690
      %5693 = vbcast.lane.b32.xlu0 %v5691, 256
      %v5694 = vpop.permute.xlu0 %5693
      %s5696 = sor.u32 256, 8
      %5697 = vbcast.lane.b32.xlu0 %v5691, %s5696
      %v5698 = vpop.permute.xlu0 %5697
      %s5700 = sor.u32 256, 16
      %5701 = vbcast.lane.b32.xlu0 %v5691, %s5700
      %v5702 = vpop.permute.xlu0 %5701
      %s5704 = sor.u32 256, 24
      %5705 = vbcast.lane.b32.xlu0 %v5691, %s5704
      %v5706 = vpop.permute.xlu0 %5705
      %s5708 = sor.u32 256, 32
      %5709 = vbcast.lane.b32.xlu0 %v5691, %s5708
      %v5710 = vpop.permute.xlu0 %5709
      %s5712 = sor.u32 256, 40
      %5713 = vbcast.lane.b32.xlu0 %v5691, %s5712
      %v5714 = vpop.permute.xlu0 %5713
      %s5716 = sor.u32 256, 48
      %5717 = vbcast.lane.b32.xlu0 %v5691, %s5716
      %v5718 = vpop.permute.xlu0 %5717
      %s5720 = sor.u32 256, 56
      %5721 = vbcast.lane.b32.xlu0 %v5691, %s5720
      %v5722 = vpop.permute.xlu0 %5721
      %s5724 = sor.u32 256, 64
      %5725 = vbcast.lane.b32.xlu0 %v5691, %s5724
      %v5726 = vpop.permute.xlu0 %5725
      %s5728 = sor.u32 256, 72
      %5729 = vbcast.lane.b32.xlu0 %v5691, %s5728
      %v5730 = vpop.permute.xlu0 %5729
      %s5732 = sor.u32 256, 80
      %5733 = vbcast.lane.b32.xlu0 %v5691, %s5732
      %v5734 = vpop.permute.xlu0 %5733
      %s5736 = sor.u32 256, 88
      %5737 = vbcast.lane.b32.xlu0 %v5691, %s5736
      %v5738 = vpop.permute.xlu0 %5737
      %s5740 = sor.u32 256, 96
      %5741 = vbcast.lane.b32.xlu0 %v5691, %s5740
      %v5742 = vpop.permute.xlu0 %5741
      %s5744 = sor.u32 256, 104
      %5745 = vbcast.lane.b32.xlu0 %v5691, %s5744
      %v5746 = vpop.permute.xlu0 %5745
      %s5748 = sor.u32 256, 112
      %5749 = vbcast.lane.b32.xlu0 %v5691, %s5748
      %v5750 = vpop.permute.xlu0 %5749
      %s5752 = sor.u32 256, 120
      %5753 = vbcast.lane.b32.xlu0 %v5691, %s5752
      %v5754 = vpop.permute.xlu0 %5753
      %v5755 = vlaneseq
      %v5756 = vshrl.u32 %v5755, 7
      %v5757 = vsub.s32 6, %v5756
      %v5758 = vrot.slane %v5352, %v5757
      %5760 = vbcast.lane.b32.xlu0 %v5758, 256
      %v5761 = vpop.permute.xlu0 %5760
      %s5763 = sor.u32 256, 8
      %5764 = vbcast.lane.b32.xlu0 %v5758, %s5763
      %v5765 = vpop.permute.xlu0 %5764
      %s5767 = sor.u32 256, 16
      %5768 = vbcast.lane.b32.xlu0 %v5758, %s5767
      %v5769 = vpop.permute.xlu0 %5768
      %s5771 = sor.u32 256, 24
      %5772 = vbcast.lane.b32.xlu0 %v5758, %s5771
      %v5773 = vpop.permute.xlu0 %5772
      %s5775 = sor.u32 256, 32
      %5776 = vbcast.lane.b32.xlu0 %v5758, %s5775
      %v5777 = vpop.permute.xlu0 %5776
      %s5779 = sor.u32 256, 40
      %5780 = vbcast.lane.b32.xlu0 %v5758, %s5779
      %v5781 = vpop.permute.xlu0 %5780
      %s5783 = sor.u32 256, 48
      %5784 = vbcast.lane.b32.xlu0 %v5758, %s5783
      %v5785 = vpop.permute.xlu0 %5784
      %s5787 = sor.u32 256, 56
      %5788 = vbcast.lane.b32.xlu0 %v5758, %s5787
      %v5789 = vpop.permute.xlu0 %5788
      %s5791 = sor.u32 256, 64
      %5792 = vbcast.lane.b32.xlu0 %v5758, %s5791
      %v5793 = vpop.permute.xlu0 %5792
      %s5795 = sor.u32 256, 72
      %5796 = vbcast.lane.b32.xlu0 %v5758, %s5795
      %v5797 = vpop.permute.xlu0 %5796
      %s5799 = sor.u32 256, 80
      %5800 = vbcast.lane.b32.xlu0 %v5758, %s5799
      %v5801 = vpop.permute.xlu0 %5800
      %s5803 = sor.u32 256, 88
      %5804 = vbcast.lane.b32.xlu0 %v5758, %s5803
      %v5805 = vpop.permute.xlu0 %5804
      %s5807 = sor.u32 256, 96
      %5808 = vbcast.lane.b32.xlu0 %v5758, %s5807
      %v5809 = vpop.permute.xlu0 %5808
      %s5811 = sor.u32 256, 104
      %5812 = vbcast.lane.b32.xlu0 %v5758, %s5811
      %v5813 = vpop.permute.xlu0 %5812
      %s5815 = sor.u32 256, 112
      %5816 = vbcast.lane.b32.xlu0 %v5758, %s5815
      %v5817 = vpop.permute.xlu0 %5816
      %s5819 = sor.u32 256, 120
      %5820 = vbcast.lane.b32.xlu0 %v5758, %s5819
      %v5821 = vpop.permute.xlu0 %5820
      %v5822 = vlaneseq
      %v5823 = vshrl.u32 %v5822, 7
      %v5824 = vsub.s32 7, %v5823
      %v5825 = vrot.slane %v5352, %v5824
      %5827 = vbcast.lane.b32.xlu0 %v5825, 256
      %v5828 = vpop.permute.xlu0 %5827
      %s5830 = sor.u32 256, 8
      %5831 = vbcast.lane.b32.xlu0 %v5825, %s5830
      %v5832 = vpop.permute.xlu0 %5831
      %s5834 = sor.u32 256, 16
      %5835 = vbcast.lane.b32.xlu0 %v5825, %s5834
      %v5836 = vpop.permute.xlu0 %5835
      %s5838 = sor.u32 256, 24
      %5839 = vbcast.lane.b32.xlu0 %v5825, %s5838
      %v5840 = vpop.permute.xlu0 %5839
      %s5842 = sor.u32 256, 32
      %5843 = vbcast.lane.b32.xlu0 %v5825, %s5842
      %v5844 = vpop.permute.xlu0 %5843
      %s5846 = sor.u32 256, 40
      %5847 = vbcast.lane.b32.xlu0 %v5825, %s5846
      %v5848 = vpop.permute.xlu0 %5847
      %s5850 = sor.u32 256, 48
      %5851 = vbcast.lane.b32.xlu0 %v5825, %s5850
      %v5852 = vpop.permute.xlu0 %5851
      %s5854 = sor.u32 256, 56
      %5855 = vbcast.lane.b32.xlu0 %v5825, %s5854
      %v5856 = vpop.permute.xlu0 %5855
      %s5858 = sor.u32 256, 64
      %5859 = vbcast.lane.b32.xlu0 %v5825, %s5858
      %v5860 = vpop.permute.xlu0 %5859
      %s5862 = sor.u32 256, 72
      %5863 = vbcast.lane.b32.xlu0 %v5825, %s5862
      %v5864 = vpop.permute.xlu0 %5863
      %s5866 = sor.u32 256, 80
      %5867 = vbcast.lane.b32.xlu0 %v5825, %s5866
      %v5868 = vpop.permute.xlu0 %5867
      %s5870 = sor.u32 256, 88
      %5871 = vbcast.lane.b32.xlu0 %v5825, %s5870
      %v5872 = vpop.permute.xlu0 %5871
      %s5874 = sor.u32 256, 96
      %5875 = vbcast.lane.b32.xlu0 %v5825, %s5874
      %v5876 = vpop.permute.xlu0 %5875
      %s5878 = sor.u32 256, 104
      %5879 = vbcast.lane.b32.xlu0 %v5825, %s5878
      %v5880 = vpop.permute.xlu0 %5879
      %s5882 = sor.u32 256, 112
      %5883 = vbcast.lane.b32.xlu0 %v5825, %s5882
      %v5884 = vpop.permute.xlu0 %5883
      %s5886 = sor.u32 256, 120
      %5887 = vbcast.lane.b32.xlu0 %v5825, %s5886
      %v5888 = vpop.permute.xlu0 %5887
      %v5889 = vcombine.low %v5359, %v5493
      %v5890 = vcombine.high %v5359, %v5493
      %v5892 = vunpack.c.l.s4 1983009808
      %v5893 = vunpack.c.0.s8 %v5892
      %v5894 = vlaneseq
      %v5895 = vshrl.u32 %v5894, 7
      %v5896 = vsub.s32 %v5893, %v5895
      %v5897 = vrot.slane %v5889, %v5896
      %v5899 = vunpack.c.l.s4 1983009808
      %v5900 = vunpack.c.0.s8 %v5899
      %v5901 = vlaneseq
      %v5902 = vshrl.u32 %v5901, 7
      %v5903 = vsub.s32 %v5900, %v5902
      %v5904 = vrot.slane %v5890, %v5903
      %v5905 = vcombine.low %v5426, %v5560
      %v5906 = vcombine.high %v5426, %v5560
      %v5908 = vunpack.c.l.s4 1983009808
      %v5909 = vunpack.c.0.s8 %v5908
      %v5910 = vlaneseq
      %v5911 = vshrl.u32 %v5910, 7
      %v5912 = vsub.s32 %v5909, %v5911
      %v5913 = vrot.slane %v5905, %v5912
      %v5915 = vunpack.c.l.s4 1983009808
      %v5916 = vunpack.c.0.s8 %v5915
      %v5917 = vlaneseq
      %v5918 = vshrl.u32 %v5917, 7
      %v5919 = vsub.s32 %v5916, %v5918
      %v5920 = vrot.slane %v5906, %v5919
      %v5921 = vcombine.low %v5627, %v5761
      %v5922 = vcombine.high %v5627, %v5761
      %v5924 = vunpack.c.l.s4 1983009808
      %v5925 = vunpack.c.0.s8 %v5924
      %v5926 = vlaneseq
      %v5927 = vshrl.u32 %v5926, 7
      %v5928 = vsub.s32 %v5925, %v5927
      %v5929 = vrot.slane %v5921, %v5928
      %v5931 = vunpack.c.l.s4 1983009808
      %v5932 = vunpack.c.0.s8 %v5931
      %v5933 = vlaneseq
      %v5934 = vshrl.u32 %v5933, 7
      %v5935 = vsub.s32 %v5932, %v5934
      %v5936 = vrot.slane %v5922, %v5935
      %v5937 = vcombine.low %v5694, %v5828
      %v5938 = vcombine.high %v5694, %v5828
      %v5940 = vunpack.c.l.s4 1983009808
      %v5941 = vunpack.c.0.s8 %v5940
      %v5942 = vlaneseq
      %v5943 = vshrl.u32 %v5942, 7
      %v5944 = vsub.s32 %v5941, %v5943
      %v5945 = vrot.slane %v5937, %v5944
      %v5947 = vunpack.c.l.s4 1983009808
      %v5948 = vunpack.c.0.s8 %v5947
      %v5949 = vlaneseq
      %v5950 = vshrl.u32 %v5949, 7
      %v5951 = vsub.s32 %v5948, %v5950
      %v5952 = vrot.slane %v5938, %v5951
      %v5953 = vcombine.low %v5897, %v5913
      %v5954 = vcombine.high %v5897, %v5913
      %v5956 = vunpack.c.l.s4 1934713408
      %v5957 = vunpack.c.0.s8 %v5956
      %v5958 = vlaneseq
      %v5959 = vshrl.u32 %v5958, 7
      %v5960 = vsub.s32 %v5957, %v5959
      %v5961 = vrot.slane %v5953, %v5960
      %v5963 = vunpack.c.l.s4 1934713408
      %v5964 = vunpack.c.0.s8 %v5963
      %v5965 = vlaneseq
      %v5966 = vshrl.u32 %v5965, 7
      %v5967 = vsub.s32 %v5964, %v5966
      %v5968 = vrot.slane %v5954, %v5967
      %v5969 = vcombine.low %v5904, %v5920
      %v5970 = vcombine.high %v5904, %v5920
      %v5972 = vunpack.c.l.s4 1934713408
      %v5973 = vunpack.c.0.s8 %v5972
      %v5974 = vlaneseq
      %v5975 = vshrl.u32 %v5974, 7
      %v5976 = vsub.s32 %v5973, %v5975
      %v5977 = vrot.slane %v5969, %v5976
      %v5979 = vunpack.c.l.s4 1934713408
      %v5980 = vunpack.c.0.s8 %v5979
      %v5981 = vlaneseq
      %v5982 = vshrl.u32 %v5981, 7
      %v5983 = vsub.s32 %v5980, %v5982
      %v5984 = vrot.slane %v5970, %v5983
      %v5985 = vcombine.low %v5929, %v5945
      %v5986 = vcombine.high %v5929, %v5945
      %v5988 = vunpack.c.l.s4 1934713408
      %v5989 = vunpack.c.0.s8 %v5988
      %v5990 = vlaneseq
      %v5991 = vshrl.u32 %v5990, 7
      %v5992 = vsub.s32 %v5989, %v5991
      %v5993 = vrot.slane %v5985, %v5992
      %v5995 = vunpack.c.l.s4 1934713408
      %v5996 = vunpack.c.0.s8 %v5995
      %v5997 = vlaneseq
      %v5998 = vshrl.u32 %v5997, 7
      %v5999 = vsub.s32 %v5996, %v5998
      %v6000 = vrot.slane %v5986, %v5999
      %v6001 = vcombine.low %v5936, %v5952
      %v6002 = vcombine.high %v5936, %v5952
      %v6004 = vunpack.c.l.s4 1934713408
      %v6005 = vunpack.c.0.s8 %v6004
      %v6006 = vlaneseq
      %v6007 = vshrl.u32 %v6006, 7
      %v6008 = vsub.s32 %v6005, %v6007
      %v6009 = vrot.slane %v6001, %v6008
      %v6011 = vunpack.c.l.s4 1934713408
      %v6012 = vunpack.c.0.s8 %v6011
      %v6013 = vlaneseq
      %v6014 = vshrl.u32 %v6013, 7
      %v6015 = vsub.s32 %v6012, %v6014
      %v6016 = vrot.slane %v6002, %v6015
      %v6017 = vcombine.low %v5961, %v5993
      %v6018 = vcombine.high %v5961, %v5993
      %v6019 = vcombine.low %v5968, %v6000
      %v6020 = vcombine.high %v5968, %v6000
      %v6021 = vcombine.low %v5977, %v6009
      %v6022 = vcombine.high %v5977, %v6009
      %v6023 = vcombine.low %v5984, %v6016
      %v6024 = vcombine.high %v5984, %v6016
      %v6025 = vcombine.low %v5363, %v5497
      %v6026 = vcombine.high %v5363, %v5497
      %v6028 = vunpack.c.l.s4 1983009808
      %v6029 = vunpack.c.0.s8 %v6028
      %v6030 = vlaneseq
      %v6031 = vshrl.u32 %v6030, 7
      %v6032 = vsub.s32 %v6029, %v6031
      %v6033 = vrot.slane %v6025, %v6032
      %v6035 = vunpack.c.l.s4 1983009808
      %v6036 = vunpack.c.0.s8 %v6035
      %v6037 = vlaneseq
      %v6038 = vshrl.u32 %v6037, 7
      %v6039 = vsub.s32 %v6036, %v6038
      %v6040 = vrot.slane %v6026, %v6039
      %v6041 = vcombine.low %v5430, %v5564
      %v6042 = vcombine.high %v5430, %v5564
      %v6044 = vunpack.c.l.s4 1983009808
      %v6045 = vunpack.c.0.s8 %v6044
      %v6046 = vlaneseq
      %v6047 = vshrl.u32 %v6046, 7
      %v6048 = vsub.s32 %v6045, %v6047
      %v6049 = vrot.slane %v6041, %v6048
      %v6051 = vunpack.c.l.s4 1983009808
      %v6052 = vunpack.c.0.s8 %v6051
      %v6053 = vlaneseq
      %v6054 = vshrl.u32 %v6053, 7
      %v6055 = vsub.s32 %v6052, %v6054
      %v6056 = vrot.slane %v6042, %v6055
      %v6057 = vcombine.low %v5631, %v5765
      %v6058 = vcombine.high %v5631, %v5765
      %v6060 = vunpack.c.l.s4 1983009808
      %v6061 = vunpack.c.0.s8 %v6060
      %v6062 = vlaneseq
      %v6063 = vshrl.u32 %v6062, 7
      %v6064 = vsub.s32 %v6061, %v6063
      %v6065 = vrot.slane %v6057, %v6064
      %v6067 = vunpack.c.l.s4 1983009808
      %v6068 = vunpack.c.0.s8 %v6067
      %v6069 = vlaneseq
      %v6070 = vshrl.u32 %v6069, 7
      %v6071 = vsub.s32 %v6068, %v6070
      %v6072 = vrot.slane %v6058, %v6071
      %v6073 = vcombine.low %v5698, %v5832
      %v6074 = vcombine.high %v5698, %v5832
      %v6076 = vunpack.c.l.s4 1983009808
      %v6077 = vunpack.c.0.s8 %v6076
      %v6078 = vlaneseq
      %v6079 = vshrl.u32 %v6078, 7
      %v6080 = vsub.s32 %v6077, %v6079
      %v6081 = vrot.slane %v6073, %v6080
      %v6083 = vunpack.c.l.s4 1983009808
      %v6084 = vunpack.c.0.s8 %v6083
      %v6085 = vlaneseq
      %v6086 = vshrl.u32 %v6085, 7
      %v6087 = vsub.s32 %v6084, %v6086
      %v6088 = vrot.slane %v6074, %v6087
      %v6089 = vcombine.low %v6033, %v6049
      %v6090 = vcombine.high %v6033, %v6049
      %v6092 = vunpack.c.l.s4 1934713408
      %v6093 = vunpack.c.0.s8 %v6092
      %v6094 = vlaneseq
      %v6095 = vshrl.u32 %v6094, 7
      %v6096 = vsub.s32 %v6093, %v6095
      %v6097 = vrot.slane %v6089, %v6096
      %v6099 = vunpack.c.l.s4 1934713408
      %v6100 = vunpack.c.0.s8 %v6099
      %v6101 = vlaneseq
      %v6102 = vshrl.u32 %v6101, 7
      %v6103 = vsub.s32 %v6100, %v6102
      %v6104 = vrot.slane %v6090, %v6103
      %v6105 = vcombine.low %v6040, %v6056
      %v6106 = vcombine.high %v6040, %v6056
      %v6108 = vunpack.c.l.s4 1934713408
      %v6109 = vunpack.c.0.s8 %v6108
      %v6110 = vlaneseq
      %v6111 = vshrl.u32 %v6110, 7
      %v6112 = vsub.s32 %v6109, %v6111
      %v6113 = vrot.slane %v6105, %v6112
      %v6115 = vunpack.c.l.s4 1934713408
      %v6116 = vunpack.c.0.s8 %v6115
      %v6117 = vlaneseq
      %v6118 = vshrl.u32 %v6117, 7
      %v6119 = vsub.s32 %v6116, %v6118
      %v6120 = vrot.slane %v6106, %v6119
      %v6121 = vcombine.low %v6065, %v6081
      %v6122 = vcombine.high %v6065, %v6081
      %v6124 = vunpack.c.l.s4 1934713408
      %v6125 = vunpack.c.0.s8 %v6124
      %v6126 = vlaneseq
      %v6127 = vshrl.u32 %v6126, 7
      %v6128 = vsub.s32 %v6125, %v6127
      %v6129 = vrot.slane %v6121, %v6128
      %v6131 = vunpack.c.l.s4 1934713408
      %v6132 = vunpack.c.0.s8 %v6131
      %v6133 = vlaneseq
      %v6134 = vshrl.u32 %v6133, 7
      %v6135 = vsub.s32 %v6132, %v6134
      %v6136 = vrot.slane %v6122, %v6135
      %v6137 = vcombine.low %v6072, %v6088
      %v6138 = vcombine.high %v6072, %v6088
      %v6140 = vunpack.c.l.s4 1934713408
      %v6141 = vunpack.c.0.s8 %v6140
      %v6142 = vlaneseq
      %v6143 = vshrl.u32 %v6142, 7
      %v6144 = vsub.s32 %v6141, %v6143
      %v6145 = vrot.slane %v6137, %v6144
      %v6147 = vunpack.c.l.s4 1934713408
      %v6148 = vunpack.c.0.s8 %v6147
      %v6149 = vlaneseq
      %v6150 = vshrl.u32 %v6149, 7
      %v6151 = vsub.s32 %v6148, %v6150
      %v6152 = vrot.slane %v6138, %v6151
      %v6153 = vcombine.low %v6097, %v6129
      %v6154 = vcombine.high %v6097, %v6129
      %v6155 = vcombine.low %v6104, %v6136
      %v6156 = vcombine.high %v6104, %v6136
      %v6157 = vcombine.low %v6113, %v6145
      %v6158 = vcombine.high %v6113, %v6145
      %v6159 = vcombine.low %v6120, %v6152
      %v6160 = vcombine.high %v6120, %v6152
      %v6161 = vcombine.low %v5367, %v5501
      %v6162 = vcombine.high %v5367, %v5501
      %v6164 = vunpack.c.l.s4 1983009808
      %v6165 = vunpack.c.0.s8 %v6164
      %v6166 = vlaneseq
      %v6167 = vshrl.u32 %v6166, 7
      %v6168 = vsub.s32 %v6165, %v6167
      %v6169 = vrot.slane %v6161, %v6168
      %v6171 = vunpack.c.l.s4 1983009808
      %v6172 = vunpack.c.0.s8 %v6171
      %v6173 = vlaneseq
      %v6174 = vshrl.u32 %v6173, 7
      %v6175 = vsub.s32 %v6172, %v6174
      %v6176 = vrot.slane %v6162, %v6175
      %v6177 = vcombine.low %v5434, %v5568
      %v6178 = vcombine.high %v5434, %v5568
      %v6180 = vunpack.c.l.s4 1983009808
      %v6181 = vunpack.c.0.s8 %v6180
      %v6182 = vlaneseq
      %v6183 = vshrl.u32 %v6182, 7
      %v6184 = vsub.s32 %v6181, %v6183
      %v6185 = vrot.slane %v6177, %v6184
      %v6187 = vunpack.c.l.s4 1983009808
      %v6188 = vunpack.c.0.s8 %v6187
      %v6189 = vlaneseq
      %v6190 = vshrl.u32 %v6189, 7
      %v6191 = vsub.s32 %v6188, %v6190
      %v6192 = vrot.slane %v6178, %v6191
      %v6193 = vcombine.low %v5635, %v5769
      %v6194 = vcombine.high %v5635, %v5769
      %v6196 = vunpack.c.l.s4 1983009808
      %v6197 = vunpack.c.0.s8 %v6196
      %v6198 = vlaneseq
      %v6199 = vshrl.u32 %v6198, 7
      %v6200 = vsub.s32 %v6197, %v6199
      %v6201 = vrot.slane %v6193, %v6200
      %v6203 = vunpack.c.l.s4 1983009808
      %v6204 = vunpack.c.0.s8 %v6203
      %v6205 = vlaneseq
      %v6206 = vshrl.u32 %v6205, 7
      %v6207 = vsub.s32 %v6204, %v6206
      %v6208 = vrot.slane %v6194, %v6207
      %v6209 = vcombine.low %v5702, %v5836
      %v6210 = vcombine.high %v5702, %v5836
      %v6212 = vunpack.c.l.s4 1983009808
      %v6213 = vunpack.c.0.s8 %v6212
      %v6214 = vlaneseq
      %v6215 = vshrl.u32 %v6214, 7
      %v6216 = vsub.s32 %v6213, %v6215
      %v6217 = vrot.slane %v6209, %v6216
      %v6219 = vunpack.c.l.s4 1983009808
      %v6220 = vunpack.c.0.s8 %v6219
      %v6221 = vlaneseq
      %v6222 = vshrl.u32 %v6221, 7
      %v6223 = vsub.s32 %v6220, %v6222
      %v6224 = vrot.slane %v6210, %v6223
      %v6225 = vcombine.low %v6169, %v6185
      %v6226 = vcombine.high %v6169, %v6185
      %v6228 = vunpack.c.l.s4 1934713408
      %v6229 = vunpack.c.0.s8 %v6228
      %v6230 = vlaneseq
      %v6231 = vshrl.u32 %v6230, 7
      %v6232 = vsub.s32 %v6229, %v6231
      %v6233 = vrot.slane %v6225, %v6232
      %v6235 = vunpack.c.l.s4 1934713408
      %v6236 = vunpack.c.0.s8 %v6235
      %v6237 = vlaneseq
      %v6238 = vshrl.u32 %v6237, 7
      %v6239 = vsub.s32 %v6236, %v6238
      %v6240 = vrot.slane %v6226, %v6239
      %v6241 = vcombine.low %v6176, %v6192
      %v6242 = vcombine.high %v6176, %v6192
      %v6244 = vunpack.c.l.s4 1934713408
      %v6245 = vunpack.c.0.s8 %v6244
      %v6246 = vlaneseq
      %v6247 = vshrl.u32 %v6246, 7
      %v6248 = vsub.s32 %v6245, %v6247
      %v6249 = vrot.slane %v6241, %v6248
      %v6251 = vunpack.c.l.s4 1934713408
      %v6252 = vunpack.c.0.s8 %v6251
      %v6253 = vlaneseq
      %v6254 = vshrl.u32 %v6253, 7
      %v6255 = vsub.s32 %v6252, %v6254
      %v6256 = vrot.slane %v6242, %v6255
      %v6257 = vcombine.low %v6201, %v6217
      %v6258 = vcombine.high %v6201, %v6217
      %v6260 = vunpack.c.l.s4 1934713408
      %v6261 = vunpack.c.0.s8 %v6260
      %v6262 = vlaneseq
      %v6263 = vshrl.u32 %v6262, 7
      %v6264 = vsub.s32 %v6261, %v6263
      %v6265 = vrot.slane %v6257, %v6264
      %v6267 = vunpack.c.l.s4 1934713408
      %v6268 = vunpack.c.0.s8 %v6267
      %v6269 = vlaneseq
      %v6270 = vshrl.u32 %v6269, 7
      %v6271 = vsub.s32 %v6268, %v6270
      %v6272 = vrot.slane %v6258, %v6271
      %v6273 = vcombine.low %v6208, %v6224
      %v6274 = vcombine.high %v6208, %v6224
      %v6276 = vunpack.c.l.s4 1934713408
      %v6277 = vunpack.c.0.s8 %v6276
      %v6278 = vlaneseq
      %v6279 = vshrl.u32 %v6278, 7
      %v6280 = vsub.s32 %v6277, %v6279
      %v6281 = vrot.slane %v6273, %v6280
      %v6283 = vunpack.c.l.s4 1934713408
      %v6284 = vunpack.c.0.s8 %v6283
      %v6285 = vlaneseq
      %v6286 = vshrl.u32 %v6285, 7
      %v6287 = vsub.s32 %v6284, %v6286
      %v6288 = vrot.slane %v6274, %v6287
      %v6289 = vcombine.low %v6233, %v6265
      %v6290 = vcombine.high %v6233, %v6265
      %v6291 = vcombine.low %v6240, %v6272
      %v6292 = vcombine.high %v6240, %v6272
      %v6293 = vcombine.low %v6249, %v6281
      %v6294 = vcombine.high %v6249, %v6281
      %v6295 = vcombine.low %v6256, %v6288
      %v6296 = vcombine.high %v6256, %v6288
      %v6297 = vcombine.low %v5371, %v5505
      %v6298 = vcombine.high %v5371, %v5505
      %v6300 = vunpack.c.l.s4 1983009808
      %v6301 = vunpack.c.0.s8 %v6300
      %v6302 = vlaneseq
      %v6303 = vshrl.u32 %v6302, 7
      %v6304 = vsub.s32 %v6301, %v6303
      %v6305 = vrot.slane %v6297, %v6304
      %v6307 = vunpack.c.l.s4 1983009808
      %v6308 = vunpack.c.0.s8 %v6307
      %v6309 = vlaneseq
      %v6310 = vshrl.u32 %v6309, 7
      %v6311 = vsub.s32 %v6308, %v6310
      %v6312 = vrot.slane %v6298, %v6311
      %v6313 = vcombine.low %v5438, %v5572
      %v6314 = vcombine.high %v5438, %v5572
      %v6316 = vunpack.c.l.s4 1983009808
      %v6317 = vunpack.c.0.s8 %v6316
      %v6318 = vlaneseq
      %v6319 = vshrl.u32 %v6318, 7
      %v6320 = vsub.s32 %v6317, %v6319
      %v6321 = vrot.slane %v6313, %v6320
      %v6323 = vunpack.c.l.s4 1983009808
      %v6324 = vunpack.c.0.s8 %v6323
      %v6325 = vlaneseq
      %v6326 = vshrl.u32 %v6325, 7
      %v6327 = vsub.s32 %v6324, %v6326
      %v6328 = vrot.slane %v6314, %v6327
      %v6329 = vcombine.low %v5639, %v5773
      %v6330 = vcombine.high %v5639, %v5773
      %v6332 = vunpack.c.l.s4 1983009808
      %v6333 = vunpack.c.0.s8 %v6332
      %v6334 = vlaneseq
      %v6335 = vshrl.u32 %v6334, 7
      %v6336 = vsub.s32 %v6333, %v6335
      %v6337 = vrot.slane %v6329, %v6336
      %v6339 = vunpack.c.l.s4 1983009808
      %v6340 = vunpack.c.0.s8 %v6339
      %v6341 = vlaneseq
      %v6342 = vshrl.u32 %v6341, 7
      %v6343 = vsub.s32 %v6340, %v6342
      %v6344 = vrot.slane %v6330, %v6343
      %v6345 = vcombine.low %v5706, %v5840
      %v6346 = vcombine.high %v5706, %v5840
      %v6348 = vunpack.c.l.s4 1983009808
      %v6349 = vunpack.c.0.s8 %v6348
      %v6350 = vlaneseq
      %v6351 = vshrl.u32 %v6350, 7
      %v6352 = vsub.s32 %v6349, %v6351
      %v6353 = vrot.slane %v6345, %v6352
      %v6355 = vunpack.c.l.s4 1983009808
      %v6356 = vunpack.c.0.s8 %v6355
      %v6357 = vlaneseq
      %v6358 = vshrl.u32 %v6357, 7
      %v6359 = vsub.s32 %v6356, %v6358
      %v6360 = vrot.slane %v6346, %v6359
      %v6361 = vcombine.low %v6305, %v6321
      %v6362 = vcombine.high %v6305, %v6321
      %v6364 = vunpack.c.l.s4 1934713408
      %v6365 = vunpack.c.0.s8 %v6364
      %v6366 = vlaneseq
      %v6367 = vshrl.u32 %v6366, 7
      %v6368 = vsub.s32 %v6365, %v6367
      %v6369 = vrot.slane %v6361, %v6368
      %v6371 = vunpack.c.l.s4 1934713408
      %v6372 = vunpack.c.0.s8 %v6371
      %v6373 = vlaneseq
      %v6374 = vshrl.u32 %v6373, 7
      %v6375 = vsub.s32 %v6372, %v6374
      %v6376 = vrot.slane %v6362, %v6375
      %v6377 = vcombine.low %v6312, %v6328
      %v6378 = vcombine.high %v6312, %v6328
      %v6380 = vunpack.c.l.s4 1934713408
      %v6381 = vunpack.c.0.s8 %v6380
      %v6382 = vlaneseq
      %v6383 = vshrl.u32 %v6382, 7
      %v6384 = vsub.s32 %v6381, %v6383
      %v6385 = vrot.slane %v6377, %v6384
      %v6387 = vunpack.c.l.s4 1934713408
      %v6388 = vunpack.c.0.s8 %v6387
      %v6389 = vlaneseq
      %v6390 = vshrl.u32 %v6389, 7
      %v6391 = vsub.s32 %v6388, %v6390
      %v6392 = vrot.slane %v6378, %v6391
      %v6393 = vcombine.low %v6337, %v6353
      %v6394 = vcombine.high %v6337, %v6353
      %v6396 = vunpack.c.l.s4 1934713408
      %v6397 = vunpack.c.0.s8 %v6396
      %v6398 = vlaneseq
      %v6399 = vshrl.u32 %v6398, 7
      %v6400 = vsub.s32 %v6397, %v6399
      %v6401 = vrot.slane %v6393, %v6400
      %v6403 = vunpack.c.l.s4 1934713408
      %v6404 = vunpack.c.0.s8 %v6403
      %v6405 = vlaneseq
      %v6406 = vshrl.u32 %v6405, 7
      %v6407 = vsub.s32 %v6404, %v6406
      %v6408 = vrot.slane %v6394, %v6407
      %v6409 = vcombine.low %v6344, %v6360
      %v6410 = vcombine.high %v6344, %v6360
      %v6412 = vunpack.c.l.s4 1934713408
      %v6413 = vunpack.c.0.s8 %v6412
      %v6414 = vlaneseq
      %v6415 = vshrl.u32 %v6414, 7
      %v6416 = vsub.s32 %v6413, %v6415
      %v6417 = vrot.slane %v6409, %v6416
      %v6419 = vunpack.c.l.s4 1934713408
      %v6420 = vunpack.c.0.s8 %v6419
      %v6421 = vlaneseq
      %v6422 = vshrl.u32 %v6421, 7
      %v6423 = vsub.s32 %v6420, %v6422
      %v6424 = vrot.slane %v6410, %v6423
      %v6425 = vcombine.low %v6369, %v6401
      %v6426 = vcombine.high %v6369, %v6401
      %v6427 = vcombine.low %v6376, %v6408
      %v6428 = vcombine.high %v6376, %v6408
      %v6429 = vcombine.low %v6385, %v6417
      %v6430 = vcombine.high %v6385, %v6417
      %v6431 = vcombine.low %v6392, %v6424
      %v6432 = vcombine.high %v6392, %v6424
      %v6433 = vcombine.low %v5375, %v5509
      %v6434 = vcombine.high %v5375, %v5509
      %v6436 = vunpack.c.l.s4 1983009808
      %v6437 = vunpack.c.0.s8 %v6436
      %v6438 = vlaneseq
      %v6439 = vshrl.u32 %v6438, 7
      %v6440 = vsub.s32 %v6437, %v6439
      %v6441 = vrot.slane %v6433, %v6440
      %v6443 = vunpack.c.l.s4 1983009808
      %v6444 = vunpack.c.0.s8 %v6443
      %v6445 = vlaneseq
      %v6446 = vshrl.u32 %v6445, 7
      %v6447 = vsub.s32 %v6444, %v6446
      %v6448 = vrot.slane %v6434, %v6447
      %v6449 = vcombine.low %v5442, %v5576
      %v6450 = vcombine.high %v5442, %v5576
      %v6452 = vunpack.c.l.s4 1983009808
      %v6453 = vunpack.c.0.s8 %v6452
      %v6454 = vlaneseq
      %v6455 = vshrl.u32 %v6454, 7
      %v6456 = vsub.s32 %v6453, %v6455
      %v6457 = vrot.slane %v6449, %v6456
      %v6459 = vunpack.c.l.s4 1983009808
      %v6460 = vunpack.c.0.s8 %v6459
      %v6461 = vlaneseq
      %v6462 = vshrl.u32 %v6461, 7
      %v6463 = vsub.s32 %v6460, %v6462
      %v6464 = vrot.slane %v6450, %v6463
      %v6465 = vcombine.low %v5643, %v5777
      %v6466 = vcombine.high %v5643, %v5777
      %v6468 = vunpack.c.l.s4 1983009808
      %v6469 = vunpack.c.0.s8 %v6468
      %v6470 = vlaneseq
      %v6471 = vshrl.u32 %v6470, 7
      %v6472 = vsub.s32 %v6469, %v6471
      %v6473 = vrot.slane %v6465, %v6472
      %v6475 = vunpack.c.l.s4 1983009808
      %v6476 = vunpack.c.0.s8 %v6475
      %v6477 = vlaneseq
      %v6478 = vshrl.u32 %v6477, 7
      %v6479 = vsub.s32 %v6476, %v6478
      %v6480 = vrot.slane %v6466, %v6479
      %v6481 = vcombine.low %v5710, %v5844
      %v6482 = vcombine.high %v5710, %v5844
      %v6484 = vunpack.c.l.s4 1983009808
      %v6485 = vunpack.c.0.s8 %v6484
      %v6486 = vlaneseq
      %v6487 = vshrl.u32 %v6486, 7
      %v6488 = vsub.s32 %v6485, %v6487
      %v6489 = vrot.slane %v6481, %v6488
      %v6491 = vunpack.c.l.s4 1983009808
      %v6492 = vunpack.c.0.s8 %v6491
      %v6493 = vlaneseq
      %v6494 = vshrl.u32 %v6493, 7
      %v6495 = vsub.s32 %v6492, %v6494
      %v6496 = vrot.slane %v6482, %v6495
      %v6497 = vcombine.low %v6441, %v6457
      %v6498 = vcombine.high %v6441, %v6457
      %v6500 = vunpack.c.l.s4 1934713408
      %v6501 = vunpack.c.0.s8 %v6500
      %v6502 = vlaneseq
      %v6503 = vshrl.u32 %v6502, 7
      %v6504 = vsub.s32 %v6501, %v6503
      %v6505 = vrot.slane %v6497, %v6504
      %v6507 = vunpack.c.l.s4 1934713408
      %v6508 = vunpack.c.0.s8 %v6507
      %v6509 = vlaneseq
      %v6510 = vshrl.u32 %v6509, 7
      %v6511 = vsub.s32 %v6508, %v6510
      %v6512 = vrot.slane %v6498, %v6511
      %v6513 = vcombine.low %v6448, %v6464
      %v6514 = vcombine.high %v6448, %v6464
      %v6516 = vunpack.c.l.s4 1934713408
      %v6517 = vunpack.c.0.s8 %v6516
      %v6518 = vlaneseq
      %v6519 = vshrl.u32 %v6518, 7
      %v6520 = vsub.s32 %v6517, %v6519
      %v6521 = vrot.slane %v6513, %v6520
      %v6523 = vunpack.c.l.s4 1934713408
      %v6524 = vunpack.c.0.s8 %v6523
      %v6525 = vlaneseq
      %v6526 = vshrl.u32 %v6525, 7
      %v6527 = vsub.s32 %v6524, %v6526
      %v6528 = vrot.slane %v6514, %v6527
      %v6529 = vcombine.low %v6473, %v6489
      %v6530 = vcombine.high %v6473, %v6489
      %v6532 = vunpack.c.l.s4 1934713408
      %v6533 = vunpack.c.0.s8 %v6532
      %v6534 = vlaneseq
      %v6535 = vshrl.u32 %v6534, 7
      %v6536 = vsub.s32 %v6533, %v6535
      %v6537 = vrot.slane %v6529, %v6536
      %v6539 = vunpack.c.l.s4 1934713408
      %v6540 = vunpack.c.0.s8 %v6539
      %v6541 = vlaneseq
      %v6542 = vshrl.u32 %v6541, 7
      %v6543 = vsub.s32 %v6540, %v6542
      %v6544 = vrot.slane %v6530, %v6543
      %v6545 = vcombine.low %v6480, %v6496
      %v6546 = vcombine.high %v6480, %v6496
      %v6548 = vunpack.c.l.s4 1934713408
      %v6549 = vunpack.c.0.s8 %v6548
      %v6550 = vlaneseq
      %v6551 = vshrl.u32 %v6550, 7
      %v6552 = vsub.s32 %v6549, %v6551
      %v6553 = vrot.slane %v6545, %v6552
      %v6555 = vunpack.c.l.s4 1934713408
      %v6556 = vunpack.c.0.s8 %v6555
      %v6557 = vlaneseq
      %v6558 = vshrl.u32 %v6557, 7
      %v6559 = vsub.s32 %v6556, %v6558
      %v6560 = vrot.slane %v6546, %v6559
      %v6561 = vcombine.low %v6505, %v6537
      %v6562 = vcombine.high %v6505, %v6537
      %v6563 = vcombine.low %v6512, %v6544
      %v6564 = vcombine.high %v6512, %v6544
      %v6565 = vcombine.low %v6521, %v6553
      %v6566 = vcombine.high %v6521, %v6553
      %v6567 = vcombine.low %v6528, %v6560
      %v6568 = vcombine.high %v6528, %v6560
      %v6569 = vcombine.low %v5379, %v5513
      %v6570 = vcombine.high %v5379, %v5513
      %v6572 = vunpack.c.l.s4 1983009808
      %v6573 = vunpack.c.0.s8 %v6572
      %v6574 = vlaneseq
      %v6575 = vshrl.u32 %v6574, 7
      %v6576 = vsub.s32 %v6573, %v6575
      %v6577 = vrot.slane %v6569, %v6576
      %v6579 = vunpack.c.l.s4 1983009808
      %v6580 = vunpack.c.0.s8 %v6579
      %v6581 = vlaneseq
      %v6582 = vshrl.u32 %v6581, 7
      %v6583 = vsub.s32 %v6580, %v6582
      %v6584 = vrot.slane %v6570, %v6583
      %v6585 = vcombine.low %v5446, %v5580
      %v6586 = vcombine.high %v5446, %v5580
      %v6588 = vunpack.c.l.s4 1983009808
      %v6589 = vunpack.c.0.s8 %v6588
      %v6590 = vlaneseq
      %v6591 = vshrl.u32 %v6590, 7
      %v6592 = vsub.s32 %v6589, %v6591
      %v6593 = vrot.slane %v6585, %v6592
      %v6595 = vunpack.c.l.s4 1983009808
      %v6596 = vunpack.c.0.s8 %v6595
      %v6597 = vlaneseq
      %v6598 = vshrl.u32 %v6597, 7
      %v6599 = vsub.s32 %v6596, %v6598
      %v6600 = vrot.slane %v6586, %v6599
      %v6601 = vcombine.low %v5647, %v5781
      %v6602 = vcombine.high %v5647, %v5781
      %v6604 = vunpack.c.l.s4 1983009808
      %v6605 = vunpack.c.0.s8 %v6604
      %v6606 = vlaneseq
      %v6607 = vshrl.u32 %v6606, 7
      %v6608 = vsub.s32 %v6605, %v6607
      %v6609 = vrot.slane %v6601, %v6608
      %v6611 = vunpack.c.l.s4 1983009808
      %v6612 = vunpack.c.0.s8 %v6611
      %v6613 = vlaneseq
      %v6614 = vshrl.u32 %v6613, 7
      %v6615 = vsub.s32 %v6612, %v6614
      %v6616 = vrot.slane %v6602, %v6615
      %v6617 = vcombine.low %v5714, %v5848
      %v6618 = vcombine.high %v5714, %v5848
      %v6620 = vunpack.c.l.s4 1983009808
      %v6621 = vunpack.c.0.s8 %v6620
      %v6622 = vlaneseq
      %v6623 = vshrl.u32 %v6622, 7
      %v6624 = vsub.s32 %v6621, %v6623
      %v6625 = vrot.slane %v6617, %v6624
      %v6627 = vunpack.c.l.s4 1983009808
      %v6628 = vunpack.c.0.s8 %v6627
      %v6629 = vlaneseq
      %v6630 = vshrl.u32 %v6629, 7
      %v6631 = vsub.s32 %v6628, %v6630
      %v6632 = vrot.slane %v6618, %v6631
      %v6633 = vcombine.low %v6577, %v6593
      %v6634 = vcombine.high %v6577, %v6593
      %v6636 = vunpack.c.l.s4 1934713408
      %v6637 = vunpack.c.0.s8 %v6636
      %v6638 = vlaneseq
      %v6639 = vshrl.u32 %v6638, 7
      %v6640 = vsub.s32 %v6637, %v6639
      %v6641 = vrot.slane %v6633, %v6640
      %v6643 = vunpack.c.l.s4 1934713408
      %v6644 = vunpack.c.0.s8 %v6643
      %v6645 = vlaneseq
      %v6646 = vshrl.u32 %v6645, 7
      %v6647 = vsub.s32 %v6644, %v6646
      %v6648 = vrot.slane %v6634, %v6647
      %v6649 = vcombine.low %v6584, %v6600
      %v6650 = vcombine.high %v6584, %v6600
      %v6652 = vunpack.c.l.s4 1934713408
      %v6653 = vunpack.c.0.s8 %v6652
      %v6654 = vlaneseq
      %v6655 = vshrl.u32 %v6654, 7
      %v6656 = vsub.s32 %v6653, %v6655
      %v6657 = vrot.slane %v6649, %v6656
      %v6659 = vunpack.c.l.s4 1934713408
      %v6660 = vunpack.c.0.s8 %v6659
      %v6661 = vlaneseq
      %v6662 = vshrl.u32 %v6661, 7
      %v6663 = vsub.s32 %v6660, %v6662
      %v6664 = vrot.slane %v6650, %v6663
      %v6665 = vcombine.low %v6609, %v6625
      %v6666 = vcombine.high %v6609, %v6625
      %v6668 = vunpack.c.l.s4 1934713408
      %v6669 = vunpack.c.0.s8 %v6668
      %v6670 = vlaneseq
      %v6671 = vshrl.u32 %v6670, 7
      %v6672 = vsub.s32 %v6669, %v6671
      %v6673 = vrot.slane %v6665, %v6672
      %v6675 = vunpack.c.l.s4 1934713408
      %v6676 = vunpack.c.0.s8 %v6675
      %v6677 = vlaneseq
      %v6678 = vshrl.u32 %v6677, 7
      %v6679 = vsub.s32 %v6676, %v6678
      %v6680 = vrot.slane %v6666, %v6679
      %v6681 = vcombine.low %v6616, %v6632
      %v6682 = vcombine.high %v6616, %v6632
      %v6684 = vunpack.c.l.s4 1934713408
      %v6685 = vunpack.c.0.s8 %v6684
      %v6686 = vlaneseq
      %v6687 = vshrl.u32 %v6686, 7
      %v6688 = vsub.s32 %v6685, %v6687
      %v6689 = vrot.slane %v6681, %v6688
      %v6691 = vunpack.c.l.s4 1934713408
      %v6692 = vunpack.c.0.s8 %v6691
      %v6693 = vlaneseq
      %v6694 = vshrl.u32 %v6693, 7
      %v6695 = vsub.s32 %v6692, %v6694
      %v6696 = vrot.slane %v6682, %v6695
      %v6697 = vcombine.low %v6641, %v6673
      %v6698 = vcombine.high %v6641, %v6673
      %v6699 = vcombine.low %v6648, %v6680
      %v6700 = vcombine.high %v6648, %v6680
      %v6701 = vcombine.low %v6657, %v6689
      %v6702 = vcombine.high %v6657, %v6689
      %v6703 = vcombine.low %v6664, %v6696
      %v6704 = vcombine.high %v6664, %v6696
      %v6705 = vcombine.low %v5383, %v5517
      %v6706 = vcombine.high %v5383, %v5517
      %v6708 = vunpack.c.l.s4 1983009808
      %v6709 = vunpack.c.0.s8 %v6708
      %v6710 = vlaneseq
      %v6711 = vshrl.u32 %v6710, 7
      %v6712 = vsub.s32 %v6709, %v6711
      %v6713 = vrot.slane %v6705, %v6712
      %v6715 = vunpack.c.l.s4 1983009808
      %v6716 = vunpack.c.0.s8 %v6715
      %v6717 = vlaneseq
      %v6718 = vshrl.u32 %v6717, 7
      %v6719 = vsub.s32 %v6716, %v6718
      %v6720 = vrot.slane %v6706, %v6719
      %v6721 = vcombine.low %v5450, %v5584
      %v6722 = vcombine.high %v5450, %v5584
      %v6724 = vunpack.c.l.s4 1983009808
      %v6725 = vunpack.c.0.s8 %v6724
      %v6726 = vlaneseq
      %v6727 = vshrl.u32 %v6726, 7
      %v6728 = vsub.s32 %v6725, %v6727
      %v6729 = vrot.slane %v6721, %v6728
      %v6731 = vunpack.c.l.s4 1983009808
      %v6732 = vunpack.c.0.s8 %v6731
      %v6733 = vlaneseq
      %v6734 = vshrl.u32 %v6733, 7
      %v6735 = vsub.s32 %v6732, %v6734
      %v6736 = vrot.slane %v6722, %v6735
      %v6737 = vcombine.low %v5651, %v5785
      %v6738 = vcombine.high %v5651, %v5785
      %v6740 = vunpack.c.l.s4 1983009808
      %v6741 = vunpack.c.0.s8 %v6740
      %v6742 = vlaneseq
      %v6743 = vshrl.u32 %v6742, 7
      %v6744 = vsub.s32 %v6741, %v6743
      %v6745 = vrot.slane %v6737, %v6744
      %v6747 = vunpack.c.l.s4 1983009808
      %v6748 = vunpack.c.0.s8 %v6747
      %v6749 = vlaneseq
      %v6750 = vshrl.u32 %v6749, 7
      %v6751 = vsub.s32 %v6748, %v6750
      %v6752 = vrot.slane %v6738, %v6751
      %v6753 = vcombine.low %v5718, %v5852
      %v6754 = vcombine.high %v5718, %v5852
      %v6756 = vunpack.c.l.s4 1983009808
      %v6757 = vunpack.c.0.s8 %v6756
      %v6758 = vlaneseq
      %v6759 = vshrl.u32 %v6758, 7
      %v6760 = vsub.s32 %v6757, %v6759
      %v6761 = vrot.slane %v6753, %v6760
      %v6763 = vunpack.c.l.s4 1983009808
      %v6764 = vunpack.c.0.s8 %v6763
      %v6765 = vlaneseq
      %v6766 = vshrl.u32 %v6765, 7
      %v6767 = vsub.s32 %v6764, %v6766
      %v6768 = vrot.slane %v6754, %v6767
      %v6769 = vcombine.low %v6713, %v6729
      %v6770 = vcombine.high %v6713, %v6729
      %v6772 = vunpack.c.l.s4 1934713408
      %v6773 = vunpack.c.0.s8 %v6772
      %v6774 = vlaneseq
      %v6775 = vshrl.u32 %v6774, 7
      %v6776 = vsub.s32 %v6773, %v6775
      %v6777 = vrot.slane %v6769, %v6776
      %v6779 = vunpack.c.l.s4 1934713408
      %v6780 = vunpack.c.0.s8 %v6779
      %v6781 = vlaneseq
      %v6782 = vshrl.u32 %v6781, 7
      %v6783 = vsub.s32 %v6780, %v6782
      %v6784 = vrot.slane %v6770, %v6783
      %v6785 = vcombine.low %v6720, %v6736
      %v6786 = vcombine.high %v6720, %v6736
      %v6788 = vunpack.c.l.s4 1934713408
      %v6789 = vunpack.c.0.s8 %v6788
      %v6790 = vlaneseq
      %v6791 = vshrl.u32 %v6790, 7
      %v6792 = vsub.s32 %v6789, %v6791
      %v6793 = vrot.slane %v6785, %v6792
      %v6795 = vunpack.c.l.s4 1934713408
      %v6796 = vunpack.c.0.s8 %v6795
      %v6797 = vlaneseq
      %v6798 = vshrl.u32 %v6797, 7
      %v6799 = vsub.s32 %v6796, %v6798
      %v6800 = vrot.slane %v6786, %v6799
      %v6801 = vcombine.low %v6745, %v6761
      %v6802 = vcombine.high %v6745, %v6761
      %v6804 = vunpack.c.l.s4 1934713408
      %v6805 = vunpack.c.0.s8 %v6804
      %v6806 = vlaneseq
      %v6807 = vshrl.u32 %v6806, 7
      %v6808 = vsub.s32 %v6805, %v6807
      %v6809 = vrot.slane %v6801, %v6808
      %v6811 = vunpack.c.l.s4 1934713408
      %v6812 = vunpack.c.0.s8 %v6811
      %v6813 = vlaneseq
      %v6814 = vshrl.u32 %v6813, 7
      %v6815 = vsub.s32 %v6812, %v6814
      %v6816 = vrot.slane %v6802, %v6815
      %v6817 = vcombine.low %v6752, %v6768
      %v6818 = vcombine.high %v6752, %v6768
      %v6820 = vunpack.c.l.s4 1934713408
      %v6821 = vunpack.c.0.s8 %v6820
      %v6822 = vlaneseq
      %v6823 = vshrl.u32 %v6822, 7
      %v6824 = vsub.s32 %v6821, %v6823
      %v6825 = vrot.slane %v6817, %v6824
      %v6827 = vunpack.c.l.s4 1934713408
      %v6828 = vunpack.c.0.s8 %v6827
      %v6829 = vlaneseq
      %v6830 = vshrl.u32 %v6829, 7
      %v6831 = vsub.s32 %v6828, %v6830
      %v6832 = vrot.slane %v6818, %v6831
      %v6833 = vcombine.low %v6777, %v6809
      %v6834 = vcombine.high %v6777, %v6809
      %v6835 = vcombine.low %v6784, %v6816
      %v6836 = vcombine.high %v6784, %v6816
      %v6837 = vcombine.low %v6793, %v6825
      %v6838 = vcombine.high %v6793, %v6825
      %v6839 = vcombine.low %v6800, %v6832
      %v6840 = vcombine.high %v6800, %v6832
      %v6841 = vcombine.low %v5387, %v5521
      %v6842 = vcombine.high %v5387, %v5521
      %v6844 = vunpack.c.l.s4 1983009808
      %v6845 = vunpack.c.0.s8 %v6844
      %v6846 = vlaneseq
      %v6847 = vshrl.u32 %v6846, 7
      %v6848 = vsub.s32 %v6845, %v6847
      %v6849 = vrot.slane %v6841, %v6848
      %v6851 = vunpack.c.l.s4 1983009808
      %v6852 = vunpack.c.0.s8 %v6851
      %v6853 = vlaneseq
      %v6854 = vshrl.u32 %v6853, 7
      %v6855 = vsub.s32 %v6852, %v6854
      %v6856 = vrot.slane %v6842, %v6855
      %v6857 = vcombine.low %v5454, %v5588
      %v6858 = vcombine.high %v5454, %v5588
      %v6860 = vunpack.c.l.s4 1983009808
      %v6861 = vunpack.c.0.s8 %v6860
      %v6862 = vlaneseq
      %v6863 = vshrl.u32 %v6862, 7
      %v6864 = vsub.s32 %v6861, %v6863
      %v6865 = vrot.slane %v6857, %v6864
      %v6867 = vunpack.c.l.s4 1983009808
      %v6868 = vunpack.c.0.s8 %v6867
      %v6869 = vlaneseq
      %v6870 = vshrl.u32 %v6869, 7
      %v6871 = vsub.s32 %v6868, %v6870
      %v6872 = vrot.slane %v6858, %v6871
      %v6873 = vcombine.low %v5655, %v5789
      %v6874 = vcombine.high %v5655, %v5789
      %v6876 = vunpack.c.l.s4 1983009808
      %v6877 = vunpack.c.0.s8 %v6876
      %v6878 = vlaneseq
      %v6879 = vshrl.u32 %v6878, 7
      %v6880 = vsub.s32 %v6877, %v6879
      %v6881 = vrot.slane %v6873, %v6880
      %v6883 = vunpack.c.l.s4 1983009808
      %v6884 = vunpack.c.0.s8 %v6883
      %v6885 = vlaneseq
      %v6886 = vshrl.u32 %v6885, 7
      %v6887 = vsub.s32 %v6884, %v6886
      %v6888 = vrot.slane %v6874, %v6887
      %v6889 = vcombine.low %v5722, %v5856
      %v6890 = vcombine.high %v5722, %v5856
      %v6892 = vunpack.c.l.s4 1983009808
      %v6893 = vunpack.c.0.s8 %v6892
      %v6894 = vlaneseq
      %v6895 = vshrl.u32 %v6894, 7
      %v6896 = vsub.s32 %v6893, %v6895
      %v6897 = vrot.slane %v6889, %v6896
      %v6899 = vunpack.c.l.s4 1983009808
      %v6900 = vunpack.c.0.s8 %v6899
      %v6901 = vlaneseq
      %v6902 = vshrl.u32 %v6901, 7
      %v6903 = vsub.s32 %v6900, %v6902
      %v6904 = vrot.slane %v6890, %v6903
      %v6905 = vcombine.low %v6849, %v6865
      %v6906 = vcombine.high %v6849, %v6865
      %v6908 = vunpack.c.l.s4 1934713408
      %v6909 = vunpack.c.0.s8 %v6908
      %v6910 = vlaneseq
      %v6911 = vshrl.u32 %v6910, 7
      %v6912 = vsub.s32 %v6909, %v6911
      %v6913 = vrot.slane %v6905, %v6912
      %v6915 = vunpack.c.l.s4 1934713408
      %v6916 = vunpack.c.0.s8 %v6915
      %v6917 = vlaneseq
      %v6918 = vshrl.u32 %v6917, 7
      %v6919 = vsub.s32 %v6916, %v6918
      %v6920 = vrot.slane %v6906, %v6919
      %v6921 = vcombine.low %v6856, %v6872
      %v6922 = vcombine.high %v6856, %v6872
      %v6924 = vunpack.c.l.s4 1934713408
      %v6925 = vunpack.c.0.s8 %v6924
      %v6926 = vlaneseq
      %v6927 = vshrl.u32 %v6926, 7
      %v6928 = vsub.s32 %v6925, %v6927
      %v6929 = vrot.slane %v6921, %v6928
      %v6931 = vunpack.c.l.s4 1934713408
      %v6932 = vunpack.c.0.s8 %v6931
      %v6933 = vlaneseq
      %v6934 = vshrl.u32 %v6933, 7
      %v6935 = vsub.s32 %v6932, %v6934
      %v6936 = vrot.slane %v6922, %v6935
      %v6937 = vcombine.low %v6881, %v6897
      %v6938 = vcombine.high %v6881, %v6897
      %v6940 = vunpack.c.l.s4 1934713408
      %v6941 = vunpack.c.0.s8 %v6940
      %v6942 = vlaneseq
      %v6943 = vshrl.u32 %v6942, 7
      %v6944 = vsub.s32 %v6941, %v6943
      %v6945 = vrot.slane %v6937, %v6944
      %v6947 = vunpack.c.l.s4 1934713408
      %v6948 = vunpack.c.0.s8 %v6947
      %v6949 = vlaneseq
      %v6950 = vshrl.u32 %v6949, 7
      %v6951 = vsub.s32 %v6948, %v6950
      %v6952 = vrot.slane %v6938, %v6951
      %v6953 = vcombine.low %v6888, %v6904
      %v6954 = vcombine.high %v6888, %v6904
      %v6956 = vunpack.c.l.s4 1934713408
      %v6957 = vunpack.c.0.s8 %v6956
      %v6958 = vlaneseq
      %v6959 = vshrl.u32 %v6958, 7
      %v6960 = vsub.s32 %v6957, %v6959
      %v6961 = vrot.slane %v6953, %v6960
      %v6963 = vunpack.c.l.s4 1934713408
      %v6964 = vunpack.c.0.s8 %v6963
      %v6965 = vlaneseq
      %v6966 = vshrl.u32 %v6965, 7
      %v6967 = vsub.s32 %v6964, %v6966
      %v6968 = vrot.slane %v6954, %v6967
      %v6969 = vcombine.low %v6913, %v6945
      %v6970 = vcombine.high %v6913, %v6945
      %v6971 = vcombine.low %v6920, %v6952
      %v6972 = vcombine.high %v6920, %v6952
      %v6973 = vcombine.low %v6929, %v6961
      %v6974 = vcombine.high %v6929, %v6961
      %v6975 = vcombine.low %v6936, %v6968
      %v6976 = vcombine.high %v6936, %v6968
      %v6977 = vcombine.low %v5391, %v5525
      %v6978 = vcombine.high %v5391, %v5525
      %v6980 = vunpack.c.l.s4 1983009808
      %v6981 = vunpack.c.0.s8 %v6980
      %v6982 = vlaneseq
      %v6983 = vshrl.u32 %v6982, 7
      %v6984 = vsub.s32 %v6981, %v6983
      %v6985 = vrot.slane %v6977, %v6984
      %v6987 = vunpack.c.l.s4 1983009808
      %v6988 = vunpack.c.0.s8 %v6987
      %v6989 = vlaneseq
      %v6990 = vshrl.u32 %v6989, 7
      %v6991 = vsub.s32 %v6988, %v6990
      %v6992 = vrot.slane %v6978, %v6991
      %v6993 = vcombine.low %v5458, %v5592
      %v6994 = vcombine.high %v5458, %v5592
      %v6996 = vunpack.c.l.s4 1983009808
      %v6997 = vunpack.c.0.s8 %v6996
      %v6998 = vlaneseq
      %v6999 = vshrl.u32 %v6998, 7
      %v7000 = vsub.s32 %v6997, %v6999
      %v7001 = vrot.slane %v6993, %v7000
      %v7003 = vunpack.c.l.s4 1983009808
      %v7004 = vunpack.c.0.s8 %v7003
      %v7005 = vlaneseq
      %v7006 = vshrl.u32 %v7005, 7
      %v7007 = vsub.s32 %v7004, %v7006
      %v7008 = vrot.slane %v6994, %v7007
      %v7009 = vcombine.low %v5659, %v5793
      %v7010 = vcombine.high %v5659, %v5793
      %v7012 = vunpack.c.l.s4 1983009808
      %v7013 = vunpack.c.0.s8 %v7012
      %v7014 = vlaneseq
      %v7015 = vshrl.u32 %v7014, 7
      %v7016 = vsub.s32 %v7013, %v7015
      %v7017 = vrot.slane %v7009, %v7016
      %v7019 = vunpack.c.l.s4 1983009808
      %v7020 = vunpack.c.0.s8 %v7019
      %v7021 = vlaneseq
      %v7022 = vshrl.u32 %v7021, 7
      %v7023 = vsub.s32 %v7020, %v7022
      %v7024 = vrot.slane %v7010, %v7023
      %v7025 = vcombine.low %v5726, %v5860
      %v7026 = vcombine.high %v5726, %v5860
      %v7028 = vunpack.c.l.s4 1983009808
      %v7029 = vunpack.c.0.s8 %v7028
      %v7030 = vlaneseq
      %v7031 = vshrl.u32 %v7030, 7
      %v7032 = vsub.s32 %v7029, %v7031
      %v7033 = vrot.slane %v7025, %v7032
      %v7035 = vunpack.c.l.s4 1983009808
      %v7036 = vunpack.c.0.s8 %v7035
      %v7037 = vlaneseq
      %v7038 = vshrl.u32 %v7037, 7
      %v7039 = vsub.s32 %v7036, %v7038
      %v7040 = vrot.slane %v7026, %v7039
      %v7041 = vcombine.low %v6985, %v7001
      %v7042 = vcombine.high %v6985, %v7001
      %v7044 = vunpack.c.l.s4 1934713408
      %v7045 = vunpack.c.0.s8 %v7044
      %v7046 = vlaneseq
      %v7047 = vshrl.u32 %v7046, 7
      %v7048 = vsub.s32 %v7045, %v7047
      %v7049 = vrot.slane %v7041, %v7048
      %v7051 = vunpack.c.l.s4 1934713408
      %v7052 = vunpack.c.0.s8 %v7051
      %v7053 = vlaneseq
      %v7054 = vshrl.u32 %v7053, 7
      %v7055 = vsub.s32 %v7052, %v7054
      %v7056 = vrot.slane %v7042, %v7055
      %v7057 = vcombine.low %v6992, %v7008
      %v7058 = vcombine.high %v6992, %v7008
      %v7060 = vunpack.c.l.s4 1934713408
      %v7061 = vunpack.c.0.s8 %v7060
      %v7062 = vlaneseq
      %v7063 = vshrl.u32 %v7062, 7
      %v7064 = vsub.s32 %v7061, %v7063
      %v7065 = vrot.slane %v7057, %v7064
      %v7067 = vunpack.c.l.s4 1934713408
      %v7068 = vunpack.c.0.s8 %v7067
      %v7069 = vlaneseq
      %v7070 = vshrl.u32 %v7069, 7
      %v7071 = vsub.s32 %v7068, %v7070
      %v7072 = vrot.slane %v7058, %v7071
      %v7073 = vcombine.low %v7017, %v7033
      %v7074 = vcombine.high %v7017, %v7033
      %v7076 = vunpack.c.l.s4 1934713408
      %v7077 = vunpack.c.0.s8 %v7076
      %v7078 = vlaneseq
      %v7079 = vshrl.u32 %v7078, 7
      %v7080 = vsub.s32 %v7077, %v7079
      %v7081 = vrot.slane %v7073, %v7080
      %v7083 = vunpack.c.l.s4 1934713408
      %v7084 = vunpack.c.0.s8 %v7083
      %v7085 = vlaneseq
      %v7086 = vshrl.u32 %v7085, 7
      %v7087 = vsub.s32 %v7084, %v7086
      %v7088 = vrot.slane %v7074, %v7087
      %v7089 = vcombine.low %v7024, %v7040
      %v7090 = vcombine.high %v7024, %v7040
      %v7092 = vunpack.c.l.s4 1934713408
      %v7093 = vunpack.c.0.s8 %v7092
      %v7094 = vlaneseq
      %v7095 = vshrl.u32 %v7094, 7
      %v7096 = vsub.s32 %v7093, %v7095
      %v7097 = vrot.slane %v7089, %v7096
      %v7099 = vunpack.c.l.s4 1934713408
      %v7100 = vunpack.c.0.s8 %v7099
      %v7101 = vlaneseq
      %v7102 = vshrl.u32 %v7101, 7
      %v7103 = vsub.s32 %v7100, %v7102
      %v7104 = vrot.slane %v7090, %v7103
      %v7105 = vcombine.low %v7049, %v7081
      %v7106 = vcombine.high %v7049, %v7081
      %v7107 = vcombine.low %v7056, %v7088
      %v7108 = vcombine.high %v7056, %v7088
      %v7109 = vcombine.low %v7065, %v7097
      %v7110 = vcombine.high %v7065, %v7097
      %v7111 = vcombine.low %v7072, %v7104
      %v7112 = vcombine.high %v7072, %v7104
      %v7113 = vcombine.low %v5395, %v5529
      %v7114 = vcombine.high %v5395, %v5529
      %v7116 = vunpack.c.l.s4 1983009808
      %v7117 = vunpack.c.0.s8 %v7116
      %v7118 = vlaneseq
      %v7119 = vshrl.u32 %v7118, 7
      %v7120 = vsub.s32 %v7117, %v7119
      %v7121 = vrot.slane %v7113, %v7120
      %v7123 = vunpack.c.l.s4 1983009808
      %v7124 = vunpack.c.0.s8 %v7123
      %v7125 = vlaneseq
      %v7126 = vshrl.u32 %v7125, 7
      %v7127 = vsub.s32 %v7124, %v7126
      %v7128 = vrot.slane %v7114, %v7127
      %v7129 = vcombine.low %v5462, %v5596
      %v7130 = vcombine.high %v5462, %v5596
      %v7132 = vunpack.c.l.s4 1983009808
      %v7133 = vunpack.c.0.s8 %v7132
      %v7134 = vlaneseq
      %v7135 = vshrl.u32 %v7134, 7
      %v7136 = vsub.s32 %v7133, %v7135
      %v7137 = vrot.slane %v7129, %v7136
      %v7139 = vunpack.c.l.s4 1983009808
      %v7140 = vunpack.c.0.s8 %v7139
      %v7141 = vlaneseq
      %v7142 = vshrl.u32 %v7141, 7
      %v7143 = vsub.s32 %v7140, %v7142
      %v7144 = vrot.slane %v7130, %v7143
      %v7145 = vcombine.low %v5663, %v5797
      %v7146 = vcombine.high %v5663, %v5797
      %v7148 = vunpack.c.l.s4 1983009808
      %v7149 = vunpack.c.0.s8 %v7148
      %v7150 = vlaneseq
      %v7151 = vshrl.u32 %v7150, 7
      %v7152 = vsub.s32 %v7149, %v7151
      %v7153 = vrot.slane %v7145, %v7152
      %v7155 = vunpack.c.l.s4 1983009808
      %v7156 = vunpack.c.0.s8 %v7155
      %v7157 = vlaneseq
      %v7158 = vshrl.u32 %v7157, 7
      %v7159 = vsub.s32 %v7156, %v7158
      %v7160 = vrot.slane %v7146, %v7159
      %v7161 = vcombine.low %v5730, %v5864
      %v7162 = vcombine.high %v5730, %v5864
      %v7164 = vunpack.c.l.s4 1983009808
      %v7165 = vunpack.c.0.s8 %v7164
      %v7166 = vlaneseq
      %v7167 = vshrl.u32 %v7166, 7
      %v7168 = vsub.s32 %v7165, %v7167
      %v7169 = vrot.slane %v7161, %v7168
      %v7171 = vunpack.c.l.s4 1983009808
      %v7172 = vunpack.c.0.s8 %v7171
      %v7173 = vlaneseq
      %v7174 = vshrl.u32 %v7173, 7
      %v7175 = vsub.s32 %v7172, %v7174
      %v7176 = vrot.slane %v7162, %v7175
      %v7177 = vcombine.low %v7121, %v7137
      %v7178 = vcombine.high %v7121, %v7137
      %v7180 = vunpack.c.l.s4 1934713408
      %v7181 = vunpack.c.0.s8 %v7180
      %v7182 = vlaneseq
      %v7183 = vshrl.u32 %v7182, 7
      %v7184 = vsub.s32 %v7181, %v7183
      %v7185 = vrot.slane %v7177, %v7184
      %v7187 = vunpack.c.l.s4 1934713408
      %v7188 = vunpack.c.0.s8 %v7187
      %v7189 = vlaneseq
      %v7190 = vshrl.u32 %v7189, 7
      %v7191 = vsub.s32 %v7188, %v7190
      %v7192 = vrot.slane %v7178, %v7191
      %v7193 = vcombine.low %v7128, %v7144
      %v7194 = vcombine.high %v7128, %v7144
      %v7196 = vunpack.c.l.s4 1934713408
      %v7197 = vunpack.c.0.s8 %v7196
      %v7198 = vlaneseq
      %v7199 = vshrl.u32 %v7198, 7
      %v7200 = vsub.s32 %v7197, %v7199
      %v7201 = vrot.slane %v7193, %v7200
      %v7203 = vunpack.c.l.s4 1934713408
      %v7204 = vunpack.c.0.s8 %v7203
      %v7205 = vlaneseq
      %v7206 = vshrl.u32 %v7205, 7
      %v7207 = vsub.s32 %v7204, %v7206
      %v7208 = vrot.slane %v7194, %v7207
      %v7209 = vcombine.low %v7153, %v7169
      %v7210 = vcombine.high %v7153, %v7169
      %v7212 = vunpack.c.l.s4 1934713408
      %v7213 = vunpack.c.0.s8 %v7212
      %v7214 = vlaneseq
      %v7215 = vshrl.u32 %v7214, 7
      %v7216 = vsub.s32 %v7213, %v7215
      %v7217 = vrot.slane %v7209, %v7216
      %v7219 = vunpack.c.l.s4 1934713408
      %v7220 = vunpack.c.0.s8 %v7219
      %v7221 = vlaneseq
      %v7222 = vshrl.u32 %v7221, 7
      %v7223 = vsub.s32 %v7220, %v7222
      %v7224 = vrot.slane %v7210, %v7223
      %v7225 = vcombine.low %v7160, %v7176
      %v7226 = vcombine.high %v7160, %v7176
      %v7228 = vunpack.c.l.s4 1934713408
      %v7229 = vunpack.c.0.s8 %v7228
      %v7230 = vlaneseq
      %v7231 = vshrl.u32 %v7230, 7
      %v7232 = vsub.s32 %v7229, %v7231
      %v7233 = vrot.slane %v7225, %v7232
      %v7235 = vunpack.c.l.s4 1934713408
      %v7236 = vunpack.c.0.s8 %v7235
      %v7237 = vlaneseq
      %v7238 = vshrl.u32 %v7237, 7
      %v7239 = vsub.s32 %v7236, %v7238
      %v7240 = vrot.slane %v7226, %v7239
      %v7241 = vcombine.low %v7185, %v7217
      %v7242 = vcombine.high %v7185, %v7217
      %v7243 = vcombine.low %v7192, %v7224
      %v7244 = vcombine.high %v7192, %v7224
      %v7245 = vcombine.low %v7201, %v7233
      %v7246 = vcombine.high %v7201, %v7233
      %v7247 = vcombine.low %v7208, %v7240
      %v7248 = vcombine.high %v7208, %v7240
      %v7249 = vcombine.low %v5399, %v5533
      %v7250 = vcombine.high %v5399, %v5533
      %v7252 = vunpack.c.l.s4 1983009808
      %v7253 = vunpack.c.0.s8 %v7252
      %v7254 = vlaneseq
      %v7255 = vshrl.u32 %v7254, 7
      %v7256 = vsub.s32 %v7253, %v7255
      %v7257 = vrot.slane %v7249, %v7256
      %v7259 = vunpack.c.l.s4 1983009808
      %v7260 = vunpack.c.0.s8 %v7259
      %v7261 = vlaneseq
      %v7262 = vshrl.u32 %v7261, 7
      %v7263 = vsub.s32 %v7260, %v7262
      %v7264 = vrot.slane %v7250, %v7263
      %v7265 = vcombine.low %v5466, %v5600
      %v7266 = vcombine.high %v5466, %v5600
      %v7268 = vunpack.c.l.s4 1983009808
      %v7269 = vunpack.c.0.s8 %v7268
      %v7270 = vlaneseq
      %v7271 = vshrl.u32 %v7270, 7
      %v7272 = vsub.s32 %v7269, %v7271
      %v7273 = vrot.slane %v7265, %v7272
      %v7275 = vunpack.c.l.s4 1983009808
      %v7276 = vunpack.c.0.s8 %v7275
      %v7277 = vlaneseq
      %v7278 = vshrl.u32 %v7277, 7
      %v7279 = vsub.s32 %v7276, %v7278
      %v7280 = vrot.slane %v7266, %v7279
      %v7281 = vcombine.low %v5667, %v5801
      %v7282 = vcombine.high %v5667, %v5801
      %v7284 = vunpack.c.l.s4 1983009808
      %v7285 = vunpack.c.0.s8 %v7284
      %v7286 = vlaneseq
      %v7287 = vshrl.u32 %v7286, 7
      %v7288 = vsub.s32 %v7285, %v7287
      %v7289 = vrot.slane %v7281, %v7288
      %v7291 = vunpack.c.l.s4 1983009808
      %v7292 = vunpack.c.0.s8 %v7291
      %v7293 = vlaneseq
      %v7294 = vshrl.u32 %v7293, 7
      %v7295 = vsub.s32 %v7292, %v7294
      %v7296 = vrot.slane %v7282, %v7295
      %v7297 = vcombine.low %v5734, %v5868
      %v7298 = vcombine.high %v5734, %v5868
      %v7300 = vunpack.c.l.s4 1983009808
      %v7301 = vunpack.c.0.s8 %v7300
      %v7302 = vlaneseq
      %v7303 = vshrl.u32 %v7302, 7
      %v7304 = vsub.s32 %v7301, %v7303
      %v7305 = vrot.slane %v7297, %v7304
      %v7307 = vunpack.c.l.s4 1983009808
      %v7308 = vunpack.c.0.s8 %v7307
      %v7309 = vlaneseq
      %v7310 = vshrl.u32 %v7309, 7
      %v7311 = vsub.s32 %v7308, %v7310
      %v7312 = vrot.slane %v7298, %v7311
      %v7313 = vcombine.low %v7257, %v7273
      %v7314 = vcombine.high %v7257, %v7273
      %v7316 = vunpack.c.l.s4 1934713408
      %v7317 = vunpack.c.0.s8 %v7316
      %v7318 = vlaneseq
      %v7319 = vshrl.u32 %v7318, 7
      %v7320 = vsub.s32 %v7317, %v7319
      %v7321 = vrot.slane %v7313, %v7320
      %v7323 = vunpack.c.l.s4 1934713408
      %v7324 = vunpack.c.0.s8 %v7323
      %v7325 = vlaneseq
      %v7326 = vshrl.u32 %v7325, 7
      %v7327 = vsub.s32 %v7324, %v7326
      %v7328 = vrot.slane %v7314, %v7327
      %v7329 = vcombine.low %v7264, %v7280
      %v7330 = vcombine.high %v7264, %v7280
      %v7332 = vunpack.c.l.s4 1934713408
      %v7333 = vunpack.c.0.s8 %v7332
      %v7334 = vlaneseq
      %v7335 = vshrl.u32 %v7334, 7
      %v7336 = vsub.s32 %v7333, %v7335
      %v7337 = vrot.slane %v7329, %v7336
      %v7339 = vunpack.c.l.s4 1934713408
      %v7340 = vunpack.c.0.s8 %v7339
      %v7341 = vlaneseq
      %v7342 = vshrl.u32 %v7341, 7
      %v7343 = vsub.s32 %v7340, %v7342
      %v7344 = vrot.slane %v7330, %v7343
      %v7345 = vcombine.low %v7289, %v7305
      %v7346 = vcombine.high %v7289, %v7305
      %v7348 = vunpack.c.l.s4 1934713408
      %v7349 = vunpack.c.0.s8 %v7348
      %v7350 = vlaneseq
      %v7351 = vshrl.u32 %v7350, 7
      %v7352 = vsub.s32 %v7349, %v7351
      %v7353 = vrot.slane %v7345, %v7352
      %v7355 = vunpack.c.l.s4 1934713408
      %v7356 = vunpack.c.0.s8 %v7355
      %v7357 = vlaneseq
      %v7358 = vshrl.u32 %v7357, 7
      %v7359 = vsub.s32 %v7356, %v7358
      %v7360 = vrot.slane %v7346, %v7359
      %v7361 = vcombine.low %v7296, %v7312
      %v7362 = vcombine.high %v7296, %v7312
      %v7364 = vunpack.c.l.s4 1934713408
      %v7365 = vunpack.c.0.s8 %v7364
      %v7366 = vlaneseq
      %v7367 = vshrl.u32 %v7366, 7
      %v7368 = vsub.s32 %v7365, %v7367
      %v7369 = vrot.slane %v7361, %v7368
      %v7371 = vunpack.c.l.s4 1934713408
      %v7372 = vunpack.c.0.s8 %v7371
      %v7373 = vlaneseq
      %v7374 = vshrl.u32 %v7373, 7
      %v7375 = vsub.s32 %v7372, %v7374
      %v7376 = vrot.slane %v7362, %v7375
      %v7377 = vcombine.low %v7321, %v7353
      %v7378 = vcombine.high %v7321, %v7353
      %v7379 = vcombine.low %v7328, %v7360
      %v7380 = vcombine.high %v7328, %v7360
      %v7381 = vcombine.low %v7337, %v7369
      %v7382 = vcombine.high %v7337, %v7369
      %v7383 = vcombine.low %v7344, %v7376
      %v7384 = vcombine.high %v7344, %v7376
      %v7385 = vcombine.low %v5403, %v5537
      %v7386 = vcombine.high %v5403, %v5537
      %v7388 = vunpack.c.l.s4 1983009808
      %v7389 = vunpack.c.0.s8 %v7388
      %v7390 = vlaneseq
      %v7391 = vshrl.u32 %v7390, 7
      %v7392 = vsub.s32 %v7389, %v7391
      %v7393 = vrot.slane %v7385, %v7392
      %v7395 = vunpack.c.l.s4 1983009808
      %v7396 = vunpack.c.0.s8 %v7395
      %v7397 = vlaneseq
      %v7398 = vshrl.u32 %v7397, 7
      %v7399 = vsub.s32 %v7396, %v7398
      %v7400 = vrot.slane %v7386, %v7399
      %v7401 = vcombine.low %v5470, %v5604
      %v7402 = vcombine.high %v5470, %v5604
      %v7404 = vunpack.c.l.s4 1983009808
      %v7405 = vunpack.c.0.s8 %v7404
      %v7406 = vlaneseq
      %v7407 = vshrl.u32 %v7406, 7
      %v7408 = vsub.s32 %v7405, %v7407
      %v7409 = vrot.slane %v7401, %v7408
      %v7411 = vunpack.c.l.s4 1983009808
      %v7412 = vunpack.c.0.s8 %v7411
      %v7413 = vlaneseq
      %v7414 = vshrl.u32 %v7413, 7
      %v7415 = vsub.s32 %v7412, %v7414
      %v7416 = vrot.slane %v7402, %v7415
      %v7417 = vcombine.low %v5671, %v5805
      %v7418 = vcombine.high %v5671, %v5805
      %v7420 = vunpack.c.l.s4 1983009808
      %v7421 = vunpack.c.0.s8 %v7420
      %v7422 = vlaneseq
      %v7423 = vshrl.u32 %v7422, 7
      %v7424 = vsub.s32 %v7421, %v7423
      %v7425 = vrot.slane %v7417, %v7424
      %v7427 = vunpack.c.l.s4 1983009808
      %v7428 = vunpack.c.0.s8 %v7427
      %v7429 = vlaneseq
      %v7430 = vshrl.u32 %v7429, 7
      %v7431 = vsub.s32 %v7428, %v7430
      %v7432 = vrot.slane %v7418, %v7431
      %v7433 = vcombine.low %v5738, %v5872
      %v7434 = vcombine.high %v5738, %v5872
      %v7436 = vunpack.c.l.s4 1983009808
      %v7437 = vunpack.c.0.s8 %v7436
      %v7438 = vlaneseq
      %v7439 = vshrl.u32 %v7438, 7
      %v7440 = vsub.s32 %v7437, %v7439
      %v7441 = vrot.slane %v7433, %v7440
      %v7443 = vunpack.c.l.s4 1983009808
      %v7444 = vunpack.c.0.s8 %v7443
      %v7445 = vlaneseq
      %v7446 = vshrl.u32 %v7445, 7
      %v7447 = vsub.s32 %v7444, %v7446
      %v7448 = vrot.slane %v7434, %v7447
      %v7449 = vcombine.low %v7393, %v7409
      %v7450 = vcombine.high %v7393, %v7409
      %v7452 = vunpack.c.l.s4 1934713408
      %v7453 = vunpack.c.0.s8 %v7452
      %v7454 = vlaneseq
      %v7455 = vshrl.u32 %v7454, 7
      %v7456 = vsub.s32 %v7453, %v7455
      %v7457 = vrot.slane %v7449, %v7456
      %v7459 = vunpack.c.l.s4 1934713408
      %v7460 = vunpack.c.0.s8 %v7459
      %v7461 = vlaneseq
      %v7462 = vshrl.u32 %v7461, 7
      %v7463 = vsub.s32 %v7460, %v7462
      %v7464 = vrot.slane %v7450, %v7463
      %v7465 = vcombine.low %v7400, %v7416
      %v7466 = vcombine.high %v7400, %v7416
      %v7468 = vunpack.c.l.s4 1934713408
      %v7469 = vunpack.c.0.s8 %v7468
      %v7470 = vlaneseq
      %v7471 = vshrl.u32 %v7470, 7
      %v7472 = vsub.s32 %v7469, %v7471
      %v7473 = vrot.slane %v7465, %v7472
      %v7475 = vunpack.c.l.s4 1934713408
      %v7476 = vunpack.c.0.s8 %v7475
      %v7477 = vlaneseq
      %v7478 = vshrl.u32 %v7477, 7
      %v7479 = vsub.s32 %v7476, %v7478
      %v7480 = vrot.slane %v7466, %v7479
      %v7481 = vcombine.low %v7425, %v7441
      %v7482 = vcombine.high %v7425, %v7441
      %v7484 = vunpack.c.l.s4 1934713408
      %v7485 = vunpack.c.0.s8 %v7484
      %v7486 = vlaneseq
      %v7487 = vshrl.u32 %v7486, 7
      %v7488 = vsub.s32 %v7485, %v7487
      %v7489 = vrot.slane %v7481, %v7488
      %v7491 = vunpack.c.l.s4 1934713408
      %v7492 = vunpack.c.0.s8 %v7491
      %v7493 = vlaneseq
      %v7494 = vshrl.u32 %v7493, 7
      %v7495 = vsub.s32 %v7492, %v7494
      %v7496 = vrot.slane %v7482, %v7495
      %v7497 = vcombine.low %v7432, %v7448
      %v7498 = vcombine.high %v7432, %v7448
      %v7500 = vunpack.c.l.s4 1934713408
      %v7501 = vunpack.c.0.s8 %v7500
      %v7502 = vlaneseq
      %v7503 = vshrl.u32 %v7502, 7
      %v7504 = vsub.s32 %v7501, %v7503
      %v7505 = vrot.slane %v7497, %v7504
      %v7507 = vunpack.c.l.s4 1934713408
      %v7508 = vunpack.c.0.s8 %v7507
      %v7509 = vlaneseq
      %v7510 = vshrl.u32 %v7509, 7
      %v7511 = vsub.s32 %v7508, %v7510
      %v7512 = vrot.slane %v7498, %v7511
      %v7513 = vcombine.low %v7457, %v7489
      %v7514 = vcombine.high %v7457, %v7489
      %v7515 = vcombine.low %v7464, %v7496
      %v7516 = vcombine.high %v7464, %v7496
      %v7517 = vcombine.low %v7473, %v7505
      %v7518 = vcombine.high %v7473, %v7505
      %v7519 = vcombine.low %v7480, %v7512
      %v7520 = vcombine.high %v7480, %v7512
      %v7521 = vcombine.low %v5407, %v5541
      %v7522 = vcombine.high %v5407, %v5541
      %v7524 = vunpack.c.l.s4 1983009808
      %v7525 = vunpack.c.0.s8 %v7524
      %v7526 = vlaneseq
      %v7527 = vshrl.u32 %v7526, 7
      %v7528 = vsub.s32 %v7525, %v7527
      %v7529 = vrot.slane %v7521, %v7528
      %v7531 = vunpack.c.l.s4 1983009808
      %v7532 = vunpack.c.0.s8 %v7531
      %v7533 = vlaneseq
      %v7534 = vshrl.u32 %v7533, 7
      %v7535 = vsub.s32 %v7532, %v7534
      %v7536 = vrot.slane %v7522, %v7535
      %v7537 = vcombine.low %v5474, %v5608
      %v7538 = vcombine.high %v5474, %v5608
      %v7540 = vunpack.c.l.s4 1983009808
      %v7541 = vunpack.c.0.s8 %v7540
      %v7542 = vlaneseq
      %v7543 = vshrl.u32 %v7542, 7
      %v7544 = vsub.s32 %v7541, %v7543
      %v7545 = vrot.slane %v7537, %v7544
      %v7547 = vunpack.c.l.s4 1983009808
      %v7548 = vunpack.c.0.s8 %v7547
      %v7549 = vlaneseq
      %v7550 = vshrl.u32 %v7549, 7
      %v7551 = vsub.s32 %v7548, %v7550
      %v7552 = vrot.slane %v7538, %v7551
      %v7553 = vcombine.low %v5675, %v5809
      %v7554 = vcombine.high %v5675, %v5809
      %v7556 = vunpack.c.l.s4 1983009808
      %v7557 = vunpack.c.0.s8 %v7556
      %v7558 = vlaneseq
      %v7559 = vshrl.u32 %v7558, 7
      %v7560 = vsub.s32 %v7557, %v7559
      %v7561 = vrot.slane %v7553, %v7560
      %v7563 = vunpack.c.l.s4 1983009808
      %v7564 = vunpack.c.0.s8 %v7563
      %v7565 = vlaneseq
      %v7566 = vshrl.u32 %v7565, 7
      %v7567 = vsub.s32 %v7564, %v7566
      %v7568 = vrot.slane %v7554, %v7567
      %v7569 = vcombine.low %v5742, %v5876
      %v7570 = vcombine.high %v5742, %v5876
      %v7572 = vunpack.c.l.s4 1983009808
      %v7573 = vunpack.c.0.s8 %v7572
      %v7574 = vlaneseq
      %v7575 = vshrl.u32 %v7574, 7
      %v7576 = vsub.s32 %v7573, %v7575
      %v7577 = vrot.slane %v7569, %v7576
      %v7579 = vunpack.c.l.s4 1983009808
      %v7580 = vunpack.c.0.s8 %v7579
      %v7581 = vlaneseq
      %v7582 = vshrl.u32 %v7581, 7
      %v7583 = vsub.s32 %v7580, %v7582
      %v7584 = vrot.slane %v7570, %v7583
      %v7585 = vcombine.low %v7529, %v7545
      %v7586 = vcombine.high %v7529, %v7545
      %v7588 = vunpack.c.l.s4 1934713408
      %v7589 = vunpack.c.0.s8 %v7588
      %v7590 = vlaneseq
      %v7591 = vshrl.u32 %v7590, 7
      %v7592 = vsub.s32 %v7589, %v7591
      %v7593 = vrot.slane %v7585, %v7592
      %v7595 = vunpack.c.l.s4 1934713408
      %v7596 = vunpack.c.0.s8 %v7595
      %v7597 = vlaneseq
      %v7598 = vshrl.u32 %v7597, 7
      %v7599 = vsub.s32 %v7596, %v7598
      %v7600 = vrot.slane %v7586, %v7599
      %v7601 = vcombine.low %v7536, %v7552
      %v7602 = vcombine.high %v7536, %v7552
      %v7604 = vunpack.c.l.s4 1934713408
      %v7605 = vunpack.c.0.s8 %v7604
      %v7606 = vlaneseq
      %v7607 = vshrl.u32 %v7606, 7
      %v7608 = vsub.s32 %v7605, %v7607
      %v7609 = vrot.slane %v7601, %v7608
      %v7611 = vunpack.c.l.s4 1934713408
      %v7612 = vunpack.c.0.s8 %v7611
      %v7613 = vlaneseq
      %v7614 = vshrl.u32 %v7613, 7
      %v7615 = vsub.s32 %v7612, %v7614
      %v7616 = vrot.slane %v7602, %v7615
      %v7617 = vcombine.low %v7561, %v7577
      %v7618 = vcombine.high %v7561, %v7577
      %v7620 = vunpack.c.l.s4 1934713408
      %v7621 = vunpack.c.0.s8 %v7620
      %v7622 = vlaneseq
      %v7623 = vshrl.u32 %v7622, 7
      %v7624 = vsub.s32 %v7621, %v7623
      %v7625 = vrot.slane %v7617, %v7624
      %v7627 = vunpack.c.l.s4 1934713408
      %v7628 = vunpack.c.0.s8 %v7627
      %v7629 = vlaneseq
      %v7630 = vshrl.u32 %v7629, 7
      %v7631 = vsub.s32 %v7628, %v7630
      %v7632 = vrot.slane %v7618, %v7631
      %v7633 = vcombine.low %v7568, %v7584
      %v7634 = vcombine.high %v7568, %v7584
      %v7636 = vunpack.c.l.s4 1934713408
      %v7637 = vunpack.c.0.s8 %v7636
      %v7638 = vlaneseq
      %v7639 = vshrl.u32 %v7638, 7
      %v7640 = vsub.s32 %v7637, %v7639
      %v7641 = vrot.slane %v7633, %v7640
      %v7643 = vunpack.c.l.s4 1934713408
      %v7644 = vunpack.c.0.s8 %v7643
      %v7645 = vlaneseq
      %v7646 = vshrl.u32 %v7645, 7
      %v7647 = vsub.s32 %v7644, %v7646
      %v7648 = vrot.slane %v7634, %v7647
      %v7649 = vcombine.low %v7593, %v7625
      %v7650 = vcombine.high %v7593, %v7625
      %v7651 = vcombine.low %v7600, %v7632
      %v7652 = vcombine.high %v7600, %v7632
      %v7653 = vcombine.low %v7609, %v7641
      %v7654 = vcombine.high %v7609, %v7641
      %v7655 = vcombine.low %v7616, %v7648
      %v7656 = vcombine.high %v7616, %v7648
      %v7657 = vcombine.low %v5411, %v5545
      %v7658 = vcombine.high %v5411, %v5545
      %v7660 = vunpack.c.l.s4 1983009808
      %v7661 = vunpack.c.0.s8 %v7660
      %v7662 = vlaneseq
      %v7663 = vshrl.u32 %v7662, 7
      %v7664 = vsub.s32 %v7661, %v7663
      %v7665 = vrot.slane %v7657, %v7664
      %v7667 = vunpack.c.l.s4 1983009808
      %v7668 = vunpack.c.0.s8 %v7667
      %v7669 = vlaneseq
      %v7670 = vshrl.u32 %v7669, 7
      %v7671 = vsub.s32 %v7668, %v7670
      %v7672 = vrot.slane %v7658, %v7671
      %v7673 = vcombine.low %v5478, %v5612
      %v7674 = vcombine.high %v5478, %v5612
      %v7676 = vunpack.c.l.s4 1983009808
      %v7677 = vunpack.c.0.s8 %v7676
      %v7678 = vlaneseq
      %v7679 = vshrl.u32 %v7678, 7
      %v7680 = vsub.s32 %v7677, %v7679
      %v7681 = vrot.slane %v7673, %v7680
      %v7683 = vunpack.c.l.s4 1983009808
      %v7684 = vunpack.c.0.s8 %v7683
      %v7685 = vlaneseq
      %v7686 = vshrl.u32 %v7685, 7
      %v7687 = vsub.s32 %v7684, %v7686
      %v7688 = vrot.slane %v7674, %v7687
      %v7689 = vcombine.low %v5679, %v5813
      %v7690 = vcombine.high %v5679, %v5813
      %v7692 = vunpack.c.l.s4 1983009808
      %v7693 = vunpack.c.0.s8 %v7692
      %v7694 = vlaneseq
      %v7695 = vshrl.u32 %v7694, 7
      %v7696 = vsub.s32 %v7693, %v7695
      %v7697 = vrot.slane %v7689, %v7696
      %v7699 = vunpack.c.l.s4 1983009808
      %v7700 = vunpack.c.0.s8 %v7699
      %v7701 = vlaneseq
      %v7702 = vshrl.u32 %v7701, 7
      %v7703 = vsub.s32 %v7700, %v7702
      %v7704 = vrot.slane %v7690, %v7703
      %v7705 = vcombine.low %v5746, %v5880
      %v7706 = vcombine.high %v5746, %v5880
      %v7708 = vunpack.c.l.s4 1983009808
      %v7709 = vunpack.c.0.s8 %v7708
      %v7710 = vlaneseq
      %v7711 = vshrl.u32 %v7710, 7
      %v7712 = vsub.s32 %v7709, %v7711
      %v7713 = vrot.slane %v7705, %v7712
      %v7715 = vunpack.c.l.s4 1983009808
      %v7716 = vunpack.c.0.s8 %v7715
      %v7717 = vlaneseq
      %v7718 = vshrl.u32 %v7717, 7
      %v7719 = vsub.s32 %v7716, %v7718
      %v7720 = vrot.slane %v7706, %v7719
      %v7721 = vcombine.low %v7665, %v7681
      %v7722 = vcombine.high %v7665, %v7681
      %v7724 = vunpack.c.l.s4 1934713408
      %v7725 = vunpack.c.0.s8 %v7724
      %v7726 = vlaneseq
      %v7727 = vshrl.u32 %v7726, 7
      %v7728 = vsub.s32 %v7725, %v7727
      %v7729 = vrot.slane %v7721, %v7728
      %v7731 = vunpack.c.l.s4 1934713408
      %v7732 = vunpack.c.0.s8 %v7731
      %v7733 = vlaneseq
      %v7734 = vshrl.u32 %v7733, 7
      %v7735 = vsub.s32 %v7732, %v7734
      %v7736 = vrot.slane %v7722, %v7735
      %v7737 = vcombine.low %v7672, %v7688
      %v7738 = vcombine.high %v7672, %v7688
      %v7740 = vunpack.c.l.s4 1934713408
      %v7741 = vunpack.c.0.s8 %v7740
      %v7742 = vlaneseq
      %v7743 = vshrl.u32 %v7742, 7
      %v7744 = vsub.s32 %v7741, %v7743
      %v7745 = vrot.slane %v7737, %v7744
      %v7747 = vunpack.c.l.s4 1934713408
      %v7748 = vunpack.c.0.s8 %v7747
      %v7749 = vlaneseq
      %v7750 = vshrl.u32 %v7749, 7
      %v7751 = vsub.s32 %v7748, %v7750
      %v7752 = vrot.slane %v7738, %v7751
      %v7753 = vcombine.low %v7697, %v7713
      %v7754 = vcombine.high %v7697, %v7713
      %v7756 = vunpack.c.l.s4 1934713408
      %v7757 = vunpack.c.0.s8 %v7756
      %v7758 = vlaneseq
      %v7759 = vshrl.u32 %v7758, 7
      %v7760 = vsub.s32 %v7757, %v7759
      %v7761 = vrot.slane %v7753, %v7760
      %v7763 = vunpack.c.l.s4 1934713408
      %v7764 = vunpack.c.0.s8 %v7763
      %v7765 = vlaneseq
      %v7766 = vshrl.u32 %v7765, 7
      %v7767 = vsub.s32 %v7764, %v7766
      %v7768 = vrot.slane %v7754, %v7767
      %v7769 = vcombine.low %v7704, %v7720
      %v7770 = vcombine.high %v7704, %v7720
      %v7772 = vunpack.c.l.s4 1934713408
      %v7773 = vunpack.c.0.s8 %v7772
      %v7774 = vlaneseq
      %v7775 = vshrl.u32 %v7774, 7
      %v7776 = vsub.s32 %v7773, %v7775
      %v7777 = vrot.slane %v7769, %v7776
      %v7779 = vunpack.c.l.s4 1934713408
      %v7780 = vunpack.c.0.s8 %v7779
      %v7781 = vlaneseq
      %v7782 = vshrl.u32 %v7781, 7
      %v7783 = vsub.s32 %v7780, %v7782
      %v7784 = vrot.slane %v7770, %v7783
      %v7785 = vcombine.low %v7729, %v7761
      %v7786 = vcombine.high %v7729, %v7761
      %v7787 = vcombine.low %v7736, %v7768
      %v7788 = vcombine.high %v7736, %v7768
      %v7789 = vcombine.low %v7745, %v7777
      %v7790 = vcombine.high %v7745, %v7777
      %v7791 = vcombine.low %v7752, %v7784
      %v7792 = vcombine.high %v7752, %v7784
      %v7793 = vcombine.low %v5415, %v5549
      %v7794 = vcombine.high %v5415, %v5549
      %v7796 = vunpack.c.l.s4 1983009808
      %v7797 = vunpack.c.0.s8 %v7796
      %v7798 = vlaneseq
      %v7799 = vshrl.u32 %v7798, 7
      %v7800 = vsub.s32 %v7797, %v7799
      %v7801 = vrot.slane %v7793, %v7800
      %v7803 = vunpack.c.l.s4 1983009808
      %v7804 = vunpack.c.0.s8 %v7803
      %v7805 = vlaneseq
      %v7806 = vshrl.u32 %v7805, 7
      %v7807 = vsub.s32 %v7804, %v7806
      %v7808 = vrot.slane %v7794, %v7807
      %v7809 = vcombine.low %v5482, %v5616
      %v7810 = vcombine.high %v5482, %v5616
      %v7812 = vunpack.c.l.s4 1983009808
      %v7813 = vunpack.c.0.s8 %v7812
      %v7814 = vlaneseq
      %v7815 = vshrl.u32 %v7814, 7
      %v7816 = vsub.s32 %v7813, %v7815
      %v7817 = vrot.slane %v7809, %v7816
      %v7819 = vunpack.c.l.s4 1983009808
      %v7820 = vunpack.c.0.s8 %v7819
      %v7821 = vlaneseq
      %v7822 = vshrl.u32 %v7821, 7
      %v7823 = vsub.s32 %v7820, %v7822
      %v7824 = vrot.slane %v7810, %v7823
      %v7825 = vcombine.low %v5683, %v5817
      %v7826 = vcombine.high %v5683, %v5817
      %v7828 = vunpack.c.l.s4 1983009808
      %v7829 = vunpack.c.0.s8 %v7828
      %v7830 = vlaneseq
      %v7831 = vshrl.u32 %v7830, 7
      %v7832 = vsub.s32 %v7829, %v7831
      %v7833 = vrot.slane %v7825, %v7832
      %v7835 = vunpack.c.l.s4 1983009808
      %v7836 = vunpack.c.0.s8 %v7835
      %v7837 = vlaneseq
      %v7838 = vshrl.u32 %v7837, 7
      %v7839 = vsub.s32 %v7836, %v7838
      %v7840 = vrot.slane %v7826, %v7839
      %v7841 = vcombine.low %v5750, %v5884
      %v7842 = vcombine.high %v5750, %v5884
      %v7844 = vunpack.c.l.s4 1983009808
      %v7845 = vunpack.c.0.s8 %v7844
      %v7846 = vlaneseq
      %v7847 = vshrl.u32 %v7846, 7
      %v7848 = vsub.s32 %v7845, %v7847
      %v7849 = vrot.slane %v7841, %v7848
      %v7851 = vunpack.c.l.s4 1983009808
      %v7852 = vunpack.c.0.s8 %v7851
      %v7853 = vlaneseq
      %v7854 = vshrl.u32 %v7853, 7
      %v7855 = vsub.s32 %v7852, %v7854
      %v7856 = vrot.slane %v7842, %v7855
      %v7857 = vcombine.low %v7801, %v7817
      %v7858 = vcombine.high %v7801, %v7817
      %v7860 = vunpack.c.l.s4 1934713408
      %v7861 = vunpack.c.0.s8 %v7860
      %v7862 = vlaneseq
      %v7863 = vshrl.u32 %v7862, 7
      %v7864 = vsub.s32 %v7861, %v7863
      %v7865 = vrot.slane %v7857, %v7864
      %v7867 = vunpack.c.l.s4 1934713408
      %v7868 = vunpack.c.0.s8 %v7867
      %v7869 = vlaneseq
      %v7870 = vshrl.u32 %v7869, 7
      %v7871 = vsub.s32 %v7868, %v7870
      %v7872 = vrot.slane %v7858, %v7871
      %v7873 = vcombine.low %v7808, %v7824
      %v7874 = vcombine.high %v7808, %v7824
      %v7876 = vunpack.c.l.s4 1934713408
      %v7877 = vunpack.c.0.s8 %v7876
      %v7878 = vlaneseq
      %v7879 = vshrl.u32 %v7878, 7
      %v7880 = vsub.s32 %v7877, %v7879
      %v7881 = vrot.slane %v7873, %v7880
      %v7883 = vunpack.c.l.s4 1934713408
      %v7884 = vunpack.c.0.s8 %v7883
      %v7885 = vlaneseq
      %v7886 = vshrl.u32 %v7885, 7
      %v7887 = vsub.s32 %v7884, %v7886
      %v7888 = vrot.slane %v7874, %v7887
      %v7889 = vcombine.low %v7833, %v7849
      %v7890 = vcombine.high %v7833, %v7849
      %v7892 = vunpack.c.l.s4 1934713408
      %v7893 = vunpack.c.0.s8 %v7892
      %v7894 = vlaneseq
      %v7895 = vshrl.u32 %v7894, 7
      %v7896 = vsub.s32 %v7893, %v7895
      %v7897 = vrot.slane %v7889, %v7896
      %v7899 = vunpack.c.l.s4 1934713408
      %v7900 = vunpack.c.0.s8 %v7899
      %v7901 = vlaneseq
      %v7902 = vshrl.u32 %v7901, 7
      %v7903 = vsub.s32 %v7900, %v7902
      %v7904 = vrot.slane %v7890, %v7903
      %v7905 = vcombine.low %v7840, %v7856
      %v7906 = vcombine.high %v7840, %v7856
      %v7908 = vunpack.c.l.s4 1934713408
      %v7909 = vunpack.c.0.s8 %v7908
      %v7910 = vlaneseq
      %v7911 = vshrl.u32 %v7910, 7
      %v7912 = vsub.s32 %v7909, %v7911
      %v7913 = vrot.slane %v7905, %v7912
      %v7915 = vunpack.c.l.s4 1934713408
      %v7916 = vunpack.c.0.s8 %v7915
      %v7917 = vlaneseq
      %v7918 = vshrl.u32 %v7917, 7
      %v7919 = vsub.s32 %v7916, %v7918
      %v7920 = vrot.slane %v7906, %v7919
      %v7921 = vcombine.low %v7865, %v7897
      %v7922 = vcombine.high %v7865, %v7897
      %v7923 = vcombine.low %v7872, %v7904
      %v7924 = vcombine.high %v7872, %v7904
      %v7925 = vcombine.low %v7881, %v7913
      %v7926 = vcombine.high %v7881, %v7913
      %v7927 = vcombine.low %v7888, %v7920
      %v7928 = vcombine.high %v7888, %v7920
      %v7929 = vcombine.low %v5419, %v5553
      %v7930 = vcombine.high %v5419, %v5553
      %v7932 = vunpack.c.l.s4 1983009808
      %v7933 = vunpack.c.0.s8 %v7932
      %v7934 = vlaneseq
      %v7935 = vshrl.u32 %v7934, 7
      %v7936 = vsub.s32 %v7933, %v7935
      %v7937 = vrot.slane %v7929, %v7936
      %v7939 = vunpack.c.l.s4 1983009808
      %v7940 = vunpack.c.0.s8 %v7939
      %v7941 = vlaneseq
      %v7942 = vshrl.u32 %v7941, 7
      %v7943 = vsub.s32 %v7940, %v7942
      %v7944 = vrot.slane %v7930, %v7943
      %v7945 = vcombine.low %v5486, %v5620
      %v7946 = vcombine.high %v5486, %v5620
      %v7948 = vunpack.c.l.s4 1983009808
      %v7949 = vunpack.c.0.s8 %v7948
      %v7950 = vlaneseq
      %v7951 = vshrl.u32 %v7950, 7
      %v7952 = vsub.s32 %v7949, %v7951
      %v7953 = vrot.slane %v7945, %v7952
      %v7955 = vunpack.c.l.s4 1983009808
      %v7956 = vunpack.c.0.s8 %v7955
      %v7957 = vlaneseq
      %v7958 = vshrl.u32 %v7957, 7
      %v7959 = vsub.s32 %v7956, %v7958
      %v7960 = vrot.slane %v7946, %v7959
      %v7961 = vcombine.low %v5687, %v5821
      %v7962 = vcombine.high %v5687, %v5821
      %v7964 = vunpack.c.l.s4 1983009808
      %v7965 = vunpack.c.0.s8 %v7964
      %v7966 = vlaneseq
      %v7967 = vshrl.u32 %v7966, 7
      %v7968 = vsub.s32 %v7965, %v7967
      %v7969 = vrot.slane %v7961, %v7968
      %v7971 = vunpack.c.l.s4 1983009808
      %v7972 = vunpack.c.0.s8 %v7971
      %v7973 = vlaneseq
      %v7974 = vshrl.u32 %v7973, 7
      %v7975 = vsub.s32 %v7972, %v7974
      %v7976 = vrot.slane %v7962, %v7975
      %v7977 = vcombine.low %v5754, %v5888
      %v7978 = vcombine.high %v5754, %v5888
      %v7980 = vunpack.c.l.s4 1983009808
      %v7981 = vunpack.c.0.s8 %v7980
      %v7982 = vlaneseq
      %v7983 = vshrl.u32 %v7982, 7
      %v7984 = vsub.s32 %v7981, %v7983
      %v7985 = vrot.slane %v7977, %v7984
      %v7987 = vunpack.c.l.s4 1983009808
      %v7988 = vunpack.c.0.s8 %v7987
      %v7989 = vlaneseq
      %v7990 = vshrl.u32 %v7989, 7
      %v7991 = vsub.s32 %v7988, %v7990
      %v7992 = vrot.slane %v7978, %v7991
      %v7993 = vcombine.low %v7937, %v7953
      %v7994 = vcombine.high %v7937, %v7953
      %v7996 = vunpack.c.l.s4 1934713408
      %v7997 = vunpack.c.0.s8 %v7996
      %v7998 = vlaneseq
      %v7999 = vshrl.u32 %v7998, 7
      %v8000 = vsub.s32 %v7997, %v7999
      %v8001 = vrot.slane %v7993, %v8000
      %v8003 = vunpack.c.l.s4 1934713408
      %v8004 = vunpack.c.0.s8 %v8003
      %v8005 = vlaneseq
      %v8006 = vshrl.u32 %v8005, 7
      %v8007 = vsub.s32 %v8004, %v8006
      %v8008 = vrot.slane %v7994, %v8007
      %v8009 = vcombine.low %v7944, %v7960
      %v8010 = vcombine.high %v7944, %v7960
      %v8012 = vunpack.c.l.s4 1934713408
      %v8013 = vunpack.c.0.s8 %v8012
      %v8014 = vlaneseq
      %v8015 = vshrl.u32 %v8014, 7
      %v8016 = vsub.s32 %v8013, %v8015
      %v8017 = vrot.slane %v8009, %v8016
      %v8019 = vunpack.c.l.s4 1934713408
      %v8020 = vunpack.c.0.s8 %v8019
      %v8021 = vlaneseq
      %v8022 = vshrl.u32 %v8021, 7
      %v8023 = vsub.s32 %v8020, %v8022
      %v8024 = vrot.slane %v8010, %v8023
      %v8025 = vcombine.low %v7969, %v7985
      %v8026 = vcombine.high %v7969, %v7985
      %v8028 = vunpack.c.l.s4 1934713408
      %v8029 = vunpack.c.0.s8 %v8028
      %v8030 = vlaneseq
      %v8031 = vshrl.u32 %v8030, 7
      %v8032 = vsub.s32 %v8029, %v8031
      %v8033 = vrot.slane %v8025, %v8032
      %v8035 = vunpack.c.l.s4 1934713408
      %v8036 = vunpack.c.0.s8 %v8035
      %v8037 = vlaneseq
      %v8038 = vshrl.u32 %v8037, 7
      %v8039 = vsub.s32 %v8036, %v8038
      %v8040 = vrot.slane %v8026, %v8039
      %v8041 = vcombine.low %v7976, %v7992
      %v8042 = vcombine.high %v7976, %v7992
      %v8044 = vunpack.c.l.s4 1934713408
      %v8045 = vunpack.c.0.s8 %v8044
      %v8046 = vlaneseq
      %v8047 = vshrl.u32 %v8046, 7
      %v8048 = vsub.s32 %v8045, %v8047
      %v8049 = vrot.slane %v8041, %v8048
      %v8051 = vunpack.c.l.s4 1934713408
      %v8052 = vunpack.c.0.s8 %v8051
      %v8053 = vlaneseq
      %v8054 = vshrl.u32 %v8053, 7
      %v8055 = vsub.s32 %v8052, %v8054
      %v8056 = vrot.slane %v8042, %v8055
      %v8057 = vcombine.low %v8001, %v8033
      %v8058 = vcombine.high %v8001, %v8033
      %v8059 = vcombine.low %v8008, %v8040
      %v8060 = vcombine.high %v8008, %v8040
      %v8061 = vcombine.low %v8017, %v8049
      %v8062 = vcombine.high %v8017, %v8049
      %v8063 = vcombine.low %v8024, %v8056
      %v8064 = vcombine.high %v8024, %v8056
      %8066 = vrot.lane.b32.xlu0 %v6018, 16
      %v8067 = vpop.permute.xlu0 %8066
      %8070 = vrot.lane.b32.xlu0 %v6019, 32
      %v8071 = vpop.permute.xlu0 %8070
      %8074 = vrot.lane.b32.xlu0 %v6020, 48
      %v8075 = vpop.permute.xlu0 %8074
      %8078 = vrot.lane.b32.xlu0 %v6021, 64
      %v8079 = vpop.permute.xlu0 %8078
      %8082 = vrot.lane.b32.xlu0 %v6022, 80
      %v8083 = vpop.permute.xlu0 %8082
      %8086 = vrot.lane.b32.xlu0 %v6023, 96
      %v8087 = vpop.permute.xlu0 %8086
      %8090 = vrot.lane.b32.xlu0 %v6024, 112
      %v8091 = vpop.permute.xlu0 %8090
      %8094 = vrot.lane.b32.xlu0 %v6154, 16
      %v8095 = vpop.permute.xlu0 %8094
      %8098 = vrot.lane.b32.xlu0 %v6155, 32
      %v8099 = vpop.permute.xlu0 %8098
      %8102 = vrot.lane.b32.xlu0 %v6156, 48
      %v8103 = vpop.permute.xlu0 %8102
      %8106 = vrot.lane.b32.xlu0 %v6157, 64
      %v8107 = vpop.permute.xlu0 %8106
      %8110 = vrot.lane.b32.xlu0 %v6158, 80
      %v8111 = vpop.permute.xlu0 %8110
      %8114 = vrot.lane.b32.xlu0 %v6159, 96
      %v8115 = vpop.permute.xlu0 %8114
      %8118 = vrot.lane.b32.xlu0 %v6160, 112
      %v8119 = vpop.permute.xlu0 %8118
      %8122 = vrot.lane.b32.xlu0 %v6290, 16
      %v8123 = vpop.permute.xlu0 %8122
      %8126 = vrot.lane.b32.xlu0 %v6291, 32
      %v8127 = vpop.permute.xlu0 %8126
      %8130 = vrot.lane.b32.xlu0 %v6292, 48
      %v8131 = vpop.permute.xlu0 %8130
      %8134 = vrot.lane.b32.xlu0 %v6293, 64
      %v8135 = vpop.permute.xlu0 %8134
      %8138 = vrot.lane.b32.xlu0 %v6294, 80
      %v8139 = vpop.permute.xlu0 %8138
      %8142 = vrot.lane.b32.xlu0 %v6295, 96
      %v8143 = vpop.permute.xlu0 %8142
      %8146 = vrot.lane.b32.xlu0 %v6296, 112
      %v8147 = vpop.permute.xlu0 %8146
      %8150 = vrot.lane.b32.xlu0 %v6426, 16
      %v8151 = vpop.permute.xlu0 %8150
      %8154 = vrot.lane.b32.xlu0 %v6427, 32
      %v8155 = vpop.permute.xlu0 %8154
      %8158 = vrot.lane.b32.xlu0 %v6428, 48
      %v8159 = vpop.permute.xlu0 %8158
      %8162 = vrot.lane.b32.xlu0 %v6429, 64
      %v8163 = vpop.permute.xlu0 %8162
      %8166 = vrot.lane.b32.xlu0 %v6430, 80
      %v8167 = vpop.permute.xlu0 %8166
      %8170 = vrot.lane.b32.xlu0 %v6431, 96
      %v8171 = vpop.permute.xlu0 %8170
      %8174 = vrot.lane.b32.xlu0 %v6432, 112
      %v8175 = vpop.permute.xlu0 %8174
      %8178 = vrot.lane.b32.xlu0 %v6562, 16
      %v8179 = vpop.permute.xlu0 %8178
      %8182 = vrot.lane.b32.xlu0 %v6563, 32
      %v8183 = vpop.permute.xlu0 %8182
      %8186 = vrot.lane.b32.xlu0 %v6564, 48
      %v8187 = vpop.permute.xlu0 %8186
      %8190 = vrot.lane.b32.xlu0 %v6565, 64
      %v8191 = vpop.permute.xlu0 %8190
      %8194 = vrot.lane.b32.xlu0 %v6566, 80
      %v8195 = vpop.permute.xlu0 %8194
      %8198 = vrot.lane.b32.xlu0 %v6567, 96
      %v8199 = vpop.permute.xlu0 %8198
      %8202 = vrot.lane.b32.xlu0 %v6568, 112
      %v8203 = vpop.permute.xlu0 %8202
      %8206 = vrot.lane.b32.xlu0 %v6698, 16
      %v8207 = vpop.permute.xlu0 %8206
      %8210 = vrot.lane.b32.xlu0 %v6699, 32
      %v8211 = vpop.permute.xlu0 %8210
      %8214 = vrot.lane.b32.xlu0 %v6700, 48
      %v8215 = vpop.permute.xlu0 %8214
      %8218 = vrot.lane.b32.xlu0 %v6701, 64
      %v8219 = vpop.permute.xlu0 %8218
      %8222 = vrot.lane.b32.xlu0 %v6702, 80
      %v8223 = vpop.permute.xlu0 %8222
      %8226 = vrot.lane.b32.xlu0 %v6703, 96
      %v8227 = vpop.permute.xlu0 %8226
      %8230 = vrot.lane.b32.xlu0 %v6704, 112
      %v8231 = vpop.permute.xlu0 %8230
      %8234 = vrot.lane.b32.xlu0 %v6834, 16
      %v8235 = vpop.permute.xlu0 %8234
      %8238 = vrot.lane.b32.xlu0 %v6835, 32
      %v8239 = vpop.permute.xlu0 %8238
      %8242 = vrot.lane.b32.xlu0 %v6836, 48
      %v8243 = vpop.permute.xlu0 %8242
      %8246 = vrot.lane.b32.xlu0 %v6837, 64
      %v8247 = vpop.permute.xlu0 %8246
      %8250 = vrot.lane.b32.xlu0 %v6838, 80
      %v8251 = vpop.permute.xlu0 %8250
      %8254 = vrot.lane.b32.xlu0 %v6839, 96
      %v8255 = vpop.permute.xlu0 %8254
      %8258 = vrot.lane.b32.xlu0 %v6840, 112
      %v8259 = vpop.permute.xlu0 %8258
      %8262 = vrot.lane.b32.xlu0 %v6970, 16
      %v8263 = vpop.permute.xlu0 %8262
      %8266 = vrot.lane.b32.xlu0 %v6971, 32
      %v8267 = vpop.permute.xlu0 %8266
      %8270 = vrot.lane.b32.xlu0 %v6972, 48
      %v8271 = vpop.permute.xlu0 %8270
      %8274 = vrot.lane.b32.xlu0 %v6973, 64
      %v8275 = vpop.permute.xlu0 %8274
      %8278 = vrot.lane.b32.xlu0 %v6974, 80
      %v8279 = vpop.permute.xlu0 %8278
      %8282 = vrot.lane.b32.xlu0 %v6975, 96
      %v8283 = vpop.permute.xlu0 %8282
      %8286 = vrot.lane.b32.xlu0 %v6976, 112
      %v8287 = vpop.permute.xlu0 %8286
      %8290 = vrot.lane.b32.xlu0 %v7106, 16
      %v8291 = vpop.permute.xlu0 %8290
      %8294 = vrot.lane.b32.xlu0 %v7107, 32
      %v8295 = vpop.permute.xlu0 %8294
      %8298 = vrot.lane.b32.xlu0 %v7108, 48
      %v8299 = vpop.permute.xlu0 %8298
      %8302 = vrot.lane.b32.xlu0 %v7109, 64
      %v8303 = vpop.permute.xlu0 %8302
      %8306 = vrot.lane.b32.xlu0 %v7110, 80
      %v8307 = vpop.permute.xlu0 %8306
      %8310 = vrot.lane.b32.xlu0 %v7111, 96
      %v8311 = vpop.permute.xlu0 %8310
      %8314 = vrot.lane.b32.xlu0 %v7112, 112
      %v8315 = vpop.permute.xlu0 %8314
      %8318 = vrot.lane.b32.xlu0 %v7242, 16
      %v8319 = vpop.permute.xlu0 %8318
      %8322 = vrot.lane.b32.xlu0 %v7243, 32
      %v8323 = vpop.permute.xlu0 %8322
      %8326 = vrot.lane.b32.xlu0 %v7244, 48
      %v8327 = vpop.permute.xlu0 %8326
      %8330 = vrot.lane.b32.xlu0 %v7245, 64
      %v8331 = vpop.permute.xlu0 %8330
      %8334 = vrot.lane.b32.xlu0 %v7246, 80
      %v8335 = vpop.permute.xlu0 %8334
      %8338 = vrot.lane.b32.xlu0 %v7247, 96
      %v8339 = vpop.permute.xlu0 %8338
      %8342 = vrot.lane.b32.xlu0 %v7248, 112
      %v8343 = vpop.permute.xlu0 %8342
      %8346 = vrot.lane.b32.xlu0 %v7378, 16
      %v8347 = vpop.permute.xlu0 %8346
      %8350 = vrot.lane.b32.xlu0 %v7379, 32
      %v8351 = vpop.permute.xlu0 %8350
      %8354 = vrot.lane.b32.xlu0 %v7380, 48
      %v8355 = vpop.permute.xlu0 %8354
      %8358 = vrot.lane.b32.xlu0 %v7381, 64
      %v8359 = vpop.permute.xlu0 %8358
      %8362 = vrot.lane.b32.xlu0 %v7382, 80
      %v8363 = vpop.permute.xlu0 %8362
      %8366 = vrot.lane.b32.xlu0 %v7383, 96
      %v8367 = vpop.permute.xlu0 %8366
      %8370 = vrot.lane.b32.xlu0 %v7384, 112
      %v8371 = vpop.permute.xlu0 %8370
      %8374 = vrot.lane.b32.xlu0 %v7514, 16
      %v8375 = vpop.permute.xlu0 %8374
      %8378 = vrot.lane.b32.xlu0 %v7515, 32
      %v8379 = vpop.permute.xlu0 %8378
      %8382 = vrot.lane.b32.xlu0 %v7516, 48
      %v8383 = vpop.permute.xlu0 %8382
      %8386 = vrot.lane.b32.xlu0 %v7517, 64
      %v8387 = vpop.permute.xlu0 %8386
      %8390 = vrot.lane.b32.xlu0 %v7518, 80
      %v8391 = vpop.permute.xlu0 %8390
      %8394 = vrot.lane.b32.xlu0 %v7519, 96
      %v8395 = vpop.permute.xlu0 %8394
      %8398 = vrot.lane.b32.xlu0 %v7520, 112
      %v8399 = vpop.permute.xlu0 %8398
      %8402 = vrot.lane.b32.xlu0 %v7650, 16
      %v8403 = vpop.permute.xlu0 %8402
      %8406 = vrot.lane.b32.xlu0 %v7651, 32
      %v8407 = vpop.permute.xlu0 %8406
      %8410 = vrot.lane.b32.xlu0 %v7652, 48
      %v8411 = vpop.permute.xlu0 %8410
      %8414 = vrot.lane.b32.xlu0 %v7653, 64
      %v8415 = vpop.permute.xlu0 %8414
      %8418 = vrot.lane.b32.xlu0 %v7654, 80
      %v8419 = vpop.permute.xlu0 %8418
      %8422 = vrot.lane.b32.xlu0 %v7655, 96
      %v8423 = vpop.permute.xlu0 %8422
      %8426 = vrot.lane.b32.xlu0 %v7656, 112
      %v8427 = vpop.permute.xlu0 %8426
      %8430 = vrot.lane.b32.xlu0 %v7786, 16
      %v8431 = vpop.permute.xlu0 %8430
      %8434 = vrot.lane.b32.xlu0 %v7787, 32
      %v8435 = vpop.permute.xlu0 %8434
      %8438 = vrot.lane.b32.xlu0 %v7788, 48
      %v8439 = vpop.permute.xlu0 %8438
      %8442 = vrot.lane.b32.xlu0 %v7789, 64
      %v8443 = vpop.permute.xlu0 %8442
      %8446 = vrot.lane.b32.xlu0 %v7790, 80
      %v8447 = vpop.permute.xlu0 %8446
      %8450 = vrot.lane.b32.xlu0 %v7791, 96
      %v8451 = vpop.permute.xlu0 %8450
      %8454 = vrot.lane.b32.xlu0 %v7792, 112
      %v8455 = vpop.permute.xlu0 %8454
      %8458 = vrot.lane.b32.xlu0 %v7922, 16
      %v8459 = vpop.permute.xlu0 %8458
      %8462 = vrot.lane.b32.xlu0 %v7923, 32
      %v8463 = vpop.permute.xlu0 %8462
      %8466 = vrot.lane.b32.xlu0 %v7924, 48
      %v8467 = vpop.permute.xlu0 %8466
      %8470 = vrot.lane.b32.xlu0 %v7925, 64
      %v8471 = vpop.permute.xlu0 %8470
      %8474 = vrot.lane.b32.xlu0 %v7926, 80
      %v8475 = vpop.permute.xlu0 %8474
      %8478 = vrot.lane.b32.xlu0 %v7927, 96
      %v8479 = vpop.permute.xlu0 %8478
      %8482 = vrot.lane.b32.xlu0 %v7928, 112
      %v8483 = vpop.permute.xlu0 %8482
      %8486 = vrot.lane.b32.xlu0 %v8058, 16
      %v8487 = vpop.permute.xlu0 %8486
      %8490 = vrot.lane.b32.xlu0 %v8059, 32
      %v8491 = vpop.permute.xlu0 %8490
      %8494 = vrot.lane.b32.xlu0 %v8060, 48
      %v8495 = vpop.permute.xlu0 %8494
      %8498 = vrot.lane.b32.xlu0 %v8061, 64
      %v8499 = vpop.permute.xlu0 %8498
      %8502 = vrot.lane.b32.xlu0 %v8062, 80
      %v8503 = vpop.permute.xlu0 %8502
      %8506 = vrot.lane.b32.xlu0 %v8063, 96
      %v8507 = vpop.permute.xlu0 %8506
      %8510 = vrot.lane.b32.xlu0 %v8064, 112
      %v8511 = vpop.permute.xlu0 %8510
      %v8513 = vsel %vm2856, %v6017, %v8067
      %vm8514 = vcmask 261120
      %v8515 = vsel %vm8514, %v8513, %v8071
      %vm8516 = vcmask 392192
      %v8517 = vsel %vm8516, %v8515, %v8075
      %vm8518 = vcmask 523264
      %v8519 = vsel %vm8518, %v8517, %v8079
      %vm8520 = vcmask 654336
      %v8521 = vsel %vm8520, %v8519, %v8083
      %vm8522 = vcmask 785408
      %v8523 = vsel %vm8522, %v8521, %v8087
      %v8524 = vsel %vm4529, %v8523, %v8091
      %v8525 = vsel %vm2856, %v6153, %v8095
      %v8526 = vsel %vm8514, %v8525, %v8099
      %v8527 = vsel %vm8516, %v8526, %v8103
      %v8528 = vsel %vm8518, %v8527, %v8107
      %v8529 = vsel %vm8520, %v8528, %v8111
      %v8530 = vsel %vm8522, %v8529, %v8115
      %v8531 = vsel %vm4529, %v8530, %v8119
      %v8532 = vsel %vm2856, %v6289, %v8123
      %v8533 = vsel %vm8514, %v8532, %v8127
      %v8534 = vsel %vm8516, %v8533, %v8131
      %v8535 = vsel %vm8518, %v8534, %v8135
      %v8536 = vsel %vm8520, %v8535, %v8139
      %v8537 = vsel %vm8522, %v8536, %v8143
      %v8538 = vsel %vm4529, %v8537, %v8147
      %v8539 = vsel %vm2856, %v6425, %v8151
      %v8540 = vsel %vm8514, %v8539, %v8155
      %v8541 = vsel %vm8516, %v8540, %v8159
      %v8542 = vsel %vm8518, %v8541, %v8163
      %v8543 = vsel %vm8520, %v8542, %v8167
      %v8544 = vsel %vm8522, %v8543, %v8171
      %v8545 = vsel %vm4529, %v8544, %v8175
      %v8546 = vsel %vm2856, %v6561, %v8179
      %v8547 = vsel %vm8514, %v8546, %v8183
      %v8548 = vsel %vm8516, %v8547, %v8187
      %v8549 = vsel %vm8518, %v8548, %v8191
      %v8550 = vsel %vm8520, %v8549, %v8195
      %v8551 = vsel %vm8522, %v8550, %v8199
      %v8552 = vsel %vm4529, %v8551, %v8203
      %v8553 = vsel %vm2856, %v6697, %v8207
      %v8554 = vsel %vm8514, %v8553, %v8211
      %v8555 = vsel %vm8516, %v8554, %v8215
      %v8556 = vsel %vm8518, %v8555, %v8219
      %v8557 = vsel %vm8520, %v8556, %v8223
      %v8558 = vsel %vm8522, %v8557, %v8227
      %v8559 = vsel %vm4529, %v8558, %v8231
      %v8560 = vsel %vm2856, %v6833, %v8235
      %v8561 = vsel %vm8514, %v8560, %v8239
      %v8562 = vsel %vm8516, %v8561, %v8243
      %v8563 = vsel %vm8518, %v8562, %v8247
      %v8564 = vsel %vm8520, %v8563, %v8251
      %v8565 = vsel %vm8522, %v8564, %v8255
      %v8566 = vsel %vm4529, %v8565, %v8259
      %v8567 = vsel %vm2856, %v6969, %v8263
      %v8568 = vsel %vm8514, %v8567, %v8267
      %v8569 = vsel %vm8516, %v8568, %v8271
      %v8570 = vsel %vm8518, %v8569, %v8275
      %v8571 = vsel %vm8520, %v8570, %v8279
      %v8572 = vsel %vm8522, %v8571, %v8283
      %v8573 = vsel %vm4529, %v8572, %v8287
      %v8574 = vsel %vm2856, %v7105, %v8291
      %v8575 = vsel %vm8514, %v8574, %v8295
      %v8576 = vsel %vm8516, %v8575, %v8299
      %v8577 = vsel %vm8518, %v8576, %v8303
      %v8578 = vsel %vm8520, %v8577, %v8307
      %v8579 = vsel %vm8522, %v8578, %v8311
      %v8580 = vsel %vm4529, %v8579, %v8315
      %v8581 = vsel %vm2856, %v7241, %v8319
      %v8582 = vsel %vm8514, %v8581, %v8323
      %v8583 = vsel %vm8516, %v8582, %v8327
      %v8584 = vsel %vm8518, %v8583, %v8331
      %v8585 = vsel %vm8520, %v8584, %v8335
      %v8586 = vsel %vm8522, %v8585, %v8339
      %v8587 = vsel %vm4529, %v8586, %v8343
      %v8588 = vsel %vm2856, %v7377, %v8347
      %v8589 = vsel %vm8514, %v8588, %v8351
      %v8590 = vsel %vm8516, %v8589, %v8355
      %v8591 = vsel %vm8518, %v8590, %v8359
      %v8592 = vsel %vm8520, %v8591, %v8363
      %v8593 = vsel %vm8522, %v8592, %v8367
      %v8594 = vsel %vm4529, %v8593, %v8371
      %v8595 = vsel %vm2856, %v7513, %v8375
      %v8596 = vsel %vm8514, %v8595, %v8379
      %v8597 = vsel %vm8516, %v8596, %v8383
      %v8598 = vsel %vm8518, %v8597, %v8387
      %v8599 = vsel %vm8520, %v8598, %v8391
      %v8600 = vsel %vm8522, %v8599, %v8395
      %v8601 = vsel %vm4529, %v8600, %v8399
      %v8602 = vsel %vm2856, %v7649, %v8403
      %v8603 = vsel %vm8514, %v8602, %v8407
      %v8604 = vsel %vm8516, %v8603, %v8411
      %v8605 = vsel %vm8518, %v8604, %v8415
      %v8606 = vsel %vm8520, %v8605, %v8419
      %v8607 = vsel %vm8522, %v8606, %v8423
      %v8608 = vsel %vm4529, %v8607, %v8427
      %v8609 = vsel %vm2856, %v7785, %v8431
      %v8610 = vsel %vm8514, %v8609, %v8435
      %v8611 = vsel %vm8516, %v8610, %v8439
      %v8612 = vsel %vm8518, %v8611, %v8443
      %v8613 = vsel %vm8520, %v8612, %v8447
      %v8614 = vsel %vm8522, %v8613, %v8451
      %v8615 = vsel %vm4529, %v8614, %v8455
      %v8616 = vsel %vm2856, %v7921, %v8459
      %v8617 = vsel %vm8514, %v8616, %v8463
      %v8618 = vsel %vm8516, %v8617, %v8467
      %v8619 = vsel %vm8518, %v8618, %v8471
      %v8620 = vsel %vm8520, %v8619, %v8475
      %v8621 = vsel %vm8522, %v8620, %v8479
      %v8622 = vsel %vm4529, %v8621, %v8483
      %v8623 = vsel %vm2856, %v8057, %v8487
      %v8624 = vsel %vm8514, %v8623, %v8491
      %v8625 = vsel %vm8516, %v8624, %v8495
      %v8626 = vsel %vm8518, %v8625, %v8499
      %v8627 = vsel %vm8520, %v8626, %v8503
      %v8628 = vsel %vm8522, %v8627, %v8507
      %v8629 = vsel %vm4529, %v8628, %v8511
      %v8630 = vld [vmem:[%s4] sm:$0xff]
      %v8631 = vld [vmem:[%s4 + $0x8] sm:$0xff]
      %v8632 = vld [vmem:[%s4 + $0x10] sm:$0xff]
      %v8633 = vld [vmem:[%s4 + $0x18] sm:$0xff]
      %v8634 = vld [vmem:[%s4 + $0x20] sm:$0xff]
      %v8635 = vld [vmem:[%s4 + $0x28] sm:$0xff]
      %v8636 = vld [vmem:[%s4 + $0x30] sm:$0xff]
      %v8637 = vld [vmem:[%s4 + $0x38] sm:$0xff]
      %v8638 = vld [vmem:[%s4 + $0x40] sm:$0xff]
      %v8639 = vld [vmem:[%s4 + $0x48] sm:$0xff]
      %v8640 = vld [vmem:[%s4 + $0x50] sm:$0xff]
      %v8641 = vld [vmem:[%s4 + $0x58] sm:$0xff]
      %v8642 = vld [vmem:[%s4 + $0x60] sm:$0xff]
      %v8643 = vld [vmem:[%s4 + $0x68] sm:$0xff]
      %v8644 = vld [vmem:[%s4 + $0x70] sm:$0xff]
      %v8645 = vld [vmem:[%s4 + $0x78] sm:$0xff]
      %v8646 = vld [vmem:[%s4 + $0x80] sm:$0x1]
      %v8647 = vld [vmem:[%s4 + $0x88] sm:$0x1]
      %v8648 = vld [vmem:[%s4 + $0x90] sm:$0x1]
      %v8649 = vld [vmem:[%s4 + $0x98] sm:$0x1]
      %v8650 = vld [vmem:[%s4 + $0xa0] sm:$0x1]
      %v8651 = vld [vmem:[%s4 + $0xa8] sm:$0x1]
      %v8652 = vld [vmem:[%s4 + $0xb0] sm:$0x1]
      %v8653 = vld [vmem:[%s4 + $0xb8] sm:$0x1]
      %v8654 = vld [vmem:[%s4 + $0xc0] sm:$0x1]
      %v8655 = vld [vmem:[%s4 + $0xc8] sm:$0x1]
      %v8656 = vld [vmem:[%s4 + $0xd0] sm:$0x1]
      %v8657 = vld [vmem:[%s4 + $0xd8] sm:$0x1]
      %v8658 = vld [vmem:[%s4 + $0xe0] sm:$0x1]
      %v8659 = vld [vmem:[%s4 + $0xe8] sm:$0x1]
      %v8660 = vld [vmem:[%s4 + $0xf0] sm:$0x1]
      %v8661 = vld [vmem:[%s4 + $0xf8] sm:$0x1]
      %v8662 = vld [vmem:[#allocation2] sm:$0xff]
      %v8663 = vld [vmem:[#allocation2 + $0x8] sm:$0xff]
      %v8664 = vld [vmem:[#allocation2 + $0x10] sm:$0xff]
      %v8665 = vld [vmem:[#allocation2 + $0x18] sm:$0xff]
      %v8666 = vld [vmem:[#allocation2 + $0x20] sm:$0xff]
      %v8667 = vld [vmem:[#allocation2 + $0x28] sm:$0xff]
      %v8668 = vld [vmem:[#allocation2 + $0x30] sm:$0xff]
      %v8669 = vld [vmem:[#allocation2 + $0x38] sm:$0xff]
      %v8670 = vld [vmem:[#allocation2 + $0x40] sm:$0xff]
      %v8671 = vld [vmem:[#allocation2 + $0x48] sm:$0xff]
      %v8672 = vld [vmem:[#allocation2 + $0x50] sm:$0xff]
      %v8673 = vld [vmem:[#allocation2 + $0x58] sm:$0xff]
      %v8674 = vld [vmem:[#allocation2 + $0x60] sm:$0xff]
      %v8675 = vld [vmem:[#allocation2 + $0x68] sm:$0xff]
      %v8676 = vld [vmem:[#allocation2 + $0x70] sm:$0xff]
      %v8677 = vld [vmem:[#allocation2 + $0x78] sm:$0xff]
      %v8678 = vld [vmem:[#allocation2 + $0x80] sm:$0xff]
      %v8679 = vlaneseq
      %v8680 = vshrl.u32 %v8679, 7
      %v8681 = vsub.s32 0, %v8680
      %v8682 = vrot.slane %v8630, %v8681
      %v8683 = vlaneseq
      %v8684 = vshrl.u32 %v8683, 7
      %v8685 = vsub.s32 0, %v8684
      %v8686 = vrot.slane %v8631, %v8685
      %v8687 = vlaneseq
      %v8688 = vshrl.u32 %v8687, 7
      %v8689 = vsub.s32 0, %v8688
      %v8690 = vrot.slane %v8632, %v8689
      %v8691 = vlaneseq
      %v8692 = vshrl.u32 %v8691, 7
      %v8693 = vsub.s32 0, %v8692
      %v8694 = vrot.slane %v8633, %v8693
      %v8695 = vlaneseq
      %v8696 = vshrl.u32 %v8695, 7
      %v8697 = vsub.s32 0, %v8696
      %v8698 = vrot.slane %v8634, %v8697
      %v8699 = vlaneseq
      %v8700 = vshrl.u32 %v8699, 7
      %v8701 = vsub.s32 0, %v8700
      %v8702 = vrot.slane %v8635, %v8701
      %v8703 = vlaneseq
      %v8704 = vshrl.u32 %v8703, 7
      %v8705 = vsub.s32 0, %v8704
      %v8706 = vrot.slane %v8636, %v8705
      %v8707 = vlaneseq
      %v8708 = vshrl.u32 %v8707, 7
      %v8709 = vsub.s32 0, %v8708
      %v8710 = vrot.slane %v8637, %v8709
      %v8711 = vlaneseq
      %v8712 = vshrl.u32 %v8711, 7
      %v8713 = vsub.s32 0, %v8712
      %v8714 = vrot.slane %v8638, %v8713
      %v8715 = vlaneseq
      %v8716 = vshrl.u32 %v8715, 7
      %v8717 = vsub.s32 0, %v8716
      %v8718 = vrot.slane %v8639, %v8717
      %v8719 = vlaneseq
      %v8720 = vshrl.u32 %v8719, 7
      %v8721 = vsub.s32 0, %v8720
      %v8722 = vrot.slane %v8640, %v8721
      %v8723 = vlaneseq
      %v8724 = vshrl.u32 %v8723, 7
      %v8725 = vsub.s32 0, %v8724
      %v8726 = vrot.slane %v8641, %v8725
      %v8727 = vlaneseq
      %v8728 = vshrl.u32 %v8727, 7
      %v8729 = vsub.s32 0, %v8728
      %v8730 = vrot.slane %v8642, %v8729
      %v8731 = vlaneseq
      %v8732 = vshrl.u32 %v8731, 7
      %v8733 = vsub.s32 0, %v8732
      %v8734 = vrot.slane %v8643, %v8733
      %v8735 = vlaneseq
      %v8736 = vshrl.u32 %v8735, 7
      %v8737 = vsub.s32 0, %v8736
      %v8738 = vrot.slane %v8644, %v8737
      %v8739 = vlaneseq
      %v8740 = vshrl.u32 %v8739, 7
      %v8741 = vsub.s32 0, %v8740
      %v8742 = vrot.slane %v8645, %v8741
      %8759 = vrot.lane.b32.xlu0 %v8682, 111
      %v8760 = vpop.permute.xlu0 %8759
      %8761 = vrot.lane.b32.xlu0 %v8686, 111
      %v8762 = vpop.permute.xlu0 %8761
      %8763 = vrot.lane.b32.xlu0 %v8690, 111
      %v8764 = vpop.permute.xlu0 %8763
      %8765 = vrot.lane.b32.xlu0 %v8694, 111
      %v8766 = vpop.permute.xlu0 %8765
      %8767 = vrot.lane.b32.xlu0 %v8698, 111
      %v8768 = vpop.permute.xlu0 %8767
      %8769 = vrot.lane.b32.xlu0 %v8702, 111
      %v8770 = vpop.permute.xlu0 %8769
      %8771 = vrot.lane.b32.xlu0 %v8706, 111
      %v8772 = vpop.permute.xlu0 %8771
      %8773 = vrot.lane.b32.xlu0 %v8710, 111
      %v8774 = vpop.permute.xlu0 %8773
      %8775 = vrot.lane.b32.xlu0 %v8714, 111
      %v8776 = vpop.permute.xlu0 %8775
      %8777 = vrot.lane.b32.xlu0 %v8718, 111
      %v8778 = vpop.permute.xlu0 %8777
      %8779 = vrot.lane.b32.xlu0 %v8722, 111
      %v8780 = vpop.permute.xlu0 %8779
      %8781 = vrot.lane.b32.xlu0 %v8726, 111
      %v8782 = vpop.permute.xlu0 %8781
      %8783 = vrot.lane.b32.xlu0 %v8730, 111
      %v8784 = vpop.permute.xlu0 %8783
      %8785 = vrot.lane.b32.xlu0 %v8734, 111
      %v8786 = vpop.permute.xlu0 %8785
      %8787 = vrot.lane.b32.xlu0 %v8738, 111
      %v8788 = vpop.permute.xlu0 %8787
      %8789 = vrot.lane.b32.xlu0 %v8742, 111
      %v8790 = vpop.permute.xlu0 %8789
      %vm8791 = vcmask 908288
      %v8792 = vsel %vm8791, %v8760, %v8762
      %v8793 = vsel %vm8791, %v8762, %v8764
      %v8794 = vsel %vm8791, %v8764, %v8766
      %v8795 = vsel %vm8791, %v8766, %v8768
      %v8796 = vsel %vm8791, %v8768, %v8770
      %v8797 = vsel %vm8791, %v8770, %v8772
      %v8798 = vsel %vm8791, %v8772, %v8774
      %v8799 = vsel %vm8791, %v8774, %v8776
      %v8800 = vsel %vm8791, %v8776, %v8778
      %v8801 = vsel %vm8791, %v8778, %v8780
      %v8802 = vsel %vm8791, %v8780, %v8782
      %v8803 = vsel %vm8791, %v8782, %v8784
      %v8804 = vsel %vm8791, %v8784, %v8786
      %v8805 = vsel %vm8791, %v8786, %v8788
      %v8806 = vsel %vm8791, %v8788, %v8790
      %v8824 = vmul.f32 %v8662, %v8760
      %v8825 = vmul.f32 %v8663, %v8792
      %v8826 = vmul.f32 %v8664, %v8793
      %v8827 = vmul.f32 %v8665, %v8794
      %v8828 = vmul.f32 %v8666, %v8795
      %v8829 = vmul.f32 %v8667, %v8796
      %v8830 = vmul.f32 %v8668, %v8797
      %v8831 = vmul.f32 %v8669, %v8798
      %v8832 = vmul.f32 %v8670, %v8799
      %v8833 = vmul.f32 %v8671, %v8800
      %v8834 = vmul.f32 %v8672, %v8801
      %v8835 = vmul.f32 %v8673, %v8802
      %v8836 = vmul.f32 %v8674, %v8803
      %v8837 = vmul.f32 %v8675, %v8804
      %v8838 = vmul.f32 %v8676, %v8805
      %v8839 = vmul.f32 %v8677, %v8806
      %v8840 = vmul.f32 %v8678, %v8790
      %8858 = vrot.lane.b32.xlu0 %v8824, 17
      %v8859 = vpop.permute.xlu0 %8858
      %8860 = vrot.lane.b32.xlu0 %v8825, 17
      %v8861 = vpop.permute.xlu0 %8860
      %8862 = vrot.lane.b32.xlu0 %v8826, 17
      %v8863 = vpop.permute.xlu0 %8862
      %8864 = vrot.lane.b32.xlu0 %v8827, 17
      %v8865 = vpop.permute.xlu0 %8864
      %8866 = vrot.lane.b32.xlu0 %v8828, 17
      %v8867 = vpop.permute.xlu0 %8866
      %8868 = vrot.lane.b32.xlu0 %v8829, 17
      %v8869 = vpop.permute.xlu0 %8868
      %8870 = vrot.lane.b32.xlu0 %v8830, 17
      %v8871 = vpop.permute.xlu0 %8870
      %8872 = vrot.lane.b32.xlu0 %v8831, 17
      %v8873 = vpop.permute.xlu0 %8872
      %8874 = vrot.lane.b32.xlu0 %v8832, 17
      %v8875 = vpop.permute.xlu0 %8874
      %8876 = vrot.lane.b32.xlu0 %v8833, 17
      %v8877 = vpop.permute.xlu0 %8876
      %8878 = vrot.lane.b32.xlu0 %v8834, 17
      %v8879 = vpop.permute.xlu0 %8878
      %8880 = vrot.lane.b32.xlu0 %v8835, 17
      %v8881 = vpop.permute.xlu0 %8880
      %8882 = vrot.lane.b32.xlu0 %v8836, 17
      %v8883 = vpop.permute.xlu0 %8882
      %8884 = vrot.lane.b32.xlu0 %v8837, 17
      %v8885 = vpop.permute.xlu0 %8884
      %8886 = vrot.lane.b32.xlu0 %v8838, 17
      %v8887 = vpop.permute.xlu0 %8886
      %8888 = vrot.lane.b32.xlu0 %v8839, 17
      %v8889 = vpop.permute.xlu0 %8888
      %8890 = vrot.lane.b32.xlu0 %v8840, 17
      %v8891 = vpop.permute.xlu0 %8890
      %vm8892 = vcmask 138240
      %v8893 = vsel %vm8892, %v8859, %v8861
      %v8894 = vsel %vm8892, %v8861, %v8863
      %v8895 = vsel %vm8892, %v8863, %v8865
      %v8896 = vsel %vm8892, %v8865, %v8867
      %v8897 = vsel %vm8892, %v8867, %v8869
      %v8898 = vsel %vm8892, %v8869, %v8871
      %v8899 = vsel %vm8892, %v8871, %v8873
      %v8900 = vsel %vm8892, %v8873, %v8875
      %v8901 = vsel %vm8892, %v8875, %v8877
      %v8902 = vsel %vm8892, %v8877, %v8879
      %v8903 = vsel %vm8892, %v8879, %v8881
      %v8904 = vsel %vm8892, %v8881, %v8883
      %v8905 = vsel %vm8892, %v8883, %v8885
      %v8906 = vsel %vm8892, %v8885, %v8887
      %v8907 = vsel %vm8892, %v8887, %v8889
      %v8908 = vsel %vm8892, %v8889, %v8891
      %8925 = vst [vmem:[#allocation3] sm:$0xff] %v8893
      %8926 = vst [vmem:[#allocation3 + $0x8] sm:$0xff] %v8894
      %8927 = vst [vmem:[#allocation3 + $0x10] sm:$0xff] %v8895
      %8928 = vst [vmem:[#allocation3 + $0x18] sm:$0xff] %v8896
      %8929 = vst [vmem:[#allocation3 + $0x20] sm:$0xff] %v8897
      %8930 = vst [vmem:[#allocation3 + $0x28] sm:$0xff] %v8898
      %8931 = vst [vmem:[#allocation3 + $0x30] sm:$0xff] %v8899
      %8932 = vst [vmem:[#allocation3 + $0x38] sm:$0xff] %v8900
      %8933 = vst [vmem:[#allocation3 + $0x40] sm:$0xff] %v8901
      %8934 = vst [vmem:[#allocation3 + $0x48] sm:$0xff] %v8902
      %8935 = vst [vmem:[#allocation3 + $0x50] sm:$0xff] %v8903
      %8936 = vst [vmem:[#allocation3 + $0x58] sm:$0xff] %v8904
      %8937 = vst [vmem:[#allocation3 + $0x60] sm:$0xff] %v8905
      %8938 = vst [vmem:[#allocation3 + $0x68] sm:$0xff] %v8906
      %8939 = vst [vmem:[#allocation3 + $0x70] sm:$0xff] %v8907
      %8940 = vst [vmem:[#allocation3 + $0x78] sm:$0xff] %v8908
      %v8941 = vld [vmem:[#allocation2] sm:$0xff]
      %v8942 = vld [vmem:[#allocation2 + $0x8] sm:$0xff]
      %v8943 = vld [vmem:[#allocation2 + $0x10] sm:$0xff]
      %v8944 = vld [vmem:[#allocation2 + $0x18] sm:$0xff]
      %v8945 = vld [vmem:[#allocation2 + $0x20] sm:$0xff]
      %v8946 = vld [vmem:[#allocation2 + $0x28] sm:$0xff]
      %v8947 = vld [vmem:[#allocation2 + $0x30] sm:$0xff]
      %v8948 = vld [vmem:[#allocation2 + $0x38] sm:$0xff]
      %v8949 = vld [vmem:[#allocation2 + $0x40] sm:$0xff]
      %v8950 = vld [vmem:[#allocation2 + $0x48] sm:$0xff]
      %v8951 = vld [vmem:[#allocation2 + $0x50] sm:$0xff]
      %v8952 = vld [vmem:[#allocation2 + $0x58] sm:$0xff]
      %v8953 = vld [vmem:[#allocation2 + $0x60] sm:$0xff]
      %v8954 = vld [vmem:[#allocation2 + $0x68] sm:$0xff]
      %v8955 = vld [vmem:[#allocation2 + $0x70] sm:$0xff]
      %v8956 = vld [vmem:[#allocation2 + $0x78] sm:$0xff]
      %v8957 = vld [vmem:[#allocation2 + $0x80] sm:$0xff]
      %v8958 = vlaneseq
      %v8959 = vshrl.u32 %v8958, 7
      %v8960 = vsub.s32 1, %v8959
      %v8961 = vrot.slane %v8630, %v8960
      %v8962 = vlaneseq
      %v8963 = vshrl.u32 %v8962, 7
      %v8964 = vsub.s32 1, %v8963
      %v8965 = vrot.slane %v8631, %v8964
      %v8966 = vlaneseq
      %v8967 = vshrl.u32 %v8966, 7
      %v8968 = vsub.s32 1, %v8967
      %v8969 = vrot.slane %v8632, %v8968
      %v8970 = vlaneseq
      %v8971 = vshrl.u32 %v8970, 7
      %v8972 = vsub.s32 1, %v8971
      %v8973 = vrot.slane %v8633, %v8972
      %v8974 = vlaneseq
      %v8975 = vshrl.u32 %v8974, 7
      %v8976 = vsub.s32 1, %v8975
      %v8977 = vrot.slane %v8634, %v8976
      %v8978 = vlaneseq
      %v8979 = vshrl.u32 %v8978, 7
      %v8980 = vsub.s32 1, %v8979
      %v8981 = vrot.slane %v8635, %v8980
      %v8982 = vlaneseq
      %v8983 = vshrl.u32 %v8982, 7
      %v8984 = vsub.s32 1, %v8983
      %v8985 = vrot.slane %v8636, %v8984
      %v8986 = vlaneseq
      %v8987 = vshrl.u32 %v8986, 7
      %v8988 = vsub.s32 1, %v8987
      %v8989 = vrot.slane %v8637, %v8988
      %v8990 = vlaneseq
      %v8991 = vshrl.u32 %v8990, 7
      %v8992 = vsub.s32 1, %v8991
      %v8993 = vrot.slane %v8638, %v8992
      %v8994 = vlaneseq
      %v8995 = vshrl.u32 %v8994, 7
      %v8996 = vsub.s32 1, %v8995
      %v8997 = vrot.slane %v8639, %v8996
      %v8998 = vlaneseq
      %v8999 = vshrl.u32 %v8998, 7
      %v9000 = vsub.s32 1, %v8999
      %v9001 = vrot.slane %v8640, %v9000
      %v9002 = vlaneseq
      %v9003 = vshrl.u32 %v9002, 7
      %v9004 = vsub.s32 1, %v9003
      %v9005 = vrot.slane %v8641, %v9004
      %v9006 = vlaneseq
      %v9007 = vshrl.u32 %v9006, 7
      %v9008 = vsub.s32 1, %v9007
      %v9009 = vrot.slane %v8642, %v9008
      %v9010 = vlaneseq
      %v9011 = vshrl.u32 %v9010, 7
      %v9012 = vsub.s32 1, %v9011
      %v9013 = vrot.slane %v8643, %v9012
      %v9014 = vlaneseq
      %v9015 = vshrl.u32 %v9014, 7
      %v9016 = vsub.s32 1, %v9015
      %v9017 = vrot.slane %v8644, %v9016
      %v9018 = vlaneseq
      %v9019 = vshrl.u32 %v9018, 7
      %v9020 = vsub.s32 1, %v9019
      %v9021 = vrot.slane %v8645, %v9020
      %9038 = vrot.lane.b32.xlu0 %v8961, 112
      %v9039 = vpop.permute.xlu0 %9038
      %9040 = vrot.lane.b32.xlu0 %v8965, 112
      %v9041 = vpop.permute.xlu0 %9040
      %9042 = vrot.lane.b32.xlu0 %v8969, 112
      %v9043 = vpop.permute.xlu0 %9042
      %9044 = vrot.lane.b32.xlu0 %v8973, 112
      %v9045 = vpop.permute.xlu0 %9044
      %9046 = vrot.lane.b32.xlu0 %v8977, 112
      %v9047 = vpop.permute.xlu0 %9046
      %9048 = vrot.lane.b32.xlu0 %v8981, 112
      %v9049 = vpop.permute.xlu0 %9048
      %9050 = vrot.lane.b32.xlu0 %v8985, 112
      %v9051 = vpop.permute.xlu0 %9050
      %9052 = vrot.lane.b32.xlu0 %v8989, 112
      %v9053 = vpop.permute.xlu0 %9052
      %9054 = vrot.lane.b32.xlu0 %v8993, 112
      %v9055 = vpop.permute.xlu0 %9054
      %9056 = vrot.lane.b32.xlu0 %v8997, 112
      %v9057 = vpop.permute.xlu0 %9056
      %9058 = vrot.lane.b32.xlu0 %v9001, 112
      %v9059 = vpop.permute.xlu0 %9058
      %9060 = vrot.lane.b32.xlu0 %v9005, 112
      %v9061 = vpop.permute.xlu0 %9060
      %9062 = vrot.lane.b32.xlu0 %v9009, 112
      %v9063 = vpop.permute.xlu0 %9062
      %9064 = vrot.lane.b32.xlu0 %v9013, 112
      %v9065 = vpop.permute.xlu0 %9064
      %9066 = vrot.lane.b32.xlu0 %v9017, 112
      %v9067 = vpop.permute.xlu0 %9066
      %9068 = vrot.lane.b32.xlu0 %v9021, 112
      %v9069 = vpop.permute.xlu0 %9068
      %v9070 = vsel %vm4529, %v9039, %v9041
      %v9071 = vsel %vm4529, %v9041, %v9043
      %v9072 = vsel %vm4529, %v9043, %v9045
      %v9073 = vsel %vm4529, %v9045, %v9047
      %v9074 = vsel %vm4529, %v9047, %v9049
      %v9075 = vsel %vm4529, %v9049, %v9051
      %v9076 = vsel %vm4529, %v9051, %v9053
      %v9077 = vsel %vm4529, %v9053, %v9055
      %v9078 = vsel %vm4529, %v9055, %v9057
      %v9079 = vsel %vm4529, %v9057, %v9059
      %v9080 = vsel %vm4529, %v9059, %v9061
      %v9081 = vsel %vm4529, %v9061, %v9063
      %v9082 = vsel %vm4529, %v9063, %v9065
      %v9083 = vsel %vm4529, %v9065, %v9067
      %v9084 = vsel %vm4529, %v9067, %v9069
      %v9102 = vmul.f32 %v8941, %v9039
      %v9103 = vmul.f32 %v8942, %v9070
      %v9104 = vmul.f32 %v8943, %v9071
      %v9105 = vmul.f32 %v8944, %v9072
      %v9106 = vmul.f32 %v8945, %v9073
      %v9107 = vmul.f32 %v8946, %v9074
      %v9108 = vmul.f32 %v8947, %v9075
      %v9109 = vmul.f32 %v8948, %v9076
      %v9110 = vmul.f32 %v8949, %v9077
      %v9111 = vmul.f32 %v8950, %v9078
      %v9112 = vmul.f32 %v8951, %v9079
      %v9113 = vmul.f32 %v8952, %v9080
      %v9114 = vmul.f32 %v8953, %v9081
      %v9115 = vmul.f32 %v8954, %v9082
      %v9116 = vmul.f32 %v8955, %v9083
      %v9117 = vmul.f32 %v8956, %v9084
      %v9118 = vmul.f32 %v8957, %v9069
      %9136 = vrot.lane.b32.xlu0 %v9102, 16
      %v9137 = vpop.permute.xlu0 %9136
      %9138 = vrot.lane.b32.xlu0 %v9103, 16
      %v9139 = vpop.permute.xlu0 %9138
      %9140 = vrot.lane.b32.xlu0 %v9104, 16
      %v9141 = vpop.permute.xlu0 %9140
      %9142 = vrot.lane.b32.xlu0 %v9105, 16
      %v9143 = vpop.permute.xlu0 %9142
      %9144 = vrot.lane.b32.xlu0 %v9106, 16
      %v9145 = vpop.permute.xlu0 %9144
      %9146 = vrot.lane.b32.xlu0 %v9107, 16
      %v9147 = vpop.permute.xlu0 %9146
      %9148 = vrot.lane.b32.xlu0 %v9108, 16
      %v9149 = vpop.permute.xlu0 %9148
      %9150 = vrot.lane.b32.xlu0 %v9109, 16
      %v9151 = vpop.permute.xlu0 %9150
      %9152 = vrot.lane.b32.xlu0 %v9110, 16
      %v9153 = vpop.permute.xlu0 %9152
      %9154 = vrot.lane.b32.xlu0 %v9111, 16
      %v9155 = vpop.permute.xlu0 %9154
      %9156 = vrot.lane.b32.xlu0 %v9112, 16
      %v9157 = vpop.permute.xlu0 %9156
      %9158 = vrot.lane.b32.xlu0 %v9113, 16
      %v9159 = vpop.permute.xlu0 %9158
      %9160 = vrot.lane.b32.xlu0 %v9114, 16
      %v9161 = vpop.permute.xlu0 %9160
      %9162 = vrot.lane.b32.xlu0 %v9115, 16
      %v9163 = vpop.permute.xlu0 %9162
      %9164 = vrot.lane.b32.xlu0 %v9116, 16
      %v9165 = vpop.permute.xlu0 %9164
      %9166 = vrot.lane.b32.xlu0 %v9117, 16
      %v9167 = vpop.permute.xlu0 %9166
      %9168 = vrot.lane.b32.xlu0 %v9118, 16
      %v9169 = vpop.permute.xlu0 %9168
      %v9170 = vsel %vm2856, %v9137, %v9139
      %v9171 = vsel %vm2856, %v9139, %v9141
      %v9172 = vsel %vm2856, %v9141, %v9143
      %v9173 = vsel %vm2856, %v9143, %v9145
      %v9174 = vsel %vm2856, %v9145, %v9147
      %v9175 = vsel %vm2856, %v9147, %v9149
      %v9176 = vsel %vm2856, %v9149, %v9151
      %v9177 = vsel %vm2856, %v9151, %v9153
      %v9178 = vsel %vm2856, %v9153, %v9155
      %v9179 = vsel %vm2856, %v9155, %v9157
      %v9180 = vsel %vm2856, %v9157, %v9159
      %v9181 = vsel %vm2856, %v9159, %v9161
      %v9182 = vsel %vm2856, %v9161, %v9163
      %v9183 = vsel %vm2856, %v9163, %v9165
      %v9184 = vsel %vm2856, %v9165, %v9167
      %v9185 = vsel %vm2856, %v9167, %v9169
      %9202 = vst [vmem:[#allocation3 + $0x80] sm:$0xff] %v9170
      %9203 = vst [vmem:[#allocation3 + $0x88] sm:$0xff] %v9171
      %9204 = vst [vmem:[#allocation3 + $0x90] sm:$0xff] %v9172
      %9205 = vst [vmem:[#allocation3 + $0x98] sm:$0xff] %v9173
      %9206 = vst [vmem:[#allocation3 + $0xa0] sm:$0xff] %v9174
      %9207 = vst [vmem:[#allocation3 + $0xa8] sm:$0xff] %v9175
      %9208 = vst [vmem:[#allocation3 + $0xb0] sm:$0xff] %v9176
      %9209 = vst [vmem:[#allocation3 + $0xb8] sm:$0xff] %v9177
      %9210 = vst [vmem:[#allocation3 + $0xc0] sm:$0xff] %v9178
      %9211 = vst [vmem:[#allocation3 + $0xc8] sm:$0xff] %v9179
      %9212 = vst [vmem:[#allocation3 + $0xd0] sm:$0xff] %v9180
      %9213 = vst [vmem:[#allocation3 + $0xd8] sm:$0xff] %v9181
      %9214 = vst [vmem:[#allocation3 + $0xe0] sm:$0xff] %v9182
      %9215 = vst [vmem:[#allocation3 + $0xe8] sm:$0xff] %v9183
      %9216 = vst [vmem:[#allocation3 + $0xf0] sm:$0xff] %v9184
      %9217 = vst [vmem:[#allocation3 + $0xf8] sm:$0xff] %v9185
      %v9218 = vld [vmem:[#allocation2] sm:$0xff]
      %v9219 = vld [vmem:[#allocation2 + $0x8] sm:$0xff]
      %v9220 = vld [vmem:[#allocation2 + $0x10] sm:$0xff]
      %v9221 = vld [vmem:[#allocation2 + $0x18] sm:$0xff]
      %v9222 = vld [vmem:[#allocation2 + $0x20] sm:$0xff]
      %v9223 = vld [vmem:[#allocation2 + $0x28] sm:$0xff]
      %v9224 = vld [vmem:[#allocation2 + $0x30] sm:$0xff]
      %v9225 = vld [vmem:[#allocation2 + $0x38] sm:$0xff]
      %v9226 = vld [vmem:[#allocation2 + $0x40] sm:$0xff]
      %v9227 = vld [vmem:[#allocation2 + $0x48] sm:$0xff]
      %v9228 = vld [vmem:[#allocation2 + $0x50] sm:$0xff]
      %v9229 = vld [vmem:[#allocation2 + $0x58] sm:$0xff]
      %v9230 = vld [vmem:[#allocation2 + $0x60] sm:$0xff]
      %v9231 = vld [vmem:[#allocation2 + $0x68] sm:$0xff]
      %v9232 = vld [vmem:[#allocation2 + $0x70] sm:$0xff]
      %v9233 = vld [vmem:[#allocation2 + $0x78] sm:$0xff]
      %v9234 = vld [vmem:[#allocation2 + $0x80] sm:$0xff]
      %v9235 = vlaneseq
      %v9236 = vshrl.u32 %v9235, 7
      %v9237 = vsub.s32 2, %v9236
      %v9238 = vrot.slane %v8630, %v9237
      %v9239 = vlaneseq
      %v9240 = vshrl.u32 %v9239, 7
      %v9241 = vsub.s32 2, %v9240
      %v9242 = vrot.slane %v8631, %v9241
      %v9243 = vlaneseq
      %v9244 = vshrl.u32 %v9243, 7
      %v9245 = vsub.s32 2, %v9244
      %v9246 = vrot.slane %v8632, %v9245
      %v9247 = vlaneseq
      %v9248 = vshrl.u32 %v9247, 7
      %v9249 = vsub.s32 2, %v9248
      %v9250 = vrot.slane %v8633, %v9249
      %v9251 = vlaneseq
      %v9252 = vshrl.u32 %v9251, 7
      %v9253 = vsub.s32 2, %v9252
      %v9254 = vrot.slane %v8634, %v9253
      %v9255 = vlaneseq
      %v9256 = vshrl.u32 %v9255, 7
      %v9257 = vsub.s32 2, %v9256
      %v9258 = vrot.slane %v8635, %v9257
      %v9259 = vlaneseq
      %v9260 = vshrl.u32 %v9259, 7
      %v9261 = vsub.s32 2, %v9260
      %v9262 = vrot.slane %v8636, %v9261
      %v9263 = vlaneseq
      %v9264 = vshrl.u32 %v9263, 7
      %v9265 = vsub.s32 2, %v9264
      %v9266 = vrot.slane %v8637, %v9265
      %v9267 = vlaneseq
      %v9268 = vshrl.u32 %v9267, 7
      %v9269 = vsub.s32 2, %v9268
      %v9270 = vrot.slane %v8638, %v9269
      %v9271 = vlaneseq
      %v9272 = vshrl.u32 %v9271, 7
      %v9273 = vsub.s32 2, %v9272
      %v9274 = vrot.slane %v8639, %v9273
      %v9275 = vlaneseq
      %v9276 = vshrl.u32 %v9275, 7
      %v9277 = vsub.s32 2, %v9276
      %v9278 = vrot.slane %v8640, %v9277
      %v9279 = vlaneseq
      %v9280 = vshrl.u32 %v9279, 7
      %v9281 = vsub.s32 2, %v9280
      %v9282 = vrot.slane %v8641, %v9281
      %v9283 = vlaneseq
      %v9284 = vshrl.u32 %v9283, 7
      %v9285 = vsub.s32 2, %v9284
      %v9286 = vrot.slane %v8642, %v9285
      %v9287 = vlaneseq
      %v9288 = vshrl.u32 %v9287, 7
      %v9289 = vsub.s32 2, %v9288
      %v9290 = vrot.slane %v8643, %v9289
      %v9291 = vlaneseq
      %v9292 = vshrl.u32 %v9291, 7
      %v9293 = vsub.s32 2, %v9292
      %v9294 = vrot.slane %v8644, %v9293
      %v9295 = vlaneseq
      %v9296 = vshrl.u32 %v9295, 7
      %v9297 = vsub.s32 2, %v9296
      %v9298 = vrot.slane %v8645, %v9297
      %9315 = vrot.lane.b32.xlu0 %v9238, 113
      %v9316 = vpop.permute.xlu0 %9315
      %9317 = vrot.lane.b32.xlu0 %v9242, 113
      %v9318 = vpop.permute.xlu0 %9317
      %9319 = vrot.lane.b32.xlu0 %v9246, 113
      %v9320 = vpop.permute.xlu0 %9319
      %9321 = vrot.lane.b32.xlu0 %v9250, 113
      %v9322 = vpop.permute.xlu0 %9321
      %9323 = vrot.lane.b32.xlu0 %v9254, 113
      %v9324 = vpop.permute.xlu0 %9323
      %9325 = vrot.lane.b32.xlu0 %v9258, 113
      %v9326 = vpop.permute.xlu0 %9325
      %9327 = vrot.lane.b32.xlu0 %v9262, 113
      %v9328 = vpop.permute.xlu0 %9327
      %9329 = vrot.lane.b32.xlu0 %v9266, 113
      %v9330 = vpop.permute.xlu0 %9329
      %9331 = vrot.lane.b32.xlu0 %v9270, 113
      %v9332 = vpop.permute.xlu0 %9331
      %9333 = vrot.lane.b32.xlu0 %v9274, 113
      %v9334 = vpop.permute.xlu0 %9333
      %9335 = vrot.lane.b32.xlu0 %v9278, 113
      %v9336 = vpop.permute.xlu0 %9335
      %9337 = vrot.lane.b32.xlu0 %v9282, 113
      %v9338 = vpop.permute.xlu0 %9337
      %9339 = vrot.lane.b32.xlu0 %v9286, 113
      %v9340 = vpop.permute.xlu0 %9339
      %9341 = vrot.lane.b32.xlu0 %v9290, 113
      %v9342 = vpop.permute.xlu0 %9341
      %9343 = vrot.lane.b32.xlu0 %v9294, 113
      %v9344 = vpop.permute.xlu0 %9343
      %9345 = vrot.lane.b32.xlu0 %v9298, 113
      %v9346 = vpop.permute.xlu0 %9345
      %vm9347 = vcmask 924672
      %v9348 = vsel %vm9347, %v9316, %v9318
      %v9349 = vsel %vm9347, %v9318, %v9320
      %v9350 = vsel %vm9347, %v9320, %v9322
      %v9351 = vsel %vm9347, %v9322, %v9324
      %v9352 = vsel %vm9347, %v9324, %v9326
      %v9353 = vsel %vm9347, %v9326, %v9328
      %v9354 = vsel %vm9347, %v9328, %v9330
      %v9355 = vsel %vm9347, %v9330, %v9332
      %v9356 = vsel %vm9347, %v9332, %v9334
      %v9357 = vsel %vm9347, %v9334, %v9336
      %v9358 = vsel %vm9347, %v9336, %v9338
      %v9359 = vsel %vm9347, %v9338, %v9340
      %v9360 = vsel %vm9347, %v9340, %v9342
      %v9361 = vsel %vm9347, %v9342, %v9344
      %v9362 = vsel %vm9347, %v9344, %v9346
      %v9380 = vmul.f32 %v9218, %v9316
      %v9381 = vmul.f32 %v9219, %v9348
      %v9382 = vmul.f32 %v9220, %v9349
      %v9383 = vmul.f32 %v9221, %v9350
      %v9384 = vmul.f32 %v9222, %v9351
      %v9385 = vmul.f32 %v9223, %v9352
      %v9386 = vmul.f32 %v9224, %v9353
      %v9387 = vmul.f32 %v9225, %v9354
      %v9388 = vmul.f32 %v9226, %v9355
      %v9389 = vmul.f32 %v9227, %v9356
      %v9390 = vmul.f32 %v9228, %v9357
      %v9391 = vmul.f32 %v9229, %v9358
      %v9392 = vmul.f32 %v9230, %v9359
      %v9393 = vmul.f32 %v9231, %v9360
      %v9394 = vmul.f32 %v9232, %v9361
      %v9395 = vmul.f32 %v9233, %v9362
      %v9396 = vmul.f32 %v9234, %v9346
      %9414 = vrot.lane.b32.xlu0 %v9380, 15
      %v9415 = vpop.permute.xlu0 %9414
      %9416 = vrot.lane.b32.xlu0 %v9381, 15
      %v9417 = vpop.permute.xlu0 %9416
      %9418 = vrot.lane.b32.xlu0 %v9382, 15
      %v9419 = vpop.permute.xlu0 %9418
      %9420 = vrot.lane.b32.xlu0 %v9383, 15
      %v9421 = vpop.permute.xlu0 %9420
      %9422 = vrot.lane.b32.xlu0 %v9384, 15
      %v9423 = vpop.permute.xlu0 %9422
      %9424 = vrot.lane.b32.xlu0 %v9385, 15
      %v9425 = vpop.permute.xlu0 %9424
      %9426 = vrot.lane.b32.xlu0 %v9386, 15
      %v9427 = vpop.permute.xlu0 %9426
      %9428 = vrot.lane.b32.xlu0 %v9387, 15
      %v9429 = vpop.permute.xlu0 %9428
      %9430 = vrot.lane.b32.xlu0 %v9388, 15
      %v9431 = vpop.permute.xlu0 %9430
      %9432 = vrot.lane.b32.xlu0 %v9389, 15
      %v9433 = vpop.permute.xlu0 %9432
      %9434 = vrot.lane.b32.xlu0 %v9390, 15
      %v9435 = vpop.permute.xlu0 %9434
      %9436 = vrot.lane.b32.xlu0 %v9391, 15
      %v9437 = vpop.permute.xlu0 %9436
      %9438 = vrot.lane.b32.xlu0 %v9392, 15
      %v9439 = vpop.permute.xlu0 %9438
      %9440 = vrot.lane.b32.xlu0 %v9393, 15
      %v9441 = vpop.permute.xlu0 %9440
      %9442 = vrot.lane.b32.xlu0 %v9394, 15
      %v9443 = vpop.permute.xlu0 %9442
      %9444 = vrot.lane.b32.xlu0 %v9395, 15
      %v9445 = vpop.permute.xlu0 %9444
      %9446 = vrot.lane.b32.xlu0 %v9396, 15
      %v9447 = vpop.permute.xlu0 %9446
      %vm9448 = vcmask 121856
      %v9449 = vsel %vm9448, %v9415, %v9417
      %v9450 = vsel %vm9448, %v9417, %v9419
      %v9451 = vsel %vm9448, %v9419, %v9421
      %v9452 = vsel %vm9448, %v9421, %v9423
      %v9453 = vsel %vm9448, %v9423, %v9425
      %v9454 = vsel %vm9448, %v9425, %v9427
      %v9455 = vsel %vm9448, %v9427, %v9429
      %v9456 = vsel %vm9448, %v9429, %v9431
      %v9457 = vsel %vm9448, %v9431, %v9433
      %v9458 = vsel %vm9448, %v9433, %v9435
      %v9459 = vsel %vm9448, %v9435, %v9437
      %v9460 = vsel %vm9448, %v9437, %v9439
      %v9461 = vsel %vm9448, %v9439, %v9441
      %v9462 = vsel %vm9448, %v9441, %v9443
      %v9463 = vsel %vm9448, %v9443, %v9445
      %v9464 = vsel %vm9448, %v9445, %v9447
      %9481 = vst [vmem:[#allocation3 + $0x100] sm:$0xff] %v9449
      %9482 = vst [vmem:[#allocation3 + $0x108] sm:$0xff] %v9450
      %9483 = vst [vmem:[#allocation3 + $0x110] sm:$0xff] %v9451
      %9484 = vst [vmem:[#allocation3 + $0x118] sm:$0xff] %v9452
      %9485 = vst [vmem:[#allocation3 + $0x120] sm:$0xff] %v9453
      %9486 = vst [vmem:[#allocation3 + $0x128] sm:$0xff] %v9454
      %9487 = vst [vmem:[#allocation3 + $0x130] sm:$0xff] %v9455
      %9488 = vst [vmem:[#allocation3 + $0x138] sm:$0xff] %v9456
      %9489 = vst [vmem:[#allocation3 + $0x140] sm:$0xff] %v9457
      %9490 = vst [vmem:[#allocation3 + $0x148] sm:$0xff] %v9458
      %9491 = vst [vmem:[#allocation3 + $0x150] sm:$0xff] %v9459
      %9492 = vst [vmem:[#allocation3 + $0x158] sm:$0xff] %v9460
      %9493 = vst [vmem:[#allocation3 + $0x160] sm:$0xff] %v9461
      %9494 = vst [vmem:[#allocation3 + $0x168] sm:$0xff] %v9462
      %9495 = vst [vmem:[#allocation3 + $0x170] sm:$0xff] %v9463
      %9496 = vst [vmem:[#allocation3 + $0x178] sm:$0xff] %v9464
      %v9497 = vld [vmem:[#allocation2] sm:$0xff]
      %v9498 = vld [vmem:[#allocation2 + $0x8] sm:$0xff]
      %v9499 = vld [vmem:[#allocation2 + $0x10] sm:$0xff]
      %v9500 = vld [vmem:[#allocation2 + $0x18] sm:$0xff]
      %v9501 = vld [vmem:[#allocation2 + $0x20] sm:$0xff]
      %v9502 = vld [vmem:[#allocation2 + $0x28] sm:$0xff]
      %v9503 = vld [vmem:[#allocation2 + $0x30] sm:$0xff]
      %v9504 = vld [vmem:[#allocation2 + $0x38] sm:$0xff]
      %v9505 = vld [vmem:[#allocation2 + $0x40] sm:$0xff]
      %v9506 = vld [vmem:[#allocation2 + $0x48] sm:$0xff]
      %v9507 = vld [vmem:[#allocation2 + $0x50] sm:$0xff]
      %v9508 = vld [vmem:[#allocation2 + $0x58] sm:$0xff]
      %v9509 = vld [vmem:[#allocation2 + $0x60] sm:$0xff]
      %v9510 = vld [vmem:[#allocation2 + $0x68] sm:$0xff]
      %v9511 = vld [vmem:[#allocation2 + $0x70] sm:$0xff]
      %v9512 = vld [vmem:[#allocation2 + $0x78] sm:$0xff]
      %v9513 = vld [vmem:[#allocation2 + $0x80] sm:$0xff]
      %v9514 = vlaneseq
      %v9515 = vshrl.u32 %v9514, 7
      %v9516 = vsub.s32 3, %v9515
      %v9517 = vrot.slane %v8630, %v9516
      %v9518 = vlaneseq
      %v9519 = vshrl.u32 %v9518, 7
      %v9520 = vsub.s32 3, %v9519
      %v9521 = vrot.slane %v8631, %v9520
      %v9522 = vlaneseq
      %v9523 = vshrl.u32 %v9522, 7
      %v9524 = vsub.s32 3, %v9523
      %v9525 = vrot.slane %v8632, %v9524
      %v9526 = vlaneseq
      %v9527 = vshrl.u32 %v9526, 7
      %v9528 = vsub.s32 3, %v9527
      %v9529 = vrot.slane %v8633, %v9528
      %v9530 = vlaneseq
      %v9531 = vshrl.u32 %v9530, 7
      %v9532 = vsub.s32 3, %v9531
      %v9533 = vrot.slane %v8634, %v9532
      %v9534 = vlaneseq
      %v9535 = vshrl.u32 %v9534, 7
      %v9536 = vsub.s32 3, %v9535
      %v9537 = vrot.slane %v8635, %v9536
      %v9538 = vlaneseq
      %v9539 = vshrl.u32 %v9538, 7
      %v9540 = vsub.s32 3, %v9539
      %v9541 = vrot.slane %v8636, %v9540
      %v9542 = vlaneseq
      %v9543 = vshrl.u32 %v9542, 7
      %v9544 = vsub.s32 3, %v9543
      %v9545 = vrot.slane %v8637, %v9544
      %v9546 = vlaneseq
      %v9547 = vshrl.u32 %v9546, 7
      %v9548 = vsub.s32 3, %v9547
      %v9549 = vrot.slane %v8638, %v9548
      %v9550 = vlaneseq
      %v9551 = vshrl.u32 %v9550, 7
      %v9552 = vsub.s32 3, %v9551
      %v9553 = vrot.slane %v8639, %v9552
      %v9554 = vlaneseq
      %v9555 = vshrl.u32 %v9554, 7
      %v9556 = vsub.s32 3, %v9555
      %v9557 = vrot.slane %v8640, %v9556
      %v9558 = vlaneseq
      %v9559 = vshrl.u32 %v9558, 7
      %v9560 = vsub.s32 3, %v9559
      %v9561 = vrot.slane %v8641, %v9560
      %v9562 = vlaneseq
      %v9563 = vshrl.u32 %v9562, 7
      %v9564 = vsub.s32 3, %v9563
      %v9565 = vrot.slane %v8642, %v9564
      %v9566 = vlaneseq
      %v9567 = vshrl.u32 %v9566, 7
      %v9568 = vsub.s32 3, %v9567
      %v9569 = vrot.slane %v8643, %v9568
      %v9570 = vlaneseq
      %v9571 = vshrl.u32 %v9570, 7
      %v9572 = vsub.s32 3, %v9571
      %v9573 = vrot.slane %v8644, %v9572
      %v9574 = vlaneseq
      %v9575 = vshrl.u32 %v9574, 7
      %v9576 = vsub.s32 3, %v9575
      %v9577 = vrot.slane %v8645, %v9576
      %9594 = vrot.lane.b32.xlu0 %v9517, 127
      %v9595 = vpop.permute.xlu0 %9594
      %9596 = vrot.lane.b32.xlu0 %v9521, 127
      %v9597 = vpop.permute.xlu0 %9596
      %9598 = vrot.lane.b32.xlu0 %v9525, 127
      %v9599 = vpop.permute.xlu0 %9598
      %9600 = vrot.lane.b32.xlu0 %v9529, 127
      %v9601 = vpop.permute.xlu0 %9600
      %9602 = vrot.lane.b32.xlu0 %v9533, 127
      %v9603 = vpop.permute.xlu0 %9602
      %9604 = vrot.lane.b32.xlu0 %v9537, 127
      %v9605 = vpop.permute.xlu0 %9604
      %9606 = vrot.lane.b32.xlu0 %v9541, 127
      %v9607 = vpop.permute.xlu0 %9606
      %9608 = vrot.lane.b32.xlu0 %v9545, 127
      %v9609 = vpop.permute.xlu0 %9608
      %9610 = vrot.lane.b32.xlu0 %v9549, 127
      %v9611 = vpop.permute.xlu0 %9610
      %9612 = vrot.lane.b32.xlu0 %v9553, 127
      %v9613 = vpop.permute.xlu0 %9612
      %9614 = vrot.lane.b32.xlu0 %v9557, 127
      %v9615 = vpop.permute.xlu0 %9614
      %9616 = vrot.lane.b32.xlu0 %v9561, 127
      %v9617 = vpop.permute.xlu0 %9616
      %9618 = vrot.lane.b32.xlu0 %v9565, 127
      %v9619 = vpop.permute.xlu0 %9618
      %9620 = vrot.lane.b32.xlu0 %v9569, 127
      %v9621 = vpop.permute.xlu0 %9620
      %9622 = vrot.lane.b32.xlu0 %v9573, 127
      %v9623 = vpop.permute.xlu0 %9622
      %9624 = vrot.lane.b32.xlu0 %v9577, 127
      %v9625 = vpop.permute.xlu0 %9624
      %vm9626 = vcmask 1039360
      %v9627 = vsel %vm9626, %v9595, %v9597
      %v9628 = vsel %vm9626, %v9597, %v9599
      %v9629 = vsel %vm9626, %v9599, %v9601
      %v9630 = vsel %vm9626, %v9601, %v9603
      %v9631 = vsel %vm9626, %v9603, %v9605
      %v9632 = vsel %vm9626, %v9605, %v9607
      %v9633 = vsel %vm9626, %v9607, %v9609
      %v9634 = vsel %vm9626, %v9609, %v9611
      %v9635 = vsel %vm9626, %v9611, %v9613
      %v9636 = vsel %vm9626, %v9613, %v9615
      %v9637 = vsel %vm9626, %v9615, %v9617
      %v9638 = vsel %vm9626, %v9617, %v9619
      %v9639 = vsel %vm9626, %v9619, %v9621
      %v9640 = vsel %vm9626, %v9621, %v9623
      %v9641 = vsel %vm9626, %v9623, %v9625
      %v9659 = vmul.f32 %v9497, %v9595
      %v9660 = vmul.f32 %v9498, %v9627
      %v9661 = vmul.f32 %v9499, %v9628
      %v9662 = vmul.f32 %v9500, %v9629
      %v9663 = vmul.f32 %v9501, %v9630
      %v9664 = vmul.f32 %v9502, %v9631
      %v9665 = vmul.f32 %v9503, %v9632
      %v9666 = vmul.f32 %v9504, %v9633
      %v9667 = vmul.f32 %v9505, %v9634
      %v9668 = vmul.f32 %v9506, %v9635
      %v9669 = vmul.f32 %v9507, %v9636
      %v9670 = vmul.f32 %v9508, %v9637
      %v9671 = vmul.f32 %v9509, %v9638
      %v9672 = vmul.f32 %v9510, %v9639
      %v9673 = vmul.f32 %v9511, %v9640
      %v9674 = vmul.f32 %v9512, %v9641
      %v9675 = vmul.f32 %v9513, %v9625
      %9693 = vrot.lane.b32.xlu0 %v9659, 1
      %v9694 = vpop.permute.xlu0 %9693
      %9695 = vrot.lane.b32.xlu0 %v9660, 1
      %v9696 = vpop.permute.xlu0 %9695
      %9697 = vrot.lane.b32.xlu0 %v9661, 1
      %v9698 = vpop.permute.xlu0 %9697
      %9699 = vrot.lane.b32.xlu0 %v9662, 1
      %v9700 = vpop.permute.xlu0 %9699
      %9701 = vrot.lane.b32.xlu0 %v9663, 1
      %v9702 = vpop.permute.xlu0 %9701
      %9703 = vrot.lane.b32.xlu0 %v9664, 1
      %v9704 = vpop.permute.xlu0 %9703
      %9705 = vrot.lane.b32.xlu0 %v9665, 1
      %v9706 = vpop.permute.xlu0 %9705
      %9707 = vrot.lane.b32.xlu0 %v9666, 1
      %v9708 = vpop.permute.xlu0 %9707
      %9709 = vrot.lane.b32.xlu0 %v9667, 1
      %v9710 = vpop.permute.xlu0 %9709
      %9711 = vrot.lane.b32.xlu0 %v9668, 1
      %v9712 = vpop.permute.xlu0 %9711
      %9713 = vrot.lane.b32.xlu0 %v9669, 1
      %v9714 = vpop.permute.xlu0 %9713
      %9715 = vrot.lane.b32.xlu0 %v9670, 1
      %v9716 = vpop.permute.xlu0 %9715
      %9717 = vrot.lane.b32.xlu0 %v9671, 1
      %v9718 = vpop.permute.xlu0 %9717
      %9719 = vrot.lane.b32.xlu0 %v9672, 1
      %v9720 = vpop.permute.xlu0 %9719
      %9721 = vrot.lane.b32.xlu0 %v9673, 1
      %v9722 = vpop.permute.xlu0 %9721
      %9723 = vrot.lane.b32.xlu0 %v9674, 1
      %v9724 = vpop.permute.xlu0 %9723
      %9725 = vrot.lane.b32.xlu0 %v9675, 1
      %v9726 = vpop.permute.xlu0 %9725
      %vm9727 = vcmask 7168
      %v9728 = vsel %vm9727, %v9694, %v9696
      %v9729 = vsel %vm9727, %v9696, %v9698
      %v9730 = vsel %vm9727, %v9698, %v9700
      %v9731 = vsel %vm9727, %v9700, %v9702
      %v9732 = vsel %vm9727, %v9702, %v9704
      %v9733 = vsel %vm9727, %v9704, %v9706
      %v9734 = vsel %vm9727, %v9706, %v9708
      %v9735 = vsel %vm9727, %v9708, %v9710
      %v9736 = vsel %vm9727, %v9710, %v9712
      %v9737 = vsel %vm9727, %v9712, %v9714
      %v9738 = vsel %vm9727, %v9714, %v9716
      %v9739 = vsel %vm9727, %v9716, %v9718
      %v9740 = vsel %vm9727, %v9718, %v9720
      %v9741 = vsel %vm9727, %v9720, %v9722
      %v9742 = vsel %vm9727, %v9722, %v9724
      %v9743 = vsel %vm9727, %v9724, %v9726
      %9760 = vst [vmem:[#allocation3 + $0x180] sm:$0xff] %v9728
      %9761 = vst [vmem:[#allocation3 + $0x188] sm:$0xff] %v9729
      %9762 = vst [vmem:[#allocation3 + $0x190] sm:$0xff] %v9730
      %9763 = vst [vmem:[#allocation3 + $0x198] sm:$0xff] %v9731
      %9764 = vst [vmem:[#allocation3 + $0x1a0] sm:$0xff] %v9732
      %9765 = vst [vmem:[#allocation3 + $0x1a8] sm:$0xff] %v9733
      %9766 = vst [vmem:[#allocation3 + $0x1b0] sm:$0xff] %v9734
      %9767 = vst [vmem:[#allocation3 + $0x1b8] sm:$0xff] %v9735
      %9768 = vst [vmem:[#allocation3 + $0x1c0] sm:$0xff] %v9736
      %9769 = vst [vmem:[#allocation3 + $0x1c8] sm:$0xff] %v9737
      %9770 = vst [vmem:[#allocation3 + $0x1d0] sm:$0xff] %v9738
      %9771 = vst [vmem:[#allocation3 + $0x1d8] sm:$0xff] %v9739
      %9772 = vst [vmem:[#allocation3 + $0x1e0] sm:$0xff] %v9740
      %9773 = vst [vmem:[#allocation3 + $0x1e8] sm:$0xff] %v9741
      %9774 = vst [vmem:[#allocation3 + $0x1f0] sm:$0xff] %v9742
      %9775 = vst [vmem:[#allocation3 + $0x1f8] sm:$0xff] %v9743
      %v9776 = vld [vmem:[#allocation2 + $0x8] sm:$0xff]
      %v9777 = vld [vmem:[#allocation2 + $0x10] sm:$0xff]
      %v9778 = vld [vmem:[#allocation2 + $0x18] sm:$0xff]
      %v9779 = vld [vmem:[#allocation2 + $0x20] sm:$0xff]
      %v9780 = vld [vmem:[#allocation2 + $0x28] sm:$0xff]
      %v9781 = vld [vmem:[#allocation2 + $0x30] sm:$0xff]
      %v9782 = vld [vmem:[#allocation2 + $0x38] sm:$0xff]
      %v9783 = vld [vmem:[#allocation2 + $0x40] sm:$0xff]
      %v9784 = vld [vmem:[#allocation2 + $0x48] sm:$0xff]
      %v9785 = vld [vmem:[#allocation2 + $0x50] sm:$0xff]
      %v9786 = vld [vmem:[#allocation2 + $0x58] sm:$0xff]
      %v9787 = vld [vmem:[#allocation2 + $0x60] sm:$0xff]
      %v9788 = vld [vmem:[#allocation2 + $0x68] sm:$0xff]
      %v9789 = vld [vmem:[#allocation2 + $0x70] sm:$0xff]
      %v9790 = vld [vmem:[#allocation2 + $0x78] sm:$0xff]
      %v9791 = vld [vmem:[#allocation2 + $0x80] sm:$0xff]
      %9792 = vst [vmem:[#allocation3 + $0x200] sm:$0xff] %v9776
      %9793 = vst [vmem:[#allocation3 + $0x208] sm:$0xff] %v9777
      %9794 = vst [vmem:[#allocation3 + $0x210] sm:$0xff] %v9778
      %9795 = vst [vmem:[#allocation3 + $0x218] sm:$0xff] %v9779
      %9796 = vst [vmem:[#allocation3 + $0x220] sm:$0xff] %v9780
      %9797 = vst [vmem:[#allocation3 + $0x228] sm:$0xff] %v9781
      %9798 = vst [vmem:[#allocation3 + $0x230] sm:$0xff] %v9782
      %9799 = vst [vmem:[#allocation3 + $0x238] sm:$0xff] %v9783
      %9800 = vst [vmem:[#allocation3 + $0x240] sm:$0xff] %v9784
      %9801 = vst [vmem:[#allocation3 + $0x248] sm:$0xff] %v9785
      %9802 = vst [vmem:[#allocation3 + $0x250] sm:$0xff] %v9786
      %9803 = vst [vmem:[#allocation3 + $0x258] sm:$0xff] %v9787
      %9804 = vst [vmem:[#allocation3 + $0x260] sm:$0xff] %v9788
      %9805 = vst [vmem:[#allocation3 + $0x268] sm:$0xff] %v9789
      %9806 = vst [vmem:[#allocation3 + $0x270] sm:$0xff] %v9790
      %9807 = vst [vmem:[#allocation3 + $0x278] sm:$0xff] %v9791
      %v9808 = vld [vmem:[#allocation2 + $0x8] sm:$0xff]
      %v9809 = vld [vmem:[#allocation2 + $0x10] sm:$0xff]
      %v9810 = vld [vmem:[#allocation2 + $0x18] sm:$0xff]
      %v9811 = vld [vmem:[#allocation2 + $0x20] sm:$0xff]
      %v9812 = vld [vmem:[#allocation2 + $0x28] sm:$0xff]
      %v9813 = vld [vmem:[#allocation2 + $0x30] sm:$0xff]
      %v9814 = vld [vmem:[#allocation2 + $0x38] sm:$0xff]
      %v9815 = vld [vmem:[#allocation2 + $0x40] sm:$0xff]
      %v9816 = vld [vmem:[#allocation2 + $0x48] sm:$0xff]
      %v9817 = vld [vmem:[#allocation2 + $0x50] sm:$0xff]
      %v9818 = vld [vmem:[#allocation2 + $0x58] sm:$0xff]
      %v9819 = vld [vmem:[#allocation2 + $0x60] sm:$0xff]
      %v9820 = vld [vmem:[#allocation2 + $0x68] sm:$0xff]
      %v9821 = vld [vmem:[#allocation2 + $0x70] sm:$0xff]
      %v9822 = vld [vmem:[#allocation2 + $0x78] sm:$0xff]
      %v9823 = vld [vmem:[#allocation2 + $0x80] sm:$0xff]
      %v9824 = vld [vmem:[#allocation2 + $0x88] sm:$0xff]
      %v9825 = vlaneseq
      %v9826 = vshrl.u32 %v9825, 7
      %v9827 = vsub.s32 5, %v9826
      %v9828 = vrot.slane %v8630, %v9827
      %v9829 = vlaneseq
      %v9830 = vshrl.u32 %v9829, 7
      %v9831 = vsub.s32 5, %v9830
      %v9832 = vrot.slane %v8631, %v9831
      %v9833 = vlaneseq
      %v9834 = vshrl.u32 %v9833, 7
      %v9835 = vsub.s32 5, %v9834
      %v9836 = vrot.slane %v8632, %v9835
      %v9837 = vlaneseq
      %v9838 = vshrl.u32 %v9837, 7
      %v9839 = vsub.s32 5, %v9838
      %v9840 = vrot.slane %v8633, %v9839
      %v9841 = vlaneseq
      %v9842 = vshrl.u32 %v9841, 7
      %v9843 = vsub.s32 5, %v9842
      %v9844 = vrot.slane %v8634, %v9843
      %v9845 = vlaneseq
      %v9846 = vshrl.u32 %v9845, 7
      %v9847 = vsub.s32 5, %v9846
      %v9848 = vrot.slane %v8635, %v9847
      %v9849 = vlaneseq
      %v9850 = vshrl.u32 %v9849, 7
      %v9851 = vsub.s32 5, %v9850
      %v9852 = vrot.slane %v8636, %v9851
      %v9853 = vlaneseq
      %v9854 = vshrl.u32 %v9853, 7
      %v9855 = vsub.s32 5, %v9854
      %v9856 = vrot.slane %v8637, %v9855
      %v9857 = vlaneseq
      %v9858 = vshrl.u32 %v9857, 7
      %v9859 = vsub.s32 5, %v9858
      %v9860 = vrot.slane %v8638, %v9859
      %v9861 = vlaneseq
      %v9862 = vshrl.u32 %v9861, 7
      %v9863 = vsub.s32 5, %v9862
      %v9864 = vrot.slane %v8639, %v9863
      %v9865 = vlaneseq
      %v9866 = vshrl.u32 %v9865, 7
      %v9867 = vsub.s32 5, %v9866
      %v9868 = vrot.slane %v8640, %v9867
      %v9869 = vlaneseq
      %v9870 = vshrl.u32 %v9869, 7
      %v9871 = vsub.s32 5, %v9870
      %v9872 = vrot.slane %v8641, %v9871
      %v9873 = vlaneseq
      %v9874 = vshrl.u32 %v9873, 7
      %v9875 = vsub.s32 5, %v9874
      %v9876 = vrot.slane %v8642, %v9875
      %v9877 = vlaneseq
      %v9878 = vshrl.u32 %v9877, 7
      %v9879 = vsub.s32 5, %v9878
      %v9880 = vrot.slane %v8643, %v9879
      %v9881 = vlaneseq
      %v9882 = vshrl.u32 %v9881, 7
      %v9883 = vsub.s32 5, %v9882
      %v9884 = vrot.slane %v8644, %v9883
      %v9885 = vlaneseq
      %v9886 = vshrl.u32 %v9885, 7
      %v9887 = vsub.s32 5, %v9886
      %v9888 = vrot.slane %v8645, %v9887
      %9905 = vrot.lane.b32.xlu0 %v9828, 1
      %v9906 = vpop.permute.xlu0 %9905
      %9907 = vrot.lane.b32.xlu0 %v9832, 1
      %v9908 = vpop.permute.xlu0 %9907
      %9909 = vrot.lane.b32.xlu0 %v9836, 1
      %v9910 = vpop.permute.xlu0 %9909
      %9911 = vrot.lane.b32.xlu0 %v9840, 1
      %v9912 = vpop.permute.xlu0 %9911
      %9913 = vrot.lane.b32.xlu0 %v9844, 1
      %v9914 = vpop.permute.xlu0 %9913
      %9915 = vrot.lane.b32.xlu0 %v9848, 1
      %v9916 = vpop.permute.xlu0 %9915
      %9917 = vrot.lane.b32.xlu0 %v9852, 1
      %v9918 = vpop.permute.xlu0 %9917
      %9919 = vrot.lane.b32.xlu0 %v9856, 1
      %v9920 = vpop.permute.xlu0 %9919
      %9921 = vrot.lane.b32.xlu0 %v9860, 1
      %v9922 = vpop.permute.xlu0 %9921
      %9923 = vrot.lane.b32.xlu0 %v9864, 1
      %v9924 = vpop.permute.xlu0 %9923
      %9925 = vrot.lane.b32.xlu0 %v9868, 1
      %v9926 = vpop.permute.xlu0 %9925
      %9927 = vrot.lane.b32.xlu0 %v9872, 1
      %v9928 = vpop.permute.xlu0 %9927
      %9929 = vrot.lane.b32.xlu0 %v9876, 1
      %v9930 = vpop.permute.xlu0 %9929
      %9931 = vrot.lane.b32.xlu0 %v9880, 1
      %v9932 = vpop.permute.xlu0 %9931
      %9933 = vrot.lane.b32.xlu0 %v9884, 1
      %v9934 = vpop.permute.xlu0 %9933
      %9935 = vrot.lane.b32.xlu0 %v9888, 1
      %v9936 = vpop.permute.xlu0 %9935
      %v9937 = vsel %vm9727, %v9906, %v9908
      %v9938 = vsel %vm9727, %v9908, %v9910
      %v9939 = vsel %vm9727, %v9910, %v9912
      %v9940 = vsel %vm9727, %v9912, %v9914
      %v9941 = vsel %vm9727, %v9914, %v9916
      %v9942 = vsel %vm9727, %v9916, %v9918
      %v9943 = vsel %vm9727, %v9918, %v9920
      %v9944 = vsel %vm9727, %v9920, %v9922
      %v9945 = vsel %vm9727, %v9922, %v9924
      %v9946 = vsel %vm9727, %v9924, %v9926
      %v9947 = vsel %vm9727, %v9926, %v9928
      %v9948 = vsel %vm9727, %v9928, %v9930
      %v9949 = vsel %vm9727, %v9930, %v9932
      %v9950 = vsel %vm9727, %v9932, %v9934
      %v9951 = vsel %vm9727, %v9934, %v9936
      %v9969 = vmul.f32 %v9808, %v9906
      %v9970 = vmul.f32 %v9809, %v9937
      %v9971 = vmul.f32 %v9810, %v9938
      %v9972 = vmul.f32 %v9811, %v9939
      %v9973 = vmul.f32 %v9812, %v9940
      %v9974 = vmul.f32 %v9813, %v9941
      %v9975 = vmul.f32 %v9814, %v9942
      %v9976 = vmul.f32 %v9815, %v9943
      %v9977 = vmul.f32 %v9816, %v9944
      %v9978 = vmul.f32 %v9817, %v9945
      %v9979 = vmul.f32 %v9818, %v9946
      %v9980 = vmul.f32 %v9819, %v9947
      %v9981 = vmul.f32 %v9820, %v9948
      %v9982 = vmul.f32 %v9821, %v9949
      %v9983 = vmul.f32 %v9822, %v9950
      %v9984 = vmul.f32 %v9823, %v9951
      %v9985 = vmul.f32 %v9824, %v9936
      %10003 = vrot.lane.b32.xlu0 %v9969, 127
      %v10004 = vpop.permute.xlu0 %10003
      %10005 = vrot.lane.b32.xlu0 %v9970, 127
      %v10006 = vpop.permute.xlu0 %10005
      %10007 = vrot.lane.b32.xlu0 %v9971, 127
      %v10008 = vpop.permute.xlu0 %10007
      %10009 = vrot.lane.b32.xlu0 %v9972, 127
      %v10010 = vpop.permute.xlu0 %10009
      %10011 = vrot.lane.b32.xlu0 %v9973, 127
      %v10012 = vpop.permute.xlu0 %10011
      %10013 = vrot.lane.b32.xlu0 %v9974, 127
      %v10014 = vpop.permute.xlu0 %10013
      %10015 = vrot.lane.b32.xlu0 %v9975, 127
      %v10016 = vpop.permute.xlu0 %10015
      %10017 = vrot.lane.b32.xlu0 %v9976, 127
      %v10018 = vpop.permute.xlu0 %10017
      %10019 = vrot.lane.b32.xlu0 %v9977, 127
      %v10020 = vpop.permute.xlu0 %10019
      %10021 = vrot.lane.b32.xlu0 %v9978, 127
      %v10022 = vpop.permute.xlu0 %10021
      %10023 = vrot.lane.b32.xlu0 %v9979, 127
      %v10024 = vpop.permute.xlu0 %10023
      %10025 = vrot.lane.b32.xlu0 %v9980, 127
      %v10026 = vpop.permute.xlu0 %10025
      %10027 = vrot.lane.b32.xlu0 %v9981, 127
      %v10028 = vpop.permute.xlu0 %10027
      %10029 = vrot.lane.b32.xlu0 %v9982, 127
      %v10030 = vpop.permute.xlu0 %10029
      %10031 = vrot.lane.b32.xlu0 %v9983, 127
      %v10032 = vpop.permute.xlu0 %10031
      %10033 = vrot.lane.b32.xlu0 %v9984, 127
      %v10034 = vpop.permute.xlu0 %10033
      %10035 = vrot.lane.b32.xlu0 %v9985, 127
      %v10036 = vpop.permute.xlu0 %10035
      %v10037 = vsel %vm9626, %v10004, %v10006
      %v10038 = vsel %vm9626, %v10006, %v10008
      %v10039 = vsel %vm9626, %v10008, %v10010
      %v10040 = vsel %vm9626, %v10010, %v10012
      %v10041 = vsel %vm9626, %v10012, %v10014
      %v10042 = vsel %vm9626, %v10014, %v10016
      %v10043 = vsel %vm9626, %v10016, %v10018
      %v10044 = vsel %vm9626, %v10018, %v10020
      %v10045 = vsel %vm9626, %v10020, %v10022
      %v10046 = vsel %vm9626, %v10022, %v10024
      %v10047 = vsel %vm9626, %v10024, %v10026
      %v10048 = vsel %vm9626, %v10026, %v10028
      %v10049 = vsel %vm9626, %v10028, %v10030
      %v10050 = vsel %vm9626, %v10030, %v10032
      %v10051 = vsel %vm9626, %v10032, %v10034
      %v10052 = vsel %vm9626, %v10034, %v10036
      %10069 = vst [vmem:[#allocation3 + $0x280] sm:$0xff] %v10037
      %10070 = vst [vmem:[#allocation3 + $0x288] sm:$0xff] %v10038
      %10071 = vst [vmem:[#allocation3 + $0x290] sm:$0xff] %v10039
      %10072 = vst [vmem:[#allocation3 + $0x298] sm:$0xff] %v10040
      %10073 = vst [vmem:[#allocation3 + $0x2a0] sm:$0xff] %v10041
      %10074 = vst [vmem:[#allocation3 + $0x2a8] sm:$0xff] %v10042
      %10075 = vst [vmem:[#allocation3 + $0x2b0] sm:$0xff] %v10043
      %10076 = vst [vmem:[#allocation3 + $0x2b8] sm:$0xff] %v10044
      %10077 = vst [vmem:[#allocation3 + $0x2c0] sm:$0xff] %v10045
      %10078 = vst [vmem:[#allocation3 + $0x2c8] sm:$0xff] %v10046
      %10079 = vst [vmem:[#allocation3 + $0x2d0] sm:$0xff] %v10047
      %10080 = vst [vmem:[#allocation3 + $0x2d8] sm:$0xff] %v10048
      %10081 = vst [vmem:[#allocation3 + $0x2e0] sm:$0xff] %v10049
      %10082 = vst [vmem:[#allocation3 + $0x2e8] sm:$0xff] %v10050
      %10083 = vst [vmem:[#allocation3 + $0x2f0] sm:$0xff] %v10051
      %10084 = vst [vmem:[#allocation3 + $0x2f8] sm:$0xff] %v10052
      %v10085 = vld [vmem:[#allocation2 + $0x8] sm:$0xff]
      %v10086 = vld [vmem:[#allocation2 + $0x10] sm:$0xff]
      %v10087 = vld [vmem:[#allocation2 + $0x18] sm:$0xff]
      %v10088 = vld [vmem:[#allocation2 + $0x20] sm:$0xff]
      %v10089 = vld [vmem:[#allocation2 + $0x28] sm:$0xff]
      %v10090 = vld [vmem:[#allocation2 + $0x30] sm:$0xff]
      %v10091 = vld [vmem:[#allocation2 + $0x38] sm:$0xff]
      %v10092 = vld [vmem:[#allocation2 + $0x40] sm:$0xff]
      %v10093 = vld [vmem:[#allocation2 + $0x48] sm:$0xff]
      %v10094 = vld [vmem:[#allocation2 + $0x50] sm:$0xff]
      %v10095 = vld [vmem:[#allocation2 + $0x58] sm:$0xff]
      %v10096 = vld [vmem:[#allocation2 + $0x60] sm:$0xff]
      %v10097 = vld [vmem:[#allocation2 + $0x68] sm:$0xff]
      %v10098 = vld [vmem:[#allocation2 + $0x70] sm:$0xff]
      %v10099 = vld [vmem:[#allocation2 + $0x78] sm:$0xff]
      %v10100 = vld [vmem:[#allocation2 + $0x80] sm:$0xff]
      %v10101 = vld [vmem:[#allocation2 + $0x88] sm:$0xff]
      %v10102 = vlaneseq
      %v10103 = vshrl.u32 %v10102, 7
      %v10104 = vsub.s32 6, %v10103
      %v10105 = vrot.slane %v8630, %v10104
      %v10106 = vlaneseq
      %v10107 = vshrl.u32 %v10106, 7
      %v10108 = vsub.s32 6, %v10107
      %v10109 = vrot.slane %v8631, %v10108
      %v10110 = vlaneseq
      %v10111 = vshrl.u32 %v10110, 7
      %v10112 = vsub.s32 6, %v10111
      %v10113 = vrot.slane %v8632, %v10112
      %v10114 = vlaneseq
      %v10115 = vshrl.u32 %v10114, 7
      %v10116 = vsub.s32 6, %v10115
      %v10117 = vrot.slane %v8633, %v10116
      %v10118 = vlaneseq
      %v10119 = vshrl.u32 %v10118, 7
      %v10120 = vsub.s32 6, %v10119
      %v10121 = vrot.slane %v8634, %v10120
      %v10122 = vlaneseq
      %v10123 = vshrl.u32 %v10122, 7
      %v10124 = vsub.s32 6, %v10123
      %v10125 = vrot.slane %v8635, %v10124
      %v10126 = vlaneseq
      %v10127 = vshrl.u32 %v10126, 7
      %v10128 = vsub.s32 6, %v10127
      %v10129 = vrot.slane %v8636, %v10128
      %v10130 = vlaneseq
      %v10131 = vshrl.u32 %v10130, 7
      %v10132 = vsub.s32 6, %v10131
      %v10133 = vrot.slane %v8637, %v10132
      %v10134 = vlaneseq
      %v10135 = vshrl.u32 %v10134, 7
      %v10136 = vsub.s32 6, %v10135
      %v10137 = vrot.slane %v8638, %v10136
      %v10138 = vlaneseq
      %v10139 = vshrl.u32 %v10138, 7
      %v10140 = vsub.s32 6, %v10139
      %v10141 = vrot.slane %v8639, %v10140
      %v10142 = vlaneseq
      %v10143 = vshrl.u32 %v10142, 7
      %v10144 = vsub.s32 6, %v10143
      %v10145 = vrot.slane %v8640, %v10144
      %v10146 = vlaneseq
      %v10147 = vshrl.u32 %v10146, 7
      %v10148 = vsub.s32 6, %v10147
      %v10149 = vrot.slane %v8641, %v10148
      %v10150 = vlaneseq
      %v10151 = vshrl.u32 %v10150, 7
      %v10152 = vsub.s32 6, %v10151
      %v10153 = vrot.slane %v8642, %v10152
      %v10154 = vlaneseq
      %v10155 = vshrl.u32 %v10154, 7
      %v10156 = vsub.s32 6, %v10155
      %v10157 = vrot.slane %v8643, %v10156
      %v10158 = vlaneseq
      %v10159 = vshrl.u32 %v10158, 7
      %v10160 = vsub.s32 6, %v10159
      %v10161 = vrot.slane %v8644, %v10160
      %v10162 = vlaneseq
      %v10163 = vshrl.u32 %v10162, 7
      %v10164 = vsub.s32 6, %v10163
      %v10165 = vrot.slane %v8645, %v10164
      %10182 = vrot.lane.b32.xlu0 %v10105, 15
      %v10183 = vpop.permute.xlu0 %10182
      %10184 = vrot.lane.b32.xlu0 %v10109, 15
      %v10185 = vpop.permute.xlu0 %10184
      %10186 = vrot.lane.b32.xlu0 %v10113, 15
      %v10187 = vpop.permute.xlu0 %10186
      %10188 = vrot.lane.b32.xlu0 %v10117, 15
      %v10189 = vpop.permute.xlu0 %10188
      %10190 = vrot.lane.b32.xlu0 %v10121, 15
      %v10191 = vpop.permute.xlu0 %10190
      %10192 = vrot.lane.b32.xlu0 %v10125, 15
      %v10193 = vpop.permute.xlu0 %10192
      %10194 = vrot.lane.b32.xlu0 %v10129, 15
      %v10195 = vpop.permute.xlu0 %10194
      %10196 = vrot.lane.b32.xlu0 %v10133, 15
      %v10197 = vpop.permute.xlu0 %10196
      %10198 = vrot.lane.b32.xlu0 %v10137, 15
      %v10199 = vpop.permute.xlu0 %10198
      %10200 = vrot.lane.b32.xlu0 %v10141, 15
      %v10201 = vpop.permute.xlu0 %10200
      %10202 = vrot.lane.b32.xlu0 %v10145, 15
      %v10203 = vpop.permute.xlu0 %10202
      %10204 = vrot.lane.b32.xlu0 %v10149, 15
      %v10205 = vpop.permute.xlu0 %10204
      %10206 = vrot.lane.b32.xlu0 %v10153, 15
      %v10207 = vpop.permute.xlu0 %10206
      %10208 = vrot.lane.b32.xlu0 %v10157, 15
      %v10209 = vpop.permute.xlu0 %10208
      %10210 = vrot.lane.b32.xlu0 %v10161, 15
      %v10211 = vpop.permute.xlu0 %10210
      %10212 = vrot.lane.b32.xlu0 %v10165, 15
      %v10213 = vpop.permute.xlu0 %10212
      %v10214 = vsel %vm9448, %v10183, %v10185
      %v10215 = vsel %vm9448, %v10185, %v10187
      %v10216 = vsel %vm9448, %v10187, %v10189
      %v10217 = vsel %vm9448, %v10189, %v10191
      %v10218 = vsel %vm9448, %v10191, %v10193
      %v10219 = vsel %vm9448, %v10193, %v10195
      %v10220 = vsel %vm9448, %v10195, %v10197
      %v10221 = vsel %vm9448, %v10197, %v10199
      %v10222 = vsel %vm9448, %v10199, %v10201
      %v10223 = vsel %vm9448, %v10201, %v10203
      %v10224 = vsel %vm9448, %v10203, %v10205
      %v10225 = vsel %vm9448, %v10205, %v10207
      %v10226 = vsel %vm9448, %v10207, %v10209
      %v10227 = vsel %vm9448, %v10209, %v10211
      %v10228 = vsel %vm9448, %v10211, %v10213
      %v10246 = vmul.f32 %v10085, %v10183
      %v10247 = vmul.f32 %v10086, %v10214
      %v10248 = vmul.f32 %v10087, %v10215
      %v10249 = vmul.f32 %v10088, %v10216
      %v10250 = vmul.f32 %v10089, %v10217
      %v10251 = vmul.f32 %v10090, %v10218
      %v10252 = vmul.f32 %v10091, %v10219
      %v10253 = vmul.f32 %v10092, %v10220
      %v10254 = vmul.f32 %v10093, %v10221
      %v10255 = vmul.f32 %v10094, %v10222
      %v10256 = vmul.f32 %v10095, %v10223
      %v10257 = vmul.f32 %v10096, %v10224
      %v10258 = vmul.f32 %v10097, %v10225
      %v10259 = vmul.f32 %v10098, %v10226
      %v10260 = vmul.f32 %v10099, %v10227
      %v10261 = vmul.f32 %v10100, %v10228
      %v10262 = vmul.f32 %v10101, %v10213
      %10280 = vrot.lane.b32.xlu0 %v10246, 113
      %v10281 = vpop.permute.xlu0 %10280
      %10282 = vrot.lane.b32.xlu0 %v10247, 113
      %v10283 = vpop.permute.xlu0 %10282
      %10284 = vrot.lane.b32.xlu0 %v10248, 113
      %v10285 = vpop.permute.xlu0 %10284
      %10286 = vrot.lane.b32.xlu0 %v10249, 113
      %v10287 = vpop.permute.xlu0 %10286
      %10288 = vrot.lane.b32.xlu0 %v10250, 113
      %v10289 = vpop.permute.xlu0 %10288
      %10290 = vrot.lane.b32.xlu0 %v10251, 113
      %v10291 = vpop.permute.xlu0 %10290
      %10292 = vrot.lane.b32.xlu0 %v10252, 113
      %v10293 = vpop.permute.xlu0 %10292
      %10294 = vrot.lane.b32.xlu0 %v10253, 113
      %v10295 = vpop.permute.xlu0 %10294
      %10296 = vrot.lane.b32.xlu0 %v10254, 113
      %v10297 = vpop.permute.xlu0 %10296
      %10298 = vrot.lane.b32.xlu0 %v10255, 113
      %v10299 = vpop.permute.xlu0 %10298
      %10300 = vrot.lane.b32.xlu0 %v10256, 113
      %v10301 = vpop.permute.xlu0 %10300
      %10302 = vrot.lane.b32.xlu0 %v10257, 113
      %v10303 = vpop.permute.xlu0 %10302
      %10304 = vrot.lane.b32.xlu0 %v10258, 113
      %v10305 = vpop.permute.xlu0 %10304
      %10306 = vrot.lane.b32.xlu0 %v10259, 113
      %v10307 = vpop.permute.xlu0 %10306
      %10308 = vrot.lane.b32.xlu0 %v10260, 113
      %v10309 = vpop.permute.xlu0 %10308
      %10310 = vrot.lane.b32.xlu0 %v10261, 113
      %v10311 = vpop.permute.xlu0 %10310
      %10312 = vrot.lane.b32.xlu0 %v10262, 113
      %v10313 = vpop.permute.xlu0 %10312
      %v10314 = vsel %vm9347, %v10281, %v10283
      %v10315 = vsel %vm9347, %v10283, %v10285
      %v10316 = vsel %vm9347, %v10285, %v10287
      %v10317 = vsel %vm9347, %v10287, %v10289
      %v10318 = vsel %vm9347, %v10289, %v10291
      %v10319 = vsel %vm9347, %v10291, %v10293
      %v10320 = vsel %vm9347, %v10293, %v10295
      %v10321 = vsel %vm9347, %v10295, %v10297
      %v10322 = vsel %vm9347, %v10297, %v10299
      %v10323 = vsel %vm9347, %v10299, %v10301
      %v10324 = vsel %vm9347, %v10301, %v10303
      %v10325 = vsel %vm9347, %v10303, %v10305
      %v10326 = vsel %vm9347, %v10305, %v10307
      %v10327 = vsel %vm9347, %v10307, %v10309
      %v10328 = vsel %vm9347, %v10309, %v10311
      %v10329 = vsel %vm9347, %v10311, %v10313
      %10346 = vst [vmem:[#allocation3 + $0x300] sm:$0xff] %v10314
      %10347 = vst [vmem:[#allocation3 + $0x308] sm:$0xff] %v10315
      %10348 = vst [vmem:[#allocation3 + $0x310] sm:$0xff] %v10316
      %10349 = vst [vmem:[#allocation3 + $0x318] sm:$0xff] %v10317
      %10350 = vst [vmem:[#allocation3 + $0x320] sm:$0xff] %v10318
      %10351 = vst [vmem:[#allocation3 + $0x328] sm:$0xff] %v10319
      %10352 = vst [vmem:[#allocation3 + $0x330] sm:$0xff] %v10320
      %10353 = vst [vmem:[#allocation3 + $0x338] sm:$0xff] %v10321
      %10354 = vst [vmem:[#allocation3 + $0x340] sm:$0xff] %v10322
      %10355 = vst [vmem:[#allocation3 + $0x348] sm:$0xff] %v10323
      %10356 = vst [vmem:[#allocation3 + $0x350] sm:$0xff] %v10324
      %10357 = vst [vmem:[#allocation3 + $0x358] sm:$0xff] %v10325
      %10358 = vst [vmem:[#allocation3 + $0x360] sm:$0xff] %v10326
      %10359 = vst [vmem:[#allocation3 + $0x368] sm:$0xff] %v10327
      %10360 = vst [vmem:[#allocation3 + $0x370] sm:$0xff] %v10328
      %10361 = vst [vmem:[#allocation3 + $0x378] sm:$0xff] %v10329
      %v10362 = vld [vmem:[#allocation2 + $0x8] sm:$0xff]
      %v10363 = vld [vmem:[#allocation2 + $0x10] sm:$0xff]
      %v10364 = vld [vmem:[#allocation2 + $0x18] sm:$0xff]
      %v10365 = vld [vmem:[#allocation2 + $0x20] sm:$0xff]
      %v10366 = vld [vmem:[#allocation2 + $0x28] sm:$0xff]
      %v10367 = vld [vmem:[#allocation2 + $0x30] sm:$0xff]
      %v10368 = vld [vmem:[#allocation2 + $0x38] sm:$0xff]
      %v10369 = vld [vmem:[#allocation2 + $0x40] sm:$0xff]
      %v10370 = vld [vmem:[#allocation2 + $0x48] sm:$0xff]
      %v10371 = vld [vmem:[#allocation2 + $0x50] sm:$0xff]
      %v10372 = vld [vmem:[#allocation2 + $0x58] sm:$0xff]
      %v10373 = vld [vmem:[#allocation2 + $0x60] sm:$0xff]
      %v10374 = vld [vmem:[#allocation2 + $0x68] sm:$0xff]
      %v10375 = vld [vmem:[#allocation2 + $0x70] sm:$0xff]
      %v10376 = vld [vmem:[#allocation2 + $0x78] sm:$0xff]
      %v10377 = vld [vmem:[#allocation2 + $0x80] sm:$0xff]
      %v10378 = vld [vmem:[#allocation2 + $0x88] sm:$0xff]
      %v10379 = vlaneseq
      %v10380 = vshrl.u32 %v10379, 7
      %v10381 = vsub.s32 7, %v10380
      %v10382 = vrot.slane %v8630, %v10381
      %v10383 = vlaneseq
      %v10384 = vshrl.u32 %v10383, 7
      %v10385 = vsub.s32 7, %v10384
      %v10386 = vrot.slane %v8631, %v10385
      %v10387 = vlaneseq
      %v10388 = vshrl.u32 %v10387, 7
      %v10389 = vsub.s32 7, %v10388
      %v10390 = vrot.slane %v8632, %v10389
      %v10391 = vlaneseq
      %v10392 = vshrl.u32 %v10391, 7
      %v10393 = vsub.s32 7, %v10392
      %v10394 = vrot.slane %v8633, %v10393
      %v10395 = vlaneseq
      %v10396 = vshrl.u32 %v10395, 7
      %v10397 = vsub.s32 7, %v10396
      %v10398 = vrot.slane %v8634, %v10397
      %v10399 = vlaneseq
      %v10400 = vshrl.u32 %v10399, 7
      %v10401 = vsub.s32 7, %v10400
      %v10402 = vrot.slane %v8635, %v10401
      %v10403 = vlaneseq
      %v10404 = vshrl.u32 %v10403, 7
      %v10405 = vsub.s32 7, %v10404
      %v10406 = vrot.slane %v8636, %v10405
      %v10407 = vlaneseq
      %v10408 = vshrl.u32 %v10407, 7
      %v10409 = vsub.s32 7, %v10408
      %v10410 = vrot.slane %v8637, %v10409
      %v10411 = vlaneseq
      %v10412 = vshrl.u32 %v10411, 7
      %v10413 = vsub.s32 7, %v10412
      %v10414 = vrot.slane %v8638, %v10413
      %v10415 = vlaneseq
      %v10416 = vshrl.u32 %v10415, 7
      %v10417 = vsub.s32 7, %v10416
      %v10418 = vrot.slane %v8639, %v10417
      %v10419 = vlaneseq
      %v10420 = vshrl.u32 %v10419, 7
      %v10421 = vsub.s32 7, %v10420
      %v10422 = vrot.slane %v8640, %v10421
      %v10423 = vlaneseq
      %v10424 = vshrl.u32 %v10423, 7
      %v10425 = vsub.s32 7, %v10424
      %v10426 = vrot.slane %v8641, %v10425
      %v10427 = vlaneseq
      %v10428 = vshrl.u32 %v10427, 7
      %v10429 = vsub.s32 7, %v10428
      %v10430 = vrot.slane %v8642, %v10429
      %v10431 = vlaneseq
      %v10432 = vshrl.u32 %v10431, 7
      %v10433 = vsub.s32 7, %v10432
      %v10434 = vrot.slane %v8643, %v10433
      %v10435 = vlaneseq
      %v10436 = vshrl.u32 %v10435, 7
      %v10437 = vsub.s32 7, %v10436
      %v10438 = vrot.slane %v8644, %v10437
      %v10439 = vlaneseq
      %v10440 = vshrl.u32 %v10439, 7
      %v10441 = vsub.s32 7, %v10440
      %v10442 = vrot.slane %v8645, %v10441
      %10459 = vrot.lane.b32.xlu0 %v10382, 16
      %v10460 = vpop.permute.xlu0 %10459
      %10461 = vrot.lane.b32.xlu0 %v10386, 16
      %v10462 = vpop.permute.xlu0 %10461
      %10463 = vrot.lane.b32.xlu0 %v10390, 16
      %v10464 = vpop.permute.xlu0 %10463
      %10465 = vrot.lane.b32.xlu0 %v10394, 16
      %v10466 = vpop.permute.xlu0 %10465
      %10467 = vrot.lane.b32.xlu0 %v10398, 16
      %v10468 = vpop.permute.xlu0 %10467
      %10469 = vrot.lane.b32.xlu0 %v10402, 16
      %v10470 = vpop.permute.xlu0 %10469
      %10471 = vrot.lane.b32.xlu0 %v10406, 16
      %v10472 = vpop.permute.xlu0 %10471
      %10473 = vrot.lane.b32.xlu0 %v10410, 16
      %v10474 = vpop.permute.xlu0 %10473
      %10475 = vrot.lane.b32.xlu0 %v10414, 16
      %v10476 = vpop.permute.xlu0 %10475
      %10477 = vrot.lane.b32.xlu0 %v10418, 16
      %v10478 = vpop.permute.xlu0 %10477
      %10479 = vrot.lane.b32.xlu0 %v10422, 16
      %v10480 = vpop.permute.xlu0 %10479
      %10481 = vrot.lane.b32.xlu0 %v10426, 16
      %v10482 = vpop.permute.xlu0 %10481
      %10483 = vrot.lane.b32.xlu0 %v10430, 16
      %v10484 = vpop.permute.xlu0 %10483
      %10485 = vrot.lane.b32.xlu0 %v10434, 16
      %v10486 = vpop.permute.xlu0 %10485
      %10487 = vrot.lane.b32.xlu0 %v10438, 16
      %v10488 = vpop.permute.xlu0 %10487
      %10489 = vrot.lane.b32.xlu0 %v10442, 16
      %v10490 = vpop.permute.xlu0 %10489
      %v10491 = vsel %vm2856, %v10460, %v10462
      %v10492 = vsel %vm2856, %v10462, %v10464
      %v10493 = vsel %vm2856, %v10464, %v10466
      %v10494 = vsel %vm2856, %v10466, %v10468
      %v10495 = vsel %vm2856, %v10468, %v10470
      %v10496 = vsel %vm2856, %v10470, %v10472
      %v10497 = vsel %vm2856, %v10472, %v10474
      %v10498 = vsel %vm2856, %v10474, %v10476
      %v10499 = vsel %vm2856, %v10476, %v10478
      %v10500 = vsel %vm2856, %v10478, %v10480
      %v10501 = vsel %vm2856, %v10480, %v10482
      %v10502 = vsel %vm2856, %v10482, %v10484
      %v10503 = vsel %vm2856, %v10484, %v10486
      %v10504 = vsel %vm2856, %v10486, %v10488
      %v10505 = vsel %vm2856, %v10488, %v10490
      %v10523 = vmul.f32 %v10362, %v10460
      %v10524 = vmul.f32 %v10363, %v10491
      %v10525 = vmul.f32 %v10364, %v10492
      %v10526 = vmul.f32 %v10365, %v10493
      %v10527 = vmul.f32 %v10366, %v10494
      %v10528 = vmul.f32 %v10367, %v10495
      %v10529 = vmul.f32 %v10368, %v10496
      %v10530 = vmul.f32 %v10369, %v10497
      %v10531 = vmul.f32 %v10370, %v10498
      %v10532 = vmul.f32 %v10371, %v10499
      %v10533 = vmul.f32 %v10372, %v10500
      %v10534 = vmul.f32 %v10373, %v10501
      %v10535 = vmul.f32 %v10374, %v10502
      %v10536 = vmul.f32 %v10375, %v10503
      %v10537 = vmul.f32 %v10376, %v10504
      %v10538 = vmul.f32 %v10377, %v10505
      %v10539 = vmul.f32 %v10378, %v10490
      %10557 = vrot.lane.b32.xlu0 %v10523, 112
      %v10558 = vpop.permute.xlu0 %10557
      %10559 = vrot.lane.b32.xlu0 %v10524, 112
      %v10560 = vpop.permute.xlu0 %10559
      %10561 = vrot.lane.b32.xlu0 %v10525, 112
      %v10562 = vpop.permute.xlu0 %10561
      %10563 = vrot.lane.b32.xlu0 %v10526, 112
      %v10564 = vpop.permute.xlu0 %10563
      %10565 = vrot.lane.b32.xlu0 %v10527, 112
      %v10566 = vpop.permute.xlu0 %10565
      %10567 = vrot.lane.b32.xlu0 %v10528, 112
      %v10568 = vpop.permute.xlu0 %10567
      %10569 = vrot.lane.b32.xlu0 %v10529, 112
      %v10570 = vpop.permute.xlu0 %10569
      %10571 = vrot.lane.b32.xlu0 %v10530, 112
      %v10572 = vpop.permute.xlu0 %10571
      %10573 = vrot.lane.b32.xlu0 %v10531, 112
      %v10574 = vpop.permute.xlu0 %10573
      %10575 = vrot.lane.b32.xlu0 %v10532, 112
      %v10576 = vpop.permute.xlu0 %10575
      %10577 = vrot.lane.b32.xlu0 %v10533, 112
      %v10578 = vpop.permute.xlu0 %10577
      %10579 = vrot.lane.b32.xlu0 %v10534, 112
      %v10580 = vpop.permute.xlu0 %10579
      %10581 = vrot.lane.b32.xlu0 %v10535, 112
      %v10582 = vpop.permute.xlu0 %10581
      %10583 = vrot.lane.b32.xlu0 %v10536, 112
      %v10584 = vpop.permute.xlu0 %10583
      %10585 = vrot.lane.b32.xlu0 %v10537, 112
      %v10586 = vpop.permute.xlu0 %10585
      %10587 = vrot.lane.b32.xlu0 %v10538, 112
      %v10588 = vpop.permute.xlu0 %10587
      %10589 = vrot.lane.b32.xlu0 %v10539, 112
      %v10590 = vpop.permute.xlu0 %10589
      %v10591 = vsel %vm4529, %v10558, %v10560
      %v10592 = vsel %vm4529, %v10560, %v10562
      %v10593 = vsel %vm4529, %v10562, %v10564
      %v10594 = vsel %vm4529, %v10564, %v10566
      %v10595 = vsel %vm4529, %v10566, %v10568
      %v10596 = vsel %vm4529, %v10568, %v10570
      %v10597 = vsel %vm4529, %v10570, %v10572
      %v10598 = vsel %vm4529, %v10572, %v10574
      %v10599 = vsel %vm4529, %v10574, %v10576
      %v10600 = vsel %vm4529, %v10576, %v10578
      %v10601 = vsel %vm4529, %v10578, %v10580
      %v10602 = vsel %vm4529, %v10580, %v10582
      %v10603 = vsel %vm4529, %v10582, %v10584
      %v10604 = vsel %vm4529, %v10584, %v10586
      %v10605 = vsel %vm4529, %v10586, %v10588
      %v10606 = vsel %vm4529, %v10588, %v10590
      %10623 = vst [vmem:[#allocation3 + $0x380] sm:$0xff] %v10591
      %10624 = vst [vmem:[#allocation3 + $0x388] sm:$0xff] %v10592
      %10625 = vst [vmem:[#allocation3 + $0x390] sm:$0xff] %v10593
      %10626 = vst [vmem:[#allocation3 + $0x398] sm:$0xff] %v10594
      %10627 = vst [vmem:[#allocation3 + $0x3a0] sm:$0xff] %v10595
      %10628 = vst [vmem:[#allocation3 + $0x3a8] sm:$0xff] %v10596
      %10629 = vst [vmem:[#allocation3 + $0x3b0] sm:$0xff] %v10597
      %10630 = vst [vmem:[#allocation3 + $0x3b8] sm:$0xff] %v10598
      %10631 = vst [vmem:[#allocation3 + $0x3c0] sm:$0xff] %v10599
      %10632 = vst [vmem:[#allocation3 + $0x3c8] sm:$0xff] %v10600
      %10633 = vst [vmem:[#allocation3 + $0x3d0] sm:$0xff] %v10601
      %10634 = vst [vmem:[#allocation3 + $0x3d8] sm:$0xff] %v10602
      %10635 = vst [vmem:[#allocation3 + $0x3e0] sm:$0xff] %v10603
      %10636 = vst [vmem:[#allocation3 + $0x3e8] sm:$0xff] %v10604
      %10637 = vst [vmem:[#allocation3 + $0x3f0] sm:$0xff] %v10605
      %10638 = vst [vmem:[#allocation3 + $0x3f8] sm:$0xff] %v10606
      %v10639 = vld [vmem:[#allocation2 + $0x8] sm:$0xff]
      %v10640 = vld [vmem:[#allocation2 + $0x10] sm:$0xff]
      %v10641 = vld [vmem:[#allocation2 + $0x18] sm:$0xff]
      %v10642 = vld [vmem:[#allocation2 + $0x20] sm:$0xff]
      %v10643 = vld [vmem:[#allocation2 + $0x28] sm:$0xff]
      %v10644 = vld [vmem:[#allocation2 + $0x30] sm:$0xff]
      %v10645 = vld [vmem:[#allocation2 + $0x38] sm:$0xff]
      %v10646 = vld [vmem:[#allocation2 + $0x40] sm:$0xff]
      %v10647 = vld [vmem:[#allocation2 + $0x48] sm:$0xff]
      %v10648 = vld [vmem:[#allocation2 + $0x50] sm:$0xff]
      %v10649 = vld [vmem:[#allocation2 + $0x58] sm:$0xff]
      %v10650 = vld [vmem:[#allocation2 + $0x60] sm:$0xff]
      %v10651 = vld [vmem:[#allocation2 + $0x68] sm:$0xff]
      %v10652 = vld [vmem:[#allocation2 + $0x70] sm:$0xff]
      %v10653 = vld [vmem:[#allocation2 + $0x78] sm:$0xff]
      %v10654 = vld [vmem:[#allocation2 + $0x80] sm:$0xff]
      %v10655 = vld [vmem:[#allocation2 + $0x88] sm:$0xff]
      %v10656 = vlaneseq
      %v10657 = vshrl.u32 %v10656, 7
      %v10658 = vsub.s32 0, %v10657
      %v10659 = vrot.slane %v8646, %v10658
      %v10660 = vlaneseq
      %v10661 = vshrl.u32 %v10660, 7
      %v10662 = vsub.s32 0, %v10661
      %v10663 = vrot.slane %v8647, %v10662
      %v10664 = vlaneseq
      %v10665 = vshrl.u32 %v10664, 7
      %v10666 = vsub.s32 0, %v10665
      %v10667 = vrot.slane %v8648, %v10666
      %v10668 = vlaneseq
      %v10669 = vshrl.u32 %v10668, 7
      %v10670 = vsub.s32 0, %v10669
      %v10671 = vrot.slane %v8649, %v10670
      %v10672 = vlaneseq
      %v10673 = vshrl.u32 %v10672, 7
      %v10674 = vsub.s32 0, %v10673
      %v10675 = vrot.slane %v8650, %v10674
      %v10676 = vlaneseq
      %v10677 = vshrl.u32 %v10676, 7
      %v10678 = vsub.s32 0, %v10677
      %v10679 = vrot.slane %v8651, %v10678
      %v10680 = vlaneseq
      %v10681 = vshrl.u32 %v10680, 7
      %v10682 = vsub.s32 0, %v10681
      %v10683 = vrot.slane %v8652, %v10682
      %v10684 = vlaneseq
      %v10685 = vshrl.u32 %v10684, 7
      %v10686 = vsub.s32 0, %v10685
      %v10687 = vrot.slane %v8653, %v10686
      %v10688 = vlaneseq
      %v10689 = vshrl.u32 %v10688, 7
      %v10690 = vsub.s32 0, %v10689
      %v10691 = vrot.slane %v8654, %v10690
      %v10692 = vlaneseq
      %v10693 = vshrl.u32 %v10692, 7
      %v10694 = vsub.s32 0, %v10693
      %v10695 = vrot.slane %v8655, %v10694
      %v10696 = vlaneseq
      %v10697 = vshrl.u32 %v10696, 7
      %v10698 = vsub.s32 0, %v10697
      %v10699 = vrot.slane %v8656, %v10698
      %v10700 = vlaneseq
      %v10701 = vshrl.u32 %v10700, 7
      %v10702 = vsub.s32 0, %v10701
      %v10703 = vrot.slane %v8657, %v10702
      %v10704 = vlaneseq
      %v10705 = vshrl.u32 %v10704, 7
      %v10706 = vsub.s32 0, %v10705
      %v10707 = vrot.slane %v8658, %v10706
      %v10708 = vlaneseq
      %v10709 = vshrl.u32 %v10708, 7
      %v10710 = vsub.s32 0, %v10709
      %v10711 = vrot.slane %v8659, %v10710
      %v10712 = vlaneseq
      %v10713 = vshrl.u32 %v10712, 7
      %v10714 = vsub.s32 0, %v10713
      %v10715 = vrot.slane %v8660, %v10714
      %v10716 = vlaneseq
      %v10717 = vshrl.u32 %v10716, 7
      %v10718 = vsub.s32 0, %v10717
      %v10719 = vrot.slane %v8661, %v10718
      %10736 = vrot.lane.b32.xlu0 %v10659, 17
      %v10737 = vpop.permute.xlu0 %10736
      %10738 = vrot.lane.b32.xlu0 %v10663, 17
      %v10739 = vpop.permute.xlu0 %10738
      %10740 = vrot.lane.b32.xlu0 %v10667, 17
      %v10741 = vpop.permute.xlu0 %10740
      %10742 = vrot.lane.b32.xlu0 %v10671, 17
      %v10743 = vpop.permute.xlu0 %10742
      %10744 = vrot.lane.b32.xlu0 %v10675, 17
      %v10745 = vpop.permute.xlu0 %10744
      %10746 = vrot.lane.b32.xlu0 %v10679, 17
      %v10747 = vpop.permute.xlu0 %10746
      %10748 = vrot.lane.b32.xlu0 %v10683, 17
      %v10749 = vpop.permute.xlu0 %10748
      %10750 = vrot.lane.b32.xlu0 %v10687, 17
      %v10751 = vpop.permute.xlu0 %10750
      %10752 = vrot.lane.b32.xlu0 %v10691, 17
      %v10753 = vpop.permute.xlu0 %10752
      %10754 = vrot.lane.b32.xlu0 %v10695, 17
      %v10755 = vpop.permute.xlu0 %10754
      %10756 = vrot.lane.b32.xlu0 %v10699, 17
      %v10757 = vpop.permute.xlu0 %10756
      %10758 = vrot.lane.b32.xlu0 %v10703, 17
      %v10759 = vpop.permute.xlu0 %10758
      %10760 = vrot.lane.b32.xlu0 %v10707, 17
      %v10761 = vpop.permute.xlu0 %10760
      %10762 = vrot.lane.b32.xlu0 %v10711, 17
      %v10763 = vpop.permute.xlu0 %10762
      %10764 = vrot.lane.b32.xlu0 %v10715, 17
      %v10765 = vpop.permute.xlu0 %10764
      %10766 = vrot.lane.b32.xlu0 %v10719, 17
      %v10767 = vpop.permute.xlu0 %10766
      %v10768 = vsel %vm8892, %v10737, %v10739
      %v10769 = vsel %vm8892, %v10739, %v10741
      %v10770 = vsel %vm8892, %v10741, %v10743
      %v10771 = vsel %vm8892, %v10743, %v10745
      %v10772 = vsel %vm8892, %v10745, %v10747
      %v10773 = vsel %vm8892, %v10747, %v10749
      %v10774 = vsel %vm8892, %v10749, %v10751
      %v10775 = vsel %vm8892, %v10751, %v10753
      %v10776 = vsel %vm8892, %v10753, %v10755
      %v10777 = vsel %vm8892, %v10755, %v10757
      %v10778 = vsel %vm8892, %v10757, %v10759
      %v10779 = vsel %vm8892, %v10759, %v10761
      %v10780 = vsel %vm8892, %v10761, %v10763
      %v10781 = vsel %vm8892, %v10763, %v10765
      %v10782 = vsel %vm8892, %v10765, %v10767
      %v10800 = vmul.f32 %v10639, %v10737
      %v10801 = vmul.f32 %v10640, %v10768
      %v10802 = vmul.f32 %v10641, %v10769
      %v10803 = vmul.f32 %v10642, %v10770
      %v10804 = vmul.f32 %v10643, %v10771
      %v10805 = vmul.f32 %v10644, %v10772
      %v10806 = vmul.f32 %v10645, %v10773
      %v10807 = vmul.f32 %v10646, %v10774
      %v10808 = vmul.f32 %v10647, %v10775
      %v10809 = vmul.f32 %v10648, %v10776
      %v10810 = vmul.f32 %v10649, %v10777
      %v10811 = vmul.f32 %v10650, %v10778
      %v10812 = vmul.f32 %v10651, %v10779
      %v10813 = vmul.f32 %v10652, %v10780
      %v10814 = vmul.f32 %v10653, %v10781
      %v10815 = vmul.f32 %v10654, %v10782
      %v10816 = vmul.f32 %v10655, %v10767
      %10834 = vrot.lane.b32.xlu0 %v10800, 111
      %v10835 = vpop.permute.xlu0 %10834
      %10836 = vrot.lane.b32.xlu0 %v10801, 111
      %v10837 = vpop.permute.xlu0 %10836
      %10838 = vrot.lane.b32.xlu0 %v10802, 111
      %v10839 = vpop.permute.xlu0 %10838
      %10840 = vrot.lane.b32.xlu0 %v10803, 111
      %v10841 = vpop.permute.xlu0 %10840
      %10842 = vrot.lane.b32.xlu0 %v10804, 111
      %v10843 = vpop.permute.xlu0 %10842
      %10844 = vrot.lane.b32.xlu0 %v10805, 111
      %v10845 = vpop.permute.xlu0 %10844
      %10846 = vrot.lane.b32.xlu0 %v10806, 111
      %v10847 = vpop.permute.xlu0 %10846
      %10848 = vrot.lane.b32.xlu0 %v10807, 111
      %v10849 = vpop.permute.xlu0 %10848
      %10850 = vrot.lane.b32.xlu0 %v10808, 111
      %v10851 = vpop.permute.xlu0 %10850
      %10852 = vrot.lane.b32.xlu0 %v10809, 111
      %v10853 = vpop.permute.xlu0 %10852
      %10854 = vrot.lane.b32.xlu0 %v10810, 111
      %v10855 = vpop.permute.xlu0 %10854
      %10856 = vrot.lane.b32.xlu0 %v10811, 111
      %v10857 = vpop.permute.xlu0 %10856
      %10858 = vrot.lane.b32.xlu0 %v10812, 111
      %v10859 = vpop.permute.xlu0 %10858
      %10860 = vrot.lane.b32.xlu0 %v10813, 111
      %v10861 = vpop.permute.xlu0 %10860
      %10862 = vrot.lane.b32.xlu0 %v10814, 111
      %v10863 = vpop.permute.xlu0 %10862
      %10864 = vrot.lane.b32.xlu0 %v10815, 111
      %v10865 = vpop.permute.xlu0 %10864
      %10866 = vrot.lane.b32.xlu0 %v10816, 111
      %v10867 = vpop.permute.xlu0 %10866
      %v10868 = vsel %vm8791, %v10835, %v10837
      %v10869 = vsel %vm8791, %v10837, %v10839
      %v10870 = vsel %vm8791, %v10839, %v10841
      %v10871 = vsel %vm8791, %v10841, %v10843
      %v10872 = vsel %vm8791, %v10843, %v10845
      %v10873 = vsel %vm8791, %v10845, %v10847
      %v10874 = vsel %vm8791, %v10847, %v10849
      %v10875 = vsel %vm8791, %v10849, %v10851
      %v10876 = vsel %vm8791, %v10851, %v10853
      %v10877 = vsel %vm8791, %v10853, %v10855
      %v10878 = vsel %vm8791, %v10855, %v10857
      %v10879 = vsel %vm8791, %v10857, %v10859
      %v10880 = vsel %vm8791, %v10859, %v10861
      %v10881 = vsel %vm8791, %v10861, %v10863
      %v10882 = vsel %vm8791, %v10863, %v10865
      %v10883 = vsel %vm8791, %v10865, %v10867
      %10900 = vst [vmem:[#allocation3 + $0x400] sm:$0xff] %v10868
      %10901 = vst [vmem:[#allocation3 + $0x408] sm:$0xff] %v10869
      %10902 = vst [vmem:[#allocation3 + $0x410] sm:$0xff] %v10870
      %10903 = vst [vmem:[#allocation3 + $0x418] sm:$0xff] %v10871
      %10904 = vst [vmem:[#allocation3 + $0x420] sm:$0xff] %v10872
      %10905 = vst [vmem:[#allocation3 + $0x428] sm:$0xff] %v10873
      %10906 = vst [vmem:[#allocation3 + $0x430] sm:$0xff] %v10874
      %10907 = vst [vmem:[#allocation3 + $0x438] sm:$0xff] %v10875
      %10908 = vst [vmem:[#allocation3 + $0x440] sm:$0xff] %v10876
      %10909 = vst [vmem:[#allocation3 + $0x448] sm:$0xff] %v10877
      %10910 = vst [vmem:[#allocation3 + $0x450] sm:$0xff] %v10878
      %10911 = vst [vmem:[#allocation3 + $0x458] sm:$0xff] %v10879
      %10912 = vst [vmem:[#allocation3 + $0x460] sm:$0xff] %v10880
      %10913 = vst [vmem:[#allocation3 + $0x468] sm:$0xff] %v10881
      %10914 = vst [vmem:[#allocation3 + $0x470] sm:$0xff] %v10882
      %10915 = vst [vmem:[#allocation3 + $0x478] sm:$0xff] %v10883
      %v10916 = vld [vmem:[%s1] sm:$0xff]
      %v10917 = vld [vmem:[#allocation3] sm:$0xff]
      %v10918 = vld [vmem:[#allocation3 + $0x8] sm:$0xff]
      %v10919 = vld [vmem:[#allocation3 + $0x10] sm:$0xff]
      %v10920 = vld [vmem:[#allocation3 + $0x18] sm:$0xff]
      %v10921 = vld [vmem:[#allocation3 + $0x20] sm:$0xff]
      %v10922 = vld [vmem:[#allocation3 + $0x28] sm:$0xff]
      %v10923 = vld [vmem:[#allocation3 + $0x30] sm:$0xff]
      %v10924 = vld [vmem:[#allocation3 + $0x38] sm:$0xff]
      %v10925 = vld [vmem:[#allocation3 + $0x40] sm:$0xff]
      %v10926 = vld [vmem:[#allocation3 + $0x48] sm:$0xff]
      %v10927 = vld [vmem:[#allocation3 + $0x50] sm:$0xff]
      %v10928 = vld [vmem:[#allocation3 + $0x58] sm:$0xff]
      %v10929 = vld [vmem:[#allocation3 + $0x60] sm:$0xff]
      %v10930 = vld [vmem:[#allocation3 + $0x68] sm:$0xff]
      %v10931 = vld [vmem:[#allocation3 + $0x70] sm:$0xff]
      %v10932 = vld [vmem:[#allocation3 + $0x78] sm:$0xff]
      %v10933 = vld [vmem:[#allocation3 + $0x80] sm:$0xff]
      %v10934 = vld [vmem:[#allocation3 + $0x88] sm:$0xff]
      %v10935 = vld [vmem:[#allocation3 + $0x90] sm:$0xff]
      %v10936 = vld [vmem:[#allocation3 + $0x98] sm:$0xff]
      %v10937 = vld [vmem:[#allocation3 + $0xa0] sm:$0xff]
      %v10938 = vld [vmem:[#allocation3 + $0xa8] sm:$0xff]
      %v10939 = vld [vmem:[#allocation3 + $0xb0] sm:$0xff]
      %v10940 = vld [vmem:[#allocation3 + $0xb8] sm:$0xff]
      %v10941 = vld [vmem:[#allocation3 + $0xc0] sm:$0xff]
      %v10942 = vld [vmem:[#allocation3 + $0xc8] sm:$0xff]
      %v10943 = vld [vmem:[#allocation3 + $0xd0] sm:$0xff]
      %v10944 = vld [vmem:[#allocation3 + $0xd8] sm:$0xff]
      %v10945 = vld [vmem:[#allocation3 + $0xe0] sm:$0xff]
      %v10946 = vld [vmem:[#allocation3 + $0xe8] sm:$0xff]
      %v10947 = vld [vmem:[#allocation3 + $0xf0] sm:$0xff]
      %v10948 = vld [vmem:[#allocation3 + $0xf8] sm:$0xff]
      %v10949 = vld [vmem:[#allocation3 + $0x100] sm:$0xff]
      %v10950 = vld [vmem:[#allocation3 + $0x108] sm:$0xff]
      %v10951 = vld [vmem:[#allocation3 + $0x110] sm:$0xff]
      %v10952 = vld [vmem:[#allocation3 + $0x118] sm:$0xff]
      %v10953 = vld [vmem:[#allocation3 + $0x120] sm:$0xff]
      %v10954 = vld [vmem:[#allocation3 + $0x128] sm:$0xff]
      %v10955 = vld [vmem:[#allocation3 + $0x130] sm:$0xff]
      %v10956 = vld [vmem:[#allocation3 + $0x138] sm:$0xff]
      %v10957 = vld [vmem:[#allocation3 + $0x140] sm:$0xff]
      %v10958 = vld [vmem:[#allocation3 + $0x148] sm:$0xff]
      %v10959 = vld [vmem:[#allocation3 + $0x150] sm:$0xff]
      %v10960 = vld [vmem:[#allocation3 + $0x158] sm:$0xff]
      %v10961 = vld [vmem:[#allocation3 + $0x160] sm:$0xff]
      %v10962 = vld [vmem:[#allocation3 + $0x168] sm:$0xff]
      %v10963 = vld [vmem:[#allocation3 + $0x170] sm:$0xff]
      %v10964 = vld [vmem:[#allocation3 + $0x178] sm:$0xff]
      %v10965 = vld [vmem:[#allocation3 + $0x180] sm:$0xff]
      %v10966 = vld [vmem:[#allocation3 + $0x188] sm:$0xff]
      %v10967 = vld [vmem:[#allocation3 + $0x190] sm:$0xff]
      %v10968 = vld [vmem:[#allocation3 + $0x198] sm:$0xff]
      %v10969 = vld [vmem:[#allocation3 + $0x1a0] sm:$0xff]
      %v10970 = vld [vmem:[#allocation3 + $0x1a8] sm:$0xff]
      %v10971 = vld [vmem:[#allocation3 + $0x1b0] sm:$0xff]
      %v10972 = vld [vmem:[#allocation3 + $0x1b8] sm:$0xff]
      %v10973 = vld [vmem:[#allocation3 + $0x1c0] sm:$0xff]
      %v10974 = vld [vmem:[#allocation3 + $0x1c8] sm:$0xff]
      %v10975 = vld [vmem:[#allocation3 + $0x1d0] sm:$0xff]
      %v10976 = vld [vmem:[#allocation3 + $0x1d8] sm:$0xff]
      %v10977 = vld [vmem:[#allocation3 + $0x1e0] sm:$0xff]
      %v10978 = vld [vmem:[#allocation3 + $0x1e8] sm:$0xff]
      %v10979 = vld [vmem:[#allocation3 + $0x1f0] sm:$0xff]
      %v10980 = vld [vmem:[#allocation3 + $0x1f8] sm:$0xff]
      %v10981 = vld [vmem:[#allocation3 + $0x200] sm:$0xff]
      %v10982 = vld [vmem:[#allocation3 + $0x208] sm:$0xff]
      %v10983 = vld [vmem:[#allocation3 + $0x210] sm:$0xff]
      %v10984 = vld [vmem:[#allocation3 + $0x218] sm:$0xff]
      %v10985 = vld [vmem:[#allocation3 + $0x220] sm:$0xff]
      %v10986 = vld [vmem:[#allocation3 + $0x228] sm:$0xff]
      %v10987 = vld [vmem:[#allocation3 + $0x230] sm:$0xff]
      %v10988 = vld [vmem:[#allocation3 + $0x238] sm:$0xff]
      %v10989 = vld [vmem:[#allocation3 + $0x240] sm:$0xff]
      %v10990 = vld [vmem:[#allocation3 + $0x248] sm:$0xff]
      %v10991 = vld [vmem:[#allocation3 + $0x250] sm:$0xff]
      %v10992 = vld [vmem:[#allocation3 + $0x258] sm:$0xff]
      %v10993 = vld [vmem:[#allocation3 + $0x260] sm:$0xff]
      %v10994 = vld [vmem:[#allocation3 + $0x268] sm:$0xff]
      %v10995 = vld [vmem:[#allocation3 + $0x270] sm:$0xff]
      %v10996 = vld [vmem:[#allocation3 + $0x278] sm:$0xff]
      %v10997 = vld [vmem:[#allocation3 + $0x280] sm:$0xff]
      %v10998 = vld [vmem:[#allocation3 + $0x288] sm:$0xff]
      %v10999 = vld [vmem:[#allocation3 + $0x290] sm:$0xff]
      %v11000 = vld [vmem:[#allocation3 + $0x298] sm:$0xff]
      %v11001 = vld [vmem:[#allocation3 + $0x2a0] sm:$0xff]
      %v11002 = vld [vmem:[#allocation3 + $0x2a8] sm:$0xff]
      %v11003 = vld [vmem:[#allocation3 + $0x2b0] sm:$0xff]
      %v11004 = vld [vmem:[#allocation3 + $0x2b8] sm:$0xff]
      %v11005 = vld [vmem:[#allocation3 + $0x2c0] sm:$0xff]
      %v11006 = vld [vmem:[#allocation3 + $0x2c8] sm:$0xff]
      %v11007 = vld [vmem:[#allocation3 + $0x2d0] sm:$0xff]
      %v11008 = vld [vmem:[#allocation3 + $0x2d8] sm:$0xff]
      %v11009 = vld [vmem:[#allocation3 + $0x2e0] sm:$0xff]
      %v11010 = vld [vmem:[#allocation3 + $0x2e8] sm:$0xff]
      %v11011 = vld [vmem:[#allocation3 + $0x2f0] sm:$0xff]
      %v11012 = vld [vmem:[#allocation3 + $0x2f8] sm:$0xff]
      %v11013 = vld [vmem:[#allocation3 + $0x300] sm:$0xff]
      %v11014 = vld [vmem:[#allocation3 + $0x308] sm:$0xff]
      %v11015 = vld [vmem:[#allocation3 + $0x310] sm:$0xff]
      %v11016 = vld [vmem:[#allocation3 + $0x318] sm:$0xff]
      %v11017 = vld [vmem:[#allocation3 + $0x320] sm:$0xff]
      %v11018 = vld [vmem:[#allocation3 + $0x328] sm:$0xff]
      %v11019 = vld [vmem:[#allocation3 + $0x330] sm:$0xff]
      %v11020 = vld [vmem:[#allocation3 + $0x338] sm:$0xff]
      %v11021 = vld [vmem:[#allocation3 + $0x340] sm:$0xff]
      %v11022 = vld [vmem:[#allocation3 + $0x348] sm:$0xff]
      %v11023 = vld [vmem:[#allocation3 + $0x350] sm:$0xff]
      %v11024 = vld [vmem:[#allocation3 + $0x358] sm:$0xff]
      %v11025 = vld [vmem:[#allocation3 + $0x360] sm:$0xff]
      %v11026 = vld [vmem:[#allocation3 + $0x368] sm:$0xff]
      %v11027 = vld [vmem:[#allocation3 + $0x370] sm:$0xff]
      %v11028 = vld [vmem:[#allocation3 + $0x378] sm:$0xff]
      %v11029 = vld [vmem:[#allocation3 + $0x380] sm:$0xff]
      %v11030 = vld [vmem:[#allocation3 + $0x388] sm:$0xff]
      %v11031 = vld [vmem:[#allocation3 + $0x390] sm:$0xff]
      %v11032 = vld [vmem:[#allocation3 + $0x398] sm:$0xff]
      %v11033 = vld [vmem:[#allocation3 + $0x3a0] sm:$0xff]
      %v11034 = vld [vmem:[#allocation3 + $0x3a8] sm:$0xff]
      %v11035 = vld [vmem:[#allocation3 + $0x3b0] sm:$0xff]
      %v11036 = vld [vmem:[#allocation3 + $0x3b8] sm:$0xff]
      %v11037 = vld [vmem:[#allocation3 + $0x3c0] sm:$0xff]
      %v11038 = vld [vmem:[#allocation3 + $0x3c8] sm:$0xff]
      %v11039 = vld [vmem:[#allocation3 + $0x3d0] sm:$0xff]
      %v11040 = vld [vmem:[#allocation3 + $0x3d8] sm:$0xff]
      %v11041 = vld [vmem:[#allocation3 + $0x3e0] sm:$0xff]
      %v11042 = vld [vmem:[#allocation3 + $0x3e8] sm:$0xff]
      %v11043 = vld [vmem:[#allocation3 + $0x3f0] sm:$0xff]
      %v11044 = vld [vmem:[#allocation3 + $0x3f8] sm:$0xff]
      %v11045 = vld [vmem:[#allocation3 + $0x400] sm:$0xff]
      %v11046 = vld [vmem:[#allocation3 + $0x408] sm:$0xff]
      %v11047 = vld [vmem:[#allocation3 + $0x410] sm:$0xff]
      %v11048 = vld [vmem:[#allocation3 + $0x418] sm:$0xff]
      %v11049 = vld [vmem:[#allocation3 + $0x420] sm:$0xff]
      %v11050 = vld [vmem:[#allocation3 + $0x428] sm:$0xff]
      %v11051 = vld [vmem:[#allocation3 + $0x430] sm:$0xff]
      %v11052 = vld [vmem:[#allocation3 + $0x438] sm:$0xff]
      %v11053 = vld [vmem:[#allocation3 + $0x440] sm:$0xff]
      %v11054 = vld [vmem:[#allocation3 + $0x448] sm:$0xff]
      %v11055 = vld [vmem:[#allocation3 + $0x450] sm:$0xff]
      %v11056 = vld [vmem:[#allocation3 + $0x458] sm:$0xff]
      %v11057 = vld [vmem:[#allocation3 + $0x460] sm:$0xff]
      %v11058 = vld [vmem:[#allocation3 + $0x468] sm:$0xff]
      %v11059 = vld [vmem:[#allocation3 + $0x470] sm:$0xff]
      %v11060 = vld [vmem:[#allocation3 + $0x478] sm:$0xff]
      %vm11061 = vcmask 588800
      %v11063 = vsel %vm11061, %v10916, 0
      %11065 = vmatprep.subr.mxu0 %v10918
      %11066 = vmatpush1.msra.mxu0 %v10917
      %11067 = vmatprep.subr.mxu0 %v10934
      %11068 = vmatpush1.msra.mxu0 %v10933
      %11069 = vmatprep.subr.mxu0 %v10950
      %11070 = vmatpush1.msra.mxu0 %v10949
      %11071 = vmatprep.subr.mxu0 %v10966
      %11072 = vmatpush1.msra.mxu0 %v10965
      %11073 = vmatprep.subr.mxu0 %v10982
      %11074 = vmatpush1.msra.mxu0 %v10981
      %11075 = vmatprep.subr.mxu0 %v10998
      %11076 = vmatpush1.msra.mxu0 %v10997
      %11077 = vmatprep.subr.mxu0 %v11014
      %11078 = vmatpush1.msra.mxu0 %v11013
      %11079 = vmatprep.subr.mxu0 %v11030
      %11080 = vmatpush1.msra.mxu0 %v11029
      %11081 = vmatprep.subr.mxu0 %v11046
      %11082 = vmatpush1.msra.mxu0 %v11045
      %11083 = vmatprep.subr.mxu0 0.0
      %11084 = vmatpush1.msra.mxu0 0.0
      %11085 = vmatprep.subr.mxu0 0.0
      %11086 = vmatpush1.msra.mxu0 0.0
      %11087 = vmatprep.subr.mxu0 0.0
      %11088 = vmatpush1.msra.mxu0 0.0
      %11089 = vmatprep.subr.mxu0 0.0
      %11090 = vmatpush1.msra.mxu0 0.0
      %11091 = vmatprep.subr.mxu0 0.0
      %11092 = vmatpush1.msra.mxu0 0.0
      %11093 = vmatprep.subr.mxu0 0.0
      %11094 = vmatpush1.msra.mxu0 0.0
      %11095 = vmatprep.subr.mxu0 0.0
      %11096 = vmatpush1.msra.mxu0 0.0
      %11097 = vmatprep.subr.mxu0 0.0
      %11098 = vmatpush1.msra.mxu0 0.0
      %11099 = vmatprep.subr.mxu0 0.0
      %11100 = vmatpush1.msra.mxu0 0.0
      %11101 = vmatprep.subr.mxu0 0.0
      %11102 = vmatpush1.msra.mxu0 0.0
      %11103 = vmatprep.subr.mxu0 0.0
      %11104 = vmatpush1.msra.mxu0 0.0
      %11105 = vmatprep.subr.mxu0 0.0
      %11106 = vmatpush1.msra.mxu0 0.0
      %11107 = vmatprep.subr.mxu0 0.0
      %11108 = vmatpush1.msra.mxu0 0.0
      %11109 = vmatprep.subr.mxu0 0.0
      %11110 = vmatpush1.msra.mxu0 0.0
      %11111 = vmatprep.subr.mxu0 0.0
      %11112 = vmatpush1.msra.mxu0 0.0
      %11113 = vmatprep.subr.mxu0 0.0
      %11114 = vmatpush1.msra.mxu0 0.0
      %11115 = vmatprep.subr.mxu0 0.0
      %11116 = vmatpush1.msra.mxu0 0.0
      %11117 = vmatprep.subr.mxu0 0.0
      %11118 = vmatpush1.msra.mxu0 0.0
      %11119 = vmatprep.subr.mxu0 0.0
      %11120 = vmatpush1.msra.mxu0 0.0
      %11121 = vmatprep.subr.mxu0 0.0
      %11122 = vmatpush1.msra.mxu0 0.0
      %11123 = vmatprep.subr.mxu0 0.0
      %11124 = vmatpush1.msra.mxu0 0.0
      %11125 = vmatprep.subr.mxu0 0.0
      %11126 = vmatpush1.msra.mxu0 0.0
      %11127 = vmatprep.subr.mxu0 0.0
      %11128 = vmatpush1.msra.mxu0 0.0
      %11129 = vmatprep.mubr.f32.mxu0 0.0
      %11130 = vmatmul.mubr.f32.gmra.mrb[0].mxu0 %v11063
      %v11131 = vpop.f32.mrb[0].mxu0
      %v11132 = vadd.f32 0.0, %v11131
      %v11133 = vpop.f32.mrb[0].mxu0
      %v11134 = vadd.f32 0.0, %v11133
      %11135 = vdwg.mxu0
      %11136 = vmatprep.subr.mxu0 %v10920
      %11137 = vmatpush1.msra.mxu0 %v10919
      %11138 = vmatprep.subr.mxu0 %v10936
      %11139 = vmatpush1.msra.mxu0 %v10935
      %11140 = vmatprep.subr.mxu0 %v10952
      %11141 = vmatpush1.msra.mxu0 %v10951
      %11142 = vmatprep.subr.mxu0 %v10968
      %11143 = vmatpush1.msra.mxu0 %v10967
      %11144 = vmatprep.subr.mxu0 %v10984
      %11145 = vmatpush1.msra.mxu0 %v10983
      %11146 = vmatprep.subr.mxu0 %v11000
      %11147 = vmatpush1.msra.mxu0 %v10999
      %11148 = vmatprep.subr.mxu0 %v11016
      %11149 = vmatpush1.msra.mxu0 %v11015
      %11150 = vmatprep.subr.mxu0 %v11032
      %11151 = vmatpush1.msra.mxu0 %v11031
      %11152 = vmatprep.subr.mxu0 %v11048
      %11153 = vmatpush1.msra.mxu0 %v11047
      %11154 = vmatprep.subr.mxu0 0.0
      %11155 = vmatpush1.msra.mxu0 0.0
      %11156 = vmatprep.subr.mxu0 0.0
      %11157 = vmatpush1.msra.mxu0 0.0
      %11158 = vmatprep.subr.mxu0 0.0
      %11159 = vmatpush1.msra.mxu0 0.0
      %11160 = vmatprep.subr.mxu0 0.0
      %11161 = vmatpush1.msra.mxu0 0.0
      %11162 = vmatprep.subr.mxu0 0.0
      %11163 = vmatpush1.msra.mxu0 0.0
      %11164 = vmatprep.subr.mxu0 0.0
      %11165 = vmatpush1.msra.mxu0 0.0
      %11166 = vmatprep.subr.mxu0 0.0
      %11167 = vmatpush1.msra.mxu0 0.0
      %11168 = vmatprep.subr.mxu0 0.0
      %11169 = vmatpush1.msra.mxu0 0.0
      %11170 = vmatprep.subr.mxu0 0.0
      %11171 = vmatpush1.msra.mxu0 0.0
      %11172 = vmatprep.subr.mxu0 0.0
      %11173 = vmatpush1.msra.mxu0 0.0
      %11174 = vmatprep.subr.mxu0 0.0
      %11175 = vmatpush1.msra.mxu0 0.0
      %11176 = vmatprep.subr.mxu0 0.0
      %11177 = vmatpush1.msra.mxu0 0.0
      %11178 = vmatprep.subr.mxu0 0.0
      %11179 = vmatpush1.msra.mxu0 0.0
      %11180 = vmatprep.subr.mxu0 0.0
      %11181 = vmatpush1.msra.mxu0 0.0
      %11182 = vmatprep.subr.mxu0 0.0
      %11183 = vmatpush1.msra.mxu0 0.0
      %11184 = vmatprep.subr.mxu0 0.0
      %11185 = vmatpush1.msra.mxu0 0.0
      %11186 = vmatprep.subr.mxu0 0.0
      %11187 = vmatpush1.msra.mxu0 0.0
      %11188 = vmatprep.subr.mxu0 0.0
      %11189 = vmatpush1.msra.mxu0 0.0
      %11190 = vmatprep.subr.mxu0 0.0
      %11191 = vmatpush1.msra.mxu0 0.0
      %11192 = vmatprep.subr.mxu0 0.0
      %11193 = vmatpush1.msra.mxu0 0.0
      %11194 = vmatprep.subr.mxu0 0.0
      %11195 = vmatpush1.msra.mxu0 0.0
      %11196 = vmatprep.subr.mxu0 0.0
      %11197 = vmatpush1.msra.mxu0 0.0
      %11198 = vmatprep.subr.mxu0 0.0
      %11199 = vmatpush1.msra.mxu0 0.0
      %11200 = vmatprep.mubr.f32.mxu0 0.0
      %11201 = vmatmul.mubr.f32.gmra.mrb[0].mxu0 %v11063
      %v11202 = vpop.f32.mrb[0].mxu0
      %v11203 = vadd.f32 0.0, %v11202
      %v11204 = vpop.f32.mrb[0].mxu0
      %v11205 = vadd.f32 0.0, %v11204
      %11206 = vdwg.mxu0
      %11207 = vmatprep.subr.mxu0 %v10922
      %11208 = vmatpush1.msra.mxu0 %v10921
      %11209 = vmatprep.subr.mxu0 %v10938
      %11210 = vmatpush1.msra.mxu0 %v10937
      %11211 = vmatprep.subr.mxu0 %v10954
      %11212 = vmatpush1.msra.mxu0 %v10953
      %11213 = vmatprep.subr.mxu0 %v10970
      %11214 = vmatpush1.msra.mxu0 %v10969
      %11215 = vmatprep.subr.mxu0 %v10986
      %11216 = vmatpush1.msra.mxu0 %v10985
      %11217 = vmatprep.subr.mxu0 %v11002
      %11218 = vmatpush1.msra.mxu0 %v11001
      %11219 = vmatprep.subr.mxu0 %v11018
      %11220 = vmatpush1.msra.mxu0 %v11017
      %11221 = vmatprep.subr.mxu0 %v11034
      %11222 = vmatpush1.msra.mxu0 %v11033
      %11223 = vmatprep.subr.mxu0 %v11050
      %11224 = vmatpush1.msra.mxu0 %v11049
      %11225 = vmatprep.subr.mxu0 0.0
      %11226 = vmatpush1.msra.mxu0 0.0
      %11227 = vmatprep.subr.mxu0 0.0
      %11228 = vmatpush1.msra.mxu0 0.0
      %11229 = vmatprep.subr.mxu0 0.0
      %11230 = vmatpush1.msra.mxu0 0.0
      %11231 = vmatprep.subr.mxu0 0.0
      %11232 = vmatpush1.msra.mxu0 0.0
      %11233 = vmatprep.subr.mxu0 0.0
      %11234 = vmatpush1.msra.mxu0 0.0
      %11235 = vmatprep.subr.mxu0 0.0
      %11236 = vmatpush1.msra.mxu0 0.0
      %11237 = vmatprep.subr.mxu0 0.0
      %11238 = vmatpush1.msra.mxu0 0.0
      %11239 = vmatprep.subr.mxu0 0.0
      %11240 = vmatpush1.msra.mxu0 0.0
      %11241 = vmatprep.subr.mxu0 0.0
      %11242 = vmatpush1.msra.mxu0 0.0
      %11243 = vmatprep.subr.mxu0 0.0
      %11244 = vmatpush1.msra.mxu0 0.0
      %11245 = vmatprep.subr.mxu0 0.0
      %11246 = vmatpush1.msra.mxu0 0.0
      %11247 = vmatprep.subr.mxu0 0.0
      %11248 = vmatpush1.msra.mxu0 0.0
      %11249 = vmatprep.subr.mxu0 0.0
      %11250 = vmatpush1.msra.mxu0 0.0
      %11251 = vmatprep.subr.mxu0 0.0
      %11252 = vmatpush1.msra.mxu0 0.0
      %11253 = vmatprep.subr.mxu0 0.0
      %11254 = vmatpush1.msra.mxu0 0.0
      %11255 = vmatprep.subr.mxu0 0.0
      %11256 = vmatpush1.msra.mxu0 0.0
      %11257 = vmatprep.subr.mxu0 0.0
      %11258 = vmatpush1.msra.mxu0 0.0
      %11259 = vmatprep.subr.mxu0 0.0
      %11260 = vmatpush1.msra.mxu0 0.0
      %11261 = vmatprep.subr.mxu0 0.0
      %11262 = vmatpush1.msra.mxu0 0.0
      %11263 = vmatprep.subr.mxu0 0.0
      %11264 = vmatpush1.msra.mxu0 0.0
      %11265 = vmatprep.subr.mxu0 0.0
      %11266 = vmatpush1.msra.mxu0 0.0
      %11267 = vmatprep.subr.mxu0 0.0
      %11268 = vmatpush1.msra.mxu0 0.0
      %11269 = vmatprep.subr.mxu0 0.0
      %11270 = vmatpush1.msra.mxu0 0.0
      %11271 = vmatprep.mubr.f32.mxu0 0.0
      %11272 = vmatmul.mubr.f32.gmra.mrb[0].mxu0 %v11063
      %v11273 = vpop.f32.mrb[0].mxu0
      %v11274 = vadd.f32 0.0, %v11273
      %v11275 = vpop.f32.mrb[0].mxu0
      %v11276 = vadd.f32 0.0, %v11275
      %11277 = vdwg.mxu0
      %11278 = vmatprep.subr.mxu0 %v10924
      %11279 = vmatpush1.msra.mxu0 %v10923
      %11280 = vmatprep.subr.mxu0 %v10940
      %11281 = vmatpush1.msra.mxu0 %v10939
      %11282 = vmatprep.subr.mxu0 %v10956
      %11283 = vmatpush1.msra.mxu0 %v10955
      %11284 = vmatprep.subr.mxu0 %v10972
      %11285 = vmatpush1.msra.mxu0 %v10971
      %11286 = vmatprep.subr.mxu0 %v10988
      %11287 = vmatpush1.msra.mxu0 %v10987
      %11288 = vmatprep.subr.mxu0 %v11004
      %11289 = vmatpush1.msra.mxu0 %v11003
      %11290 = vmatprep.subr.mxu0 %v11020
      %11291 = vmatpush1.msra.mxu0 %v11019
      %11292 = vmatprep.subr.mxu0 %v11036
      %11293 = vmatpush1.msra.mxu0 %v11035
      %11294 = vmatprep.subr.mxu0 %v11052
      %11295 = vmatpush1.msra.mxu0 %v11051
      %11296 = vmatprep.subr.mxu0 0.0
      %11297 = vmatpush1.msra.mxu0 0.0
      %11298 = vmatprep.subr.mxu0 0.0
      %11299 = vmatpush1.msra.mxu0 0.0
      %11300 = vmatprep.subr.mxu0 0.0
      %11301 = vmatpush1.msra.mxu0 0.0
      %11302 = vmatprep.subr.mxu0 0.0
      %11303 = vmatpush1.msra.mxu0 0.0
      %11304 = vmatprep.subr.mxu0 0.0
      %11305 = vmatpush1.msra.mxu0 0.0
      %11306 = vmatprep.subr.mxu0 0.0
      %11307 = vmatpush1.msra.mxu0 0.0
      %11308 = vmatprep.subr.mxu0 0.0
      %11309 = vmatpush1.msra.mxu0 0.0
      %11310 = vmatprep.subr.mxu0 0.0
      %11311 = vmatpush1.msra.mxu0 0.0
      %11312 = vmatprep.subr.mxu0 0.0
      %11313 = vmatpush1.msra.mxu0 0.0
      %11314 = vmatprep.subr.mxu0 0.0
      %11315 = vmatpush1.msra.mxu0 0.0
      %11316 = vmatprep.subr.mxu0 0.0
      %11317 = vmatpush1.msra.mxu0 0.0
      %11318 = vmatprep.subr.mxu0 0.0
      %11319 = vmatpush1.msra.mxu0 0.0
      %11320 = vmatprep.subr.mxu0 0.0
      %11321 = vmatpush1.msra.mxu0 0.0
      %11322 = vmatprep.subr.mxu0 0.0
      %11323 = vmatpush1.msra.mxu0 0.0
      %11324 = vmatprep.subr.mxu0 0.0
      %11325 = vmatpush1.msra.mxu0 0.0
      %11326 = vmatprep.subr.mxu0 0.0
      %11327 = vmatpush1.msra.mxu0 0.0
      %11328 = vmatprep.subr.mxu0 0.0
      %11329 = vmatpush1.msra.mxu0 0.0
      %11330 = vmatprep.subr.mxu0 0.0
      %11331 = vmatpush1.msra.mxu0 0.0
      %11332 = vmatprep.subr.mxu0 0.0
      %11333 = vmatpush1.msra.mxu0 0.0
      %11334 = vmatprep.subr.mxu0 0.0
      %11335 = vmatpush1.msra.mxu0 0.0
      %11336 = vmatprep.subr.mxu0 0.0
      %11337 = vmatpush1.msra.mxu0 0.0
      %11338 = vmatprep.subr.mxu0 0.0
      %11339 = vmatpush1.msra.mxu0 0.0
      %11340 = vmatprep.subr.mxu0 0.0
      %11341 = vmatpush1.msra.mxu0 0.0
      %11342 = vmatprep.mubr.f32.mxu0 0.0
      %11343 = vmatmul.mubr.f32.gmra.mrb[0].mxu0 %v11063
      %v11344 = vpop.f32.mrb[0].mxu0
      %v11345 = vadd.f32 0.0, %v11344
      %v11346 = vpop.f32.mrb[0].mxu0
      %v11347 = vadd.f32 0.0, %v11346
      %11348 = vdwg.mxu0
      %11349 = vmatprep.subr.mxu0 %v10926
      %11350 = vmatpush1.msra.mxu0 %v10925
      %11351 = vmatprep.subr.mxu0 %v10942
      %11352 = vmatpush1.msra.mxu0 %v10941
      %11353 = vmatprep.subr.mxu0 %v10958
      %11354 = vmatpush1.msra.mxu0 %v10957
      %11355 = vmatprep.subr.mxu0 %v10974
      %11356 = vmatpush1.msra.mxu0 %v10973
      %11357 = vmatprep.subr.mxu0 %v10990
      %11358 = vmatpush1.msra.mxu0 %v10989
      %11359 = vmatprep.subr.mxu0 %v11006
      %11360 = vmatpush1.msra.mxu0 %v11005
      %11361 = vmatprep.subr.mxu0 %v11022
      %11362 = vmatpush1.msra.mxu0 %v11021
      %11363 = vmatprep.subr.mxu0 %v11038
      %11364 = vmatpush1.msra.mxu0 %v11037
      %11365 = vmatprep.subr.mxu0 %v11054
      %11366 = vmatpush1.msra.mxu0 %v11053
      %11367 = vmatprep.subr.mxu0 0.0
      %11368 = vmatpush1.msra.mxu0 0.0
      %11369 = vmatprep.subr.mxu0 0.0
      %11370 = vmatpush1.msra.mxu0 0.0
      %11371 = vmatprep.subr.mxu0 0.0
      %11372 = vmatpush1.msra.mxu0 0.0
      %11373 = vmatprep.subr.mxu0 0.0
      %11374 = vmatpush1.msra.mxu0 0.0
      %11375 = vmatprep.subr.mxu0 0.0
      %11376 = vmatpush1.msra.mxu0 0.0
      %11377 = vmatprep.subr.mxu0 0.0
      %11378 = vmatpush1.msra.mxu0 0.0
      %11379 = vmatprep.subr.mxu0 0.0
      %11380 = vmatpush1.msra.mxu0 0.0
      %11381 = vmatprep.subr.mxu0 0.0
      %11382 = vmatpush1.msra.mxu0 0.0
      %11383 = vmatprep.subr.mxu0 0.0
      %11384 = vmatpush1.msra.mxu0 0.0
      %11385 = vmatprep.subr.mxu0 0.0
      %11386 = vmatpush1.msra.mxu0 0.0
      %11387 = vmatprep.subr.mxu0 0.0
      %11388 = vmatpush1.msra.mxu0 0.0
      %11389 = vmatprep.subr.mxu0 0.0
      %11390 = vmatpush1.msra.mxu0 0.0
      %11391 = vmatprep.subr.mxu0 0.0
      %11392 = vmatpush1.msra.mxu0 0.0
      %11393 = vmatprep.subr.mxu0 0.0
      %11394 = vmatpush1.msra.mxu0 0.0
      %11395 = vmatprep.subr.mxu0 0.0
      %11396 = vmatpush1.msra.mxu0 0.0
      %11397 = vmatprep.subr.mxu0 0.0
      %11398 = vmatpush1.msra.mxu0 0.0
      %11399 = vmatprep.subr.mxu0 0.0
      %11400 = vmatpush1.msra.mxu0 0.0
      %11401 = vmatprep.subr.mxu0 0.0
      %11402 = vmatpush1.msra.mxu0 0.0
      %11403 = vmatprep.subr.mxu0 0.0
      %11404 = vmatpush1.msra.mxu0 0.0
      %11405 = vmatprep.subr.mxu0 0.0
      %11406 = vmatpush1.msra.mxu0 0.0
      %11407 = vmatprep.subr.mxu0 0.0
      %11408 = vmatpush1.msra.mxu0 0.0
      %11409 = vmatprep.subr.mxu0 0.0
      %11410 = vmatpush1.msra.mxu0 0.0
      %11411 = vmatprep.subr.mxu0 0.0
      %11412 = vmatpush1.msra.mxu0 0.0
      %11413 = vmatprep.mubr.f32.mxu0 0.0
      %11414 = vmatmul.mubr.f32.gmra.mrb[0].mxu0 %v11063
      %v11415 = vpop.f32.mrb[0].mxu0
      %v11416 = vadd.f32 0.0, %v11415
      %v11417 = vpop.f32.mrb[0].mxu0
      %v11418 = vadd.f32 0.0, %v11417
      %11419 = vdwg.mxu0
      %11420 = vmatprep.subr.mxu0 %v10928
      %11421 = vmatpush1.msra.mxu0 %v10927
      %11422 = vmatprep.subr.mxu0 %v10944
      %11423 = vmatpush1.msra.mxu0 %v10943
      %11424 = vmatprep.subr.mxu0 %v10960
      %11425 = vmatpush1.msra.mxu0 %v10959
      %11426 = vmatprep.subr.mxu0 %v10976
      %11427 = vmatpush1.msra.mxu0 %v10975
      %11428 = vmatprep.subr.mxu0 %v10992
      %11429 = vmatpush1.msra.mxu0 %v10991
      %11430 = vmatprep.subr.mxu0 %v11008
      %11431 = vmatpush1.msra.mxu0 %v11007
      %11432 = vmatprep.subr.mxu0 %v11024
      %11433 = vmatpush1.msra.mxu0 %v11023
      %11434 = vmatprep.subr.mxu0 %v11040
      %11435 = vmatpush1.msra.mxu0 %v11039
      %11436 = vmatprep.subr.mxu0 %v11056
      %11437 = vmatpush1.msra.mxu0 %v11055
      %11438 = vmatprep.subr.mxu0 0.0
      %11439 = vmatpush1.msra.mxu0 0.0
      %11440 = vmatprep.subr.mxu0 0.0
      %11441 = vmatpush1.msra.mxu0 0.0
      %11442 = vmatprep.subr.mxu0 0.0
      %11443 = vmatpush1.msra.mxu0 0.0
      %11444 = vmatprep.subr.mxu0 0.0
      %11445 = vmatpush1.msra.mxu0 0.0
      %11446 = vmatprep.subr.mxu0 0.0
      %11447 = vmatpush1.msra.mxu0 0.0
      %11448 = vmatprep.subr.mxu0 0.0
      %11449 = vmatpush1.msra.mxu0 0.0
      %11450 = vmatprep.subr.mxu0 0.0
      %11451 = vmatpush1.msra.mxu0 0.0
      %11452 = vmatprep.subr.mxu0 0.0
      %11453 = vmatpush1.msra.mxu0 0.0
      %11454 = vmatprep.subr.mxu0 0.0
      %11455 = vmatpush1.msra.mxu0 0.0
      %11456 = vmatprep.subr.mxu0 0.0
      %11457 = vmatpush1.msra.mxu0 0.0
      %11458 = vmatprep.subr.mxu0 0.0
      %11459 = vmatpush1.msra.mxu0 0.0
      %11460 = vmatprep.subr.mxu0 0.0
      %11461 = vmatpush1.msra.mxu0 0.0
      %11462 = vmatprep.subr.mxu0 0.0
      %11463 = vmatpush1.msra.mxu0 0.0
      %11464 = vmatprep.subr.mxu0 0.0
      %11465 = vmatpush1.msra.mxu0 0.0
      %11466 = vmatprep.subr.mxu0 0.0
      %11467 = vmatpush1.msra.mxu0 0.0
      %11468 = vmatprep.subr.mxu0 0.0
      %11469 = vmatpush1.msra.mxu0 0.0
      %11470 = vmatprep.subr.mxu0 0.0
      %11471 = vmatpush1.msra.mxu0 0.0
      %11472 = vmatprep.subr.mxu0 0.0
      %11473 = vmatpush1.msra.mxu0 0.0
      %11474 = vmatprep.subr.mxu0 0.0
      %11475 = vmatpush1.msra.mxu0 0.0
      %11476 = vmatprep.subr.mxu0 0.0
      %11477 = vmatpush1.msra.mxu0 0.0
      %11478 = vmatprep.subr.mxu0 0.0
      %11479 = vmatpush1.msra.mxu0 0.0
      %11480 = vmatprep.subr.mxu0 0.0
      %11481 = vmatpush1.msra.mxu0 0.0
      %11482 = vmatprep.subr.mxu0 0.0
      %11483 = vmatpush1.msra.mxu0 0.0
      %11484 = vmatprep.mubr.f32.mxu0 0.0
      %11485 = vmatmul.mubr.f32.gmra.mrb[0].mxu0 %v11063
      %v11486 = vpop.f32.mrb[0].mxu0
      %v11487 = vadd.f32 0.0, %v11486
      %v11488 = vpop.f32.mrb[0].mxu0
      %v11489 = vadd.f32 0.0, %v11488
      %11490 = vdwg.mxu0
      %11491 = vmatprep.subr.mxu0 %v10930
      %11492 = vmatpush1.msra.mxu0 %v10929
      %11493 = vmatprep.subr.mxu0 %v10946
      %11494 = vmatpush1.msra.mxu0 %v10945
      %11495 = vmatprep.subr.mxu0 %v10962
      %11496 = vmatpush1.msra.mxu0 %v10961
      %11497 = vmatprep.subr.mxu0 %v10978
      %11498 = vmatpush1.msra.mxu0 %v10977
      %11499 = vmatprep.subr.mxu0 %v10994
      %11500 = vmatpush1.msra.mxu0 %v10993
      %11501 = vmatprep.subr.mxu0 %v11010
      %11502 = vmatpush1.msra.mxu0 %v11009
      %11503 = vmatprep.subr.mxu0 %v11026
      %11504 = vmatpush1.msra.mxu0 %v11025
      %11505 = vmatprep.subr.mxu0 %v11042
      %11506 = vmatpush1.msra.mxu0 %v11041
      %11507 = vmatprep.subr.mxu0 %v11058
      %11508 = vmatpush1.msra.mxu0 %v11057
      %11509 = vmatprep.subr.mxu0 0.0
      %11510 = vmatpush1.msra.mxu0 0.0
      %11511 = vmatprep.subr.mxu0 0.0
      %11512 = vmatpush1.msra.mxu0 0.0
      %11513 = vmatprep.subr.mxu0 0.0
      %11514 = vmatpush1.msra.mxu0 0.0
      %11515 = vmatprep.subr.mxu0 0.0
      %11516 = vmatpush1.msra.mxu0 0.0
      %11517 = vmatprep.subr.mxu0 0.0
      %11518 = vmatpush1.msra.mxu0 0.0
      %11519 = vmatprep.subr.mxu0 0.0
      %11520 = vmatpush1.msra.mxu0 0.0
      %11521 = vmatprep.subr.mxu0 0.0
      %11522 = vmatpush1.msra.mxu0 0.0
      %11523 = vmatprep.subr.mxu0 0.0
      %11524 = vmatpush1.msra.mxu0 0.0
      %11525 = vmatprep.subr.mxu0 0.0
      %11526 = vmatpush1.msra.mxu0 0.0
      %11527 = vmatprep.subr.mxu0 0.0
      %11528 = vmatpush1.msra.mxu0 0.0
      %11529 = vmatprep.subr.mxu0 0.0
      %11530 = vmatpush1.msra.mxu0 0.0
      %11531 = vmatprep.subr.mxu0 0.0
      %11532 = vmatpush1.msra.mxu0 0.0
      %11533 = vmatprep.subr.mxu0 0.0
      %11534 = vmatpush1.msra.mxu0 0.0
      %11535 = vmatprep.subr.mxu0 0.0
      %11536 = vmatpush1.msra.mxu0 0.0
      %11537 = vmatprep.subr.mxu0 0.0
      %11538 = vmatpush1.msra.mxu0 0.0
      %11539 = vmatprep.subr.mxu0 0.0
      %11540 = vmatpush1.msra.mxu0 0.0
      %11541 = vmatprep.subr.mxu0 0.0
      %11542 = vmatpush1.msra.mxu0 0.0
      %11543 = vmatprep.subr.mxu0 0.0
      %11544 = vmatpush1.msra.mxu0 0.0
      %11545 = vmatprep.subr.mxu0 0.0
      %11546 = vmatpush1.msra.mxu0 0.0
      %11547 = vmatprep.subr.mxu0 0.0
      %11548 = vmatpush1.msra.mxu0 0.0
      %11549 = vmatprep.subr.mxu0 0.0
      %11550 = vmatpush1.msra.mxu0 0.0
      %11551 = vmatprep.subr.mxu0 0.0
      %11552 = vmatpush1.msra.mxu0 0.0
      %11553 = vmatprep.subr.mxu0 0.0
      %11554 = vmatpush1.msra.mxu0 0.0
      %11555 = vmatprep.mubr.f32.mxu0 0.0
      %11556 = vmatmul.mubr.f32.gmra.mrb[0].mxu0 %v11063
      %v11557 = vpop.f32.mrb[0].mxu0
      %v11558 = vadd.f32 0.0, %v11557
      %v11559 = vpop.f32.mrb[0].mxu0
      %v11560 = vadd.f32 0.0, %v11559
      %11561 = vdwg.mxu0
      %11562 = vmatprep.subr.mxu0 %v10932
      %11563 = vmatpush1.msra.mxu0 %v10931
      %11564 = vmatprep.subr.mxu0 %v10948
      %11565 = vmatpush1.msra.mxu0 %v10947
      %11566 = vmatprep.subr.mxu0 %v10964
      %11567 = vmatpush1.msra.mxu0 %v10963
      %11568 = vmatprep.subr.mxu0 %v10980
      %11569 = vmatpush1.msra.mxu0 %v10979
      %11570 = vmatprep.subr.mxu0 %v10996
      %11571 = vmatpush1.msra.mxu0 %v10995
      %11572 = vmatprep.subr.mxu0 %v11012
      %11573 = vmatpush1.msra.mxu0 %v11011
      %11574 = vmatprep.subr.mxu0 %v11028
      %11575 = vmatpush1.msra.mxu0 %v11027
      %11576 = vmatprep.subr.mxu0 %v11044
      %11577 = vmatpush1.msra.mxu0 %v11043
      %11578 = vmatprep.subr.mxu0 %v11060
      %11579 = vmatpush1.msra.mxu0 %v11059
      %11580 = vmatprep.subr.mxu0 0.0
      %11581 = vmatpush1.msra.mxu0 0.0
      %11582 = vmatprep.subr.mxu0 0.0
      %11583 = vmatpush1.msra.mxu0 0.0
      %11584 = vmatprep.subr.mxu0 0.0
      %11585 = vmatpush1.msra.mxu0 0.0
      %11586 = vmatprep.subr.mxu0 0.0
      %11587 = vmatpush1.msra.mxu0 0.0
      %11588 = vmatprep.subr.mxu0 0.0
      %11589 = vmatpush1.msra.mxu0 0.0
      %11590 = vmatprep.subr.mxu0 0.0
      %11591 = vmatpush1.msra.mxu0 0.0
      %11592 = vmatprep.subr.mxu0 0.0
      %11593 = vmatpush1.msra.mxu0 0.0
      %11594 = vmatprep.subr.mxu0 0.0
      %11595 = vmatpush1.msra.mxu0 0.0
      %11596 = vmatprep.subr.mxu0 0.0
      %11597 = vmatpush1.msra.mxu0 0.0
      %11598 = vmatprep.subr.mxu0 0.0
      %11599 = vmatpush1.msra.mxu0 0.0
      %11600 = vmatprep.subr.mxu0 0.0
      %11601 = vmatpush1.msra.mxu0 0.0
      %11602 = vmatprep.subr.mxu0 0.0
      %11603 = vmatpush1.msra.mxu0 0.0
      %11604 = vmatprep.subr.mxu0 0.0
      %11605 = vmatpush1.msra.mxu0 0.0
      %11606 = vmatprep.subr.mxu0 0.0
      %11607 = vmatpush1.msra.mxu0 0.0
      %11608 = vmatprep.subr.mxu0 0.0
      %11609 = vmatpush1.msra.mxu0 0.0
      %11610 = vmatprep.subr.mxu0 0.0
      %11611 = vmatpush1.msra.mxu0 0.0
      %11612 = vmatprep.subr.mxu0 0.0
      %11613 = vmatpush1.msra.mxu0 0.0
      %11614 = vmatprep.subr.mxu0 0.0
      %11615 = vmatpush1.msra.mxu0 0.0
      %11616 = vmatprep.subr.mxu0 0.0
      %11617 = vmatpush1.msra.mxu0 0.0
      %11618 = vmatprep.subr.mxu0 0.0
      %11619 = vmatpush1.msra.mxu0 0.0
      %11620 = vmatprep.subr.mxu0 0.0
      %11621 = vmatpush1.msra.mxu0 0.0
      %11622 = vmatprep.subr.mxu0 0.0
      %11623 = vmatpush1.msra.mxu0 0.0
      %11624 = vmatprep.subr.mxu0 0.0
      %11625 = vmatpush1.msra.mxu0 0.0
      %11626 = vmatprep.mubr.f32.mxu0 0.0
      %11627 = vmatmul.mubr.f32.gmra.mrb[0].mxu0 %v11063
      %v11628 = vpop.f32.mrb[0].mxu0
      %v11629 = vadd.f32 0.0, %v11628
      %v11630 = vpop.f32.mrb[0].mxu0
      %v11631 = vadd.f32 0.0, %v11630
      %11632 = vdwg.mxu0
      %v11633 = vmul.f32 %v11132, %v8524
      %v11634 = vmul.f32 %v11134, %v8531
      %v11635 = vmul.f32 %v11203, %v8538
      %v11636 = vmul.f32 %v11205, %v8545
      %v11637 = vmul.f32 %v11274, %v8552
      %v11638 = vmul.f32 %v11276, %v8559
      %v11639 = vmul.f32 %v11345, %v8566
      %v11640 = vmul.f32 %v11347, %v8573
      %v11641 = vmul.f32 %v11416, %v8580
      %v11642 = vmul.f32 %v11418, %v8587
      %v11643 = vmul.f32 %v11487, %v8594
      %v11644 = vmul.f32 %v11489, %v8601
      %v11645 = vmul.f32 %v11558, %v8608
      %v11646 = vmul.f32 %v11560, %v8615
      %v11647 = vmul.f32 %v11629, %v8622
      %v11648 = vmul.f32 %v11631, %v8629
      %v11649 = vadd.f32 %v11633, %v312
      %v11650 = vadd.f32 %v11634, %v313
      %v11651 = vadd.f32 %v11635, %v314
      %v11652 = vadd.f32 %v11636, %v315
      %v11653 = vadd.f32 %v11637, %v316
      %v11654 = vadd.f32 %v11638, %v317
      %v11655 = vadd.f32 %v11639, %v318
      %v11656 = vadd.f32 %v11640, %v319
      %v11657 = vadd.f32 %v11641, %v320
      %v11658 = vadd.f32 %v11642, %v321
      %v11659 = vadd.f32 %v11643, %v322
      %v11660 = vadd.f32 %v11644, %v323
      %v11661 = vadd.f32 %v11645, %v324
      %v11662 = vadd.f32 %v11646, %v325
      %v11663 = vadd.f32 %v11647, %v326
      %v11664 = vadd.f32 %v11648, %v327
      %11665 = vst [vmem:[%s265] sm:$0xff] %v11649
      %11666 = vst [vmem:[%s265 + $0x8] sm:$0xff] %v11650
      %s11667 = scalar_lea.vmem %s265, 16
      %11668 = vst [vmem:[%s11667] sm:$0xff] %v11651
      %11669 = vst [vmem:[%s11667 + $0x8] sm:$0xff] %v11652
      %s11670 = scalar_lea.vmem %s265, 32
      %11671 = vst [vmem:[%s11670] sm:$0xff] %v11653
      %11672 = vst [vmem:[%s11670 + $0x8] sm:$0xff] %v11654
      %s11673 = scalar_lea.vmem %s265, 48
      %11674 = vst [vmem:[%s11673] sm:$0xff] %v11655
      %11675 = vst [vmem:[%s11673 + $0x8] sm:$0xff] %v11656
      %s11676 = scalar_lea.vmem %s265, 64
      %11677 = vst [vmem:[%s11676] sm:$0xff] %v11657
      %11678 = vst [vmem:[%s11676 + $0x8] sm:$0xff] %v11658
      %s11679 = scalar_lea.vmem %s265, 80
      %11680 = vst [vmem:[%s11679] sm:$0xff] %v11659
      %11681 = vst [vmem:[%s11679 + $0x8] sm:$0xff] %v11660
      %s11682 = scalar_lea.vmem %s265, 96
      %11683 = vst [vmem:[%s11682] sm:$0xff] %v11661
      %11684 = vst [vmem:[%s11682 + $0x8] sm:$0xff] %v11662
      %s11685 = scalar_lea.vmem %s265, 112
      %11686 = vst [vmem:[%s11685] sm:$0xff] %v11663
      %11687 = vst [vmem:[%s11685 + $0x8] sm:$0xff] %v11664
      %s11688 = smul.u32 8, %s18
      %p11689 = scmp.lt.s32.totalorder %s11688, 15
      %s11690 = scalar_select %p11689, %s11688, 15
      %s11691 = smul.addr %s11690, 2
      %s11692 = smul.addr %s11691, 8
      %s11693 = scalar_lea.vmem %s5, %s11692
      %p11694 = scmp.lt.s32.totalorder %s18, 1
      %s11695 = scalar_select %p11694, %s18, 1
      %s11696 = smul.addr %s11695, 8
      %s11697 = scalar_lea.vmem %s6, %s11696
      // Predicated region
      $region41: #{dpfe_forward.1} parent=39 // pred_check
        %p11698 = pneg %p146
      $region42: #{dpfe_forward.1} parent=39 // pred_check_branch
        %11700 = sbr.rel (%p11698) target = $region44
      $region43: #{dpfe_forward.1} parent=39 // pred_region
        %s11701 = smul.u32 8, %s18
      $region44: #{dpfe_forward.1} parent=39 // pred_fallthru
        _
      // Predicated region
      $region45: #{dpfe_forward.1} parent=39 // pred_check
        %p11702 = pneg %p172
      $region46: #{dpfe_forward.1} parent=39 // pred_check_branch
        %11704 = sbr.rel (%p11702) target = $region48
      $region47: #{dpfe_forward.1} parent=39 // pred_region
        _
      $region48: #{dpfe_forward.1} parent=39 // pred_fallthru
        _
    $region40: #{dpfe_forward.1} parent=5 // pred_fallthru
      _
    %p11705 = scmp.le.s32.totalorder 2, %s13
    // Predicated region
    $region49: #{dpfe_forward.1} parent=5 // pred_check
      %p11706 = pneg %p11705
    $region50: #{dpfe_forward.1} parent=5 // pred_check_branch
      %11708 = sbr.rel (%p11706) target = $region52
    $region51: #{dpfe_forward.1} parent=5 // pred_region
      %s11709 = ssub.s32 %s13, 2
      // Predicated region
      $region53: #{dpfe_forward.1} parent=51 // pred_check
        %p11710 = pneg %p152
      $region54: #{dpfe_forward.1} parent=51 // pred_check_branch
        %11712 = sbr.rel (%p11710) target = $region56
      $region55: #{dpfe_forward.1} parent=51 // pred_region
        %s11713 = smul.u32 8, %s19
        %p11714 = scmp.lt.s32.totalorder %s11713, 15
        %s11715 = scalar_select %p11714, %s11713, 15
        %s11716 = smul.addr %s11715, 2
        %s11717 = smul.addr %s11716, 8
        %s11718 = scalar_lea.vmem %s5, %s11717
      $region56: #{dpfe_forward.1} parent=51 // pred_fallthru
        _
      // Predicated region
      $region57: #{dpfe_forward.1} parent=51 // pred_check
        %p11719 = pneg %p178
      $region58: #{dpfe_forward.1} parent=51 // pred_check_branch
        %11721 = sbr.rel (%p11719) target = $region60
      $region59: #{dpfe_forward.1} parent=51 // pred_region
        %p11722 = scmp.lt.s32.totalorder %s19, 1
        %s11723 = scalar_select %p11722, %s19, 1
        %s11724 = smul.addr %s11723, 8
        %s11725 = scalar_lea.vmem %s6, %s11724
      $region60: #{dpfe_forward.1} parent=51 // pred_fallthru
        _
    $region52: #{dpfe_forward.1} parent=5 // pred_fallthru
      _
  $region6: #{dpfe_forward.1} parent=0 // loop_footer
    %s17 = sadd.s32 1, %s13
  $region7: #{dpfe_forward.1} parent=0 // loop_footer_branch
    %12 = sbr.rel target = $region3
  $region8: #{dpfe_forward.1} parent=0 // loop_exit
    _

</llo_original>
